<compile_context>
chip_gen: v7x
topology: tpu7x:2x2x1
jax: 0.10.0
libtpu: 0.0.40
codegen_flags: <defaults>
</compile_context>

<pallas_src>
import functools

import jax
import jax.numpy as jnp
from jax import lax
from jax.experimental import pallas as pl
from jax.experimental.pallas import tpu as pltpu


# ----------------------------------------------------------------------------
# Fused whole-network kernel.
# ----------------------------------------------------------------------------
def _cnn_fused_kernel(x_ref, w1_ref, wr1_ref, wr2_ref, w2_ref,
                      cbias_ref, gamma_ref, beta_ref, p_ref, o_ref,
                      *, B, F0, T, C, eps_main, eps_res):
    """Entire CNN forward on one VMEM-resident block.

    Activation layout between layers: 2-D (B*F, L) with L = C*T lanes,
    lane index = c*T + t (channel-major, time-minor).
    """
    L = C * T

    def conv(h2, f_in, c_in, w_ref_, bias_row, relu, stride2):
        """3x3 conv, padding=1, stride ((2 if stride2 else 1), 1), + bias.

        Time-axis taps + channel contraction are folded into banded weight
        slabs; the three freq-axis taps are accumulated with three matmuls
        (no 3x-wide lane concat in VMEM).
        """
        l_in = c_in * T
        h3 = h2.reshape(B, f_in, l_in)
        zrow = jnp.zeros((B, 1, l_in), jnp.float32)
        hp = jnp.concatenate([zrow, h3, zrow], axis=1)        # (B, f_in+2, l_in)
        step = 2 if stride2 else 1
        f_out = f_in // step
        acc = jnp.zeros((B * f_out, L), jnp.float32)
        for k in range(3):
            if stride2:
                # select even output rows while gathering the tap, instead of
                # building all rows and discarding half afterwards.
                sel = hp[:, k:k + 2 * f_out, :].reshape(
                    B, f_out, 2, l_in)[:, :, 0, :]            # (B, f_out, l_in)
            else:
                sel = hp[:, k:k + f_out, :]                   # (B, f_out, l_in)
            rows = sel.reshape(B * f_out, l_in).astype(jnp.bfloat16)
            wk = w_ref_[k * l_in:(k + 1) * l_in, :]           # (l_in, L) bf16 slab
            acc = acc + jnp.dot(rows, wk, preferred_element_type=jnp.float32)
        y = acc + cbias_ref[bias_row:bias_row + 1, :]
        if relu:
            y = jnp.maximum(y, 0.0)
        return y, f_out                                        # (B*f_out, L)

    def batchnorm(h2, f_cur, row, eps, relu_after):
        """Training-mode BN (biased variance) per channel over (B, F, T).

        One (2, L) x (L, L) matmul against the 0/1 same-channel matrix
        simultaneously reduces sum(x) / sum(x*x) per channel AND broadcasts
        the result back onto every lane of that channel.  HIGHEST precision
        keeps the statistics at f32 accuracy.
        """
        inv_n = 1.0 / float(B * f_cur * T)
        s1 = jnp.sum(h2, axis=0, keepdims=True)               # (1, L)
        s2 = jnp.sum(h2 * h2, axis=0, keepdims=True)          # (1, L)
        stats = jnp.concatenate([s1, s2], axis=0)             # (2, L)
        bc = jnp.dot(stats, p_ref[...],
                     precision=lax.Precision.HIGHEST,
                     preferred_element_type=jnp.float32) * inv_n
        mean = bc[0:1, :]
        var = jnp.maximum(bc[1:2, :] - mean * mean, 0.0)      # E[x^2]-mean^2, f32
        y = (h2 - mean) * lax.rsqrt(var + eps) * gamma_ref[row:row + 1, :] \
            + beta_ref[row:row + 1, :]
        if relu_after:
            y = jnp.maximum(y, 0.0)
        return y

    # input: (B, F0, T); Cin = 1 so its lane axis is just time.
    h = x_ref[...].reshape(B * F0, T)

    # conv1 (stride (2,1)) -> bn1 -> relu
    h, f_cur = conv(h, F0, 1, w1_ref, bias_row=0, relu=False, stride2=True)
    h = batchnorm(h, f_cur, row=0, eps=eps_main, relu_after=True)

    # resblock1 / resblock2: (shared conv -> relu -> bn(eps=C)) x 3 each
    for blk, (w_ref_, bias_row) in enumerate(((wr1_ref, 1), (wr2_ref, 2))):
        for i in range(3):
            h, f_cur = conv(h, f_cur, C, w_ref_, bias_row=bias_row,
                            relu=True, stride2=False)
            h = batchnorm(h, f_cur, row=1 + 3 * blk + i, eps=eps_res,
                          relu_after=False)

    # conv2 (stride (2,1)) -> relu -> bn2
    h, f_cur = conv(h, f_cur, C, w2_ref, bias_row=3, relu=True, stride2=True)
    h = batchnorm(h, f_cur, row=7, eps=eps_main, relu_after=False)

    # lane-dense writeback: (B*F_out, C*T) = one full-lane tile, unmasked vst.
    # The flatten(1,2) layout shuffle happens in the wrapper.
    o_ref[...] = h.astype(o_ref.dtype)


# ----------------------------------------------------------------------------
# Host-side packing: banded conv matrices, per-lane bias/BN vectors, P matrix.
# Call ONCE (outside the jit'd forward) and pass the packed pytree around.
# ----------------------------------------------------------------------------
def pack_params(params, C, T):
    L = C * T

    def banded(w):
        # w: (3, 3, Cin, Cout) ->  (3*Cin*T, Cout*T), bf16
        # row = kh*(Cin*T) + c_in*T + t_in ; col = c_out*T + t_out
        # value = w[kh, t_in - t_out + 1, c_in, c_out] if |t_in - t_out| <= 1
        KH, KW, Cin, Cout = w.shape
        ti = jnp.arange(T)[:, None]
        to = jnp.arange(T)[None, :]
        kw_idx = ti - to + 1
        valid = ((kw_idx >= 0) & (kw_idx <= KW - 1)).astype(w.dtype)
        kw_c = jnp.clip(kw_idx, 0, KW - 1)
        band = w[:, kw_c, :, :] * valid[None, :, :, None, None]  # (KH,T,T,Cin,Cout)
        band = jnp.transpose(band, (0, 3, 1, 4, 2))               # (KH,Cin,T,Cout,T)
        return band.reshape(KH * Cin * T, Cout * T).astype(jnp.bfloat16)

    def lane(v):   # per-channel (C,) -> per-lane (L,) with lane = c*T + t
        return jnp.repeat(v, T)

    w1, b1 = params["conv1"]
    wr1, br1 = params["rb1_conv"]
    wr2, br2 = params["rb2_conv"]
    w2, b2 = params["conv2"]
    bns = [params["bn1"]] + params["rb1_bns"] + params["rb2_bns"] + [params["bn2"]]
    ch = jnp.arange(L) // T
    return {
        "w1": banded(w1), "wr1": banded(wr1), "wr2": banded(wr2), "w2": banded(w2),
        "cbias": jnp.stack([lane(b1), lane(br1), lane(br2), lane(b2)]),
        "gamma": jnp.stack([lane(g) for g, _ in bns]),
        "beta": jnp.stack([lane(b) for _, b in bns]),
        "pmat": (ch[:, None] == ch[None, :]).astype(jnp.float32),
    }


# ----------------------------------------------------------------------------
# Public forward: NCHW (B, 1, F, T) in  ->  (B, C*F_out, T) out.
# ----------------------------------------------------------------------------
def cnn_forward(x_nchw, packed, C):
    B, Cin, F0, T = x_nchw.shape
    assert Cin == 1 and F0 % 4 == 0
    F_out = F0 // 4
    L = C * T
    kern = functools.partial(_cnn_fused_kernel, B=B, F0=F0, T=T, C=C,
                             eps_main=1e-5, eps_res=float(C))
    vmem_spec = pl.BlockSpec(memory_space=pltpu.MemorySpace.VMEM)
    raw = pl.pallas_call(
        kern,
        out_shape=jax.ShapeDtypeStruct((B * F_out, L), jnp.float32),
        in_specs=[vmem_spec] * 9,
        out_specs=vmem_spec,
        compiler_params=pltpu.CompilerParams(vmem_limit_bytes=32 * 1024 * 1024),
    )(x_nchw.reshape(B, F0, T), packed["w1"], packed["wr1"], packed["wr2"],
      packed["w2"], packed["cbias"], packed["gamma"], packed["beta"],
      packed["pmat"])
    # nn.Flatten(1,2) of NCHW (B, C, F_out, T) -> (B, C*F_out, T), done in the
    # wrapper on a lane-dense kernel output (tiny tensor, free in XLA).
    out = raw.reshape(B, F_out, C, T).transpose(0, 2, 1, 3).reshape(
        B, C * F_out, T)
    return out.astype(x_nchw.dtype)


# ----------------------------------------------------------------------------
# Deterministic parameter construction (PyTorch-default-like shapes/init).
# ----------------------------------------------------------------------------
def init_params(C, key):
    keys = jax.random.split(key, 4)

    def conv_params(k, cin, cout):
        fan_in = cin * 9
        bound = 1.0 / jnp.sqrt(fan_in)
        kw_, kb_ = jax.random.split(k)
        w = jax.random.uniform(kw_, (3, 3, cin, cout), jnp.float32, -bound, bound)
        b = jax.random.uniform(kb_, (cout,), jnp.float32, -bound, bound)
        return w, b

    def bn_params(c):
        return jnp.ones((c,), jnp.float32), jnp.zeros((c,), jnp.float32)

    p = {}
    p["conv1"] = conv_params(keys[0], 1, C)
    p["conv2"] = conv_params(keys[1], C, C)
    p["bn1"] = bn_params(C)
    p["bn2"] = bn_params(C)
    p["rb1_conv"] = conv_params(keys[2], C, C)
    p["rb1_bns"] = [bn_params(C) for _ in range(3)]
    p["rb2_conv"] = conv_params(keys[3], C, C)
    p["rb2_bns"] = [bn_params(C) for _ in range(3)]
    return p


# ----------------------------------------------------------------------------
# Pure-JAX reference (XLA convs) for a correctness check of the fused kernel.
# ----------------------------------------------------------------------------
def _reference_forward(x_nchw, params, C):
    def conv(x, w, b, stride_h):
        y = lax.conv_general_dilated(
            x, w, window_strides=(stride_h, 1), padding=((1, 1), (1, 1)),
            dimension_numbers=("NHWC", "HWIO", "NHWC"))
        return y + b[None, None, None, :]

    def bn(x, g, be, eps):
        mean = jnp.mean(x, axis=(0, 1, 2), keepdims=True)
        var = jnp.mean(jnp.square(x - mean), axis=(0, 1, 2), keepdims=True)
        return (x - mean) * lax.rsqrt(var + eps) * g[None, None, None, :] \
            + be[None, None, None, :]

    x = jnp.transpose(x_nchw, (0, 2, 3, 1))                     # NHWC
    w, b = params["conv1"]
    h = conv(x, w, b, 2)
    g, be = params["bn1"]
    h = jnp.maximum(bn(h, g, be, 1e-5), 0.0)
    for conv_key, bn_key in (("rb1_conv", "rb1_bns"), ("rb2_conv", "rb2_bns")):
        w, b = params[conv_key]
        for g, be in params[bn_key]:
            h = jnp.maximum(conv(h, w, b, 1), 0.0)
            h = bn(h, g, be, float(C))
    w, b = params["conv2"]
    h = jnp.maximum(conv(h, w, b, 2), 0.0)
    g, be = params["bn2"]
    h = bn(h, g, be, 1e-5)
    B_, F_, T_, C_ = h.shape
    return jnp.transpose(h, (0, 3, 1, 2)).reshape(B_, C_ * F_, T_)


if __name__ == "__main__":
    B, C, F, T = 2, 8, 16, 16          # C*T = 128 -> one full lane tile
    key = jax.random.PRNGKey(0)
    k_x, k_p = jax.random.split(key)
    x = jax.random.normal(k_x, (B, 1, F, T), jnp.float32)       # NCHW like PyTorch
    params = init_params(C, k_p)

    # pack ONCE, outside the jit'd forward (banded-weight construction is not
    # re-run per step).
    packed = jax.tree_util.tree_map(jax.block_until_ready,
                                    pack_params(params, C, T))

    fwd = jax.jit(functools.partial(cnn_forward, C=C))
    out = jax.block_until_ready(fwd(x, packed))

    expected = (B, C * (F // 4), T)                             # (2, 32, 16)
    assert out.shape == expected, (out.shape, expected)
    assert bool(jnp.all(jnp.isfinite(out)))

    # cross-check against the XLA reference; tolerance absorbs bf16 MXU
    # operand rounding in the convs (BN stats run at HIGHEST precision).
    ref = jax.block_until_ready(
        jax.jit(functools.partial(_reference_forward, C=C))(x, params))
    max_err = float(jnp.max(jnp.abs(out - ref)))
    assert max_err < 1e-1, max_err

    print("KERNEL_OK")
</pallas_src>

<mosaic_0001>
module attributes {stable_mosaic.version = 11 : i64} {
  func.func @_cnn_fused_kernel(%arg0: memref<2x16x16xf32, #tpu.memory_space<vmem>>, %arg1: memref<48x128xbf16, #tpu.memory_space<vmem>>, %arg2: memref<384x128xbf16, #tpu.memory_space<vmem>>, %arg3: memref<384x128xbf16, #tpu.memory_space<vmem>>, %arg4: memref<384x128xbf16, #tpu.memory_space<vmem>>, %arg5: memref<4x128xf32, #tpu.memory_space<vmem>>, %arg6: memref<8x128xf32, #tpu.memory_space<vmem>>, %arg7: memref<8x128xf32, #tpu.memory_space<vmem>>, %arg8: memref<128x128xf32, #tpu.memory_space<vmem>>, %arg9: memref<8x128xf32, #tpu.memory_space<vmem>>) attributes {dimension_semantics = [], scalar_prefetch = 0 : i64, scratch_operands = 0 : i64, tpu.core_type = #tpu.core_type<tc>} {
    %c0 = arith.constant 0 : index
    %c0_0 = arith.constant 0 : index
    %c0_1 = arith.constant 0 : index
    %0 = vector.load %arg0[%c0, %c0_0, %c0_1] : memref<2x16x16xf32, #tpu.memory_space<vmem>>, vector<2x16x16xf32>
    %1 = vector.shape_cast %0 : vector<2x16x16xf32> to vector<32x16xf32>
    %2 = vector.shape_cast %1 : vector<32x16xf32> to vector<2x16x16xf32>
    %cst = arith.constant 0.000000e+00 : f32
    %3 = vector.broadcast %cst : f32 to vector<2x1x16xf32>
    %4 = tpu.concatenate %3, %2, %3 in 1 : vector<2x1x16xf32>, vector<2x16x16xf32>, vector<2x1x16xf32> -> vector<2x18x16xf32>
    %cst_2 = arith.constant 0.000000e+00 : f32
    %5 = vector.broadcast %cst_2 : f32 to vector<16x128xf32>
    %6 = vector.extract_strided_slice %4 {offsets = [0, 0, 0], sizes = [2, 16, 16], strides = [1, 1, 1]} : vector<2x18x16xf32> to vector<2x16x16xf32>
    %7 = vector.shape_cast %6 : vector<2x16x16xf32> to vector<2x8x2x16xf32>
    %8 = vector.extract_strided_slice %7 {offsets = [0, 0, 0, 0], sizes = [2, 8, 1, 16], strides = [1, 1, 1, 1]} : vector<2x8x2x16xf32> to vector<2x8x1x16xf32>
    %9 = vector.shape_cast %8 : vector<2x8x1x16xf32> to vector<2x8x16xf32>
    %10 = vector.shape_cast %9 : vector<2x8x16xf32> to vector<16x16xf32>
    %11 = arith.truncf %10 : vector<16x16xf32> to vector<16x16xbf16>
    %c0_3 = arith.constant 0 : index
    %c0_4 = arith.constant 0 : index
    %12 = vector.load %arg1[%c0_3, %c0_4] : memref<48x128xbf16, #tpu.memory_space<vmem>>, vector<16x128xbf16>
    %cst_5 = arith.constant dense<0.000000e+00> : vector<16x128xf32>
    %13 = tpu.matmul %11, %12, %cst_5 {dimension_numbers = #tpu.dot_dimension_numbers<[1], [0], [0], [1], [0, 0, 1, 1], [], []>} : vector<16x16xbf16>, vector<16x128xbf16>, vector<16x128xf32> -> vector<16x128xf32>
    %14 = arith.addf %5, %13 : vector<16x128xf32>
    %15 = vector.extract_strided_slice %4 {offsets = [0, 1, 0], sizes = [2, 16, 16], strides = [1, 1, 1]} : vector<2x18x16xf32> to vector<2x16x16xf32>
    %16 = vector.shape_cast %15 : vector<2x16x16xf32> to vector<2x8x2x16xf32>
    %17 = vector.extract_strided_slice %16 {offsets = [0, 0, 0, 0], sizes = [2, 8, 1, 16], strides = [1, 1, 1, 1]} : vector<2x8x2x16xf32> to vector<2x8x1x16xf32>
    %18 = vector.shape_cast %17 : vector<2x8x1x16xf32> to vector<2x8x16xf32>
    %19 = vector.shape_cast %18 : vector<2x8x16xf32> to vector<16x16xf32>
    %20 = arith.truncf %19 : vector<16x16xf32> to vector<16x16xbf16>
    %c16 = arith.constant 16 : index
    %c0_6 = arith.constant 0 : index
    %21 = vector.load %arg1[%c16, %c0_6] : memref<48x128xbf16, #tpu.memory_space<vmem>>, vector<16x128xbf16>
    %cst_7 = arith.constant dense<0.000000e+00> : vector<16x128xf32>
    %22 = tpu.matmul %20, %21, %cst_7 {dimension_numbers = #tpu.dot_dimension_numbers<[1], [0], [0], [1], [0, 0, 1, 1], [], []>} : vector<16x16xbf16>, vector<16x128xbf16>, vector<16x128xf32> -> vector<16x128xf32>
    %23 = arith.addf %14, %22 : vector<16x128xf32>
    %24 = vector.extract_strided_slice %4 {offsets = [0, 2, 0], sizes = [2, 16, 16], strides = [1, 1, 1]} : vector<2x18x16xf32> to vector<2x16x16xf32>
    %25 = vector.shape_cast %24 : vector<2x16x16xf32> to vector<2x8x2x16xf32>
    %26 = vector.extract_strided_slice %25 {offsets = [0, 0, 0, 0], sizes = [2, 8, 1, 16], strides = [1, 1, 1, 1]} : vector<2x8x2x16xf32> to vector<2x8x1x16xf32>
    %27 = vector.shape_cast %26 : vector<2x8x1x16xf32> to vector<2x8x16xf32>
    %28 = vector.shape_cast %27 : vector<2x8x16xf32> to vector<16x16xf32>
    %29 = arith.truncf %28 : vector<16x16xf32> to vector<16x16xbf16>
    %c32 = arith.constant 32 : index
    %c0_8 = arith.constant 0 : index
    %30 = vector.load %arg1[%c32, %c0_8] : memref<48x128xbf16, #tpu.memory_space<vmem>>, vector<16x128xbf16>
    %cst_9 = arith.constant dense<0.000000e+00> : vector<16x128xf32>
    %31 = tpu.matmul %29, %30, %cst_9 {dimension_numbers = #tpu.dot_dimension_numbers<[1], [0], [0], [1], [0, 0, 1, 1], [], []>} : vector<16x16xbf16>, vector<16x128xbf16>, vector<16x128xf32> -> vector<16x128xf32>
    %32 = arith.addf %23, %31 : vector<16x128xf32>
    %c0_10 = arith.constant 0 : index
    %c0_11 = arith.constant 0 : index
    %33 = vector.load %arg5[%c0_10, %c0_11] : memref<4x128xf32, #tpu.memory_space<vmem>>, vector<1x128xf32>
    %34 = vector.broadcast %33 : vector<1x128xf32> to vector<16x128xf32>
    %35 = arith.addf %32, %34 : vector<16x128xf32>
    %cst_12 = arith.constant dense<0.000000e+00> : vector<128xf32>
    %36 = vector.multi_reduction <add>, %35, %cst_12 [0] : vector<16x128xf32> to vector<128xf32>
    %37 = vector.shape_cast %36 : vector<128xf32> to vector<1x128xf32>
    %38 = arith.mulf %35, %35 : vector<16x128xf32>
    %cst_13 = arith.constant dense<0.000000e+00> : vector<128xf32>
    %39 = vector.multi_reduction <add>, %38, %cst_13 [0] : vector<16x128xf32> to vector<128xf32>
    %40 = vector.shape_cast %39 : vector<128xf32> to vector<1x128xf32>
    %41 = tpu.concatenate %37, %40 in 0 : vector<1x128xf32>, vector<1x128xf32> -> vector<2x128xf32>
    %c0_14 = arith.constant 0 : index
    %c0_15 = arith.constant 0 : index
    %42 = vector.load %arg8[%c0_14, %c0_15] : memref<128x128xf32, #tpu.memory_space<vmem>>, vector<128x128xf32>
    %cst_16 = arith.constant dense<0.000000e+00> : vector<2x128xf32>
    %43 = tpu.matmul %41, %42, %cst_16 {dimension_numbers = #tpu.dot_dimension_numbers<[1], [0], [0], [1], [0, 0, 1, 1], [], []>, precision = #tpu.contract_precision<fp32>} : vector<2x128xf32>, vector<128x128xf32>, vector<2x128xf32> -> vector<2x128xf32>
    %cst_17 = arith.constant 3.906250e-03 : f32
    %44 = vector.broadcast %cst_17 : f32 to vector<2x128xf32>
    %45 = arith.mulf %43, %44 : vector<2x128xf32>
    %46 = vector.extract_strided_slice %45 {offsets = [0, 0], sizes = [1, 128], strides = [1, 1]} : vector<2x128xf32> to vector<1x128xf32>
    %47 = vector.extract_strided_slice %45 {offsets = [1, 0], sizes = [1, 128], strides = [1, 1]} : vector<2x128xf32> to vector<1x128xf32>
    %48 = arith.mulf %46, %46 : vector<1x128xf32>
    %49 = arith.subf %47, %48 : vector<1x128xf32>
    %cst_18 = arith.constant 0.000000e+00 : f32
    %50 = vector.broadcast %cst_18 : f32 to vector<1x128xf32>
    %51 = arith.maximumf %49, %50 : vector<1x128xf32>
    %52 = vector.broadcast %46 : vector<1x128xf32> to vector<16x128xf32>
    %53 = arith.subf %35, %52 : vector<16x128xf32>
    %cst_19 = arith.constant 9.99999974E-6 : f32
    %54 = vector.broadcast %cst_19 : f32 to vector<1x128xf32>
    %55 = arith.addf %51, %54 : vector<1x128xf32>
    %56 = math.rsqrt %55 : vector<1x128xf32>
    %57 = vector.broadcast %56 : vector<1x128xf32> to vector<16x128xf32>
    %58 = arith.mulf %53, %57 : vector<16x128xf32>
    %c0_20 = arith.constant 0 : index
    %c0_21 = arith.constant 0 : index
    %59 = vector.load %arg6[%c0_20, %c0_21] : memref<8x128xf32, #tpu.memory_space<vmem>>, vector<1x128xf32>
    %60 = vector.broadcast %59 : vector<1x128xf32> to vector<16x128xf32>
    %61 = arith.mulf %58, %60 : vector<16x128xf32>
    %c0_22 = arith.constant 0 : index
    %c0_23 = arith.constant 0 : index
    %62 = vector.load %arg7[%c0_22, %c0_23] : memref<8x128xf32, #tpu.memory_space<vmem>>, vector<1x128xf32>
    %63 = vector.broadcast %62 : vector<1x128xf32> to vector<16x128xf32>
    %64 = arith.addf %61, %63 : vector<16x128xf32>
    %cst_24 = arith.constant 0.000000e+00 : f32
    %65 = vector.broadcast %cst_24 : f32 to vector<16x128xf32>
    %66 = arith.maximumf %64, %65 : vector<16x128xf32>
    %67 = vector.shape_cast %66 : vector<16x128xf32> to vector<2x8x128xf32>
    %cst_25 = arith.constant 0.000000e+00 : f32
    %68 = vector.broadcast %cst_25 : f32 to vector<2x1x128xf32>
    %69 = tpu.concatenate %68, %67, %68 in 1 : vector<2x1x128xf32>, vector<2x8x128xf32>, vector<2x1x128xf32> -> vector<2x10x128xf32>
    %cst_26 = arith.constant 0.000000e+00 : f32
    %70 = vector.broadcast %cst_26 : f32 to vector<16x128xf32>
    %71 = vector.extract_strided_slice %69 {offsets = [0, 0, 0], sizes = [2, 8, 128], strides = [1, 1, 1]} : vector<2x10x128xf32> to vector<2x8x128xf32>
    %72 = vector.shape_cast %71 : vector<2x8x128xf32> to vector<16x128xf32>
    %73 = arith.truncf %72 : vector<16x128xf32> to vector<16x128xbf16>
    %c0_27 = arith.constant 0 : index
    %c0_28 = arith.constant 0 : index
    %74 = vector.load %arg2[%c0_27, %c0_28] : memref<384x128xbf16, #tpu.memory_space<vmem>>, vector<128x128xbf16>
    %cst_29 = arith.constant dense<0.000000e+00> : vector<16x128xf32>
    %75 = tpu.matmul %73, %74, %cst_29 {dimension_numbers = #tpu.dot_dimension_numbers<[1], [0], [0], [1], [0, 0, 1, 1], [], []>} : vector<16x128xbf16>, vector<128x128xbf16>, vector<16x128xf32> -> vector<16x128xf32>
    %76 = arith.addf %70, %75 : vector<16x128xf32>
    %77 = vector.extract_strided_slice %69 {offsets = [0, 1, 0], sizes = [2, 8, 128], strides = [1, 1, 1]} : vector<2x10x128xf32> to vector<2x8x128xf32>
    %78 = vector.shape_cast %77 : vector<2x8x128xf32> to vector<16x128xf32>
    %79 = arith.truncf %78 : vector<16x128xf32> to vector<16x128xbf16>
    %c128 = arith.constant 128 : index
    %c0_30 = arith.constant 0 : index
    %80 = vector.load %arg2[%c128, %c0_30] : memref<384x128xbf16, #tpu.memory_space<vmem>>, vector<128x128xbf16>
    %cst_31 = arith.constant dense<0.000000e+00> : vector<16x128xf32>
    %81 = tpu.matmul %79, %80, %cst_31 {dimension_numbers = #tpu.dot_dimension_numbers<[1], [0], [0], [1], [0, 0, 1, 1], [], []>} : vector<16x128xbf16>, vector<128x128xbf16>, vector<16x128xf32> -> vector<16x128xf32>
    %82 = arith.addf %76, %81 : vector<16x128xf32>
    %83 = vector.extract_strided_slice %69 {offsets = [0, 2, 0], sizes = [2, 8, 128], strides = [1, 1, 1]} : vector<2x10x128xf32> to vector<2x8x128xf32>
    %84 = vector.shape_cast %83 : vector<2x8x128xf32> to vector<16x128xf32>
    %85 = arith.truncf %84 : vector<16x128xf32> to vector<16x128xbf16>
    %c256 = arith.constant 256 : index
    %c0_32 = arith.constant 0 : index
    %86 = vector.load %arg2[%c256, %c0_32] : memref<384x128xbf16, #tpu.memory_space<vmem>>, vector<128x128xbf16>
    %cst_33 = arith.constant dense<0.000000e+00> : vector<16x128xf32>
    %87 = tpu.matmul %85, %86, %cst_33 {dimension_numbers = #tpu.dot_dimension_numbers<[1], [0], [0], [1], [0, 0, 1, 1], [], []>} : vector<16x128xbf16>, vector<128x128xbf16>, vector<16x128xf32> -> vector<16x128xf32>
    %88 = arith.addf %82, %87 : vector<16x128xf32>
    %c1 = arith.constant 1 : index
    %c0_34 = arith.constant 0 : index
    %89 = vector.load %arg5[%c1, %c0_34] : memref<4x128xf32, #tpu.memory_space<vmem>>, vector<1x128xf32>
    %90 = vector.broadcast %89 : vector<1x128xf32> to vector<16x128xf32>
    %91 = arith.addf %88, %90 : vector<16x128xf32>
    %cst_35 = arith.constant 0.000000e+00 : f32
    %92 = vector.broadcast %cst_35 : f32 to vector<16x128xf32>
    %93 = arith.maximumf %91, %92 : vector<16x128xf32>
    %cst_36 = arith.constant dense<0.000000e+00> : vector<128xf32>
    %94 = vector.multi_reduction <add>, %93, %cst_36 [0] : vector<16x128xf32> to vector<128xf32>
    %95 = vector.shape_cast %94 : vector<128xf32> to vector<1x128xf32>
    %96 = arith.mulf %93, %93 : vector<16x128xf32>
    %cst_37 = arith.constant dense<0.000000e+00> : vector<128xf32>
    %97 = vector.multi_reduction <add>, %96, %cst_37 [0] : vector<16x128xf32> to vector<128xf32>
    %98 = vector.shape_cast %97 : vector<128xf32> to vector<1x128xf32>
    %99 = tpu.concatenate %95, %98 in 0 : vector<1x128xf32>, vector<1x128xf32> -> vector<2x128xf32>
    %c0_38 = arith.constant 0 : index
    %c0_39 = arith.constant 0 : index
    %100 = vector.load %arg8[%c0_38, %c0_39] : memref<128x128xf32, #tpu.memory_space<vmem>>, vector<128x128xf32>
    %cst_40 = arith.constant dense<0.000000e+00> : vector<2x128xf32>
    %101 = tpu.matmul %99, %100, %cst_40 {dimension_numbers = #tpu.dot_dimension_numbers<[1], [0], [0], [1], [0, 0, 1, 1], [], []>, precision = #tpu.contract_precision<fp32>} : vector<2x128xf32>, vector<128x128xf32>, vector<2x128xf32> -> vector<2x128xf32>
    %cst_41 = arith.constant 3.906250e-03 : f32
    %102 = vector.broadcast %cst_41 : f32 to vector<2x128xf32>
    %103 = arith.mulf %101, %102 : vector<2x128xf32>
    %104 = vector.extract_strided_slice %103 {offsets = [0, 0], sizes = [1, 128], strides = [1, 1]} : vector<2x128xf32> to vector<1x128xf32>
    %105 = vector.extract_strided_slice %103 {offsets = [1, 0], sizes = [1, 128], strides = [1, 1]} : vector<2x128xf32> to vector<1x128xf32>
    %106 = arith.mulf %104, %104 : vector<1x128xf32>
    %107 = arith.subf %105, %106 : vector<1x128xf32>
    %cst_42 = arith.constant 0.000000e+00 : f32
    %108 = vector.broadcast %cst_42 : f32 to vector<1x128xf32>
    %109 = arith.maximumf %107, %108 : vector<1x128xf32>
    %110 = vector.broadcast %104 : vector<1x128xf32> to vector<16x128xf32>
    %111 = arith.subf %93, %110 : vector<16x128xf32>
    %cst_43 = arith.constant 8.000000e+00 : f32
    %112 = vector.broadcast %cst_43 : f32 to vector<1x128xf32>
    %113 = arith.addf %109, %112 : vector<1x128xf32>
    %114 = math.rsqrt %113 : vector<1x128xf32>
    %115 = vector.broadcast %114 : vector<1x128xf32> to vector<16x128xf32>
    %116 = arith.mulf %111, %115 : vector<16x128xf32>
    %c1_44 = arith.constant 1 : index
    %c0_45 = arith.constant 0 : index
    %117 = vector.load %arg6[%c1_44, %c0_45] : memref<8x128xf32, #tpu.memory_space<vmem>>, vector<1x128xf32>
    %118 = vector.broadcast %117 : vector<1x128xf32> to vector<16x128xf32>
    %119 = arith.mulf %116, %118 : vector<16x128xf32>
    %c1_46 = arith.constant 1 : index
    %c0_47 = arith.constant 0 : index
    %120 = vector.load %arg7[%c1_46, %c0_47] : memref<8x128xf32, #tpu.memory_space<vmem>>, vector<1x128xf32>
    %121 = vector.broadcast %120 : vector<1x128xf32> to vector<16x128xf32>
    %122 = arith.addf %119, %121 : vector<16x128xf32>
    %123 = vector.shape_cast %122 : vector<16x128xf32> to vector<2x8x128xf32>
    %cst_48 = arith.constant 0.000000e+00 : f32
    %124 = vector.broadcast %cst_48 : f32 to vector<2x1x128xf32>
    %125 = tpu.concatenate %124, %123, %124 in 1 : vector<2x1x128xf32>, vector<2x8x128xf32>, vector<2x1x128xf32> -> vector<2x10x128xf32>
    %cst_49 = arith.constant 0.000000e+00 : f32
    %126 = vector.broadcast %cst_49 : f32 to vector<16x128xf32>
    %127 = vector.extract_strided_slice %125 {offsets = [0, 0, 0], sizes = [2, 8, 128], strides = [1, 1, 1]} : vector<2x10x128xf32> to vector<2x8x128xf32>
    %128 = vector.shape_cast %127 : vector<2x8x128xf32> to vector<16x128xf32>
    %129 = arith.truncf %128 : vector<16x128xf32> to vector<16x128xbf16>
    %c0_50 = arith.constant 0 : index
    %c0_51 = arith.constant 0 : index
    %130 = vector.load %arg2[%c0_50, %c0_51] : memref<384x128xbf16, #tpu.memory_space<vmem>>, vector<128x128xbf16>
    %cst_52 = arith.constant dense<0.000000e+00> : vector<16x128xf32>
    %131 = tpu.matmul %129, %130, %cst_52 {dimension_numbers = #tpu.dot_dimension_numbers<[1], [0], [0], [1], [0, 0, 1, 1], [], []>} : vector<16x128xbf16>, vector<128x128xbf16>, vector<16x128xf32> -> vector<16x128xf32>
    %132 = arith.addf %126, %131 : vector<16x128xf32>
    %133 = vector.extract_strided_slice %125 {offsets = [0, 1, 0], sizes = [2, 8, 128], strides = [1, 1, 1]} : vector<2x10x128xf32> to vector<2x8x128xf32>
    %134 = vector.shape_cast %133 : vector<2x8x128xf32> to vector<16x128xf32>
    %135 = arith.truncf %134 : vector<16x128xf32> to vector<16x128xbf16>
    %c128_53 = arith.constant 128 : index
    %c0_54 = arith.constant 0 : index
    %136 = vector.load %arg2[%c128_53, %c0_54] : memref<384x128xbf16, #tpu.memory_space<vmem>>, vector<128x128xbf16>
    %cst_55 = arith.constant dense<0.000000e+00> : vector<16x128xf32>
    %137 = tpu.matmul %135, %136, %cst_55 {dimension_numbers = #tpu.dot_dimension_numbers<[1], [0], [0], [1], [0, 0, 1, 1], [], []>} : vector<16x128xbf16>, vector<128x128xbf16>, vector<16x128xf32> -> vector<16x128xf32>
    %138 = arith.addf %132, %137 : vector<16x128xf32>
    %139 = vector.extract_strided_slice %125 {offsets = [0, 2, 0], sizes = [2, 8, 128], strides = [1, 1, 1]} : vector<2x10x128xf32> to vector<2x8x128xf32>
    %140 = vector.shape_cast %139 : vector<2x8x128xf32> to vector<16x128xf32>
    %141 = arith.truncf %140 : vector<16x128xf32> to vector<16x128xbf16>
    %c256_56 = arith.constant 256 : index
    %c0_57 = arith.constant 0 : index
    %142 = vector.load %arg2[%c256_56, %c0_57] : memref<384x128xbf16, #tpu.memory_space<vmem>>, vector<128x128xbf16>
    %cst_58 = arith.constant dense<0.000000e+00> : vector<16x128xf32>
    %143 = tpu.matmul %141, %142, %cst_58 {dimension_numbers = #tpu.dot_dimension_numbers<[1], [0], [0], [1], [0, 0, 1, 1], [], []>} : vector<16x128xbf16>, vector<128x128xbf16>, vector<16x128xf32> -> vector<16x128xf32>
    %144 = arith.addf %138, %143 : vector<16x128xf32>
    %c1_59 = arith.constant 1 : index
    %c0_60 = arith.constant 0 : index
    %145 = vector.load %arg5[%c1_59, %c0_60] : memref<4x128xf32, #tpu.memory_space<vmem>>, vector<1x128xf32>
    %146 = vector.broadcast %145 : vector<1x128xf32> to vector<16x128xf32>
    %147 = arith.addf %144, %146 : vector<16x128xf32>
    %cst_61 = arith.constant 0.000000e+00 : f32
    %148 = vector.broadcast %cst_61 : f32 to vector<16x128xf32>
    %149 = arith.maximumf %147, %148 : vector<16x128xf32>
    %cst_62 = arith.constant dense<0.000000e+00> : vector<128xf32>
    %150 = vector.multi_reduction <add>, %149, %cst_62 [0] : vector<16x128xf32> to vector<128xf32>
    %151 = vector.shape_cast %150 : vector<128xf32> to vector<1x128xf32>
    %152 = arith.mulf %149, %149 : vector<16x128xf32>
    %cst_63 = arith.constant dense<0.000000e+00> : vector<128xf32>
    %153 = vector.multi_reduction <add>, %152, %cst_63 [0] : vector<16x128xf32> to vector<128xf32>
    %154 = vector.shape_cast %153 : vector<128xf32> to vector<1x128xf32>
    %155 = tpu.concatenate %151, %154 in 0 : vector<1x128xf32>, vector<1x128xf32> -> vector<2x128xf32>
    %c0_64 = arith.constant 0 : index
    %c0_65 = arith.constant 0 : index
    %156 = vector.load %arg8[%c0_64, %c0_65] : memref<128x128xf32, #tpu.memory_space<vmem>>, vector<128x128xf32>
    %cst_66 = arith.constant dense<0.000000e+00> : vector<2x128xf32>
    %157 = tpu.matmul %155, %156, %cst_66 {dimension_numbers = #tpu.dot_dimension_numbers<[1], [0], [0], [1], [0, 0, 1, 1], [], []>, precision = #tpu.contract_precision<fp32>} : vector<2x128xf32>, vector<128x128xf32>, vector<2x128xf32> -> vector<2x128xf32>
    %cst_67 = arith.constant 3.906250e-03 : f32
    %158 = vector.broadcast %cst_67 : f32 to vector<2x128xf32>
    %159 = arith.mulf %157, %158 : vector<2x128xf32>
    %160 = vector.extract_strided_slice %159 {offsets = [0, 0], sizes = [1, 128], strides = [1, 1]} : vector<2x128xf32> to vector<1x128xf32>
    %161 = vector.extract_strided_slice %159 {offsets = [1, 0], sizes = [1, 128], strides = [1, 1]} : vector<2x128xf32> to vector<1x128xf32>
    %162 = arith.mulf %160, %160 : vector<1x128xf32>
    %163 = arith.subf %161, %162 : vector<1x128xf32>
    %cst_68 = arith.constant 0.000000e+00 : f32
    %164 = vector.broadcast %cst_68 : f32 to vector<1x128xf32>
    %165 = arith.maximumf %163, %164 : vector<1x128xf32>
    %166 = vector.broadcast %160 : vector<1x128xf32> to vector<16x128xf32>
    %167 = arith.subf %149, %166 : vector<16x128xf32>
    %cst_69 = arith.constant 8.000000e+00 : f32
    %168 = vector.broadcast %cst_69 : f32 to vector<1x128xf32>
    %169 = arith.addf %165, %168 : vector<1x128xf32>
    %170 = math.rsqrt %169 : vector<1x128xf32>
    %171 = vector.broadcast %170 : vector<1x128xf32> to vector<16x128xf32>
    %172 = arith.mulf %167, %171 : vector<16x128xf32>
    %c2 = arith.constant 2 : index
    %c0_70 = arith.constant 0 : index
    %173 = vector.load %arg6[%c2, %c0_70] : memref<8x128xf32, #tpu.memory_space<vmem>>, vector<1x128xf32>
    %174 = vector.broadcast %173 : vector<1x128xf32> to vector<16x128xf32>
    %175 = arith.mulf %172, %174 : vector<16x128xf32>
    %c2_71 = arith.constant 2 : index
    %c0_72 = arith.constant 0 : index
    %176 = vector.load %arg7[%c2_71, %c0_72] : memref<8x128xf32, #tpu.memory_space<vmem>>, vector<1x128xf32>
    %177 = vector.broadcast %176 : vector<1x128xf32> to vector<16x128xf32>
    %178 = arith.addf %175, %177 : vector<16x128xf32>
    %179 = vector.shape_cast %178 : vector<16x128xf32> to vector<2x8x128xf32>
    %cst_73 = arith.constant 0.000000e+00 : f32
    %180 = vector.broadcast %cst_73 : f32 to vector<2x1x128xf32>
    %181 = tpu.concatenate %180, %179, %180 in 1 : vector<2x1x128xf32>, vector<2x8x128xf32>, vector<2x1x128xf32> -> vector<2x10x128xf32>
    %cst_74 = arith.constant 0.000000e+00 : f32
    %182 = vector.broadcast %cst_74 : f32 to vector<16x128xf32>
    %183 = vector.extract_strided_slice %181 {offsets = [0, 0, 0], sizes = [2, 8, 128], strides = [1, 1, 1]} : vector<2x10x128xf32> to vector<2x8x128xf32>
    %184 = vector.shape_cast %183 : vector<2x8x128xf32> to vector<16x128xf32>
    %185 = arith.truncf %184 : vector<16x128xf32> to vector<16x128xbf16>
    %c0_75 = arith.constant 0 : index
    %c0_76 = arith.constant 0 : index
    %186 = vector.load %arg2[%c0_75, %c0_76] : memref<384x128xbf16, #tpu.memory_space<vmem>>, vector<128x128xbf16>
    %cst_77 = arith.constant dense<0.000000e+00> : vector<16x128xf32>
    %187 = tpu.matmul %185, %186, %cst_77 {dimension_numbers = #tpu.dot_dimension_numbers<[1], [0], [0], [1], [0, 0, 1, 1], [], []>} : vector<16x128xbf16>, vector<128x128xbf16>, vector<16x128xf32> -> vector<16x128xf32>
    %188 = arith.addf %182, %187 : vector<16x128xf32>
    %189 = vector.extract_strided_slice %181 {offsets = [0, 1, 0], sizes = [2, 8, 128], strides = [1, 1, 1]} : vector<2x10x128xf32> to vector<2x8x128xf32>
    %190 = vector.shape_cast %189 : vector<2x8x128xf32> to vector<16x128xf32>
    %191 = arith.truncf %190 : vector<16x128xf32> to vector<16x128xbf16>
    %c128_78 = arith.constant 128 : index
    %c0_79 = arith.constant 0 : index
    %192 = vector.load %arg2[%c128_78, %c0_79] : memref<384x128xbf16, #tpu.memory_space<vmem>>, vector<128x128xbf16>
    %cst_80 = arith.constant dense<0.000000e+00> : vector<16x128xf32>
    %193 = tpu.matmul %191, %192, %cst_80 {dimension_numbers = #tpu.dot_dimension_numbers<[1], [0], [0], [1], [0, 0, 1, 1], [], []>} : vector<16x128xbf16>, vector<128x128xbf16>, vector<16x128xf32> -> vector<16x128xf32>
    %194 = arith.addf %188, %193 : vector<16x128xf32>
    %195 = vector.extract_strided_slice %181 {offsets = [0, 2, 0], sizes = [2, 8, 128], strides = [1, 1, 1]} : vector<2x10x128xf32> to vector<2x8x128xf32>
    %196 = vector.shape_cast %195 : vector<2x8x128xf32> to vector<16x128xf32>
    %197 = arith.truncf %196 : vector<16x128xf32> to vector<16x128xbf16>
    %c256_81 = arith.constant 256 : index
    %c0_82 = arith.constant 0 : index
    %198 = vector.load %arg2[%c256_81, %c0_82] : memref<384x128xbf16, #tpu.memory_space<vmem>>, vector<128x128xbf16>
    %cst_83 = arith.constant dense<0.000000e+00> : vector<16x128xf32>
    %199 = tpu.matmul %197, %198, %cst_83 {dimension_numbers = #tpu.dot_dimension_numbers<[1], [0], [0], [1], [0, 0, 1, 1], [], []>} : vector<16x128xbf16>, vector<128x128xbf16>, vector<16x128xf32> -> vector<16x128xf32>
    %200 = arith.addf %194, %199 : vector<16x128xf32>
    %c1_84 = arith.constant 1 : index
    %c0_85 = arith.constant 0 : index
    %201 = vector.load %arg5[%c1_84, %c0_85] : memref<4x128xf32, #tpu.memory_space<vmem>>, vector<1x128xf32>
    %202 = vector.broadcast %201 : vector<1x128xf32> to vector<16x128xf32>
    %203 = arith.addf %200, %202 : vector<16x128xf32>
    %cst_86 = arith.constant 0.000000e+00 : f32
    %204 = vector.broadcast %cst_86 : f32 to vector<16x128xf32>
    %205 = arith.maximumf %203, %204 : vector<16x128xf32>
    %cst_87 = arith.constant dense<0.000000e+00> : vector<128xf32>
    %206 = vector.multi_reduction <add>, %205, %cst_87 [0] : vector<16x128xf32> to vector<128xf32>
    %207 = vector.shape_cast %206 : vector<128xf32> to vector<1x128xf32>
    %208 = arith.mulf %205, %205 : vector<16x128xf32>
    %cst_88 = arith.constant dense<0.000000e+00> : vector<128xf32>
    %209 = vector.multi_reduction <add>, %208, %cst_88 [0] : vector<16x128xf32> to vector<128xf32>
    %210 = vector.shape_cast %209 : vector<128xf32> to vector<1x128xf32>
    %211 = tpu.concatenate %207, %210 in 0 : vector<1x128xf32>, vector<1x128xf32> -> vector<2x128xf32>
    %c0_89 = arith.constant 0 : index
    %c0_90 = arith.constant 0 : index
    %212 = vector.load %arg8[%c0_89, %c0_90] : memref<128x128xf32, #tpu.memory_space<vmem>>, vector<128x128xf32>
    %cst_91 = arith.constant dense<0.000000e+00> : vector<2x128xf32>
    %213 = tpu.matmul %211, %212, %cst_91 {dimension_numbers = #tpu.dot_dimension_numbers<[1], [0], [0], [1], [0, 0, 1, 1], [], []>, precision = #tpu.contract_precision<fp32>} : vector<2x128xf32>, vector<128x128xf32>, vector<2x128xf32> -> vector<2x128xf32>
    %cst_92 = arith.constant 3.906250e-03 : f32
    %214 = vector.broadcast %cst_92 : f32 to vector<2x128xf32>
    %215 = arith.mulf %213, %214 : vector<2x128xf32>
    %216 = vector.extract_strided_slice %215 {offsets = [0, 0], sizes = [1, 128], strides = [1, 1]} : vector<2x128xf32> to vector<1x128xf32>
    %217 = vector.extract_strided_slice %215 {offsets = [1, 0], sizes = [1, 128], strides = [1, 1]} : vector<2x128xf32> to vector<1x128xf32>
    %218 = arith.mulf %216, %216 : vector<1x128xf32>
    %219 = arith.subf %217, %218 : vector<1x128xf32>
    %cst_93 = arith.constant 0.000000e+00 : f32
    %220 = vector.broadcast %cst_93 : f32 to vector<1x128xf32>
    %221 = arith.maximumf %219, %220 : vector<1x128xf32>
    %222 = vector.broadcast %216 : vector<1x128xf32> to vector<16x128xf32>
    %223 = arith.subf %205, %222 : vector<16x128xf32>
    %cst_94 = arith.constant 8.000000e+00 : f32
    %224 = vector.broadcast %cst_94 : f32 to vector<1x128xf32>
    %225 = arith.addf %221, %224 : vector<1x128xf32>
    %226 = math.rsqrt %225 : vector<1x128xf32>
    %227 = vector.broadcast %226 : vector<1x128xf32> to vector<16x128xf32>
    %228 = arith.mulf %223, %227 : vector<16x128xf32>
    %c3 = arith.constant 3 : index
    %c0_95 = arith.constant 0 : index
    %229 = vector.load %arg6[%c3, %c0_95] : memref<8x128xf32, #tpu.memory_space<vmem>>, vector<1x128xf32>
    %230 = vector.broadcast %229 : vector<1x128xf32> to vector<16x128xf32>
    %231 = arith.mulf %228, %230 : vector<16x128xf32>
    %c3_96 = arith.constant 3 : index
    %c0_97 = arith.constant 0 : index
    %232 = vector.load %arg7[%c3_96, %c0_97] : memref<8x128xf32, #tpu.memory_space<vmem>>, vector<1x128xf32>
    %233 = vector.broadcast %232 : vector<1x128xf32> to vector<16x128xf32>
    %234 = arith.addf %231, %233 : vector<16x128xf32>
    %235 = vector.shape_cast %234 : vector<16x128xf32> to vector<2x8x128xf32>
    %cst_98 = arith.constant 0.000000e+00 : f32
    %236 = vector.broadcast %cst_98 : f32 to vector<2x1x128xf32>
    %237 = tpu.concatenate %236, %235, %236 in 1 : vector<2x1x128xf32>, vector<2x8x128xf32>, vector<2x1x128xf32> -> vector<2x10x128xf32>
    %cst_99 = arith.constant 0.000000e+00 : f32
    %238 = vector.broadcast %cst_99 : f32 to vector<16x128xf32>
    %239 = vector.extract_strided_slice %237 {offsets = [0, 0, 0], sizes = [2, 8, 128], strides = [1, 1, 1]} : vector<2x10x128xf32> to vector<2x8x128xf32>
    %240 = vector.shape_cast %239 : vector<2x8x128xf32> to vector<16x128xf32>
    %241 = arith.truncf %240 : vector<16x128xf32> to vector<16x128xbf16>
    %c0_100 = arith.constant 0 : index
    %c0_101 = arith.constant 0 : index
    %242 = vector.load %arg3[%c0_100, %c0_101] : memref<384x128xbf16, #tpu.memory_space<vmem>>, vector<128x128xbf16>
    %cst_102 = arith.constant dense<0.000000e+00> : vector<16x128xf32>
    %243 = tpu.matmul %241, %242, %cst_102 {dimension_numbers = #tpu.dot_dimension_numbers<[1], [0], [0], [1], [0, 0, 1, 1], [], []>} : vector<16x128xbf16>, vector<128x128xbf16>, vector<16x128xf32> -> vector<16x128xf32>
    %244 = arith.addf %238, %243 : vector<16x128xf32>
    %245 = vector.extract_strided_slice %237 {offsets = [0, 1, 0], sizes = [2, 8, 128], strides = [1, 1, 1]} : vector<2x10x128xf32> to vector<2x8x128xf32>
    %246 = vector.shape_cast %245 : vector<2x8x128xf32> to vector<16x128xf32>
    %247 = arith.truncf %246 : vector<16x128xf32> to vector<16x128xbf16>
    %c128_103 = arith.constant 128 : index
    %c0_104 = arith.constant 0 : index
    %248 = vector.load %arg3[%c128_103, %c0_104] : memref<384x128xbf16, #tpu.memory_space<vmem>>, vector<128x128xbf16>
    %cst_105 = arith.constant dense<0.000000e+00> : vector<16x128xf32>
    %249 = tpu.matmul %247, %248, %cst_105 {dimension_numbers = #tpu.dot_dimension_numbers<[1], [0], [0], [1], [0, 0, 1, 1], [], []>} : vector<16x128xbf16>, vector<128x128xbf16>, vector<16x128xf32> -> vector<16x128xf32>
    %250 = arith.addf %244, %249 : vector<16x128xf32>
    %251 = vector.extract_strided_slice %237 {offsets = [0, 2, 0], sizes = [2, 8, 128], strides = [1, 1, 1]} : vector<2x10x128xf32> to vector<2x8x128xf32>
    %252 = vector.shape_cast %251 : vector<2x8x128xf32> to vector<16x128xf32>
    %253 = arith.truncf %252 : vector<16x128xf32> to vector<16x128xbf16>
    %c256_106 = arith.constant 256 : index
    %c0_107 = arith.constant 0 : index
    %254 = vector.load %arg3[%c256_106, %c0_107] : memref<384x128xbf16, #tpu.memory_space<vmem>>, vector<128x128xbf16>
    %cst_108 = arith.constant dense<0.000000e+00> : vector<16x128xf32>
    %255 = tpu.matmul %253, %254, %cst_108 {dimension_numbers = #tpu.dot_dimension_numbers<[1], [0], [0], [1], [0, 0, 1, 1], [], []>} : vector<16x128xbf16>, vector<128x128xbf16>, vector<16x128xf32> -> vector<16x128xf32>
    %256 = arith.addf %250, %255 : vector<16x128xf32>
    %c2_109 = arith.constant 2 : index
    %c0_110 = arith.constant 0 : index
    %257 = vector.load %arg5[%c2_109, %c0_110] : memref<4x128xf32, #tpu.memory_space<vmem>>, vector<1x128xf32>
    %258 = vector.broadcast %257 : vector<1x128xf32> to vector<16x128xf32>
    %259 = arith.addf %256, %258 : vector<16x128xf32>
    %cst_111 = arith.constant 0.000000e+00 : f32
    %260 = vector.broadcast %cst_111 : f32 to vector<16x128xf32>
    %261 = arith.maximumf %259, %260 : vector<16x128xf32>
    %cst_112 = arith.constant dense<0.000000e+00> : vector<128xf32>
    %262 = vector.multi_reduction <add>, %261, %cst_112 [0] : vector<16x128xf32> to vector<128xf32>
    %263 = vector.shape_cast %262 : vector<128xf32> to vector<1x128xf32>
    %264 = arith.mulf %261, %261 : vector<16x128xf32>
    %cst_113 = arith.constant dense<0.000000e+00> : vector<128xf32>
    %265 = vector.multi_reduction <add>, %264, %cst_113 [0] : vector<16x128xf32> to vector<128xf32>
    %266 = vector.shape_cast %265 : vector<128xf32> to vector<1x128xf32>
    %267 = tpu.concatenate %263, %266 in 0 : vector<1x128xf32>, vector<1x128xf32> -> vector<2x128xf32>
    %c0_114 = arith.constant 0 : index
    %c0_115 = arith.constant 0 : index
    %268 = vector.load %arg8[%c0_114, %c0_115] : memref<128x128xf32, #tpu.memory_space<vmem>>, vector<128x128xf32>
    %cst_116 = arith.constant dense<0.000000e+00> : vector<2x128xf32>
    %269 = tpu.matmul %267, %268, %cst_116 {dimension_numbers = #tpu.dot_dimension_numbers<[1], [0], [0], [1], [0, 0, 1, 1], [], []>, precision = #tpu.contract_precision<fp32>} : vector<2x128xf32>, vector<128x128xf32>, vector<2x128xf32> -> vector<2x128xf32>
    %cst_117 = arith.constant 3.906250e-03 : f32
    %270 = vector.broadcast %cst_117 : f32 to vector<2x128xf32>
    %271 = arith.mulf %269, %270 : vector<2x128xf32>
    %272 = vector.extract_strided_slice %271 {offsets = [0, 0], sizes = [1, 128], strides = [1, 1]} : vector<2x128xf32> to vector<1x128xf32>
    %273 = vector.extract_strided_slice %271 {offsets = [1, 0], sizes = [1, 128], strides = [1, 1]} : vector<2x128xf32> to vector<1x128xf32>
    %274 = arith.mulf %272, %272 : vector<1x128xf32>
    %275 = arith.subf %273, %274 : vector<1x128xf32>
    %cst_118 = arith.constant 0.000000e+00 : f32
    %276 = vector.broadcast %cst_118 : f32 to vector<1x128xf32>
    %277 = arith.maximumf %275, %276 : vector<1x128xf32>
    %278 = vector.broadcast %272 : vector<1x128xf32> to vector<16x128xf32>
    %279 = arith.subf %261, %278 : vector<16x128xf32>
    %cst_119 = arith.constant 8.000000e+00 : f32
    %280 = vector.broadcast %cst_119 : f32 to vector<1x128xf32>
    %281 = arith.addf %277, %280 : vector<1x128xf32>
    %282 = math.rsqrt %281 : vector<1x128xf32>
    %283 = vector.broadcast %282 : vector<1x128xf32> to vector<16x128xf32>
    %284 = arith.mulf %279, %283 : vector<16x128xf32>
    %c4 = arith.constant 4 : index
    %c0_120 = arith.constant 0 : index
    %285 = vector.load %arg6[%c4, %c0_120] : memref<8x128xf32, #tpu.memory_space<vmem>>, vector<1x128xf32>
    %286 = vector.broadcast %285 : vector<1x128xf32> to vector<16x128xf32>
    %287 = arith.mulf %284, %286 : vector<16x128xf32>
    %c4_121 = arith.constant 4 : index
    %c0_122 = arith.constant 0 : index
    %288 = vector.load %arg7[%c4_121, %c0_122] : memref<8x128xf32, #tpu.memory_space<vmem>>, vector<1x128xf32>
    %289 = vector.broadcast %288 : vector<1x128xf32> to vector<16x128xf32>
    %290 = arith.addf %287, %289 : vector<16x128xf32>
    %291 = vector.shape_cast %290 : vector<16x128xf32> to vector<2x8x128xf32>
    %cst_123 = arith.constant 0.000000e+00 : f32
    %292 = vector.broadcast %cst_123 : f32 to vector<2x1x128xf32>
    %293 = tpu.concatenate %292, %291, %292 in 1 : vector<2x1x128xf32>, vector<2x8x128xf32>, vector<2x1x128xf32> -> vector<2x10x128xf32>
    %cst_124 = arith.constant 0.000000e+00 : f32
    %294 = vector.broadcast %cst_124 : f32 to vector<16x128xf32>
    %295 = vector.extract_strided_slice %293 {offsets = [0, 0, 0], sizes = [2, 8, 128], strides = [1, 1, 1]} : vector<2x10x128xf32> to vector<2x8x128xf32>
    %296 = vector.shape_cast %295 : vector<2x8x128xf32> to vector<16x128xf32>
    %297 = arith.truncf %296 : vector<16x128xf32> to vector<16x128xbf16>
    %c0_125 = arith.constant 0 : index
    %c0_126 = arith.constant 0 : index
    %298 = vector.load %arg3[%c0_125, %c0_126] : memref<384x128xbf16, #tpu.memory_space<vmem>>, vector<128x128xbf16>
    %cst_127 = arith.constant dense<0.000000e+00> : vector<16x128xf32>
    %299 = tpu.matmul %297, %298, %cst_127 {dimension_numbers = #tpu.dot_dimension_numbers<[1], [0], [0], [1], [0, 0, 1, 1], [], []>} : vector<16x128xbf16>, vector<128x128xbf16>, vector<16x128xf32> -> vector<16x128xf32>
    %300 = arith.addf %294, %299 : vector<16x128xf32>
    %301 = vector.extract_strided_slice %293 {offsets = [0, 1, 0], sizes = [2, 8, 128], strides = [1, 1, 1]} : vector<2x10x128xf32> to vector<2x8x128xf32>
    %302 = vector.shape_cast %301 : vector<2x8x128xf32> to vector<16x128xf32>
    %303 = arith.truncf %302 : vector<16x128xf32> to vector<16x128xbf16>
    %c128_128 = arith.constant 128 : index
    %c0_129 = arith.constant 0 : index
    %304 = vector.load %arg3[%c128_128, %c0_129] : memref<384x128xbf16, #tpu.memory_space<vmem>>, vector<128x128xbf16>
    %cst_130 = arith.constant dense<0.000000e+00> : vector<16x128xf32>
    %305 = tpu.matmul %303, %304, %cst_130 {dimension_numbers = #tpu.dot_dimension_numbers<[1], [0], [0], [1], [0, 0, 1, 1], [], []>} : vector<16x128xbf16>, vector<128x128xbf16>, vector<16x128xf32> -> vector<16x128xf32>
    %306 = arith.addf %300, %305 : vector<16x128xf32>
    %307 = vector.extract_strided_slice %293 {offsets = [0, 2, 0], sizes = [2, 8, 128], strides = [1, 1, 1]} : vector<2x10x128xf32> to vector<2x8x128xf32>
    %308 = vector.shape_cast %307 : vector<2x8x128xf32> to vector<16x128xf32>
    %309 = arith.truncf %308 : vector<16x128xf32> to vector<16x128xbf16>
    %c256_131 = arith.constant 256 : index
    %c0_132 = arith.constant 0 : index
    %310 = vector.load %arg3[%c256_131, %c0_132] : memref<384x128xbf16, #tpu.memory_space<vmem>>, vector<128x128xbf16>
    %cst_133 = arith.constant dense<0.000000e+00> : vector<16x128xf32>
    %311 = tpu.matmul %309, %310, %cst_133 {dimension_numbers = #tpu.dot_dimension_numbers<[1], [0], [0], [1], [0, 0, 1, 1], [], []>} : vector<16x128xbf16>, vector<128x128xbf16>, vector<16x128xf32> -> vector<16x128xf32>
    %312 = arith.addf %306, %311 : vector<16x128xf32>
    %c2_134 = arith.constant 2 : index
    %c0_135 = arith.constant 0 : index
    %313 = vector.load %arg5[%c2_134, %c0_135] : memref<4x128xf32, #tpu.memory_space<vmem>>, vector<1x128xf32>
    %314 = vector.broadcast %313 : vector<1x128xf32> to vector<16x128xf32>
    %315 = arith.addf %312, %314 : vector<16x128xf32>
    %cst_136 = arith.constant 0.000000e+00 : f32
    %316 = vector.broadcast %cst_136 : f32 to vector<16x128xf32>
    %317 = arith.maximumf %315, %316 : vector<16x128xf32>
    %cst_137 = arith.constant dense<0.000000e+00> : vector<128xf32>
    %318 = vector.multi_reduction <add>, %317, %cst_137 [0] : vector<16x128xf32> to vector<128xf32>
    %319 = vector.shape_cast %318 : vector<128xf32> to vector<1x128xf32>
    %320 = arith.mulf %317, %317 : vector<16x128xf32>
    %cst_138 = arith.constant dense<0.000000e+00> : vector<128xf32>
    %321 = vector.multi_reduction <add>, %320, %cst_138 [0] : vector<16x128xf32> to vector<128xf32>
    %322 = vector.shape_cast %321 : vector<128xf32> to vector<1x128xf32>
    %323 = tpu.concatenate %319, %322 in 0 : vector<1x128xf32>, vector<1x128xf32> -> vector<2x128xf32>
    %c0_139 = arith.constant 0 : index
    %c0_140 = arith.constant 0 : index
    %324 = vector.load %arg8[%c0_139, %c0_140] : memref<128x128xf32, #tpu.memory_space<vmem>>, vector<128x128xf32>
    %cst_141 = arith.constant dense<0.000000e+00> : vector<2x128xf32>
    %325 = tpu.matmul %323, %324, %cst_141 {dimension_numbers = #tpu.dot_dimension_numbers<[1], [0], [0], [1], [0, 0, 1, 1], [], []>, precision = #tpu.contract_precision<fp32>} : vector<2x128xf32>, vector<128x128xf32>, vector<2x128xf32> -> vector<2x128xf32>
    %cst_142 = arith.constant 3.906250e-03 : f32
    %326 = vector.broadcast %cst_142 : f32 to vector<2x128xf32>
    %327 = arith.mulf %325, %326 : vector<2x128xf32>
    %328 = vector.extract_strided_slice %327 {offsets = [0, 0], sizes = [1, 128], strides = [1, 1]} : vector<2x128xf32> to vector<1x128xf32>
    %329 = vector.extract_strided_slice %327 {offsets = [1, 0], sizes = [1, 128], strides = [1, 1]} : vector<2x128xf32> to vector<1x128xf32>
    %330 = arith.mulf %328, %328 : vector<1x128xf32>
    %331 = arith.subf %329, %330 : vector<1x128xf32>
    %cst_143 = arith.constant 0.000000e+00 : f32
    %332 = vector.broadcast %cst_143 : f32 to vector<1x128xf32>
    %333 = arith.maximumf %331, %332 : vector<1x128xf32>
    %334 = vector.broadcast %328 : vector<1x128xf32> to vector<16x128xf32>
    %335 = arith.subf %317, %334 : vector<16x128xf32>
    %cst_144 = arith.constant 8.000000e+00 : f32
    %336 = vector.broadcast %cst_144 : f32 to vector<1x128xf32>
    %337 = arith.addf %333, %336 : vector<1x128xf32>
    %338 = math.rsqrt %337 : vector<1x128xf32>
    %339 = vector.broadcast %338 : vector<1x128xf32> to vector<16x128xf32>
    %340 = arith.mulf %335, %339 : vector<16x128xf32>
    %c5 = arith.constant 5 : index
    %c0_145 = arith.constant 0 : index
    %341 = vector.load %arg6[%c5, %c0_145] : memref<8x128xf32, #tpu.memory_space<vmem>>, vector<1x128xf32>
    %342 = vector.broadcast %341 : vector<1x128xf32> to vector<16x128xf32>
    %343 = arith.mulf %340, %342 : vector<16x128xf32>
    %c5_146 = arith.constant 5 : index
    %c0_147 = arith.constant 0 : index
    %344 = vector.load %arg7[%c5_146, %c0_147] : memref<8x128xf32, #tpu.memory_space<vmem>>, vector<1x128xf32>
    %345 = vector.broadcast %344 : vector<1x128xf32> to vector<16x128xf32>
    %346 = arith.addf %343, %345 : vector<16x128xf32>
    %347 = vector.shape_cast %346 : vector<16x128xf32> to vector<2x8x128xf32>
    %cst_148 = arith.constant 0.000000e+00 : f32
    %348 = vector.broadcast %cst_148 : f32 to vector<2x1x128xf32>
    %349 = tpu.concatenate %348, %347, %348 in 1 : vector<2x1x128xf32>, vector<2x8x128xf32>, vector<2x1x128xf32> -> vector<2x10x128xf32>
    %cst_149 = arith.constant 0.000000e+00 : f32
    %350 = vector.broadcast %cst_149 : f32 to vector<16x128xf32>
    %351 = vector.extract_strided_slice %349 {offsets = [0, 0, 0], sizes = [2, 8, 128], strides = [1, 1, 1]} : vector<2x10x128xf32> to vector<2x8x128xf32>
    %352 = vector.shape_cast %351 : vector<2x8x128xf32> to vector<16x128xf32>
    %353 = arith.truncf %352 : vector<16x128xf32> to vector<16x128xbf16>
    %c0_150 = arith.constant 0 : index
    %c0_151 = arith.constant 0 : index
    %354 = vector.load %arg3[%c0_150, %c0_151] : memref<384x128xbf16, #tpu.memory_space<vmem>>, vector<128x128xbf16>
    %cst_152 = arith.constant dense<0.000000e+00> : vector<16x128xf32>
    %355 = tpu.matmul %353, %354, %cst_152 {dimension_numbers = #tpu.dot_dimension_numbers<[1], [0], [0], [1], [0, 0, 1, 1], [], []>} : vector<16x128xbf16>, vector<128x128xbf16>, vector<16x128xf32> -> vector<16x128xf32>
    %356 = arith.addf %350, %355 : vector<16x128xf32>
    %357 = vector.extract_strided_slice %349 {offsets = [0, 1, 0], sizes = [2, 8, 128], strides = [1, 1, 1]} : vector<2x10x128xf32> to vector<2x8x128xf32>
    %358 = vector.shape_cast %357 : vector<2x8x128xf32> to vector<16x128xf32>
    %359 = arith.truncf %358 : vector<16x128xf32> to vector<16x128xbf16>
    %c128_153 = arith.constant 128 : index
    %c0_154 = arith.constant 0 : index
    %360 = vector.load %arg3[%c128_153, %c0_154] : memref<384x128xbf16, #tpu.memory_space<vmem>>, vector<128x128xbf16>
    %cst_155 = arith.constant dense<0.000000e+00> : vector<16x128xf32>
    %361 = tpu.matmul %359, %360, %cst_155 {dimension_numbers = #tpu.dot_dimension_numbers<[1], [0], [0], [1], [0, 0, 1, 1], [], []>} : vector<16x128xbf16>, vector<128x128xbf16>, vector<16x128xf32> -> vector<16x128xf32>
    %362 = arith.addf %356, %361 : vector<16x128xf32>
    %363 = vector.extract_strided_slice %349 {offsets = [0, 2, 0], sizes = [2, 8, 128], strides = [1, 1, 1]} : vector<2x10x128xf32> to vector<2x8x128xf32>
    %364 = vector.shape_cast %363 : vector<2x8x128xf32> to vector<16x128xf32>
    %365 = arith.truncf %364 : vector<16x128xf32> to vector<16x128xbf16>
    %c256_156 = arith.constant 256 : index
    %c0_157 = arith.constant 0 : index
    %366 = vector.load %arg3[%c256_156, %c0_157] : memref<384x128xbf16, #tpu.memory_space<vmem>>, vector<128x128xbf16>
    %cst_158 = arith.constant dense<0.000000e+00> : vector<16x128xf32>
    %367 = tpu.matmul %365, %366, %cst_158 {dimension_numbers = #tpu.dot_dimension_numbers<[1], [0], [0], [1], [0, 0, 1, 1], [], []>} : vector<16x128xbf16>, vector<128x128xbf16>, vector<16x128xf32> -> vector<16x128xf32>
    %368 = arith.addf %362, %367 : vector<16x128xf32>
    %c2_159 = arith.constant 2 : index
    %c0_160 = arith.constant 0 : index
    %369 = vector.load %arg5[%c2_159, %c0_160] : memref<4x128xf32, #tpu.memory_space<vmem>>, vector<1x128xf32>
    %370 = vector.broadcast %369 : vector<1x128xf32> to vector<16x128xf32>
    %371 = arith.addf %368, %370 : vector<16x128xf32>
    %cst_161 = arith.constant 0.000000e+00 : f32
    %372 = vector.broadcast %cst_161 : f32 to vector<16x128xf32>
    %373 = arith.maximumf %371, %372 : vector<16x128xf32>
    %cst_162 = arith.constant dense<0.000000e+00> : vector<128xf32>
    %374 = vector.multi_reduction <add>, %373, %cst_162 [0] : vector<16x128xf32> to vector<128xf32>
    %375 = vector.shape_cast %374 : vector<128xf32> to vector<1x128xf32>
    %376 = arith.mulf %373, %373 : vector<16x128xf32>
    %cst_163 = arith.constant dense<0.000000e+00> : vector<128xf32>
    %377 = vector.multi_reduction <add>, %376, %cst_163 [0] : vector<16x128xf32> to vector<128xf32>
    %378 = vector.shape_cast %377 : vector<128xf32> to vector<1x128xf32>
    %379 = tpu.concatenate %375, %378 in 0 : vector<1x128xf32>, vector<1x128xf32> -> vector<2x128xf32>
    %c0_164 = arith.constant 0 : index
    %c0_165 = arith.constant 0 : index
    %380 = vector.load %arg8[%c0_164, %c0_165] : memref<128x128xf32, #tpu.memory_space<vmem>>, vector<128x128xf32>
    %cst_166 = arith.constant dense<0.000000e+00> : vector<2x128xf32>
    %381 = tpu.matmul %379, %380, %cst_166 {dimension_numbers = #tpu.dot_dimension_numbers<[1], [0], [0], [1], [0, 0, 1, 1], [], []>, precision = #tpu.contract_precision<fp32>} : vector<2x128xf32>, vector<128x128xf32>, vector<2x128xf32> -> vector<2x128xf32>
    %cst_167 = arith.constant 3.906250e-03 : f32
    %382 = vector.broadcast %cst_167 : f32 to vector<2x128xf32>
    %383 = arith.mulf %381, %382 : vector<2x128xf32>
    %384 = vector.extract_strided_slice %383 {offsets = [0, 0], sizes = [1, 128], strides = [1, 1]} : vector<2x128xf32> to vector<1x128xf32>
    %385 = vector.extract_strided_slice %383 {offsets = [1, 0], sizes = [1, 128], strides = [1, 1]} : vector<2x128xf32> to vector<1x128xf32>
    %386 = arith.mulf %384, %384 : vector<1x128xf32>
    %387 = arith.subf %385, %386 : vector<1x128xf32>
    %cst_168 = arith.constant 0.000000e+00 : f32
    %388 = vector.broadcast %cst_168 : f32 to vector<1x128xf32>
    %389 = arith.maximumf %387, %388 : vector<1x128xf32>
    %390 = vector.broadcast %384 : vector<1x128xf32> to vector<16x128xf32>
    %391 = arith.subf %373, %390 : vector<16x128xf32>
    %cst_169 = arith.constant 8.000000e+00 : f32
    %392 = vector.broadcast %cst_169 : f32 to vector<1x128xf32>
    %393 = arith.addf %389, %392 : vector<1x128xf32>
    %394 = math.rsqrt %393 : vector<1x128xf32>
    %395 = vector.broadcast %394 : vector<1x128xf32> to vector<16x128xf32>
    %396 = arith.mulf %391, %395 : vector<16x128xf32>
    %c6 = arith.constant 6 : index
    %c0_170 = arith.constant 0 : index
    %397 = vector.load %arg6[%c6, %c0_170] : memref<8x128xf32, #tpu.memory_space<vmem>>, vector<1x128xf32>
    %398 = vector.broadcast %397 : vector<1x128xf32> to vector<16x128xf32>
    %399 = arith.mulf %396, %398 : vector<16x128xf32>
    %c6_171 = arith.constant 6 : index
    %c0_172 = arith.constant 0 : index
    %400 = vector.load %arg7[%c6_171, %c0_172] : memref<8x128xf32, #tpu.memory_space<vmem>>, vector<1x128xf32>
    %401 = vector.broadcast %400 : vector<1x128xf32> to vector<16x128xf32>
    %402 = arith.addf %399, %401 : vector<16x128xf32>
    %403 = vector.shape_cast %402 : vector<16x128xf32> to vector<2x8x128xf32>
    %cst_173 = arith.constant 0.000000e+00 : f32
    %404 = vector.broadcast %cst_173 : f32 to vector<2x1x128xf32>
    %405 = tpu.concatenate %404, %403, %404 in 1 : vector<2x1x128xf32>, vector<2x8x128xf32>, vector<2x1x128xf32> -> vector<2x10x128xf32>
    %cst_174 = arith.constant 0.000000e+00 : f32
    %406 = vector.broadcast %cst_174 : f32 to vector<8x128xf32>
    %407 = vector.extract_strided_slice %405 {offsets = [0, 0, 0], sizes = [2, 8, 128], strides = [1, 1, 1]} : vector<2x10x128xf32> to vector<2x8x128xf32>
    %408 = vector.shape_cast %407 : vector<2x8x128xf32> to vector<2x4x2x128xf32>
    %409 = vector.extract_strided_slice %408 {offsets = [0, 0, 0, 0], sizes = [2, 4, 1, 128], strides = [1, 1, 1, 1]} : vector<2x4x2x128xf32> to vector<2x4x1x128xf32>
    %410 = vector.shape_cast %409 : vector<2x4x1x128xf32> to vector<2x4x128xf32>
    %411 = vector.shape_cast %410 : vector<2x4x128xf32> to vector<8x128xf32>
    %412 = arith.truncf %411 : vector<8x128xf32> to vector<8x128xbf16>
    %c0_175 = arith.constant 0 : index
    %c0_176 = arith.constant 0 : index
    %413 = vector.load %arg4[%c0_175, %c0_176] : memref<384x128xbf16, #tpu.memory_space<vmem>>, vector<128x128xbf16>
    %cst_177 = arith.constant dense<0.000000e+00> : vector<8x128xf32>
    %414 = tpu.matmul %412, %413, %cst_177 {dimension_numbers = #tpu.dot_dimension_numbers<[1], [0], [0], [1], [0, 0, 1, 1], [], []>} : vector<8x128xbf16>, vector<128x128xbf16>, vector<8x128xf32> -> vector<8x128xf32>
    %415 = arith.addf %406, %414 : vector<8x128xf32>
    %416 = vector.extract_strided_slice %405 {offsets = [0, 1, 0], sizes = [2, 8, 128], strides = [1, 1, 1]} : vector<2x10x128xf32> to vector<2x8x128xf32>
    %417 = vector.shape_cast %416 : vector<2x8x128xf32> to vector<2x4x2x128xf32>
    %418 = vector.extract_strided_slice %417 {offsets = [0, 0, 0, 0], sizes = [2, 4, 1, 128], strides = [1, 1, 1, 1]} : vector<2x4x2x128xf32> to vector<2x4x1x128xf32>
    %419 = vector.shape_cast %418 : vector<2x4x1x128xf32> to vector<2x4x128xf32>
    %420 = vector.shape_cast %419 : vector<2x4x128xf32> to vector<8x128xf32>
    %421 = arith.truncf %420 : vector<8x128xf32> to vector<8x128xbf16>
    %c128_178 = arith.constant 128 : index
    %c0_179 = arith.constant 0 : index
    %422 = vector.load %arg4[%c128_178, %c0_179] : memref<384x128xbf16, #tpu.memory_space<vmem>>, vector<128x128xbf16>
    %cst_180 = arith.constant dense<0.000000e+00> : vector<8x128xf32>
    %423 = tpu.matmul %421, %422, %cst_180 {dimension_numbers = #tpu.dot_dimension_numbers<[1], [0], [0], [1], [0, 0, 1, 1], [], []>} : vector<8x128xbf16>, vector<128x128xbf16>, vector<8x128xf32> -> vector<8x128xf32>
    %424 = arith.addf %415, %423 : vector<8x128xf32>
    %425 = vector.extract_strided_slice %405 {offsets = [0, 2, 0], sizes = [2, 8, 128], strides = [1, 1, 1]} : vector<2x10x128xf32> to vector<2x8x128xf32>
    %426 = vector.shape_cast %425 : vector<2x8x128xf32> to vector<2x4x2x128xf32>
    %427 = vector.extract_strided_slice %426 {offsets = [0, 0, 0, 0], sizes = [2, 4, 1, 128], strides = [1, 1, 1, 1]} : vector<2x4x2x128xf32> to vector<2x4x1x128xf32>
    %428 = vector.shape_cast %427 : vector<2x4x1x128xf32> to vector<2x4x128xf32>
    %429 = vector.shape_cast %428 : vector<2x4x128xf32> to vector<8x128xf32>
    %430 = arith.truncf %429 : vector<8x128xf32> to vector<8x128xbf16>
    %c256_181 = arith.constant 256 : index
    %c0_182 = arith.constant 0 : index
    %431 = vector.load %arg4[%c256_181, %c0_182] : memref<384x128xbf16, #tpu.memory_space<vmem>>, vector<128x128xbf16>
    %cst_183 = arith.constant dense<0.000000e+00> : vector<8x128xf32>
    %432 = tpu.matmul %430, %431, %cst_183 {dimension_numbers = #tpu.dot_dimension_numbers<[1], [0], [0], [1], [0, 0, 1, 1], [], []>} : vector<8x128xbf16>, vector<128x128xbf16>, vector<8x128xf32> -> vector<8x128xf32>
    %433 = arith.addf %424, %432 : vector<8x128xf32>
    %c3_184 = arith.constant 3 : index
    %c0_185 = arith.constant 0 : index
    %434 = vector.load %arg5[%c3_184, %c0_185] : memref<4x128xf32, #tpu.memory_space<vmem>>, vector<1x128xf32>
    %435 = vector.broadcast %434 : vector<1x128xf32> to vector<8x128xf32>
    %436 = arith.addf %433, %435 : vector<8x128xf32>
    %cst_186 = arith.constant 0.000000e+00 : f32
    %437 = vector.broadcast %cst_186 : f32 to vector<8x128xf32>
    %438 = arith.maximumf %436, %437 : vector<8x128xf32>
    %cst_187 = arith.constant dense<0.000000e+00> : vector<128xf32>
    %439 = vector.multi_reduction <add>, %438, %cst_187 [0] : vector<8x128xf32> to vector<128xf32>
    %440 = vector.shape_cast %439 : vector<128xf32> to vector<1x128xf32>
    %441 = arith.mulf %438, %438 : vector<8x128xf32>
    %cst_188 = arith.constant dense<0.000000e+00> : vector<128xf32>
    %442 = vector.multi_reduction <add>, %441, %cst_188 [0] : vector<8x128xf32> to vector<128xf32>
    %443 = vector.shape_cast %442 : vector<128xf32> to vector<1x128xf32>
    %444 = tpu.concatenate %440, %443 in 0 : vector<1x128xf32>, vector<1x128xf32> -> vector<2x128xf32>
    %c0_189 = arith.constant 0 : index
    %c0_190 = arith.constant 0 : index
    %445 = vector.load %arg8[%c0_189, %c0_190] : memref<128x128xf32, #tpu.memory_space<vmem>>, vector<128x128xf32>
    %cst_191 = arith.constant dense<0.000000e+00> : vector<2x128xf32>
    %446 = tpu.matmul %444, %445, %cst_191 {dimension_numbers = #tpu.dot_dimension_numbers<[1], [0], [0], [1], [0, 0, 1, 1], [], []>, precision = #tpu.contract_precision<fp32>} : vector<2x128xf32>, vector<128x128xf32>, vector<2x128xf32> -> vector<2x128xf32>
    %cst_192 = arith.constant 7.812500e-03 : f32
    %447 = vector.broadcast %cst_192 : f32 to vector<2x128xf32>
    %448 = arith.mulf %446, %447 : vector<2x128xf32>
    %449 = vector.extract_strided_slice %448 {offsets = [0, 0], sizes = [1, 128], strides = [1, 1]} : vector<2x128xf32> to vector<1x128xf32>
    %450 = vector.extract_strided_slice %448 {offsets = [1, 0], sizes = [1, 128], strides = [1, 1]} : vector<2x128xf32> to vector<1x128xf32>
    %451 = arith.mulf %449, %449 : vector<1x128xf32>
    %452 = arith.subf %450, %451 : vector<1x128xf32>
    %cst_193 = arith.constant 0.000000e+00 : f32
    %453 = vector.broadcast %cst_193 : f32 to vector<1x128xf32>
    %454 = arith.maximumf %452, %453 : vector<1x128xf32>
    %455 = vector.broadcast %449 : vector<1x128xf32> to vector<8x128xf32>
    %456 = arith.subf %438, %455 : vector<8x128xf32>
    %cst_194 = arith.constant 9.99999974E-6 : f32
    %457 = vector.broadcast %cst_194 : f32 to vector<1x128xf32>
    %458 = arith.addf %454, %457 : vector<1x128xf32>
    %459 = math.rsqrt %458 : vector<1x128xf32>
    %460 = vector.broadcast %459 : vector<1x128xf32> to vector<8x128xf32>
    %461 = arith.mulf %456, %460 : vector<8x128xf32>
    %c7 = arith.constant 7 : index
    %c0_195 = arith.constant 0 : index
    %462 = vector.load %arg6[%c7, %c0_195] : memref<8x128xf32, #tpu.memory_space<vmem>>, vector<1x128xf32>
    %463 = vector.broadcast %462 : vector<1x128xf32> to vector<8x128xf32>
    %464 = arith.mulf %461, %463 : vector<8x128xf32>
    %c7_196 = arith.constant 7 : index
    %c0_197 = arith.constant 0 : index
    %465 = vector.load %arg7[%c7_196, %c0_197] : memref<8x128xf32, #tpu.memory_space<vmem>>, vector<1x128xf32>
    %466 = vector.broadcast %465 : vector<1x128xf32> to vector<8x128xf32>
    %467 = arith.addf %464, %466 : vector<8x128xf32>
    %c0_198 = arith.constant 0 : index
    %c0_199 = arith.constant 0 : index
    %468 = vector.load %arg9[%c0_198, %c0_199] : memref<8x128xf32, #tpu.memory_space<vmem>>, vector<8x128xf32>
    tpu.vector_store %arg9[%c0_198, %c0_199], %467 {strides = array<i32>} : memref<8x128xf32, #tpu.memory_space<vmem>>, vector<8x128xf32>,
    return
  }
}

</mosaic_0001>

<llo_original>
// kernel: cnn_forward.1
$region0: #{cnn_forward.1}
  #allocation0 [shape = 'u32[]', space=smem, size = 0x4, offset = 0x4, fixed_abs, tag = 'smem constant byte address 0x4 - core index']
  #allocation1 [shape = 'u32[144,128]{1,0:T(1,128)}', space=vmem, size = 0x12000, scoped, tag = 'internal scratch']
  %s0 = inlined_call_operand.hbm [shape: f32[2,16,16], index: 0, kind: input, shape index: {}]
  %s1 = inlined_call_operand.hbm [shape: bf16[48,128], index: 1, kind: input, shape index: {}]
  %s2 = inlined_call_operand.hbm [shape: bf16[384,128], index: 2, kind: input, shape index: {}]
  %s3 = inlined_call_operand.hbm [shape: bf16[384,128], index: 3, kind: input, shape index: {}]
  %s4 = inlined_call_operand.hbm [shape: bf16[384,128], index: 4, kind: input, shape index: {}]
  %s5 = inlined_call_operand.vmem [shape: f32[4,128], index: 5, kind: input, shape index: {}]
  %s6 = inlined_call_operand.vmem [shape: f32[8,128], index: 6, kind: input, shape index: {}]
  %s7 = inlined_call_operand.hbm [shape: f32[8,128], index: 7, kind: input, shape index: {}]
  %s8 = inlined_call_operand.hbm [shape: f32[128,128], index: 8, kind: input, shape index: {}]
  %s9 = inlined_call_operand.vmem [shape: f32[8,128], index: 9, kind: output, shape index: {}]
  %s10 = sld [smem:[#allocation0]]
  $region74: #{cnn_forward.1} parent=0
    _
  %s12 = ssub.s32 1, %s10
  %s13 = scalar_select 0, %s12, %s10
  $region1: #{cnn_forward.1} parent=0
    #allocation2 [shape = 'u8[16384]{0}', space=vmem, size = 0x4000, scoped, tag = 'input window, operand 0, single buffered']
    #allocation3 [shape = 's32[1]{0}', space=sflag, size = 0x4, scoped, tag = 'scoped memory for cnn_forward.1']
    #allocation4 [shape = 'u8[12288]{0}', space=vmem, size = 0x3000, scoped, tag = 'input window, operand 1, single buffered']
    #allocation5 [shape = 's32[1]{0}', space=sflag, size = 0x4, scoped, tag = 'scoped memory for cnn_forward.1']
    #allocation6 [shape = 'u8[98304]{0}', space=vmem, size = 0x18000, scoped, tag = 'input window, operand 2, single buffered']
    #allocation7 [shape = 'u8[98304]{0}', space=vmem, size = 0x18000, scoped, tag = 'input window, operand 3, single buffered']
    #allocation8 [shape = 's32[1]{0}', space=sflag, size = 0x4, scoped, tag = 'scoped memory for cnn_forward.1']
    #allocation9 [shape = 'u8[98304]{0}', space=vmem, size = 0x18000, scoped, tag = 'input window, operand 4, single buffered']
    #allocation10 [shape = 'u8[4096]{0}', space=vmem, size = 0x1000, scoped, tag = 'input window, operand 7, single buffered']
    #allocation11 [shape = 's32[1]{0}', space=sflag, size = 0x4, scoped, tag = 'scoped memory for cnn_forward.1']
    #allocation12 [shape = 'u8[65536]{0}', space=vmem, size = 0x10000, scoped, tag = 'input window, operand 8, single buffered']
    %14 = vsyncpa [#allocation3], 0
    %15 = vsyncpa [#allocation5], 0
    %16 = vsyncpa [#allocation8], 0
    %17 = vsyncpa [#allocation11], 0
    // Predicated region
    $region2: #{cnn_forward.1} parent=1 // pred_check
      _
    $region3: #{cnn_forward.1} parent=1 // pred_check_branch
      %19 = sbr.rel (0) target = $region5
    $region4: #{cnn_forward.1} parent=1 // pred_region
      %s21 = ssub.s32 512, 512
      %22 = vsyncadd [#allocation3], %s21
      %s23 = sshll.u32 [#allocation2], 4
      %s24 = int_to_ptr.vmem [resolvable:$true] %s23
      %29 = dma.hbm_to_vmem [thread:$0]  %s0, 512, %s24, [#allocation3], 128, 128, 8
    $region5: #{cnn_forward.1} parent=1 // pred_fallthru
      _
    // Predicated region
    $region6: #{cnn_forward.1} parent=1 // pred_check
      _
    $region7: #{cnn_forward.1} parent=1 // pred_check_branch
      %31 = sbr.rel (0) target = $region9
    $region8: #{cnn_forward.1} parent=1 // pred_region
      %s33 = ssub.s32 384, 384
      %34 = vsyncadd [#allocation5], %s33
      %s35 = sshll.u32 [#allocation4], 4
      %s36 = int_to_ptr.vmem [resolvable:$true] %s35
      %41 = dma.hbm_to_vmem [thread:$0]  %s1, 384, %s36, [#allocation5], 64, 64, 4
    $region9: #{cnn_forward.1} parent=1 // pred_fallthru
      _
    // Predicated region
    $region10: #{cnn_forward.1} parent=1 // pred_check
      _
    $region11: #{cnn_forward.1} parent=1 // pred_check_branch
      %43 = sbr.rel (0) target = $region13
    $region12: #{cnn_forward.1} parent=1 // pred_region
      %s45 = ssub.s32 3072, 3072
      %46 = vsyncadd [#allocation5], %s45
      %s47 = sshll.u32 [#allocation6], 4
      %s48 = int_to_ptr.vmem [resolvable:$true] %s47
      %53 = dma.hbm_to_vmem [thread:$0]  %s2, 3072, %s48, [#allocation5], 64, 64, 4
    $region13: #{cnn_forward.1} parent=1 // pred_fallthru
      _
    // Predicated region
    $region14: #{cnn_forward.1} parent=1 // pred_check
      _
    $region15: #{cnn_forward.1} parent=1 // pred_check_branch
      %55 = sbr.rel (0) target = $region17
    $region16: #{cnn_forward.1} parent=1 // pred_region
      %s57 = ssub.s32 3072, 3072
      %58 = vsyncadd [#allocation8], %s57
      %s59 = sshll.u32 [#allocation7], 4
      %s60 = int_to_ptr.vmem [resolvable:$true] %s59
      %65 = dma.hbm_to_vmem [thread:$0]  %s3, 3072, %s60, [#allocation8], 64, 64, 4
    $region17: #{cnn_forward.1} parent=1 // pred_fallthru
      _
    // Predicated region
    $region18: #{cnn_forward.1} parent=1 // pred_check
      _
    $region19: #{cnn_forward.1} parent=1 // pred_check_branch
      %67 = sbr.rel (0) target = $region21
    $region20: #{cnn_forward.1} parent=1 // pred_region
      %s69 = ssub.s32 3072, 3072
      %70 = vsyncadd [#allocation8], %s69
      %s71 = sshll.u32 [#allocation9], 4
      %s72 = int_to_ptr.vmem [resolvable:$true] %s71
      %77 = dma.hbm_to_vmem [thread:$0]  %s4, 3072, %s72, [#allocation8], 64, 64, 4
    $region21: #{cnn_forward.1} parent=1 // pred_fallthru
      _
    // Predicated region
    $region22: #{cnn_forward.1} parent=1 // pred_check
      _
    $region23: #{cnn_forward.1} parent=1 // pred_check_branch
      %79 = sbr.rel (0) target = $region25
    $region24: #{cnn_forward.1} parent=1 // pred_region
      _
    $region25: #{cnn_forward.1} parent=1 // pred_fallthru
      _
    // Predicated region
    $region26: #{cnn_forward.1} parent=1 // pred_check
      _
    $region27: #{cnn_forward.1} parent=1 // pred_check_branch
      %81 = sbr.rel (0) target = $region29
    $region28: #{cnn_forward.1} parent=1 // pred_region
      _
    $region29: #{cnn_forward.1} parent=1 // pred_fallthru
      _
    // Predicated region
    $region30: #{cnn_forward.1} parent=1 // pred_check
      _
    $region31: #{cnn_forward.1} parent=1 // pred_check_branch
      %83 = sbr.rel (0) target = $region33
    $region32: #{cnn_forward.1} parent=1 // pred_region
      %s85 = ssub.s32 128, 128
      %86 = vsyncadd [#allocation11], %s85
      %s88 = sshll.u32 [#allocation10], 4
      %s89 = int_to_ptr.vmem [resolvable:$true] %s88
      %91 = dma.hbm_to_vmem [thread:$0]  %s7, 128, %s89, [#allocation11]
    $region33: #{cnn_forward.1} parent=1 // pred_fallthru
      _
    // Predicated region
    $region34: #{cnn_forward.1} parent=1 // pred_check
      _
    $region35: #{cnn_forward.1} parent=1 // pred_check_branch
      %93 = sbr.rel (0) target = $region37
    $region36: #{cnn_forward.1} parent=1 // pred_region
      %s95 = ssub.s32 2048, 2048
      %96 = vsyncadd [#allocation11], %s95
      %s97 = sshll.u32 [#allocation12], 4
      %s98 = int_to_ptr.vmem [resolvable:$true] %s97
      %103 = dma.hbm_to_vmem [thread:$0]  %s8, 2048, %s98, [#allocation11], 128, 128, 8
    $region37: #{cnn_forward.1} parent=1 // pred_fallthru
      _
    // Predicated region
    $region38: #{cnn_forward.1} parent=1 // pred_check
      _
    $region39: #{cnn_forward.1} parent=1 // pred_check_branch
      %105 = sbr.rel (0) target = $region41
    $region40: #{cnn_forward.1} parent=1 // pred_region
      %106 = dma.done [#allocation3], 512
    $region41: #{cnn_forward.1} parent=1 // pred_fallthru
      _
    // Predicated region
    $region42: #{cnn_forward.1} parent=1 // pred_check
      _
    $region43: #{cnn_forward.1} parent=1 // pred_check_branch
      %108 = sbr.rel (0) target = $region45
    $region44: #{cnn_forward.1} parent=1 // pred_region
      %109 = dma.done [#allocation5], 384
    $region45: #{cnn_forward.1} parent=1 // pred_fallthru
      _
    // Predicated region
    $region46: #{cnn_forward.1} parent=1 // pred_check
      _
    $region47: #{cnn_forward.1} parent=1 // pred_check_branch
      %111 = sbr.rel (0) target = $region49
    $region48: #{cnn_forward.1} parent=1 // pred_region
      %112 = dma.done [#allocation5], 3072
    $region49: #{cnn_forward.1} parent=1 // pred_fallthru
      _
    // Predicated region
    $region50: #{cnn_forward.1} parent=1 // pred_check
      _
    $region51: #{cnn_forward.1} parent=1 // pred_check_branch
      %114 = sbr.rel (0) target = $region53
    $region52: #{cnn_forward.1} parent=1 // pred_region
      %115 = dma.done [#allocation8], 3072
    $region53: #{cnn_forward.1} parent=1 // pred_fallthru
      _
    // Predicated region
    $region54: #{cnn_forward.1} parent=1 // pred_check
      _
    $region55: #{cnn_forward.1} parent=1 // pred_check_branch
      %117 = sbr.rel (0) target = $region57
    $region56: #{cnn_forward.1} parent=1 // pred_region
      %118 = dma.done [#allocation8], 3072
    $region57: #{cnn_forward.1} parent=1 // pred_fallthru
      _
    // Predicated region
    $region58: #{cnn_forward.1} parent=1 // pred_check
      _
    $region59: #{cnn_forward.1} parent=1 // pred_check_branch
      %120 = sbr.rel (0) target = $region61
    $region60: #{cnn_forward.1} parent=1 // pred_region
      %121 = dma.done [#allocation11], 128
    $region61: #{cnn_forward.1} parent=1 // pred_fallthru
      _
    // Predicated region
    $region62: #{cnn_forward.1} parent=1 // pred_check
      _
    $region63: #{cnn_forward.1} parent=1 // pred_check_branch
      %123 = sbr.rel (0) target = $region65
    $region64: #{cnn_forward.1} parent=1 // pred_region
      %124 = dma.done [#allocation11], 2048
    $region65: #{cnn_forward.1} parent=1 // pred_fallthru
      _
    %v126 = vld [vmem:[#allocation2] sm:$0xff]
    %v127 = vld [vmem:[#allocation2 + $0x8] sm:$0xff]
    %v128 = vld [vmem:[#allocation2 + $0x10] sm:$0xff]
    %v129 = vld [vmem:[#allocation2 + $0x18] sm:$0xff]
    %vm134 = vcmask 1040384
    %v135 = vrot.slane %v126, 7
    %v136 = vrot.slane %v127, 7
    %v137 = vsel %vm134, %v135, %v136
    %v138 = vrot.slane %v128, 7
    %v139 = vrot.slane %v129, 7
    %v140 = vsel %vm134, %v138, %v139
    %v145 = vsel %vm134, 0.0, %v135
    %v146 = vsel %vm134, 0.0, %v138
    %v147 = vsel %vm134, %v136, 0.0
    %v148 = vsel %vm134, %v139, 0.0
    %v151 = vcombine.high %v145, %v145
    %v153 = vunpack.c.l.s4 1983009808
    %v154 = vunpack.c.0.s8 %v153
    %v155 = vlaneseq
    %v156 = vshrl.u32 %v155, 7
    %v157 = vsub.s32 %v154, %v156
    %v158 = vrot.slane %v145, %v157
    %v160 = vunpack.c.l.s4 1983009808
    %v161 = vunpack.c.0.s8 %v160
    %v162 = vlaneseq
    %v163 = vshrl.u32 %v162, 7
    %v164 = vsub.s32 %v161, %v163
    %v165 = vrot.slane %v151, %v164
    %v166 = vcombine.high %v158, %v158
    %v167 = vcombine.high %v165, %v165
    %v168 = vcombine.high %v137, %v137
    %v170 = vunpack.c.l.s4 1983009808
    %v171 = vunpack.c.0.s8 %v170
    %v172 = vlaneseq
    %v173 = vshrl.u32 %v172, 7
    %v174 = vsub.s32 %v171, %v173
    %v175 = vrot.slane %v137, %v174
    %v177 = vunpack.c.l.s4 1983009808
    %v178 = vunpack.c.0.s8 %v177
    %v179 = vlaneseq
    %v180 = vshrl.u32 %v179, 7
    %v181 = vsub.s32 %v178, %v180
    %v182 = vrot.slane %v168, %v181
    %v183 = vcombine.high %v175, %v175
    %v184 = vcombine.high %v182, %v182
    %v185 = vcombine.high %v146, %v146
    %v187 = vunpack.c.l.s4 1983009808
    %v188 = vunpack.c.0.s8 %v187
    %v189 = vlaneseq
    %v190 = vshrl.u32 %v189, 7
    %v191 = vsub.s32 %v188, %v190
    %v192 = vrot.slane %v146, %v191
    %v194 = vunpack.c.l.s4 1983009808
    %v195 = vunpack.c.0.s8 %v194
    %v196 = vlaneseq
    %v197 = vshrl.u32 %v196, 7
    %v198 = vsub.s32 %v195, %v197
    %v199 = vrot.slane %v185, %v198
    %v200 = vcombine.high %v192, %v192
    %v201 = vcombine.high %v199, %v199
    %v202 = vcombine.high %v140, %v140
    %v204 = vunpack.c.l.s4 1983009808
    %v205 = vunpack.c.0.s8 %v204
    %v206 = vlaneseq
    %v207 = vshrl.u32 %v206, 7
    %v208 = vsub.s32 %v205, %v207
    %v209 = vrot.slane %v140, %v208
    %v211 = vunpack.c.l.s4 1983009808
    %v212 = vunpack.c.0.s8 %v211
    %v213 = vlaneseq
    %v214 = vshrl.u32 %v213, 7
    %v215 = vsub.s32 %v212, %v214
    %v216 = vrot.slane %v202, %v215
    %v217 = vcombine.high %v209, %v209
    %v218 = vcombine.high %v216, %v216
    %v235 = vpack.c.bf16 %v158, %v158
    %v236 = vpack.c.bf16 %v166, %v166
    %v237 = vpack.c.bf16 %v165, %v165
    %v238 = vpack.c.bf16 %v167, %v167
    %v239 = vpack.c.bf16 %v175, %v175
    %v240 = vpack.c.bf16 %v183, %v183
    %v241 = vpack.c.bf16 %v182, %v182
    %v242 = vpack.c.bf16 %v184, %v184
    %v243 = vpack.c.bf16 %v192, %v192
    %v244 = vpack.c.bf16 %v200, %v200
    %v245 = vpack.c.bf16 %v199, %v199
    %v246 = vpack.c.bf16 %v201, %v201
    %v247 = vpack.c.bf16 %v209, %v209
    %v248 = vpack.c.bf16 %v217, %v217
    %v249 = vpack.c.bf16 %v216, %v216
    %v250 = vpack.c.bf16 %v218, %v218
    %v251 = vld [vmem:[#allocation4] sm:$0xf]
    %v252 = vld [vmem:[#allocation4 + $0x4] sm:$0xf]
    %v256 = vunpack.c.l.s4 1983009808
    %v257 = vunpack.c.0.s8 %v256
    %v258 = vlaneseq
    %v259 = vshrl.u32 %v258, 7
    %v260 = vsub.s32 %v257, %v259
    %v261 = vrot.slane %v147, %v260
    %v263 = vunpack.c.l.s4 1983009808
    %v264 = vunpack.c.0.s8 %v263
    %v265 = vlaneseq
    %v266 = vshrl.u32 %v265, 7
    %v267 = vsub.s32 %v264, %v266
    %v268 = vrot.slane %v148, %v267
    %vm269 = vcmask 1042434
    %vm270 = vmor %vm134, %vm269
    %vm271 = vcmask 1044484
    %vm272 = vmor %vm270, %vm271
    %vm273 = vcmask 1046534
    %vm274 = vmor %vm272, %vm273
    %v275 = vrot.slane %v158, 7
    %v276 = vrot.slane %v275, 2
    %v277 = vrot.slane %v166, 7
    %v278 = vsel %vm274, %v276, %v277
    %v279 = vrot.slane %v277, 2
    %v280 = vrot.slane %v165, 7
    %v281 = vsel %vm274, %v279, %v280
    %v282 = vrot.slane %v280, 2
    %v283 = vrot.slane %v167, 7
    %v284 = vsel %vm274, %v282, %v283
    %v285 = vrot.slane %v283, 2
    %v286 = vrot.slane %v175, 7
    %v287 = vsel %vm274, %v285, %v286
    %v288 = vrot.slane %v286, 2
    %v289 = vrot.slane %v183, 7
    %v290 = vsel %vm274, %v288, %v289
    %v291 = vrot.slane %v289, 2
    %v292 = vrot.slane %v182, 7
    %v293 = vsel %vm274, %v291, %v292
    %v294 = vrot.slane %v292, 2
    %v295 = vrot.slane %v184, 7
    %v296 = vsel %vm274, %v294, %v295
    %v297 = vrot.slane %v295, 2
    %v298 = vrot.slane %v261, 7
    %v299 = vsel %vm274, %v297, %v298
    %v300 = vrot.slane %v192, 7
    %v301 = vrot.slane %v300, 2
    %v302 = vrot.slane %v200, 7
    %v303 = vsel %vm274, %v301, %v302
    %v304 = vrot.slane %v302, 2
    %v305 = vrot.slane %v199, 7
    %v306 = vsel %vm274, %v304, %v305
    %v307 = vrot.slane %v305, 2
    %v308 = vrot.slane %v201, 7
    %v309 = vsel %vm274, %v307, %v308
    %v310 = vrot.slane %v308, 2
    %v311 = vrot.slane %v209, 7
    %v312 = vsel %vm274, %v310, %v311
    %v313 = vrot.slane %v311, 2
    %v314 = vrot.slane %v217, 7
    %v315 = vsel %vm274, %v313, %v314
    %v316 = vrot.slane %v314, 2
    %v317 = vrot.slane %v216, 7
    %v318 = vsel %vm274, %v316, %v317
    %v319 = vrot.slane %v317, 2
    %v320 = vrot.slane %v218, 7
    %v321 = vsel %vm274, %v319, %v320
    %v322 = vrot.slane %v320, 2
    %v323 = vrot.slane %v268, 7
    %v324 = vsel %vm274, %v322, %v323
    %v341 = vpack.c.bf16 %v278, %v278
    %v342 = vpack.c.bf16 %v281, %v281
    %v343 = vpack.c.bf16 %v284, %v284
    %v344 = vpack.c.bf16 %v287, %v287
    %v345 = vpack.c.bf16 %v290, %v290
    %v346 = vpack.c.bf16 %v293, %v293
    %v347 = vpack.c.bf16 %v296, %v296
    %v348 = vpack.c.bf16 %v299, %v299
    %v349 = vpack.c.bf16 %v303, %v303
    %v350 = vpack.c.bf16 %v306, %v306
    %v351 = vpack.c.bf16 %v309, %v309
    %v352 = vpack.c.bf16 %v312, %v312
    %v353 = vpack.c.bf16 %v315, %v315
    %v354 = vpack.c.bf16 %v318, %v318
    %v355 = vpack.c.bf16 %v321, %v321
    %v356 = vpack.c.bf16 %v324, %v324
    %v357 = vld [vmem:[#allocation4 + $0x8] sm:$0xf]
    %v358 = vld [vmem:[#allocation4 + $0xc] sm:$0xf]
    %v375 = vunpack.c.l.b16 %v341
    %v376 = vunpack.c.l.b16 %v342
    %v377 = vunpack.c.l.b16 %v343
    %v378 = vunpack.c.l.b16 %v344
    %v379 = vunpack.c.l.b16 %v345
    %v380 = vunpack.c.l.b16 %v346
    %v381 = vunpack.c.l.b16 %v347
    %v382 = vunpack.c.l.b16 %v348
    %v383 = vunpack.c.l.b16 %v349
    %v384 = vunpack.c.l.b16 %v350
    %v385 = vunpack.c.l.b16 %v351
    %v386 = vunpack.c.l.b16 %v352
    %v387 = vunpack.c.l.b16 %v353
    %v388 = vunpack.c.l.b16 %v354
    %v389 = vunpack.c.l.b16 %v355
    %v390 = vunpack.c.l.b16 %v356
    %v391 = vrot.slane %v376, 7
    %vm392 = vcmask 1041409
    %v393 = vsel %vm392, %v391, %v375
    %v394 = vrot.slane %v377, 6
    %v395 = vsel %vm269, %v394, %v393
    %v396 = vrot.slane %v378, 5
    %vm397 = vcmask 1043459
    %v398 = vsel %vm397, %v396, %v395
    %v399 = vrot.slane %v379, 4
    %v400 = vsel %vm271, %v399, %v398
    %v401 = vrot.slane %v380, 3
    %vm402 = vcmask 1045509
    %v403 = vsel %vm402, %v401, %v400
    %v404 = vrot.slane %v381, 2
    %v405 = vsel %vm273, %v404, %v403
    %v406 = vrot.slane %v382, 1
    %vm407 = vcmask 1047559
    %v408 = vsel %vm407, %v406, %v405
    %v409 = vrot.slane %v384, 7
    %v410 = vsel %vm392, %v409, %v383
    %v411 = vrot.slane %v385, 6
    %v412 = vsel %vm269, %v411, %v410
    %v413 = vrot.slane %v386, 5
    %v414 = vsel %vm397, %v413, %v412
    %v415 = vrot.slane %v387, 4
    %v416 = vsel %vm271, %v415, %v414
    %v417 = vrot.slane %v388, 3
    %v418 = vsel %vm402, %v417, %v416
    %v419 = vrot.slane %v389, 2
    %v420 = vsel %vm273, %v419, %v418
    %v421 = vrot.slane %v390, 1
    %v422 = vsel %vm407, %v421, %v420
    %v423 = vpack.c.b16 %v422, %v408
    %v426 = vunpack.c.l.b16 %v357
    %v427 = vunpack.c.l.b16 %v358
    %v428 = vpack.c.b16 %v427, %v426
    %vm430 = vcmask 130048
    %v432 = vsel %vm430, %v423, 0
    %434 = vmatprep.subr.bf16.mxu0 0
    %435 = vmatpush1.bf16.msra.mxu0 %v428
    %436 = vmatprep.subr.bf16.mxu0 0
    %437 = vmatpush1.bf16.msra.mxu0 0
    %438 = vmatprep.subr.bf16.mxu0 0
    %439 = vmatpush1.bf16.msra.mxu0 0
    %440 = vmatprep.subr.bf16.mxu0 0
    %441 = vmatpush1.bf16.msra.mxu0 0
    %442 = vmatprep.subr.bf16.mxu0 0
    %443 = vmatpush1.bf16.msra.mxu0 0
    %444 = vmatprep.subr.bf16.mxu0 0
    %445 = vmatpush1.bf16.msra.mxu0 0
    %446 = vmatprep.subr.bf16.mxu0 0
    %447 = vmatpush1.bf16.msra.mxu0 0
    %448 = vmatprep.subr.bf16.mxu0 0
    %449 = vmatpush1.bf16.msra.mxu0 0
    %450 = vmatprep.subr.bf16.mxu0 0
    %451 = vmatpush1.bf16.msra.mxu0 0
    %452 = vmatprep.subr.bf16.mxu0 0
    %453 = vmatpush1.bf16.msra.mxu0 0
    %454 = vmatprep.subr.bf16.mxu0 0
    %455 = vmatpush1.bf16.msra.mxu0 0
    %456 = vmatprep.subr.bf16.mxu0 0
    %457 = vmatpush1.bf16.msra.mxu0 0
    %458 = vmatprep.subr.bf16.mxu0 0
    %459 = vmatpush1.bf16.msra.mxu0 0
    %460 = vmatprep.subr.bf16.mxu0 0
    %461 = vmatpush1.bf16.msra.mxu0 0
    %462 = vmatprep.subr.bf16.mxu0 0
    %463 = vmatpush1.bf16.msra.mxu0 0
    %464 = vmatprep.subr.bf16.mxu0 0
    %465 = vmatpush1.bf16.msra.mxu0 0
    %466 = vmatprep.mubr.bf16.mxu0 0
    %467 = vmatmul.mubr.bf16.gmra.mrb[0].mxu0 %v432
    %v468 = vpop.f32.mrb[0].mxu0
    %v469 = vadd.f32 0.0, %v468
    %v470 = vpop.f32.mrb[0].mxu0
    %v471 = vpop.f32.mrb[0].mxu0
    %v472 = vadd.f32 0.0, %v471
    %v473 = vpop.f32.mrb[0].mxu0
    %474 = vdwg.mxu0
    %v491 = vunpack.c.l.b16 %v235
    %v492 = vunpack.c.l.b16 %v236
    %v493 = vunpack.c.l.b16 %v237
    %v494 = vunpack.c.l.b16 %v238
    %v495 = vunpack.c.l.b16 %v239
    %v496 = vunpack.c.l.b16 %v240
    %v497 = vunpack.c.l.b16 %v241
    %v498 = vunpack.c.l.b16 %v242
    %v499 = vunpack.c.l.b16 %v243
    %v500 = vunpack.c.l.b16 %v244
    %v501 = vunpack.c.l.b16 %v245
    %v502 = vunpack.c.l.b16 %v246
    %v503 = vunpack.c.l.b16 %v247
    %v504 = vunpack.c.l.b16 %v248
    %v505 = vunpack.c.l.b16 %v249
    %v506 = vunpack.c.l.b16 %v250
    %v507 = vrot.slane %v492, 7
    %v508 = vsel %vm392, %v507, %v491
    %v509 = vrot.slane %v493, 6
    %v510 = vsel %vm269, %v509, %v508
    %v511 = vrot.slane %v494, 5
    %v512 = vsel %vm397, %v511, %v510
    %v513 = vrot.slane %v495, 4
    %v514 = vsel %vm271, %v513, %v512
    %v515 = vrot.slane %v496, 3
    %v516 = vsel %vm402, %v515, %v514
    %v517 = vrot.slane %v497, 2
    %v518 = vsel %vm273, %v517, %v516
    %v519 = vrot.slane %v498, 1
    %v520 = vsel %vm407, %v519, %v518
    %v521 = vrot.slane %v500, 7
    %v522 = vsel %vm392, %v521, %v499
    %v523 = vrot.slane %v501, 6
    %v524 = vsel %vm269, %v523, %v522
    %v525 = vrot.slane %v502, 5
    %v526 = vsel %vm397, %v525, %v524
    %v527 = vrot.slane %v503, 4
    %v528 = vsel %vm271, %v527, %v526
    %v529 = vrot.slane %v504, 3
    %v530 = vsel %vm402, %v529, %v528
    %v531 = vrot.slane %v505, 2
    %v532 = vsel %vm273, %v531, %v530
    %v533 = vrot.slane %v506, 1
    %v534 = vsel %vm407, %v533, %v532
    %v535 = vpack.c.b16 %v534, %v520
    %v538 = vunpack.c.l.b16 %v251
    %v539 = vunpack.c.l.b16 %v252
    %v540 = vpack.c.b16 %v539, %v538
    %v543 = vsel %vm430, %v535, 0
    %545 = vmatprep.subr.bf16.mxu0 0
    %546 = vmatpush1.bf16.msra.mxu0 %v540
    %547 = vmatprep.subr.bf16.mxu0 0
    %548 = vmatpush1.bf16.msra.mxu0 0
    %549 = vmatprep.subr.bf16.mxu0 0
    %550 = vmatpush1.bf16.msra.mxu0 0
    %551 = vmatprep.subr.bf16.mxu0 0
    %552 = vmatpush1.bf16.msra.mxu0 0
    %553 = vmatprep.subr.bf16.mxu0 0
    %554 = vmatpush1.bf16.msra.mxu0 0
    %555 = vmatprep.subr.bf16.mxu0 0
    %556 = vmatpush1.bf16.msra.mxu0 0
    %557 = vmatprep.subr.bf16.mxu0 0
    %558 = vmatpush1.bf16.msra.mxu0 0
    %559 = vmatprep.subr.bf16.mxu0 0
    %560 = vmatpush1.bf16.msra.mxu0 0
    %561 = vmatprep.subr.bf16.mxu0 0
    %562 = vmatpush1.bf16.msra.mxu0 0
    %563 = vmatprep.subr.bf16.mxu0 0
    %564 = vmatpush1.bf16.msra.mxu0 0
    %565 = vmatprep.subr.bf16.mxu0 0
    %566 = vmatpush1.bf16.msra.mxu0 0
    %567 = vmatprep.subr.bf16.mxu0 0
    %568 = vmatpush1.bf16.msra.mxu0 0
    %569 = vmatprep.subr.bf16.mxu0 0
    %570 = vmatpush1.bf16.msra.mxu0 0
    %571 = vmatprep.subr.bf16.mxu0 0
    %572 = vmatpush1.bf16.msra.mxu0 0
    %573 = vmatprep.subr.bf16.mxu0 0
    %574 = vmatpush1.bf16.msra.mxu0 0
    %575 = vmatprep.subr.bf16.mxu0 0
    %576 = vmatpush1.bf16.msra.mxu0 0
    %577 = vmatprep.mubr.bf16.mxu0 0
    %578 = vmatmul.mubr.bf16.gmra.mrb[0].mxu0 %v543
    %v579 = vpop.f32.mrb[0].mxu0
    %v580 = vadd.f32 %v469, %v579
    %v581 = vpop.f32.mrb[0].mxu0
    %v582 = vpop.f32.mrb[0].mxu0
    %v583 = vadd.f32 %v472, %v582
    %v584 = vpop.f32.mrb[0].mxu0
    %585 = vdwg.mxu0
    %v588 = vpack.c.bf16 %v261, %v261
    %v589 = vpack.c.bf16 %v268, %v268
    %v590 = vld [vmem:[#allocation4 + $0x10] sm:$0xf]
    %v591 = vld [vmem:[#allocation4 + $0x14] sm:$0xf]
    %v594 = vunpack.c.l.b16 %v588
    %v595 = vunpack.c.l.b16 %v589
    %v596 = vrot.slane %v493, 7
    %v597 = vsel %vm392, %v596, %v492
    %v598 = vrot.slane %v494, 6
    %v599 = vsel %vm269, %v598, %v597
    %v600 = vrot.slane %v495, 5
    %v601 = vsel %vm397, %v600, %v599
    %v602 = vrot.slane %v496, 4
    %v603 = vsel %vm271, %v602, %v601
    %v604 = vrot.slane %v497, 3
    %v605 = vsel %vm402, %v604, %v603
    %v606 = vrot.slane %v498, 2
    %v607 = vsel %vm273, %v606, %v605
    %v608 = vrot.slane %v594, 1
    %v609 = vsel %vm407, %v608, %v607
    %v610 = vrot.slane %v501, 7
    %v611 = vsel %vm392, %v610, %v500
    %v612 = vrot.slane %v502, 6
    %v613 = vsel %vm269, %v612, %v611
    %v614 = vrot.slane %v503, 5
    %v615 = vsel %vm397, %v614, %v613
    %v616 = vrot.slane %v504, 4
    %v617 = vsel %vm271, %v616, %v615
    %v618 = vrot.slane %v505, 3
    %v619 = vsel %vm402, %v618, %v617
    %v620 = vrot.slane %v506, 2
    %v621 = vsel %vm273, %v620, %v619
    %v622 = vrot.slane %v595, 1
    %v623 = vsel %vm407, %v622, %v621
    %v624 = vpack.c.b16 %v623, %v609
    %v627 = vunpack.c.l.b16 %v590
    %v628 = vunpack.c.l.b16 %v591
    %v629 = vpack.c.b16 %v628, %v627
    %v632 = vsel %vm430, %v624, 0
    %634 = vmatprep.subr.bf16.mxu0 0
    %635 = vmatpush1.bf16.msra.mxu0 %v629
    %636 = vmatprep.subr.bf16.mxu0 0
    %637 = vmatpush1.bf16.msra.mxu0 0
    %638 = vmatprep.subr.bf16.mxu0 0
    %639 = vmatpush1.bf16.msra.mxu0 0
    %640 = vmatprep.subr.bf16.mxu0 0
    %641 = vmatpush1.bf16.msra.mxu0 0
    %642 = vmatprep.subr.bf16.mxu0 0
    %643 = vmatpush1.bf16.msra.mxu0 0
    %644 = vmatprep.subr.bf16.mxu0 0
    %645 = vmatpush1.bf16.msra.mxu0 0
    %646 = vmatprep.subr.bf16.mxu0 0
    %647 = vmatpush1.bf16.msra.mxu0 0
    %648 = vmatprep.subr.bf16.mxu0 0
    %649 = vmatpush1.bf16.msra.mxu0 0
    %650 = vmatprep.subr.bf16.mxu0 0
    %651 = vmatpush1.bf16.msra.mxu0 0
    %652 = vmatprep.subr.bf16.mxu0 0
    %653 = vmatpush1.bf16.msra.mxu0 0
    %654 = vmatprep.subr.bf16.mxu0 0
    %655 = vmatpush1.bf16.msra.mxu0 0
    %656 = vmatprep.subr.bf16.mxu0 0
    %657 = vmatpush1.bf16.msra.mxu0 0
    %658 = vmatprep.subr.bf16.mxu0 0
    %659 = vmatpush1.bf16.msra.mxu0 0
    %660 = vmatprep.subr.bf16.mxu0 0
    %661 = vmatpush1.bf16.msra.mxu0 0
    %662 = vmatprep.subr.bf16.mxu0 0
    %663 = vmatpush1.bf16.msra.mxu0 0
    %664 = vmatprep.subr.bf16.mxu0 0
    %665 = vmatpush1.bf16.msra.mxu0 0
    %666 = vmatprep.mubr.bf16.mxu0 0
    %667 = vmatmul.mubr.bf16.gmra.mrb[0].mxu0 %v632
    %v668 = vpop.f32.mrb[0].mxu0
    %v669 = vadd.f32 0.0, %v668
    %v670 = vpop.f32.mrb[0].mxu0
    %v671 = vpop.f32.mrb[0].mxu0
    %v672 = vadd.f32 0.0, %v671
    %v673 = vpop.f32.mrb[0].mxu0
    %674 = vdwg.mxu0
    %v675 = vadd.f32 %v580, %v669
    %v676 = vadd.f32 %v583, %v672
    %v677 = vld [vmem:[%s5] sm:$0x1]
    %v678 = vlaneseq
    %v679 = vshrl.u32 %v678, 7
    %v680 = vsub.s32 0, %v679
    %v681 = vrot.slane %v677, %v680
    %v682 = vadd.f32 %v675, %v681
    %v683 = vadd.f32 %v676, %v681
    %v684 = vadd.f32 %v682, %v683
    %v685 = vrot.slane %v684, 4
    %v686 = vadd.f32 %v684, %v685
    %v687 = vrot.slane %v686, 2
    %v688 = vadd.f32 %v686, %v687
    %v689 = vrot.slane %v688, 1
    %v690 = vadd.f32 %v688, %v689
    %v691 = vmul.f32 %v682, %v682
    %v692 = vmul.f32 %v683, %v683
    %v693 = vadd.f32 %v691, %v692
    %v694 = vrot.slane %v693, 4
    %v695 = vadd.f32 %v693, %v694
    %v696 = vrot.slane %v695, 2
    %v697 = vadd.f32 %v695, %v696
    %v698 = vrot.slane %v697, 1
    %v699 = vadd.f32 %v697, %v698
    %v700 = vsel %vm134, %v690, %v699
    %v701 = vld [vmem:[#allocation12] sm:$0xff]
    %v702 = vld [vmem:[#allocation12 + $0x8] sm:$0xff]
    %v703 = vld [vmem:[#allocation12 + $0x10] sm:$0xff]
    %v704 = vld [vmem:[#allocation12 + $0x18] sm:$0xff]
    %v705 = vld [vmem:[#allocation12 + $0x20] sm:$0xff]
    %v706 = vld [vmem:[#allocation12 + $0x28] sm:$0xff]
    %v707 = vld [vmem:[#allocation12 + $0x30] sm:$0xff]
    %v708 = vld [vmem:[#allocation12 + $0x38] sm:$0xff]
    %v709 = vld [vmem:[#allocation12 + $0x40] sm:$0xff]
    %v710 = vld [vmem:[#allocation12 + $0x48] sm:$0xff]
    %v711 = vld [vmem:[#allocation12 + $0x50] sm:$0xff]
    %v712 = vld [vmem:[#allocation12 + $0x58] sm:$0xff]
    %v713 = vld [vmem:[#allocation12 + $0x60] sm:$0xff]
    %v714 = vld [vmem:[#allocation12 + $0x68] sm:$0xff]
    %v715 = vld [vmem:[#allocation12 + $0x70] sm:$0xff]
    %v716 = vld [vmem:[#allocation12 + $0x78] sm:$0xff]
    %717 = vmatprep.subr.mxu0 0.0
    %v718 = vand.u32 %v701, 4294901760
    %719 = vmatpush1.msra.mxu0 %v718
    %720 = vmatprep.subr.mxu0 0.0
    %v721 = vand.u32 %v702, 4294901760
    %722 = vmatpush1.msra.mxu0 %v721
    %723 = vmatprep.subr.mxu0 0.0
    %v724 = vand.u32 %v703, 4294901760
    %725 = vmatpush1.msra.mxu0 %v724
    %726 = vmatprep.subr.mxu0 0.0
    %v727 = vand.u32 %v704, 4294901760
    %728 = vmatpush1.msra.mxu0 %v727
    %729 = vmatprep.subr.mxu0 0.0
    %v730 = vand.u32 %v705, 4294901760
    %731 = vmatpush1.msra.mxu0 %v730
    %732 = vmatprep.subr.mxu0 0.0
    %v733 = vand.u32 %v706, 4294901760
    %734 = vmatpush1.msra.mxu0 %v733
    %735 = vmatprep.subr.mxu0 0.0
    %v736 = vand.u32 %v707, 4294901760
    %737 = vmatpush1.msra.mxu0 %v736
    %738 = vmatprep.subr.mxu0 0.0
    %v739 = vand.u32 %v708, 4294901760
    %740 = vmatpush1.msra.mxu0 %v739
    %741 = vmatprep.subr.mxu0 0.0
    %v742 = vand.u32 %v709, 4294901760
    %743 = vmatpush1.msra.mxu0 %v742
    %744 = vmatprep.subr.mxu0 0.0
    %v745 = vand.u32 %v710, 4294901760
    %746 = vmatpush1.msra.mxu0 %v745
    %747 = vmatprep.subr.mxu0 0.0
    %v748 = vand.u32 %v711, 4294901760
    %749 = vmatpush1.msra.mxu0 %v748
    %750 = vmatprep.subr.mxu0 0.0
    %v751 = vand.u32 %v712, 4294901760
    %752 = vmatpush1.msra.mxu0 %v751
    %753 = vmatprep.subr.mxu0 0.0
    %v754 = vand.u32 %v713, 4294901760
    %755 = vmatpush1.msra.mxu0 %v754
    %756 = vmatprep.subr.mxu0 0.0
    %v757 = vand.u32 %v714, 4294901760
    %758 = vmatpush1.msra.mxu0 %v757
    %759 = vmatprep.subr.mxu0 0.0
    %v760 = vand.u32 %v715, 4294901760
    %761 = vmatpush1.msra.mxu0 %v760
    %762 = vmatprep.subr.mxu0 0.0
    %v763 = vand.u32 %v716, 4294901760
    %764 = vmatpush1.msra.mxu0 %v763
    %765 = vmatprep.subr.mxu0 0.0
    %766 = vmatpush1.msra.mxu0 0.0
    %767 = vmatprep.subr.mxu0 0.0
    %768 = vmatpush1.msra.mxu0 0.0
    %769 = vmatprep.subr.mxu0 0.0
    %770 = vmatpush1.msra.mxu0 0.0
    %771 = vmatprep.subr.mxu0 0.0
    %772 = vmatpush1.msra.mxu0 0.0
    %773 = vmatprep.subr.mxu0 0.0
    %774 = vmatpush1.msra.mxu0 0.0
    %775 = vmatprep.subr.mxu0 0.0
    %776 = vmatpush1.msra.mxu0 0.0
    %777 = vmatprep.subr.mxu0 0.0
    %778 = vmatpush1.msra.mxu0 0.0
    %779 = vmatprep.subr.mxu0 0.0
    %780 = vmatpush1.msra.mxu0 0.0
    %781 = vmatprep.subr.mxu0 0.0
    %782 = vmatpush1.msra.mxu0 0.0
    %783 = vmatprep.subr.mxu0 0.0
    %784 = vmatpush1.msra.mxu0 0.0
    %785 = vmatprep.subr.mxu0 0.0
    %786 = vmatpush1.msra.mxu0 0.0
    %787 = vmatprep.subr.mxu0 0.0
    %788 = vmatpush1.msra.mxu0 0.0
    %789 = vmatprep.subr.mxu0 0.0
    %790 = vmatpush1.msra.mxu0 0.0
    %791 = vmatprep.subr.mxu0 0.0
    %792 = vmatpush1.msra.mxu0 0.0
    %793 = vmatprep.subr.mxu0 0.0
    %794 = vmatpush1.msra.mxu0 0.0
    %795 = vmatprep.subr.mxu0 0.0
    %796 = vmatpush1.msra.mxu0 0.0
    %797 = vmatprep.mubr.f32.mxu0 0.0
    %v798 = vand.u32 %v700, 4294901760
    %v799 = vsub.f32 %v700, %v798
    %v800 = vand.u32 %v799, 4294901760
    %v801 = vsub.f32 %v799, %v800
    %v802 = vand.u32 %v801, 4294901760
    %803 = vmatmul.mubr.f32.gmra.mrb[0].mxu0 %v802
    %v804 = vpop.f32.mrb[0].mxu0
    %v805 = vadd.f32 0.0, %v804
    %v806 = vpop.f32.mrb[0].mxu0
    %807 = vdwg.mxu0
    %808 = vmatprep.subr.mxu0 0.0
    %v809 = vand.u32 %v701, 4294901760
    %v810 = vsub.f32 %v701, %v809
    %v811 = vand.u32 %v810, 4294901760
    %v812 = vsub.f32 %v810, %v811
    %v813 = vand.u32 %v812, 4294901760
    %814 = vmatpush1.msra.mxu0 %v813
    %815 = vmatprep.subr.mxu0 0.0
    %v816 = vand.u32 %v702, 4294901760
    %v817 = vsub.f32 %v702, %v816
    %v818 = vand.u32 %v817, 4294901760
    %v819 = vsub.f32 %v817, %v818
    %v820 = vand.u32 %v819, 4294901760
    %821 = vmatpush1.msra.mxu0 %v820
    %822 = vmatprep.subr.mxu0 0.0
    %v823 = vand.u32 %v703, 4294901760
    %v824 = vsub.f32 %v703, %v823
    %v825 = vand.u32 %v824, 4294901760
    %v826 = vsub.f32 %v824, %v825
    %v827 = vand.u32 %v826, 4294901760
    %828 = vmatpush1.msra.mxu0 %v827
    %829 = vmatprep.subr.mxu0 0.0
    %v830 = vand.u32 %v704, 4294901760
    %v831 = vsub.f32 %v704, %v830
    %v832 = vand.u32 %v831, 4294901760
    %v833 = vsub.f32 %v831, %v832
    %v834 = vand.u32 %v833, 4294901760
    %835 = vmatpush1.msra.mxu0 %v834
    %836 = vmatprep.subr.mxu0 0.0
    %v837 = vand.u32 %v705, 4294901760
    %v838 = vsub.f32 %v705, %v837
    %v839 = vand.u32 %v838, 4294901760
    %v840 = vsub.f32 %v838, %v839
    %v841 = vand.u32 %v840, 4294901760
    %842 = vmatpush1.msra.mxu0 %v841
    %843 = vmatprep.subr.mxu0 0.0
    %v844 = vand.u32 %v706, 4294901760
    %v845 = vsub.f32 %v706, %v844
    %v846 = vand.u32 %v845, 4294901760
    %v847 = vsub.f32 %v845, %v846
    %v848 = vand.u32 %v847, 4294901760
    %849 = vmatpush1.msra.mxu0 %v848
    %850 = vmatprep.subr.mxu0 0.0
    %v851 = vand.u32 %v707, 4294901760
    %v852 = vsub.f32 %v707, %v851
    %v853 = vand.u32 %v852, 4294901760
    %v854 = vsub.f32 %v852, %v853
    %v855 = vand.u32 %v854, 4294901760
    %856 = vmatpush1.msra.mxu0 %v855
    %857 = vmatprep.subr.mxu0 0.0
    %v858 = vand.u32 %v708, 4294901760
    %v859 = vsub.f32 %v708, %v858
    %v860 = vand.u32 %v859, 4294901760
    %v861 = vsub.f32 %v859, %v860
    %v862 = vand.u32 %v861, 4294901760
    %863 = vmatpush1.msra.mxu0 %v862
    %864 = vmatprep.subr.mxu0 0.0
    %v865 = vand.u32 %v709, 4294901760
    %v866 = vsub.f32 %v709, %v865
    %v867 = vand.u32 %v866, 4294901760
    %v868 = vsub.f32 %v866, %v867
    %v869 = vand.u32 %v868, 4294901760
    %870 = vmatpush1.msra.mxu0 %v869
    %871 = vmatprep.subr.mxu0 0.0
    %v872 = vand.u32 %v710, 4294901760
    %v873 = vsub.f32 %v710, %v872
    %v874 = vand.u32 %v873, 4294901760
    %v875 = vsub.f32 %v873, %v874
    %v876 = vand.u32 %v875, 4294901760
    %877 = vmatpush1.msra.mxu0 %v876
    %878 = vmatprep.subr.mxu0 0.0
    %v879 = vand.u32 %v711, 4294901760
    %v880 = vsub.f32 %v711, %v879
    %v881 = vand.u32 %v880, 4294901760
    %v882 = vsub.f32 %v880, %v881
    %v883 = vand.u32 %v882, 4294901760
    %884 = vmatpush1.msra.mxu0 %v883
    %885 = vmatprep.subr.mxu0 0.0
    %v886 = vand.u32 %v712, 4294901760
    %v887 = vsub.f32 %v712, %v886
    %v888 = vand.u32 %v887, 4294901760
    %v889 = vsub.f32 %v887, %v888
    %v890 = vand.u32 %v889, 4294901760
    %891 = vmatpush1.msra.mxu0 %v890
    %892 = vmatprep.subr.mxu0 0.0
    %v893 = vand.u32 %v713, 4294901760
    %v894 = vsub.f32 %v713, %v893
    %v895 = vand.u32 %v894, 4294901760
    %v896 = vsub.f32 %v894, %v895
    %v897 = vand.u32 %v896, 4294901760
    %898 = vmatpush1.msra.mxu0 %v897
    %899 = vmatprep.subr.mxu0 0.0
    %v900 = vand.u32 %v714, 4294901760
    %v901 = vsub.f32 %v714, %v900
    %v902 = vand.u32 %v901, 4294901760
    %v903 = vsub.f32 %v901, %v902
    %v904 = vand.u32 %v903, 4294901760
    %905 = vmatpush1.msra.mxu0 %v904
    %906 = vmatprep.subr.mxu0 0.0
    %v907 = vand.u32 %v715, 4294901760
    %v908 = vsub.f32 %v715, %v907
    %v909 = vand.u32 %v908, 4294901760
    %v910 = vsub.f32 %v908, %v909
    %v911 = vand.u32 %v910, 4294901760
    %912 = vmatpush1.msra.mxu0 %v911
    %913 = vmatprep.subr.mxu0 0.0
    %v914 = vand.u32 %v716, 4294901760
    %v915 = vsub.f32 %v716, %v914
    %v916 = vand.u32 %v915, 4294901760
    %v917 = vsub.f32 %v915, %v916
    %v918 = vand.u32 %v917, 4294901760
    %919 = vmatpush1.msra.mxu0 %v918
    %920 = vmatprep.subr.mxu0 0.0
    %921 = vmatpush1.msra.mxu0 0.0
    %922 = vmatprep.subr.mxu0 0.0
    %923 = vmatpush1.msra.mxu0 0.0
    %924 = vmatprep.subr.mxu0 0.0
    %925 = vmatpush1.msra.mxu0 0.0
    %926 = vmatprep.subr.mxu0 0.0
    %927 = vmatpush1.msra.mxu0 0.0
    %928 = vmatprep.subr.mxu0 0.0
    %929 = vmatpush1.msra.mxu0 0.0
    %930 = vmatprep.subr.mxu0 0.0
    %931 = vmatpush1.msra.mxu0 0.0
    %932 = vmatprep.subr.mxu0 0.0
    %933 = vmatpush1.msra.mxu0 0.0
    %934 = vmatprep.subr.mxu0 0.0
    %935 = vmatpush1.msra.mxu0 0.0
    %936 = vmatprep.subr.mxu0 0.0
    %937 = vmatpush1.msra.mxu0 0.0
    %938 = vmatprep.subr.mxu0 0.0
    %939 = vmatpush1.msra.mxu0 0.0
    %940 = vmatprep.subr.mxu0 0.0
    %941 = vmatpush1.msra.mxu0 0.0
    %942 = vmatprep.subr.mxu0 0.0
    %943 = vmatpush1.msra.mxu0 0.0
    %944 = vmatprep.subr.mxu0 0.0
    %945 = vmatpush1.msra.mxu0 0.0
    %946 = vmatprep.subr.mxu0 0.0
    %947 = vmatpush1.msra.mxu0 0.0
    %948 = vmatprep.subr.mxu0 0.0
    %949 = vmatpush1.msra.mxu0 0.0
    %950 = vmatprep.subr.mxu0 0.0
    %951 = vmatpush1.msra.mxu0 0.0
    %952 = vmatprep.mubr.f32.mxu0 0.0
    %v953 = vand.u32 %v700, 4294901760
    %954 = vmatmul.mubr.f32.gmra.mrb[0].mxu0 %v953
    %v955 = vpop.f32.mrb[0].mxu0
    %v956 = vadd.f32 %v805, %v955
    %v957 = vpop.f32.mrb[0].mxu0
    %958 = vdwg.mxu0
    %959 = vmatprep.subr.mxu0 0.0
    %v960 = vand.u32 %v701, 4294901760
    %v961 = vsub.f32 %v701, %v960
    %962 = vmatpush1.msra.mxu0 %v961
    %963 = vmatprep.subr.mxu0 0.0
    %v964 = vand.u32 %v702, 4294901760
    %v965 = vsub.f32 %v702, %v964
    %966 = vmatpush1.msra.mxu0 %v965
    %967 = vmatprep.subr.mxu0 0.0
    %v968 = vand.u32 %v703, 4294901760
    %v969 = vsub.f32 %v703, %v968
    %970 = vmatpush1.msra.mxu0 %v969
    %971 = vmatprep.subr.mxu0 0.0
    %v972 = vand.u32 %v704, 4294901760
    %v973 = vsub.f32 %v704, %v972
    %974 = vmatpush1.msra.mxu0 %v973
    %975 = vmatprep.subr.mxu0 0.0
    %v976 = vand.u32 %v705, 4294901760
    %v977 = vsub.f32 %v705, %v976
    %978 = vmatpush1.msra.mxu0 %v977
    %979 = vmatprep.subr.mxu0 0.0
    %v980 = vand.u32 %v706, 4294901760
    %v981 = vsub.f32 %v706, %v980
    %982 = vmatpush1.msra.mxu0 %v981
    %983 = vmatprep.subr.mxu0 0.0
    %v984 = vand.u32 %v707, 4294901760
    %v985 = vsub.f32 %v707, %v984
    %986 = vmatpush1.msra.mxu0 %v985
    %987 = vmatprep.subr.mxu0 0.0
    %v988 = vand.u32 %v708, 4294901760
    %v989 = vsub.f32 %v708, %v988
    %990 = vmatpush1.msra.mxu0 %v989
    %991 = vmatprep.subr.mxu0 0.0
    %v992 = vand.u32 %v709, 4294901760
    %v993 = vsub.f32 %v709, %v992
    %994 = vmatpush1.msra.mxu0 %v993
    %995 = vmatprep.subr.mxu0 0.0
    %v996 = vand.u32 %v710, 4294901760
    %v997 = vsub.f32 %v710, %v996
    %998 = vmatpush1.msra.mxu0 %v997
    %999 = vmatprep.subr.mxu0 0.0
    %v1000 = vand.u32 %v711, 4294901760
    %v1001 = vsub.f32 %v711, %v1000
    %1002 = vmatpush1.msra.mxu0 %v1001
    %1003 = vmatprep.subr.mxu0 0.0
    %v1004 = vand.u32 %v712, 4294901760
    %v1005 = vsub.f32 %v712, %v1004
    %1006 = vmatpush1.msra.mxu0 %v1005
    %1007 = vmatprep.subr.mxu0 0.0
    %v1008 = vand.u32 %v713, 4294901760
    %v1009 = vsub.f32 %v713, %v1008
    %1010 = vmatpush1.msra.mxu0 %v1009
    %1011 = vmatprep.subr.mxu0 0.0
    %v1012 = vand.u32 %v714, 4294901760
    %v1013 = vsub.f32 %v714, %v1012
    %1014 = vmatpush1.msra.mxu0 %v1013
    %1015 = vmatprep.subr.mxu0 0.0
    %v1016 = vand.u32 %v715, 4294901760
    %v1017 = vsub.f32 %v715, %v1016
    %1018 = vmatpush1.msra.mxu0 %v1017
    %1019 = vmatprep.subr.mxu0 0.0
    %v1020 = vand.u32 %v716, 4294901760
    %v1021 = vsub.f32 %v716, %v1020
    %1022 = vmatpush1.msra.mxu0 %v1021
    %1023 = vmatprep.subr.mxu0 0.0
    %1024 = vmatpush1.msra.mxu0 0.0
    %1025 = vmatprep.subr.mxu0 0.0
    %1026 = vmatpush1.msra.mxu0 0.0
    %1027 = vmatprep.subr.mxu0 0.0
    %1028 = vmatpush1.msra.mxu0 0.0
    %1029 = vmatprep.subr.mxu0 0.0
    %1030 = vmatpush1.msra.mxu0 0.0
    %1031 = vmatprep.subr.mxu0 0.0
    %1032 = vmatpush1.msra.mxu0 0.0
    %1033 = vmatprep.subr.mxu0 0.0
    %1034 = vmatpush1.msra.mxu0 0.0
    %1035 = vmatprep.subr.mxu0 0.0
    %1036 = vmatpush1.msra.mxu0 0.0
    %1037 = vmatprep.subr.mxu0 0.0
    %1038 = vmatpush1.msra.mxu0 0.0
    %1039 = vmatprep.subr.mxu0 0.0
    %1040 = vmatpush1.msra.mxu0 0.0
    %1041 = vmatprep.subr.mxu0 0.0
    %1042 = vmatpush1.msra.mxu0 0.0
    %1043 = vmatprep.subr.mxu0 0.0
    %1044 = vmatpush1.msra.mxu0 0.0
    %1045 = vmatprep.subr.mxu0 0.0
    %1046 = vmatpush1.msra.mxu0 0.0
    %1047 = vmatprep.subr.mxu0 0.0
    %1048 = vmatpush1.msra.mxu0 0.0
    %1049 = vmatprep.subr.mxu0 0.0
    %1050 = vmatpush1.msra.mxu0 0.0
    %1051 = vmatprep.subr.mxu0 0.0
    %1052 = vmatpush1.msra.mxu0 0.0
    %1053 = vmatprep.subr.mxu0 0.0
    %1054 = vmatpush1.msra.mxu0 0.0
    %1055 = vmatprep.mubr.f32.mxu0 0.0
    %v1056 = vand.u32 %v700, 4294901760
    %v1057 = vsub.f32 %v700, %v1056
    %1058 = vmatmul.mubr.f32.gmra.mrb[0].mxu0 %v1057
    %v1059 = vpop.f32.mrb[0].mxu0
    %v1060 = vadd.f32 %v956, %v1059
    %v1061 = vpop.f32.mrb[0].mxu0
    %1062 = vdwg.mxu0
    %1063 = vmatprep.subr.mxu0 0.0
    %v1064 = vand.u32 %v701, 4294901760
    %1065 = vmatpush1.msra.mxu0 %v1064
    %1066 = vmatprep.subr.mxu0 0.0
    %v1067 = vand.u32 %v702, 4294901760
    %1068 = vmatpush1.msra.mxu0 %v1067
    %1069 = vmatprep.subr.mxu0 0.0
    %v1070 = vand.u32 %v703, 4294901760
    %1071 = vmatpush1.msra.mxu0 %v1070
    %1072 = vmatprep.subr.mxu0 0.0
    %v1073 = vand.u32 %v704, 4294901760
    %1074 = vmatpush1.msra.mxu0 %v1073
    %1075 = vmatprep.subr.mxu0 0.0
    %v1076 = vand.u32 %v705, 4294901760
    %1077 = vmatpush1.msra.mxu0 %v1076
    %1078 = vmatprep.subr.mxu0 0.0
    %v1079 = vand.u32 %v706, 4294901760
    %1080 = vmatpush1.msra.mxu0 %v1079
    %1081 = vmatprep.subr.mxu0 0.0
    %v1082 = vand.u32 %v707, 4294901760
    %1083 = vmatpush1.msra.mxu0 %v1082
    %1084 = vmatprep.subr.mxu0 0.0
    %v1085 = vand.u32 %v708, 4294901760
    %1086 = vmatpush1.msra.mxu0 %v1085
    %1087 = vmatprep.subr.mxu0 0.0
    %v1088 = vand.u32 %v709, 4294901760
    %1089 = vmatpush1.msra.mxu0 %v1088
    %1090 = vmatprep.subr.mxu0 0.0
    %v1091 = vand.u32 %v710, 4294901760
    %1092 = vmatpush1.msra.mxu0 %v1091
    %1093 = vmatprep.subr.mxu0 0.0
    %v1094 = vand.u32 %v711, 4294901760
    %1095 = vmatpush1.msra.mxu0 %v1094
    %1096 = vmatprep.subr.mxu0 0.0
    %v1097 = vand.u32 %v712, 4294901760
    %1098 = vmatpush1.msra.mxu0 %v1097
    %1099 = vmatprep.subr.mxu0 0.0
    %v1100 = vand.u32 %v713, 4294901760
    %1101 = vmatpush1.msra.mxu0 %v1100
    %1102 = vmatprep.subr.mxu0 0.0
    %v1103 = vand.u32 %v714, 4294901760
    %1104 = vmatpush1.msra.mxu0 %v1103
    %1105 = vmatprep.subr.mxu0 0.0
    %v1106 = vand.u32 %v715, 4294901760
    %1107 = vmatpush1.msra.mxu0 %v1106
    %1108 = vmatprep.subr.mxu0 0.0
    %v1109 = vand.u32 %v716, 4294901760
    %1110 = vmatpush1.msra.mxu0 %v1109
    %1111 = vmatprep.subr.mxu0 0.0
    %1112 = vmatpush1.msra.mxu0 0.0
    %1113 = vmatprep.subr.mxu0 0.0
    %1114 = vmatpush1.msra.mxu0 0.0
    %1115 = vmatprep.subr.mxu0 0.0
    %1116 = vmatpush1.msra.mxu0 0.0
    %1117 = vmatprep.subr.mxu0 0.0
    %1118 = vmatpush1.msra.mxu0 0.0
    %1119 = vmatprep.subr.mxu0 0.0
    %1120 = vmatpush1.msra.mxu0 0.0
    %1121 = vmatprep.subr.mxu0 0.0
    %1122 = vmatpush1.msra.mxu0 0.0
    %1123 = vmatprep.subr.mxu0 0.0
    %1124 = vmatpush1.msra.mxu0 0.0
    %1125 = vmatprep.subr.mxu0 0.0
    %1126 = vmatpush1.msra.mxu0 0.0
    %1127 = vmatprep.subr.mxu0 0.0
    %1128 = vmatpush1.msra.mxu0 0.0
    %1129 = vmatprep.subr.mxu0 0.0
    %1130 = vmatpush1.msra.mxu0 0.0
    %1131 = vmatprep.subr.mxu0 0.0
    %1132 = vmatpush1.msra.mxu0 0.0
    %1133 = vmatprep.subr.mxu0 0.0
    %1134 = vmatpush1.msra.mxu0 0.0
    %1135 = vmatprep.subr.mxu0 0.0
    %1136 = vmatpush1.msra.mxu0 0.0
    %1137 = vmatprep.subr.mxu0 0.0
    %1138 = vmatpush1.msra.mxu0 0.0
    %1139 = vmatprep.subr.mxu0 0.0
    %1140 = vmatpush1.msra.mxu0 0.0
    %1141 = vmatprep.subr.mxu0 0.0
    %1142 = vmatpush1.msra.mxu0 0.0
    %1143 = vmatprep.mubr.f32.mxu0 0.0
    %v1144 = vand.u32 %v700, 4294901760
    %v1145 = vsub.f32 %v700, %v1144
    %v1146 = vand.u32 %v1145, 4294901760
    %1147 = vmatmul.mubr.f32.gmra.mrb[0].mxu0 %v1146
    %v1148 = vpop.f32.mrb[0].mxu0
    %v1149 = vadd.f32 %v1060, %v1148
    %v1150 = vpop.f32.mrb[0].mxu0
    %1151 = vdwg.mxu0
    %1152 = vmatprep.subr.mxu0 0.0
    %v1153 = vand.u32 %v701, 4294901760
    %v1154 = vsub.f32 %v701, %v1153
    %v1155 = vand.u32 %v1154, 4294901760
    %1156 = vmatpush1.msra.mxu0 %v1155
    %1157 = vmatprep.subr.mxu0 0.0
    %v1158 = vand.u32 %v702, 4294901760
    %v1159 = vsub.f32 %v702, %v1158
    %v1160 = vand.u32 %v1159, 4294901760
    %1161 = vmatpush1.msra.mxu0 %v1160
    %1162 = vmatprep.subr.mxu0 0.0
    %v1163 = vand.u32 %v703, 4294901760
    %v1164 = vsub.f32 %v703, %v1163
    %v1165 = vand.u32 %v1164, 4294901760
    %1166 = vmatpush1.msra.mxu0 %v1165
    %1167 = vmatprep.subr.mxu0 0.0
    %v1168 = vand.u32 %v704, 4294901760
    %v1169 = vsub.f32 %v704, %v1168
    %v1170 = vand.u32 %v1169, 4294901760
    %1171 = vmatpush1.msra.mxu0 %v1170
    %1172 = vmatprep.subr.mxu0 0.0
    %v1173 = vand.u32 %v705, 4294901760
    %v1174 = vsub.f32 %v705, %v1173
    %v1175 = vand.u32 %v1174, 4294901760
    %1176 = vmatpush1.msra.mxu0 %v1175
    %1177 = vmatprep.subr.mxu0 0.0
    %v1178 = vand.u32 %v706, 4294901760
    %v1179 = vsub.f32 %v706, %v1178
    %v1180 = vand.u32 %v1179, 4294901760
    %1181 = vmatpush1.msra.mxu0 %v1180
    %1182 = vmatprep.subr.mxu0 0.0
    %v1183 = vand.u32 %v707, 4294901760
    %v1184 = vsub.f32 %v707, %v1183
    %v1185 = vand.u32 %v1184, 4294901760
    %1186 = vmatpush1.msra.mxu0 %v1185
    %1187 = vmatprep.subr.mxu0 0.0
    %v1188 = vand.u32 %v708, 4294901760
    %v1189 = vsub.f32 %v708, %v1188
    %v1190 = vand.u32 %v1189, 4294901760
    %1191 = vmatpush1.msra.mxu0 %v1190
    %1192 = vmatprep.subr.mxu0 0.0
    %v1193 = vand.u32 %v709, 4294901760
    %v1194 = vsub.f32 %v709, %v1193
    %v1195 = vand.u32 %v1194, 4294901760
    %1196 = vmatpush1.msra.mxu0 %v1195
    %1197 = vmatprep.subr.mxu0 0.0
    %v1198 = vand.u32 %v710, 4294901760
    %v1199 = vsub.f32 %v710, %v1198
    %v1200 = vand.u32 %v1199, 4294901760
    %1201 = vmatpush1.msra.mxu0 %v1200
    %1202 = vmatprep.subr.mxu0 0.0
    %v1203 = vand.u32 %v711, 4294901760
    %v1204 = vsub.f32 %v711, %v1203
    %v1205 = vand.u32 %v1204, 4294901760
    %1206 = vmatpush1.msra.mxu0 %v1205
    %1207 = vmatprep.subr.mxu0 0.0
    %v1208 = vand.u32 %v712, 4294901760
    %v1209 = vsub.f32 %v712, %v1208
    %v1210 = vand.u32 %v1209, 4294901760
    %1211 = vmatpush1.msra.mxu0 %v1210
    %1212 = vmatprep.subr.mxu0 0.0
    %v1213 = vand.u32 %v713, 4294901760
    %v1214 = vsub.f32 %v713, %v1213
    %v1215 = vand.u32 %v1214, 4294901760
    %1216 = vmatpush1.msra.mxu0 %v1215
    %1217 = vmatprep.subr.mxu0 0.0
    %v1218 = vand.u32 %v714, 4294901760
    %v1219 = vsub.f32 %v714, %v1218
    %v1220 = vand.u32 %v1219, 4294901760
    %1221 = vmatpush1.msra.mxu0 %v1220
    %1222 = vmatprep.subr.mxu0 0.0
    %v1223 = vand.u32 %v715, 4294901760
    %v1224 = vsub.f32 %v715, %v1223
    %v1225 = vand.u32 %v1224, 4294901760
    %1226 = vmatpush1.msra.mxu0 %v1225
    %1227 = vmatprep.subr.mxu0 0.0
    %v1228 = vand.u32 %v716, 4294901760
    %v1229 = vsub.f32 %v716, %v1228
    %v1230 = vand.u32 %v1229, 4294901760
    %1231 = vmatpush1.msra.mxu0 %v1230
    %1232 = vmatprep.subr.mxu0 0.0
    %1233 = vmatpush1.msra.mxu0 0.0
    %1234 = vmatprep.subr.mxu0 0.0
    %1235 = vmatpush1.msra.mxu0 0.0
    %1236 = vmatprep.subr.mxu0 0.0
    %1237 = vmatpush1.msra.mxu0 0.0
    %1238 = vmatprep.subr.mxu0 0.0
    %1239 = vmatpush1.msra.mxu0 0.0
    %1240 = vmatprep.subr.mxu0 0.0
    %1241 = vmatpush1.msra.mxu0 0.0
    %1242 = vmatprep.subr.mxu0 0.0
    %1243 = vmatpush1.msra.mxu0 0.0
    %1244 = vmatprep.subr.mxu0 0.0
    %1245 = vmatpush1.msra.mxu0 0.0
    %1246 = vmatprep.subr.mxu0 0.0
    %1247 = vmatpush1.msra.mxu0 0.0
    %1248 = vmatprep.subr.mxu0 0.0
    %1249 = vmatpush1.msra.mxu0 0.0
    %1250 = vmatprep.subr.mxu0 0.0
    %1251 = vmatpush1.msra.mxu0 0.0
    %1252 = vmatprep.subr.mxu0 0.0
    %1253 = vmatpush1.msra.mxu0 0.0
    %1254 = vmatprep.subr.mxu0 0.0
    %1255 = vmatpush1.msra.mxu0 0.0
    %1256 = vmatprep.subr.mxu0 0.0
    %1257 = vmatpush1.msra.mxu0 0.0
    %1258 = vmatprep.subr.mxu0 0.0
    %1259 = vmatpush1.msra.mxu0 0.0
    %1260 = vmatprep.subr.mxu0 0.0
    %1261 = vmatpush1.msra.mxu0 0.0
    %1262 = vmatprep.subr.mxu0 0.0
    %1263 = vmatpush1.msra.mxu0 0.0
    %1264 = vmatprep.mubr.f32.mxu0 0.0
    %v1265 = vand.u32 %v700, 4294901760
    %1266 = vmatmul.mubr.f32.gmra.mrb[0].mxu0 %v1265
    %v1267 = vpop.f32.mrb[0].mxu0
    %v1268 = vadd.f32 %v1149, %v1267
    %v1269 = vpop.f32.mrb[0].mxu0
    %1270 = vdwg.mxu0
    %1271 = vmatprep.subr.mxu0 0.0
    %v1272 = vand.u32 %v701, 4294901760
    %1273 = vmatpush1.msra.mxu0 %v1272
    %1274 = vmatprep.subr.mxu0 0.0
    %v1275 = vand.u32 %v702, 4294901760
    %1276 = vmatpush1.msra.mxu0 %v1275
    %1277 = vmatprep.subr.mxu0 0.0
    %v1278 = vand.u32 %v703, 4294901760
    %1279 = vmatpush1.msra.mxu0 %v1278
    %1280 = vmatprep.subr.mxu0 0.0
    %v1281 = vand.u32 %v704, 4294901760
    %1282 = vmatpush1.msra.mxu0 %v1281
    %1283 = vmatprep.subr.mxu0 0.0
    %v1284 = vand.u32 %v705, 4294901760
    %1285 = vmatpush1.msra.mxu0 %v1284
    %1286 = vmatprep.subr.mxu0 0.0
    %v1287 = vand.u32 %v706, 4294901760
    %1288 = vmatpush1.msra.mxu0 %v1287
    %1289 = vmatprep.subr.mxu0 0.0
    %v1290 = vand.u32 %v707, 4294901760
    %1291 = vmatpush1.msra.mxu0 %v1290
    %1292 = vmatprep.subr.mxu0 0.0
    %v1293 = vand.u32 %v708, 4294901760
    %1294 = vmatpush1.msra.mxu0 %v1293
    %1295 = vmatprep.subr.mxu0 0.0
    %v1296 = vand.u32 %v709, 4294901760
    %1297 = vmatpush1.msra.mxu0 %v1296
    %1298 = vmatprep.subr.mxu0 0.0
    %v1299 = vand.u32 %v710, 4294901760
    %1300 = vmatpush1.msra.mxu0 %v1299
    %1301 = vmatprep.subr.mxu0 0.0
    %v1302 = vand.u32 %v711, 4294901760
    %1303 = vmatpush1.msra.mxu0 %v1302
    %1304 = vmatprep.subr.mxu0 0.0
    %v1305 = vand.u32 %v712, 4294901760
    %1306 = vmatpush1.msra.mxu0 %v1305
    %1307 = vmatprep.subr.mxu0 0.0
    %v1308 = vand.u32 %v713, 4294901760
    %1309 = vmatpush1.msra.mxu0 %v1308
    %1310 = vmatprep.subr.mxu0 0.0
    %v1311 = vand.u32 %v714, 4294901760
    %1312 = vmatpush1.msra.mxu0 %v1311
    %1313 = vmatprep.subr.mxu0 0.0
    %v1314 = vand.u32 %v715, 4294901760
    %1315 = vmatpush1.msra.mxu0 %v1314
    %1316 = vmatprep.subr.mxu0 0.0
    %v1317 = vand.u32 %v716, 4294901760
    %1318 = vmatpush1.msra.mxu0 %v1317
    %1319 = vmatprep.subr.mxu0 0.0
    %1320 = vmatpush1.msra.mxu0 0.0
    %1321 = vmatprep.subr.mxu0 0.0
    %1322 = vmatpush1.msra.mxu0 0.0
    %1323 = vmatprep.subr.mxu0 0.0
    %1324 = vmatpush1.msra.mxu0 0.0
    %1325 = vmatprep.subr.mxu0 0.0
    %1326 = vmatpush1.msra.mxu0 0.0
    %1327 = vmatprep.subr.mxu0 0.0
    %1328 = vmatpush1.msra.mxu0 0.0
    %1329 = vmatprep.subr.mxu0 0.0
    %1330 = vmatpush1.msra.mxu0 0.0
    %1331 = vmatprep.subr.mxu0 0.0
    %1332 = vmatpush1.msra.mxu0 0.0
    %1333 = vmatprep.subr.mxu0 0.0
    %1334 = vmatpush1.msra.mxu0 0.0
    %1335 = vmatprep.subr.mxu0 0.0
    %1336 = vmatpush1.msra.mxu0 0.0
    %1337 = vmatprep.subr.mxu0 0.0
    %1338 = vmatpush1.msra.mxu0 0.0
    %1339 = vmatprep.subr.mxu0 0.0
    %1340 = vmatpush1.msra.mxu0 0.0
    %1341 = vmatprep.subr.mxu0 0.0
    %1342 = vmatpush1.msra.mxu0 0.0
    %1343 = vmatprep.subr.mxu0 0.0
    %1344 = vmatpush1.msra.mxu0 0.0
    %1345 = vmatprep.subr.mxu0 0.0
    %1346 = vmatpush1.msra.mxu0 0.0
    %1347 = vmatprep.subr.mxu0 0.0
    %1348 = vmatpush1.msra.mxu0 0.0
    %1349 = vmatprep.subr.mxu0 0.0
    %1350 = vmatpush1.msra.mxu0 0.0
    %1351 = vmatprep.mubr.f32.mxu0 0.0
    %v1352 = vand.u32 %v700, 4294901760
    %1353 = vmatmul.mubr.f32.gmra.mrb[0].mxu0 %v1352
    %v1354 = vpop.f32.mrb[0].mxu0
    %v1355 = vadd.f32 %v1268, %v1354
    %v1356 = vpop.f32.mrb[0].mxu0
    %1357 = vdwg.mxu0
    %v1358 = vmul.f32 %v1355, 0.00390625
    %v1359 = vmul.f32 %v1358, %v1358
    %v1361 = vrot.slane %v1359, 7
    %v1363 = vsub.f32 %v1358, %v1361
    %v1364 = vmax.f32 %v1363, 0.0
    %v1365 = vlaneseq
    %v1366 = vshrl.u32 %v1365, 7
    %v1367 = vsub.s32 0, %v1366
    %v1368 = vrot.slane %v1358, %v1367
    %v1369 = vsub.f32 %v682, %v1368
    %v1370 = vsub.f32 %v683, %v1368
    %v1371 = vadd.f32 %v1364, 1e-05
    %v1372 = vrsqrt.pop %v1371
    %v1373 = vlaneseq
    %v1374 = vshrl.u32 %v1373, 7
    %v1375 = vsub.s32 1, %v1374
    %v1376 = vrot.slane %v1372, %v1375
    %v1377 = vmul.f32 %v1369, %v1376
    %v1378 = vmul.f32 %v1370, %v1376
    %v1379 = vld [vmem:[%s6] sm:$0x1]
    %v1380 = vlaneseq
    %v1381 = vshrl.u32 %v1380, 7
    %v1382 = vsub.s32 0, %v1381
    %v1383 = vrot.slane %v1379, %v1382
    %v1384 = vmul.f32 %v1377, %v1383
    %v1385 = vmul.f32 %v1378, %v1383
    %v1386 = vld [vmem:[#allocation10] sm:$0x1]
    %v1387 = vlaneseq
    %v1388 = vshrl.u32 %v1387, 7
    %v1389 = vsub.s32 0, %v1388
    %v1390 = vrot.slane %v1386, %v1389
    %v1391 = vadd.f32 %v1384, %v1390
    %v1392 = vadd.f32 %v1385, %v1390
    %v1393 = vmax.f32 %v1391, 0.0
    %v1394 = vmax.f32 %v1392, 0.0
    %v1397 = vrot.slane %v1393, 7
    %v1398 = vrot.slane %v1394, 7
    %v1401 = vsel %vm134, 0.0, %v1397
    %v1402 = vsel %vm134, 0.0, %v1398
    %v1403 = vsel %vm134, %v1397, 0.0
    %v1404 = vsel %vm134, %v1398, 0.0
    %v1405 = vpack.c.bf16 %v1402, %v1401
    %v1406 = vld [vmem:[#allocation6] sm:$0xf]
    %v1407 = vld [vmem:[#allocation6 + $0x4] sm:$0xf]
    %v1408 = vld [vmem:[#allocation6 + $0x8] sm:$0xf]
    %v1409 = vld [vmem:[#allocation6 + $0xc] sm:$0xf]
    %v1410 = vld [vmem:[#allocation6 + $0x10] sm:$0xf]
    %v1411 = vld [vmem:[#allocation6 + $0x14] sm:$0xf]
    %v1412 = vld [vmem:[#allocation6 + $0x18] sm:$0xf]
    %v1413 = vld [vmem:[#allocation6 + $0x1c] sm:$0xf]
    %v1414 = vld [vmem:[#allocation6 + $0x20] sm:$0xf]
    %v1415 = vld [vmem:[#allocation6 + $0x24] sm:$0xf]
    %v1416 = vld [vmem:[#allocation6 + $0x28] sm:$0xf]
    %v1417 = vld [vmem:[#allocation6 + $0x2c] sm:$0xf]
    %v1418 = vld [vmem:[#allocation6 + $0x30] sm:$0xf]
    %v1419 = vld [vmem:[#allocation6 + $0x34] sm:$0xf]
    %v1420 = vld [vmem:[#allocation6 + $0x38] sm:$0xf]
    %v1421 = vld [vmem:[#allocation6 + $0x3c] sm:$0xf]
    %vm1426 = vcmask 1046528
    %v1427 = vrot.slane %v1401, 1
    %v1428 = vrot.slane %v1403, 1
    %v1429 = vsel %vm1426, %v1427, %v1428
    %v1430 = vrot.slane %v1402, 1
    %v1431 = vrot.slane %v1404, 1
    %v1432 = vsel %vm1426, %v1430, %v1431
    %v1435 = vpack.c.bf16 %v1432, %v1429
    %v1436 = vld [vmem:[#allocation6 + $0x40] sm:$0xf]
    %v1437 = vld [vmem:[#allocation6 + $0x44] sm:$0xf]
    %v1438 = vld [vmem:[#allocation6 + $0x48] sm:$0xf]
    %v1439 = vld [vmem:[#allocation6 + $0x4c] sm:$0xf]
    %v1440 = vld [vmem:[#allocation6 + $0x50] sm:$0xf]
    %v1441 = vld [vmem:[#allocation6 + $0x54] sm:$0xf]
    %v1442 = vld [vmem:[#allocation6 + $0x58] sm:$0xf]
    %v1443 = vld [vmem:[#allocation6 + $0x5c] sm:$0xf]
    %v1444 = vld [vmem:[#allocation6 + $0x60] sm:$0xf]
    %v1445 = vld [vmem:[#allocation6 + $0x64] sm:$0xf]
    %v1446 = vld [vmem:[#allocation6 + $0x68] sm:$0xf]
    %v1447 = vld [vmem:[#allocation6 + $0x6c] sm:$0xf]
    %v1448 = vld [vmem:[#allocation6 + $0x70] sm:$0xf]
    %v1449 = vld [vmem:[#allocation6 + $0x74] sm:$0xf]
    %v1450 = vld [vmem:[#allocation6 + $0x78] sm:$0xf]
    %v1451 = vld [vmem:[#allocation6 + $0x7c] sm:$0xf]
    %v1468 = vunpack.c.l.b16 %v1436
    %v1469 = vunpack.c.l.b16 %v1437
    %v1470 = vunpack.c.l.b16 %v1438
    %v1471 = vunpack.c.l.b16 %v1439
    %v1472 = vunpack.c.l.b16 %v1440
    %v1473 = vunpack.c.l.b16 %v1441
    %v1474 = vunpack.c.l.b16 %v1442
    %v1475 = vunpack.c.l.b16 %v1443
    %v1476 = vunpack.c.l.b16 %v1444
    %v1477 = vunpack.c.l.b16 %v1445
    %v1478 = vunpack.c.l.b16 %v1446
    %v1479 = vunpack.c.l.b16 %v1447
    %v1480 = vunpack.c.l.b16 %v1448
    %v1481 = vunpack.c.l.b16 %v1449
    %v1482 = vunpack.c.l.b16 %v1450
    %v1483 = vunpack.c.l.b16 %v1451
    %v1484 = vpack.c.b16 %v1469, %v1468
    %v1485 = vpack.c.b16 %v1471, %v1470
    %v1486 = vpack.c.b16 %v1473, %v1472
    %v1487 = vpack.c.b16 %v1475, %v1474
    %v1488 = vpack.c.b16 %v1477, %v1476
    %v1489 = vpack.c.b16 %v1479, %v1478
    %v1490 = vpack.c.b16 %v1481, %v1480
    %v1491 = vpack.c.b16 %v1483, %v1482
    %1500 = vmatprep.subr.bf16.mxu0 0
    %1501 = vmatpush1.bf16.msra.mxu0 %v1484
    %1502 = vmatprep.subr.bf16.mxu0 0
    %1503 = vmatpush1.bf16.msra.mxu0 %v1485
    %1504 = vmatprep.subr.bf16.mxu0 0
    %1505 = vmatpush1.bf16.msra.mxu0 %v1486
    %1506 = vmatprep.subr.bf16.mxu0 0
    %1507 = vmatpush1.bf16.msra.mxu0 %v1487
    %1508 = vmatprep.subr.bf16.mxu0 0
    %1509 = vmatpush1.bf16.msra.mxu0 %v1488
    %1510 = vmatprep.subr.bf16.mxu0 0
    %1511 = vmatpush1.bf16.msra.mxu0 %v1489
    %1512 = vmatprep.subr.bf16.mxu0 0
    %1513 = vmatpush1.bf16.msra.mxu0 %v1490
    %1514 = vmatprep.subr.bf16.mxu0 0
    %1515 = vmatpush1.bf16.msra.mxu0 %v1491
    %1516 = vmatprep.subr.bf16.mxu0 0
    %1517 = vmatpush1.bf16.msra.mxu0 0
    %1518 = vmatprep.subr.bf16.mxu0 0
    %1519 = vmatpush1.bf16.msra.mxu0 0
    %1520 = vmatprep.subr.bf16.mxu0 0
    %1521 = vmatpush1.bf16.msra.mxu0 0
    %1522 = vmatprep.subr.bf16.mxu0 0
    %1523 = vmatpush1.bf16.msra.mxu0 0
    %1524 = vmatprep.subr.bf16.mxu0 0
    %1525 = vmatpush1.bf16.msra.mxu0 0
    %1526 = vmatprep.subr.bf16.mxu0 0
    %1527 = vmatpush1.bf16.msra.mxu0 0
    %1528 = vmatprep.subr.bf16.mxu0 0
    %1529 = vmatpush1.bf16.msra.mxu0 0
    %1530 = vmatprep.subr.bf16.mxu0 0
    %1531 = vmatpush1.bf16.msra.mxu0 0
    %1532 = vmatprep.mubr.bf16.mxu0 0
    %1533 = vmatmul.mubr.bf16.gmra.mrb[0].mxu0 %v1435
    %v1534 = vpop.f32.mrb[0].mxu0
    %v1535 = vadd.f32 0.0, %v1534
    %v1536 = vpop.f32.mrb[0].mxu0
    %v1537 = vpop.f32.mrb[0].mxu0
    %v1538 = vadd.f32 0.0, %v1537
    %v1539 = vpop.f32.mrb[0].mxu0
    %1540 = vdwg.mxu0
    %v1557 = vunpack.c.l.b16 %v1406
    %v1558 = vunpack.c.l.b16 %v1407
    %v1559 = vunpack.c.l.b16 %v1408
    %v1560 = vunpack.c.l.b16 %v1409
    %v1561 = vunpack.c.l.b16 %v1410
    %v1562 = vunpack.c.l.b16 %v1411
    %v1563 = vunpack.c.l.b16 %v1412
    %v1564 = vunpack.c.l.b16 %v1413
    %v1565 = vunpack.c.l.b16 %v1414
    %v1566 = vunpack.c.l.b16 %v1415
    %v1567 = vunpack.c.l.b16 %v1416
    %v1568 = vunpack.c.l.b16 %v1417
    %v1569 = vunpack.c.l.b16 %v1418
    %v1570 = vunpack.c.l.b16 %v1419
    %v1571 = vunpack.c.l.b16 %v1420
    %v1572 = vunpack.c.l.b16 %v1421
    %v1573 = vpack.c.b16 %v1558, %v1557
    %v1574 = vpack.c.b16 %v1560, %v1559
    %v1575 = vpack.c.b16 %v1562, %v1561
    %v1576 = vpack.c.b16 %v1564, %v1563
    %v1577 = vpack.c.b16 %v1566, %v1565
    %v1578 = vpack.c.b16 %v1568, %v1567
    %v1579 = vpack.c.b16 %v1570, %v1569
    %v1580 = vpack.c.b16 %v1572, %v1571
    %1589 = vmatprep.subr.bf16.mxu0 0
    %1590 = vmatpush1.bf16.msra.mxu0 %v1573
    %1591 = vmatprep.subr.bf16.mxu0 0
    %1592 = vmatpush1.bf16.msra.mxu0 %v1574
    %1593 = vmatprep.subr.bf16.mxu0 0
    %1594 = vmatpush1.bf16.msra.mxu0 %v1575
    %1595 = vmatprep.subr.bf16.mxu0 0
    %1596 = vmatpush1.bf16.msra.mxu0 %v1576
    %1597 = vmatprep.subr.bf16.mxu0 0
    %1598 = vmatpush1.bf16.msra.mxu0 %v1577
    %1599 = vmatprep.subr.bf16.mxu0 0
    %1600 = vmatpush1.bf16.msra.mxu0 %v1578
    %1601 = vmatprep.subr.bf16.mxu0 0
    %1602 = vmatpush1.bf16.msra.mxu0 %v1579
    %1603 = vmatprep.subr.bf16.mxu0 0
    %1604 = vmatpush1.bf16.msra.mxu0 %v1580
    %1605 = vmatprep.subr.bf16.mxu0 0
    %1606 = vmatpush1.bf16.msra.mxu0 0
    %1607 = vmatprep.subr.bf16.mxu0 0
    %1608 = vmatpush1.bf16.msra.mxu0 0
    %1609 = vmatprep.subr.bf16.mxu0 0
    %1610 = vmatpush1.bf16.msra.mxu0 0
    %1611 = vmatprep.subr.bf16.mxu0 0
    %1612 = vmatpush1.bf16.msra.mxu0 0
    %1613 = vmatprep.subr.bf16.mxu0 0
    %1614 = vmatpush1.bf16.msra.mxu0 0
    %1615 = vmatprep.subr.bf16.mxu0 0
    %1616 = vmatpush1.bf16.msra.mxu0 0
    %1617 = vmatprep.subr.bf16.mxu0 0
    %1618 = vmatpush1.bf16.msra.mxu0 0
    %1619 = vmatprep.subr.bf16.mxu0 0
    %1620 = vmatpush1.bf16.msra.mxu0 0
    %1621 = vmatprep.mubr.bf16.mxu0 0
    %1622 = vmatmul.mubr.bf16.gmra.mrb[0].mxu0 %v1405
    %v1623 = vpop.f32.mrb[0].mxu0
    %v1624 = vadd.f32 %v1535, %v1623
    %v1625 = vpop.f32.mrb[0].mxu0
    %v1626 = vpop.f32.mrb[0].mxu0
    %v1627 = vadd.f32 %v1538, %v1626
    %v1628 = vpop.f32.mrb[0].mxu0
    %1629 = vdwg.mxu0
    %vm1630 = vcmask 1045504
    %v1631 = vrot.slane %v1401, 2
    %v1632 = vrot.slane %v1403, 2
    %v1633 = vsel %vm1630, %v1631, %v1632
    %v1634 = vrot.slane %v1402, 2
    %v1635 = vrot.slane %v1404, 2
    %v1636 = vsel %vm1630, %v1634, %v1635
    %v1639 = vpack.c.bf16 %v1636, %v1633
    %v1640 = vld [vmem:[#allocation6 + $0x80] sm:$0xf]
    %v1641 = vld [vmem:[#allocation6 + $0x84] sm:$0xf]
    %v1642 = vld [vmem:[#allocation6 + $0x88] sm:$0xf]
    %v1643 = vld [vmem:[#allocation6 + $0x8c] sm:$0xf]
    %v1644 = vld [vmem:[#allocation6 + $0x90] sm:$0xf]
    %v1645 = vld [vmem:[#allocation6 + $0x94] sm:$0xf]
    %v1646 = vld [vmem:[#allocation6 + $0x98] sm:$0xf]
    %v1647 = vld [vmem:[#allocation6 + $0x9c] sm:$0xf]
    %v1648 = vld [vmem:[#allocation6 + $0xa0] sm:$0xf]
    %v1649 = vld [vmem:[#allocation6 + $0xa4] sm:$0xf]
    %v1650 = vld [vmem:[#allocation6 + $0xa8] sm:$0xf]
    %v1651 = vld [vmem:[#allocation6 + $0xac] sm:$0xf]
    %v1652 = vld [vmem:[#allocation6 + $0xb0] sm:$0xf]
    %v1653 = vld [vmem:[#allocation6 + $0xb4] sm:$0xf]
    %v1654 = vld [vmem:[#allocation6 + $0xb8] sm:$0xf]
    %v1655 = vld [vmem:[#allocation6 + $0xbc] sm:$0xf]
    %v1672 = vunpack.c.l.b16 %v1640
    %v1673 = vunpack.c.l.b16 %v1641
    %v1674 = vunpack.c.l.b16 %v1642
    %v1675 = vunpack.c.l.b16 %v1643
    %v1676 = vunpack.c.l.b16 %v1644
    %v1677 = vunpack.c.l.b16 %v1645
    %v1678 = vunpack.c.l.b16 %v1646
    %v1679 = vunpack.c.l.b16 %v1647
    %v1680 = vunpack.c.l.b16 %v1648
    %v1681 = vunpack.c.l.b16 %v1649
    %v1682 = vunpack.c.l.b16 %v1650
    %v1683 = vunpack.c.l.b16 %v1651
    %v1684 = vunpack.c.l.b16 %v1652
    %v1685 = vunpack.c.l.b16 %v1653
    %v1686 = vunpack.c.l.b16 %v1654
    %v1687 = vunpack.c.l.b16 %v1655
    %v1688 = vpack.c.b16 %v1673, %v1672
    %v1689 = vpack.c.b16 %v1675, %v1674
    %v1690 = vpack.c.b16 %v1677, %v1676
    %v1691 = vpack.c.b16 %v1679, %v1678
    %v1692 = vpack.c.b16 %v1681, %v1680
    %v1693 = vpack.c.b16 %v1683, %v1682
    %v1694 = vpack.c.b16 %v1685, %v1684
    %v1695 = vpack.c.b16 %v1687, %v1686
    %1704 = vmatprep.subr.bf16.mxu0 0
    %1705 = vmatpush1.bf16.msra.mxu0 %v1688
    %1706 = vmatprep.subr.bf16.mxu0 0
    %1707 = vmatpush1.bf16.msra.mxu0 %v1689
    %1708 = vmatprep.subr.bf16.mxu0 0
    %1709 = vmatpush1.bf16.msra.mxu0 %v1690
    %1710 = vmatprep.subr.bf16.mxu0 0
    %1711 = vmatpush1.bf16.msra.mxu0 %v1691
    %1712 = vmatprep.subr.bf16.mxu0 0
    %1713 = vmatpush1.bf16.msra.mxu0 %v1692
    %1714 = vmatprep.subr.bf16.mxu0 0
    %1715 = vmatpush1.bf16.msra.mxu0 %v1693
    %1716 = vmatprep.subr.bf16.mxu0 0
    %1717 = vmatpush1.bf16.msra.mxu0 %v1694
    %1718 = vmatprep.subr.bf16.mxu0 0
    %1719 = vmatpush1.bf16.msra.mxu0 %v1695
    %1720 = vmatprep.subr.bf16.mxu0 0
    %1721 = vmatpush1.bf16.msra.mxu0 0
    %1722 = vmatprep.subr.bf16.mxu0 0
    %1723 = vmatpush1.bf16.msra.mxu0 0
    %1724 = vmatprep.subr.bf16.mxu0 0
    %1725 = vmatpush1.bf16.msra.mxu0 0
    %1726 = vmatprep.subr.bf16.mxu0 0
    %1727 = vmatpush1.bf16.msra.mxu0 0
    %1728 = vmatprep.subr.bf16.mxu0 0
    %1729 = vmatpush1.bf16.msra.mxu0 0
    %1730 = vmatprep.subr.bf16.mxu0 0
    %1731 = vmatpush1.bf16.msra.mxu0 0
    %1732 = vmatprep.subr.bf16.mxu0 0
    %1733 = vmatpush1.bf16.msra.mxu0 0
    %1734 = vmatprep.subr.bf16.mxu0 0
    %1735 = vmatpush1.bf16.msra.mxu0 0
    %1736 = vmatprep.mubr.bf16.mxu0 0
    %1737 = vmatmul.mubr.bf16.gmra.mrb[0].mxu0 %v1639
    %v1738 = vpop.f32.mrb[0].mxu0
    %v1739 = vadd.f32 0.0, %v1738
    %v1740 = vpop.f32.mrb[0].mxu0
    %v1741 = vpop.f32.mrb[0].mxu0
    %v1742 = vadd.f32 0.0, %v1741
    %v1743 = vpop.f32.mrb[0].mxu0
    %1744 = vdwg.mxu0
    %v1745 = vadd.f32 %v1624, %v1739
    %v1746 = vadd.f32 %v1627, %v1742
    %v1747 = vld [vmem:[%s5 + $0x1] sm:$0x1]
    %v1748 = vlaneseq
    %v1749 = vshrl.u32 %v1748, 7
    %v1750 = vsub.s32 0, %v1749
    %v1751 = vrot.slane %v1747, %v1750
    %v1752 = vadd.f32 %v1745, %v1751
    %v1753 = vadd.f32 %v1746, %v1751
    %v1754 = vmax.f32 %v1752, 0.0
    %v1755 = vmax.f32 %v1753, 0.0
    %v1756 = vadd.f32 %v1754, %v1755
    %v1757 = vrot.slane %v1756, 4
    %v1758 = vadd.f32 %v1756, %v1757
    %v1759 = vrot.slane %v1758, 2
    %v1760 = vadd.f32 %v1758, %v1759
    %v1761 = vrot.slane %v1760, 1
    %v1762 = vadd.f32 %v1760, %v1761
    %v1763 = vmul.f32 %v1754, %v1754
    %v1764 = vmul.f32 %v1755, %v1755
    %v1765 = vadd.f32 %v1763, %v1764
    %v1766 = vrot.slane %v1765, 4
    %v1767 = vadd.f32 %v1765, %v1766
    %v1768 = vrot.slane %v1767, 2
    %v1769 = vadd.f32 %v1767, %v1768
    %v1770 = vrot.slane %v1769, 1
    %v1771 = vadd.f32 %v1769, %v1770
    %v1772 = vsel %vm134, %v1762, %v1771
    %1773 = vmatprep.subr.mxu0 0.0
    %v1774 = vand.u32 %v701, 4294901760
    %1775 = vmatpush1.msra.mxu0 %v1774
    %1776 = vmatprep.subr.mxu0 0.0
    %v1777 = vand.u32 %v702, 4294901760
    %1778 = vmatpush1.msra.mxu0 %v1777
    %1779 = vmatprep.subr.mxu0 0.0
    %v1780 = vand.u32 %v703, 4294901760
    %1781 = vmatpush1.msra.mxu0 %v1780
    %1782 = vmatprep.subr.mxu0 0.0
    %v1783 = vand.u32 %v704, 4294901760
    %1784 = vmatpush1.msra.mxu0 %v1783
    %1785 = vmatprep.subr.mxu0 0.0
    %v1786 = vand.u32 %v705, 4294901760
    %1787 = vmatpush1.msra.mxu0 %v1786
    %1788 = vmatprep.subr.mxu0 0.0
    %v1789 = vand.u32 %v706, 4294901760
    %1790 = vmatpush1.msra.mxu0 %v1789
    %1791 = vmatprep.subr.mxu0 0.0
    %v1792 = vand.u32 %v707, 4294901760
    %1793 = vmatpush1.msra.mxu0 %v1792
    %1794 = vmatprep.subr.mxu0 0.0
    %v1795 = vand.u32 %v708, 4294901760
    %1796 = vmatpush1.msra.mxu0 %v1795
    %1797 = vmatprep.subr.mxu0 0.0
    %v1798 = vand.u32 %v709, 4294901760
    %1799 = vmatpush1.msra.mxu0 %v1798
    %1800 = vmatprep.subr.mxu0 0.0
    %v1801 = vand.u32 %v710, 4294901760
    %1802 = vmatpush1.msra.mxu0 %v1801
    %1803 = vmatprep.subr.mxu0 0.0
    %v1804 = vand.u32 %v711, 4294901760
    %1805 = vmatpush1.msra.mxu0 %v1804
    %1806 = vmatprep.subr.mxu0 0.0
    %v1807 = vand.u32 %v712, 4294901760
    %1808 = vmatpush1.msra.mxu0 %v1807
    %1809 = vmatprep.subr.mxu0 0.0
    %v1810 = vand.u32 %v713, 4294901760
    %1811 = vmatpush1.msra.mxu0 %v1810
    %1812 = vmatprep.subr.mxu0 0.0
    %v1813 = vand.u32 %v714, 4294901760
    %1814 = vmatpush1.msra.mxu0 %v1813
    %1815 = vmatprep.subr.mxu0 0.0
    %v1816 = vand.u32 %v715, 4294901760
    %1817 = vmatpush1.msra.mxu0 %v1816
    %1818 = vmatprep.subr.mxu0 0.0
    %v1819 = vand.u32 %v716, 4294901760
    %1820 = vmatpush1.msra.mxu0 %v1819
    %1821 = vmatprep.subr.mxu0 0.0
    %1822 = vmatpush1.msra.mxu0 0.0
    %1823 = vmatprep.subr.mxu0 0.0
    %1824 = vmatpush1.msra.mxu0 0.0
    %1825 = vmatprep.subr.mxu0 0.0
    %1826 = vmatpush1.msra.mxu0 0.0
    %1827 = vmatprep.subr.mxu0 0.0
    %1828 = vmatpush1.msra.mxu0 0.0
    %1829 = vmatprep.subr.mxu0 0.0
    %1830 = vmatpush1.msra.mxu0 0.0
    %1831 = vmatprep.subr.mxu0 0.0
    %1832 = vmatpush1.msra.mxu0 0.0
    %1833 = vmatprep.subr.mxu0 0.0
    %1834 = vmatpush1.msra.mxu0 0.0
    %1835 = vmatprep.subr.mxu0 0.0
    %1836 = vmatpush1.msra.mxu0 0.0
    %1837 = vmatprep.subr.mxu0 0.0
    %1838 = vmatpush1.msra.mxu0 0.0
    %1839 = vmatprep.subr.mxu0 0.0
    %1840 = vmatpush1.msra.mxu0 0.0
    %1841 = vmatprep.subr.mxu0 0.0
    %1842 = vmatpush1.msra.mxu0 0.0
    %1843 = vmatprep.subr.mxu0 0.0
    %1844 = vmatpush1.msra.mxu0 0.0
    %1845 = vmatprep.subr.mxu0 0.0
    %1846 = vmatpush1.msra.mxu0 0.0
    %1847 = vmatprep.subr.mxu0 0.0
    %1848 = vmatpush1.msra.mxu0 0.0
    %1849 = vmatprep.subr.mxu0 0.0
    %1850 = vmatpush1.msra.mxu0 0.0
    %1851 = vmatprep.subr.mxu0 0.0
    %1852 = vmatpush1.msra.mxu0 0.0
    %1853 = vmatprep.mubr.f32.mxu0 0.0
    %v1854 = vand.u32 %v1772, 4294901760
    %v1855 = vsub.f32 %v1772, %v1854
    %v1856 = vand.u32 %v1855, 4294901760
    %v1857 = vsub.f32 %v1855, %v1856
    %v1858 = vand.u32 %v1857, 4294901760
    %1859 = vmatmul.mubr.f32.gmra.mrb[0].mxu0 %v1858
    %v1860 = vpop.f32.mrb[0].mxu0
    %v1861 = vadd.f32 0.0, %v1860
    %v1862 = vpop.f32.mrb[0].mxu0
    %1863 = vdwg.mxu0
    %1864 = vmatprep.subr.mxu0 0.0
    %v1865 = vand.u32 %v701, 4294901760
    %v1866 = vsub.f32 %v701, %v1865
    %v1867 = vand.u32 %v1866, 4294901760
    %v1868 = vsub.f32 %v1866, %v1867
    %v1869 = vand.u32 %v1868, 4294901760
    %1870 = vmatpush1.msra.mxu0 %v1869
    %1871 = vmatprep.subr.mxu0 0.0
    %v1872 = vand.u32 %v702, 4294901760
    %v1873 = vsub.f32 %v702, %v1872
    %v1874 = vand.u32 %v1873, 4294901760
    %v1875 = vsub.f32 %v1873, %v1874
    %v1876 = vand.u32 %v1875, 4294901760
    %1877 = vmatpush1.msra.mxu0 %v1876
    %1878 = vmatprep.subr.mxu0 0.0
    %v1879 = vand.u32 %v703, 4294901760
    %v1880 = vsub.f32 %v703, %v1879
    %v1881 = vand.u32 %v1880, 4294901760
    %v1882 = vsub.f32 %v1880, %v1881
    %v1883 = vand.u32 %v1882, 4294901760
    %1884 = vmatpush1.msra.mxu0 %v1883
    %1885 = vmatprep.subr.mxu0 0.0
    %v1886 = vand.u32 %v704, 4294901760
    %v1887 = vsub.f32 %v704, %v1886
    %v1888 = vand.u32 %v1887, 4294901760
    %v1889 = vsub.f32 %v1887, %v1888
    %v1890 = vand.u32 %v1889, 4294901760
    %1891 = vmatpush1.msra.mxu0 %v1890
    %1892 = vmatprep.subr.mxu0 0.0
    %v1893 = vand.u32 %v705, 4294901760
    %v1894 = vsub.f32 %v705, %v1893
    %v1895 = vand.u32 %v1894, 4294901760
    %v1896 = vsub.f32 %v1894, %v1895
    %v1897 = vand.u32 %v1896, 4294901760
    %1898 = vmatpush1.msra.mxu0 %v1897
    %1899 = vmatprep.subr.mxu0 0.0
    %v1900 = vand.u32 %v706, 4294901760
    %v1901 = vsub.f32 %v706, %v1900
    %v1902 = vand.u32 %v1901, 4294901760
    %v1903 = vsub.f32 %v1901, %v1902
    %v1904 = vand.u32 %v1903, 4294901760
    %1905 = vmatpush1.msra.mxu0 %v1904
    %1906 = vmatprep.subr.mxu0 0.0
    %v1907 = vand.u32 %v707, 4294901760
    %v1908 = vsub.f32 %v707, %v1907
    %v1909 = vand.u32 %v1908, 4294901760
    %v1910 = vsub.f32 %v1908, %v1909
    %v1911 = vand.u32 %v1910, 4294901760
    %1912 = vmatpush1.msra.mxu0 %v1911
    %1913 = vmatprep.subr.mxu0 0.0
    %v1914 = vand.u32 %v708, 4294901760
    %v1915 = vsub.f32 %v708, %v1914
    %v1916 = vand.u32 %v1915, 4294901760
    %v1917 = vsub.f32 %v1915, %v1916
    %v1918 = vand.u32 %v1917, 4294901760
    %1919 = vmatpush1.msra.mxu0 %v1918
    %1920 = vmatprep.subr.mxu0 0.0
    %v1921 = vand.u32 %v709, 4294901760
    %v1922 = vsub.f32 %v709, %v1921
    %v1923 = vand.u32 %v1922, 4294901760
    %v1924 = vsub.f32 %v1922, %v1923
    %v1925 = vand.u32 %v1924, 4294901760
    %1926 = vmatpush1.msra.mxu0 %v1925
    %1927 = vmatprep.subr.mxu0 0.0
    %v1928 = vand.u32 %v710, 4294901760
    %v1929 = vsub.f32 %v710, %v1928
    %v1930 = vand.u32 %v1929, 4294901760
    %v1931 = vsub.f32 %v1929, %v1930
    %v1932 = vand.u32 %v1931, 4294901760
    %1933 = vmatpush1.msra.mxu0 %v1932
    %1934 = vmatprep.subr.mxu0 0.0
    %v1935 = vand.u32 %v711, 4294901760
    %v1936 = vsub.f32 %v711, %v1935
    %v1937 = vand.u32 %v1936, 4294901760
    %v1938 = vsub.f32 %v1936, %v1937
    %v1939 = vand.u32 %v1938, 4294901760
    %1940 = vmatpush1.msra.mxu0 %v1939
    %1941 = vmatprep.subr.mxu0 0.0
    %v1942 = vand.u32 %v712, 4294901760
    %v1943 = vsub.f32 %v712, %v1942
    %v1944 = vand.u32 %v1943, 4294901760
    %v1945 = vsub.f32 %v1943, %v1944
    %v1946 = vand.u32 %v1945, 4294901760
    %1947 = vmatpush1.msra.mxu0 %v1946
    %1948 = vmatprep.subr.mxu0 0.0
    %v1949 = vand.u32 %v713, 4294901760
    %v1950 = vsub.f32 %v713, %v1949
    %v1951 = vand.u32 %v1950, 4294901760
    %v1952 = vsub.f32 %v1950, %v1951
    %v1953 = vand.u32 %v1952, 4294901760
    %1954 = vmatpush1.msra.mxu0 %v1953
    %1955 = vmatprep.subr.mxu0 0.0
    %v1956 = vand.u32 %v714, 4294901760
    %v1957 = vsub.f32 %v714, %v1956
    %v1958 = vand.u32 %v1957, 4294901760
    %v1959 = vsub.f32 %v1957, %v1958
    %v1960 = vand.u32 %v1959, 4294901760
    %1961 = vmatpush1.msra.mxu0 %v1960
    %1962 = vmatprep.subr.mxu0 0.0
    %v1963 = vand.u32 %v715, 4294901760
    %v1964 = vsub.f32 %v715, %v1963
    %v1965 = vand.u32 %v1964, 4294901760
    %v1966 = vsub.f32 %v1964, %v1965
    %v1967 = vand.u32 %v1966, 4294901760
    %1968 = vmatpush1.msra.mxu0 %v1967
    %1969 = vmatprep.subr.mxu0 0.0
    %v1970 = vand.u32 %v716, 4294901760
    %v1971 = vsub.f32 %v716, %v1970
    %v1972 = vand.u32 %v1971, 4294901760
    %v1973 = vsub.f32 %v1971, %v1972
    %v1974 = vand.u32 %v1973, 4294901760
    %1975 = vmatpush1.msra.mxu0 %v1974
    %1976 = vmatprep.subr.mxu0 0.0
    %1977 = vmatpush1.msra.mxu0 0.0
    %1978 = vmatprep.subr.mxu0 0.0
    %1979 = vmatpush1.msra.mxu0 0.0
    %1980 = vmatprep.subr.mxu0 0.0
    %1981 = vmatpush1.msra.mxu0 0.0
    %1982 = vmatprep.subr.mxu0 0.0
    %1983 = vmatpush1.msra.mxu0 0.0
    %1984 = vmatprep.subr.mxu0 0.0
    %1985 = vmatpush1.msra.mxu0 0.0
    %1986 = vmatprep.subr.mxu0 0.0
    %1987 = vmatpush1.msra.mxu0 0.0
    %1988 = vmatprep.subr.mxu0 0.0
    %1989 = vmatpush1.msra.mxu0 0.0
    %1990 = vmatprep.subr.mxu0 0.0
    %1991 = vmatpush1.msra.mxu0 0.0
    %1992 = vmatprep.subr.mxu0 0.0
    %1993 = vmatpush1.msra.mxu0 0.0
    %1994 = vmatprep.subr.mxu0 0.0
    %1995 = vmatpush1.msra.mxu0 0.0
    %1996 = vmatprep.subr.mxu0 0.0
    %1997 = vmatpush1.msra.mxu0 0.0
    %1998 = vmatprep.subr.mxu0 0.0
    %1999 = vmatpush1.msra.mxu0 0.0
    %2000 = vmatprep.subr.mxu0 0.0
    %2001 = vmatpush1.msra.mxu0 0.0
    %2002 = vmatprep.subr.mxu0 0.0
    %2003 = vmatpush1.msra.mxu0 0.0
    %2004 = vmatprep.subr.mxu0 0.0
    %2005 = vmatpush1.msra.mxu0 0.0
    %2006 = vmatprep.subr.mxu0 0.0
    %2007 = vmatpush1.msra.mxu0 0.0
    %2008 = vmatprep.mubr.f32.mxu0 0.0
    %v2009 = vand.u32 %v1772, 4294901760
    %2010 = vmatmul.mubr.f32.gmra.mrb[0].mxu0 %v2009
    %v2011 = vpop.f32.mrb[0].mxu0
    %v2012 = vadd.f32 %v1861, %v2011
    %v2013 = vpop.f32.mrb[0].mxu0
    %2014 = vdwg.mxu0
    %2015 = vmatprep.subr.mxu0 0.0
    %v2016 = vand.u32 %v701, 4294901760
    %v2017 = vsub.f32 %v701, %v2016
    %2018 = vmatpush1.msra.mxu0 %v2017
    %2019 = vmatprep.subr.mxu0 0.0
    %v2020 = vand.u32 %v702, 4294901760
    %v2021 = vsub.f32 %v702, %v2020
    %2022 = vmatpush1.msra.mxu0 %v2021
    %2023 = vmatprep.subr.mxu0 0.0
    %v2024 = vand.u32 %v703, 4294901760
    %v2025 = vsub.f32 %v703, %v2024
    %2026 = vmatpush1.msra.mxu0 %v2025
    %2027 = vmatprep.subr.mxu0 0.0
    %v2028 = vand.u32 %v704, 4294901760
    %v2029 = vsub.f32 %v704, %v2028
    %2030 = vmatpush1.msra.mxu0 %v2029
    %2031 = vmatprep.subr.mxu0 0.0
    %v2032 = vand.u32 %v705, 4294901760
    %v2033 = vsub.f32 %v705, %v2032
    %2034 = vmatpush1.msra.mxu0 %v2033
    %2035 = vmatprep.subr.mxu0 0.0
    %v2036 = vand.u32 %v706, 4294901760
    %v2037 = vsub.f32 %v706, %v2036
    %2038 = vmatpush1.msra.mxu0 %v2037
    %2039 = vmatprep.subr.mxu0 0.0
    %v2040 = vand.u32 %v707, 4294901760
    %v2041 = vsub.f32 %v707, %v2040
    %2042 = vmatpush1.msra.mxu0 %v2041
    %2043 = vmatprep.subr.mxu0 0.0
    %v2044 = vand.u32 %v708, 4294901760
    %v2045 = vsub.f32 %v708, %v2044
    %2046 = vmatpush1.msra.mxu0 %v2045
    %2047 = vmatprep.subr.mxu0 0.0
    %v2048 = vand.u32 %v709, 4294901760
    %v2049 = vsub.f32 %v709, %v2048
    %2050 = vmatpush1.msra.mxu0 %v2049
    %2051 = vmatprep.subr.mxu0 0.0
    %v2052 = vand.u32 %v710, 4294901760
    %v2053 = vsub.f32 %v710, %v2052
    %2054 = vmatpush1.msra.mxu0 %v2053
    %2055 = vmatprep.subr.mxu0 0.0
    %v2056 = vand.u32 %v711, 4294901760
    %v2057 = vsub.f32 %v711, %v2056
    %2058 = vmatpush1.msra.mxu0 %v2057
    %2059 = vmatprep.subr.mxu0 0.0
    %v2060 = vand.u32 %v712, 4294901760
    %v2061 = vsub.f32 %v712, %v2060
    %2062 = vmatpush1.msra.mxu0 %v2061
    %2063 = vmatprep.subr.mxu0 0.0
    %v2064 = vand.u32 %v713, 4294901760
    %v2065 = vsub.f32 %v713, %v2064
    %2066 = vmatpush1.msra.mxu0 %v2065
    %2067 = vmatprep.subr.mxu0 0.0
    %v2068 = vand.u32 %v714, 4294901760
    %v2069 = vsub.f32 %v714, %v2068
    %2070 = vmatpush1.msra.mxu0 %v2069
    %2071 = vmatprep.subr.mxu0 0.0
    %v2072 = vand.u32 %v715, 4294901760
    %v2073 = vsub.f32 %v715, %v2072
    %2074 = vmatpush1.msra.mxu0 %v2073
    %2075 = vmatprep.subr.mxu0 0.0
    %v2076 = vand.u32 %v716, 4294901760
    %v2077 = vsub.f32 %v716, %v2076
    %2078 = vmatpush1.msra.mxu0 %v2077
    %2079 = vmatprep.subr.mxu0 0.0
    %2080 = vmatpush1.msra.mxu0 0.0
    %2081 = vmatprep.subr.mxu0 0.0
    %2082 = vmatpush1.msra.mxu0 0.0
    %2083 = vmatprep.subr.mxu0 0.0
    %2084 = vmatpush1.msra.mxu0 0.0
    %2085 = vmatprep.subr.mxu0 0.0
    %2086 = vmatpush1.msra.mxu0 0.0
    %2087 = vmatprep.subr.mxu0 0.0
    %2088 = vmatpush1.msra.mxu0 0.0
    %2089 = vmatprep.subr.mxu0 0.0
    %2090 = vmatpush1.msra.mxu0 0.0
    %2091 = vmatprep.subr.mxu0 0.0
    %2092 = vmatpush1.msra.mxu0 0.0
    %2093 = vmatprep.subr.mxu0 0.0
    %2094 = vmatpush1.msra.mxu0 0.0
    %2095 = vmatprep.subr.mxu0 0.0
    %2096 = vmatpush1.msra.mxu0 0.0
    %2097 = vmatprep.subr.mxu0 0.0
    %2098 = vmatpush1.msra.mxu0 0.0
    %2099 = vmatprep.subr.mxu0 0.0
    %2100 = vmatpush1.msra.mxu0 0.0
    %2101 = vmatprep.subr.mxu0 0.0
    %2102 = vmatpush1.msra.mxu0 0.0
    %2103 = vmatprep.subr.mxu0 0.0
    %2104 = vmatpush1.msra.mxu0 0.0
    %2105 = vmatprep.subr.mxu0 0.0
    %2106 = vmatpush1.msra.mxu0 0.0
    %2107 = vmatprep.subr.mxu0 0.0
    %2108 = vmatpush1.msra.mxu0 0.0
    %2109 = vmatprep.subr.mxu0 0.0
    %2110 = vmatpush1.msra.mxu0 0.0
    %2111 = vmatprep.mubr.f32.mxu0 0.0
    %v2112 = vand.u32 %v1772, 4294901760
    %v2113 = vsub.f32 %v1772, %v2112
    %2114 = vmatmul.mubr.f32.gmra.mrb[0].mxu0 %v2113
    %v2115 = vpop.f32.mrb[0].mxu0
    %v2116 = vadd.f32 %v2012, %v2115
    %v2117 = vpop.f32.mrb[0].mxu0
    %2118 = vdwg.mxu0
    %2119 = vmatprep.subr.mxu0 0.0
    %v2120 = vand.u32 %v701, 4294901760
    %2121 = vmatpush1.msra.mxu0 %v2120
    %2122 = vmatprep.subr.mxu0 0.0
    %v2123 = vand.u32 %v702, 4294901760
    %2124 = vmatpush1.msra.mxu0 %v2123
    %2125 = vmatprep.subr.mxu0 0.0
    %v2126 = vand.u32 %v703, 4294901760
    %2127 = vmatpush1.msra.mxu0 %v2126
    %2128 = vmatprep.subr.mxu0 0.0
    %v2129 = vand.u32 %v704, 4294901760
    %2130 = vmatpush1.msra.mxu0 %v2129
    %2131 = vmatprep.subr.mxu0 0.0
    %v2132 = vand.u32 %v705, 4294901760
    %2133 = vmatpush1.msra.mxu0 %v2132
    %2134 = vmatprep.subr.mxu0 0.0
    %v2135 = vand.u32 %v706, 4294901760
    %2136 = vmatpush1.msra.mxu0 %v2135
    %2137 = vmatprep.subr.mxu0 0.0
    %v2138 = vand.u32 %v707, 4294901760
    %2139 = vmatpush1.msra.mxu0 %v2138
    %2140 = vmatprep.subr.mxu0 0.0
    %v2141 = vand.u32 %v708, 4294901760
    %2142 = vmatpush1.msra.mxu0 %v2141
    %2143 = vmatprep.subr.mxu0 0.0
    %v2144 = vand.u32 %v709, 4294901760
    %2145 = vmatpush1.msra.mxu0 %v2144
    %2146 = vmatprep.subr.mxu0 0.0
    %v2147 = vand.u32 %v710, 4294901760
    %2148 = vmatpush1.msra.mxu0 %v2147
    %2149 = vmatprep.subr.mxu0 0.0
    %v2150 = vand.u32 %v711, 4294901760
    %2151 = vmatpush1.msra.mxu0 %v2150
    %2152 = vmatprep.subr.mxu0 0.0
    %v2153 = vand.u32 %v712, 4294901760
    %2154 = vmatpush1.msra.mxu0 %v2153
    %2155 = vmatprep.subr.mxu0 0.0
    %v2156 = vand.u32 %v713, 4294901760
    %2157 = vmatpush1.msra.mxu0 %v2156
    %2158 = vmatprep.subr.mxu0 0.0
    %v2159 = vand.u32 %v714, 4294901760
    %2160 = vmatpush1.msra.mxu0 %v2159
    %2161 = vmatprep.subr.mxu0 0.0
    %v2162 = vand.u32 %v715, 4294901760
    %2163 = vmatpush1.msra.mxu0 %v2162
    %2164 = vmatprep.subr.mxu0 0.0
    %v2165 = vand.u32 %v716, 4294901760
    %2166 = vmatpush1.msra.mxu0 %v2165
    %2167 = vmatprep.subr.mxu0 0.0
    %2168 = vmatpush1.msra.mxu0 0.0
    %2169 = vmatprep.subr.mxu0 0.0
    %2170 = vmatpush1.msra.mxu0 0.0
    %2171 = vmatprep.subr.mxu0 0.0
    %2172 = vmatpush1.msra.mxu0 0.0
    %2173 = vmatprep.subr.mxu0 0.0
    %2174 = vmatpush1.msra.mxu0 0.0
    %2175 = vmatprep.subr.mxu0 0.0
    %2176 = vmatpush1.msra.mxu0 0.0
    %2177 = vmatprep.subr.mxu0 0.0
    %2178 = vmatpush1.msra.mxu0 0.0
    %2179 = vmatprep.subr.mxu0 0.0
    %2180 = vmatpush1.msra.mxu0 0.0
    %2181 = vmatprep.subr.mxu0 0.0
    %2182 = vmatpush1.msra.mxu0 0.0
    %2183 = vmatprep.subr.mxu0 0.0
    %2184 = vmatpush1.msra.mxu0 0.0
    %2185 = vmatprep.subr.mxu0 0.0
    %2186 = vmatpush1.msra.mxu0 0.0
    %2187 = vmatprep.subr.mxu0 0.0
    %2188 = vmatpush1.msra.mxu0 0.0
    %2189 = vmatprep.subr.mxu0 0.0
    %2190 = vmatpush1.msra.mxu0 0.0
    %2191 = vmatprep.subr.mxu0 0.0
    %2192 = vmatpush1.msra.mxu0 0.0
    %2193 = vmatprep.subr.mxu0 0.0
    %2194 = vmatpush1.msra.mxu0 0.0
    %2195 = vmatprep.subr.mxu0 0.0
    %2196 = vmatpush1.msra.mxu0 0.0
    %2197 = vmatprep.subr.mxu0 0.0
    %2198 = vmatpush1.msra.mxu0 0.0
    %2199 = vmatprep.mubr.f32.mxu0 0.0
    %v2200 = vand.u32 %v1772, 4294901760
    %v2201 = vsub.f32 %v1772, %v2200
    %v2202 = vand.u32 %v2201, 4294901760
    %2203 = vmatmul.mubr.f32.gmra.mrb[0].mxu0 %v2202
    %v2204 = vpop.f32.mrb[0].mxu0
    %v2205 = vadd.f32 %v2116, %v2204
    %v2206 = vpop.f32.mrb[0].mxu0
    %2207 = vdwg.mxu0
    %2208 = vmatprep.subr.mxu0 0.0
    %v2209 = vand.u32 %v701, 4294901760
    %v2210 = vsub.f32 %v701, %v2209
    %v2211 = vand.u32 %v2210, 4294901760
    %2212 = vmatpush1.msra.mxu0 %v2211
    %2213 = vmatprep.subr.mxu0 0.0
    %v2214 = vand.u32 %v702, 4294901760
    %v2215 = vsub.f32 %v702, %v2214
    %v2216 = vand.u32 %v2215, 4294901760
    %2217 = vmatpush1.msra.mxu0 %v2216
    %2218 = vmatprep.subr.mxu0 0.0
    %v2219 = vand.u32 %v703, 4294901760
    %v2220 = vsub.f32 %v703, %v2219
    %v2221 = vand.u32 %v2220, 4294901760
    %2222 = vmatpush1.msra.mxu0 %v2221
    %2223 = vmatprep.subr.mxu0 0.0
    %v2224 = vand.u32 %v704, 4294901760
    %v2225 = vsub.f32 %v704, %v2224
    %v2226 = vand.u32 %v2225, 4294901760
    %2227 = vmatpush1.msra.mxu0 %v2226
    %2228 = vmatprep.subr.mxu0 0.0
    %v2229 = vand.u32 %v705, 4294901760
    %v2230 = vsub.f32 %v705, %v2229
    %v2231 = vand.u32 %v2230, 4294901760
    %2232 = vmatpush1.msra.mxu0 %v2231
    %2233 = vmatprep.subr.mxu0 0.0
    %v2234 = vand.u32 %v706, 4294901760
    %v2235 = vsub.f32 %v706, %v2234
    %v2236 = vand.u32 %v2235, 4294901760
    %2237 = vmatpush1.msra.mxu0 %v2236
    %2238 = vmatprep.subr.mxu0 0.0
    %v2239 = vand.u32 %v707, 4294901760
    %v2240 = vsub.f32 %v707, %v2239
    %v2241 = vand.u32 %v2240, 4294901760
    %2242 = vmatpush1.msra.mxu0 %v2241
    %2243 = vmatprep.subr.mxu0 0.0
    %v2244 = vand.u32 %v708, 4294901760
    %v2245 = vsub.f32 %v708, %v2244
    %v2246 = vand.u32 %v2245, 4294901760
    %2247 = vmatpush1.msra.mxu0 %v2246
    %2248 = vmatprep.subr.mxu0 0.0
    %v2249 = vand.u32 %v709, 4294901760
    %v2250 = vsub.f32 %v709, %v2249
    %v2251 = vand.u32 %v2250, 4294901760
    %2252 = vmatpush1.msra.mxu0 %v2251
    %2253 = vmatprep.subr.mxu0 0.0
    %v2254 = vand.u32 %v710, 4294901760
    %v2255 = vsub.f32 %v710, %v2254
    %v2256 = vand.u32 %v2255, 4294901760
    %2257 = vmatpush1.msra.mxu0 %v2256
    %2258 = vmatprep.subr.mxu0 0.0
    %v2259 = vand.u32 %v711, 4294901760
    %v2260 = vsub.f32 %v711, %v2259
    %v2261 = vand.u32 %v2260, 4294901760
    %2262 = vmatpush1.msra.mxu0 %v2261
    %2263 = vmatprep.subr.mxu0 0.0
    %v2264 = vand.u32 %v712, 4294901760
    %v2265 = vsub.f32 %v712, %v2264
    %v2266 = vand.u32 %v2265, 4294901760
    %2267 = vmatpush1.msra.mxu0 %v2266
    %2268 = vmatprep.subr.mxu0 0.0
    %v2269 = vand.u32 %v713, 4294901760
    %v2270 = vsub.f32 %v713, %v2269
    %v2271 = vand.u32 %v2270, 4294901760
    %2272 = vmatpush1.msra.mxu0 %v2271
    %2273 = vmatprep.subr.mxu0 0.0
    %v2274 = vand.u32 %v714, 4294901760
    %v2275 = vsub.f32 %v714, %v2274
    %v2276 = vand.u32 %v2275, 4294901760
    %2277 = vmatpush1.msra.mxu0 %v2276
    %2278 = vmatprep.subr.mxu0 0.0
    %v2279 = vand.u32 %v715, 4294901760
    %v2280 = vsub.f32 %v715, %v2279
    %v2281 = vand.u32 %v2280, 4294901760
    %2282 = vmatpush1.msra.mxu0 %v2281
    %2283 = vmatprep.subr.mxu0 0.0
    %v2284 = vand.u32 %v716, 4294901760
    %v2285 = vsub.f32 %v716, %v2284
    %v2286 = vand.u32 %v2285, 4294901760
    %2287 = vmatpush1.msra.mxu0 %v2286
    %2288 = vmatprep.subr.mxu0 0.0
    %2289 = vmatpush1.msra.mxu0 0.0
    %2290 = vmatprep.subr.mxu0 0.0
    %2291 = vmatpush1.msra.mxu0 0.0
    %2292 = vmatprep.subr.mxu0 0.0
    %2293 = vmatpush1.msra.mxu0 0.0
    %2294 = vmatprep.subr.mxu0 0.0
    %2295 = vmatpush1.msra.mxu0 0.0
    %2296 = vmatprep.subr.mxu0 0.0
    %2297 = vmatpush1.msra.mxu0 0.0
    %2298 = vmatprep.subr.mxu0 0.0
    %2299 = vmatpush1.msra.mxu0 0.0
    %2300 = vmatprep.subr.mxu0 0.0
    %2301 = vmatpush1.msra.mxu0 0.0
    %2302 = vmatprep.subr.mxu0 0.0
    %2303 = vmatpush1.msra.mxu0 0.0
    %2304 = vmatprep.subr.mxu0 0.0
    %2305 = vmatpush1.msra.mxu0 0.0
    %2306 = vmatprep.subr.mxu0 0.0
    %2307 = vmatpush1.msra.mxu0 0.0
    %2308 = vmatprep.subr.mxu0 0.0
    %2309 = vmatpush1.msra.mxu0 0.0
    %2310 = vmatprep.subr.mxu0 0.0
    %2311 = vmatpush1.msra.mxu0 0.0
    %2312 = vmatprep.subr.mxu0 0.0
    %2313 = vmatpush1.msra.mxu0 0.0
    %2314 = vmatprep.subr.mxu0 0.0
    %2315 = vmatpush1.msra.mxu0 0.0
    %2316 = vmatprep.subr.mxu0 0.0
    %2317 = vmatpush1.msra.mxu0 0.0
    %2318 = vmatprep.subr.mxu0 0.0
    %2319 = vmatpush1.msra.mxu0 0.0
    %2320 = vmatprep.mubr.f32.mxu0 0.0
    %v2321 = vand.u32 %v1772, 4294901760
    %2322 = vmatmul.mubr.f32.gmra.mrb[0].mxu0 %v2321
    %v2323 = vpop.f32.mrb[0].mxu0
    %v2324 = vadd.f32 %v2205, %v2323
    %v2325 = vpop.f32.mrb[0].mxu0
    %2326 = vdwg.mxu0
    %2327 = vmatprep.subr.mxu0 0.0
    %v2328 = vand.u32 %v701, 4294901760
    %2329 = vmatpush1.msra.mxu0 %v2328
    %2330 = vmatprep.subr.mxu0 0.0
    %v2331 = vand.u32 %v702, 4294901760
    %2332 = vmatpush1.msra.mxu0 %v2331
    %2333 = vmatprep.subr.mxu0 0.0
    %v2334 = vand.u32 %v703, 4294901760
    %2335 = vmatpush1.msra.mxu0 %v2334
    %2336 = vmatprep.subr.mxu0 0.0
    %v2337 = vand.u32 %v704, 4294901760
    %2338 = vmatpush1.msra.mxu0 %v2337
    %2339 = vmatprep.subr.mxu0 0.0
    %v2340 = vand.u32 %v705, 4294901760
    %2341 = vmatpush1.msra.mxu0 %v2340
    %2342 = vmatprep.subr.mxu0 0.0
    %v2343 = vand.u32 %v706, 4294901760
    %2344 = vmatpush1.msra.mxu0 %v2343
    %2345 = vmatprep.subr.mxu0 0.0
    %v2346 = vand.u32 %v707, 4294901760
    %2347 = vmatpush1.msra.mxu0 %v2346
    %2348 = vmatprep.subr.mxu0 0.0
    %v2349 = vand.u32 %v708, 4294901760
    %2350 = vmatpush1.msra.mxu0 %v2349
    %2351 = vmatprep.subr.mxu0 0.0
    %v2352 = vand.u32 %v709, 4294901760
    %2353 = vmatpush1.msra.mxu0 %v2352
    %2354 = vmatprep.subr.mxu0 0.0
    %v2355 = vand.u32 %v710, 4294901760
    %2356 = vmatpush1.msra.mxu0 %v2355
    %2357 = vmatprep.subr.mxu0 0.0
    %v2358 = vand.u32 %v711, 4294901760
    %2359 = vmatpush1.msra.mxu0 %v2358
    %2360 = vmatprep.subr.mxu0 0.0
    %v2361 = vand.u32 %v712, 4294901760
    %2362 = vmatpush1.msra.mxu0 %v2361
    %2363 = vmatprep.subr.mxu0 0.0
    %v2364 = vand.u32 %v713, 4294901760
    %2365 = vmatpush1.msra.mxu0 %v2364
    %2366 = vmatprep.subr.mxu0 0.0
    %v2367 = vand.u32 %v714, 4294901760
    %2368 = vmatpush1.msra.mxu0 %v2367
    %2369 = vmatprep.subr.mxu0 0.0
    %v2370 = vand.u32 %v715, 4294901760
    %2371 = vmatpush1.msra.mxu0 %v2370
    %2372 = vmatprep.subr.mxu0 0.0
    %v2373 = vand.u32 %v716, 4294901760
    %2374 = vmatpush1.msra.mxu0 %v2373
    %2375 = vmatprep.subr.mxu0 0.0
    %2376 = vmatpush1.msra.mxu0 0.0
    %2377 = vmatprep.subr.mxu0 0.0
    %2378 = vmatpush1.msra.mxu0 0.0
    %2379 = vmatprep.subr.mxu0 0.0
    %2380 = vmatpush1.msra.mxu0 0.0
    %2381 = vmatprep.subr.mxu0 0.0
    %2382 = vmatpush1.msra.mxu0 0.0
    %2383 = vmatprep.subr.mxu0 0.0
    %2384 = vmatpush1.msra.mxu0 0.0
    %2385 = vmatprep.subr.mxu0 0.0
    %2386 = vmatpush1.msra.mxu0 0.0
    %2387 = vmatprep.subr.mxu0 0.0
    %2388 = vmatpush1.msra.mxu0 0.0
    %2389 = vmatprep.subr.mxu0 0.0
    %2390 = vmatpush1.msra.mxu0 0.0
    %2391 = vmatprep.subr.mxu0 0.0
    %2392 = vmatpush1.msra.mxu0 0.0
    %2393 = vmatprep.subr.mxu0 0.0
    %2394 = vmatpush1.msra.mxu0 0.0
    %2395 = vmatprep.subr.mxu0 0.0
    %2396 = vmatpush1.msra.mxu0 0.0
    %2397 = vmatprep.subr.mxu0 0.0
    %2398 = vmatpush1.msra.mxu0 0.0
    %2399 = vmatprep.subr.mxu0 0.0
    %2400 = vmatpush1.msra.mxu0 0.0
    %2401 = vmatprep.subr.mxu0 0.0
    %2402 = vmatpush1.msra.mxu0 0.0
    %2403 = vmatprep.subr.mxu0 0.0
    %2404 = vmatpush1.msra.mxu0 0.0
    %2405 = vmatprep.subr.mxu0 0.0
    %2406 = vmatpush1.msra.mxu0 0.0
    %2407 = vmatprep.mubr.f32.mxu0 0.0
    %v2408 = vand.u32 %v1772, 4294901760
    %2409 = vmatmul.mubr.f32.gmra.mrb[0].mxu0 %v2408
    %v2410 = vpop.f32.mrb[0].mxu0
    %v2411 = vadd.f32 %v2324, %v2410
    %v2412 = vpop.f32.mrb[0].mxu0
    %2413 = vdwg.mxu0
    %v2414 = vmul.f32 %v2411, 0.00390625
    %v2415 = vmul.f32 %v2414, %v2414
    %v2417 = vrot.slane %v2415, 7
    %v2419 = vsub.f32 %v2414, %v2417
    %v2420 = vmax.f32 %v2419, 0.0
    %v2421 = vlaneseq
    %v2422 = vshrl.u32 %v2421, 7
    %v2423 = vsub.s32 0, %v2422
    %v2424 = vrot.slane %v2414, %v2423
    %v2425 = vsub.f32 %v1754, %v2424
    %v2426 = vsub.f32 %v1755, %v2424
    %v2427 = vadd.f32 %v2420, 8.0
    %v2428 = vrsqrt.pop %v2427
    %v2429 = vlaneseq
    %v2430 = vshrl.u32 %v2429, 7
    %v2431 = vsub.s32 1, %v2430
    %v2432 = vrot.slane %v2428, %v2431
    %v2433 = vmul.f32 %v2425, %v2432
    %v2434 = vmul.f32 %v2426, %v2432
    %v2435 = vld [vmem:[%s6 + $0x1] sm:$0x1]
    %v2436 = vlaneseq
    %v2437 = vshrl.u32 %v2436, 7
    %v2438 = vsub.s32 0, %v2437
    %v2439 = vrot.slane %v2435, %v2438
    %v2440 = vmul.f32 %v2433, %v2439
    %v2441 = vmul.f32 %v2434, %v2439
    %v2442 = vld [vmem:[#allocation10 + $0x1] sm:$0x1]
    %v2443 = vlaneseq
    %v2444 = vshrl.u32 %v2443, 7
    %v2445 = vsub.s32 0, %v2444
    %v2446 = vrot.slane %v2442, %v2445
    %v2447 = vadd.f32 %v2440, %v2446
    %v2448 = vadd.f32 %v2441, %v2446
    %v2451 = vrot.slane %v2447, 7
    %v2452 = vrot.slane %v2448, 7
    %v2455 = vsel %vm134, 0.0, %v2451
    %v2456 = vsel %vm134, 0.0, %v2452
    %v2457 = vsel %vm134, %v2451, 0.0
    %v2458 = vsel %vm134, %v2452, 0.0
    %v2459 = vpack.c.bf16 %v2456, %v2455
    %v2464 = vrot.slane %v2455, 1
    %v2465 = vrot.slane %v2457, 1
    %v2466 = vsel %vm1426, %v2464, %v2465
    %v2467 = vrot.slane %v2456, 1
    %v2468 = vrot.slane %v2458, 1
    %v2469 = vsel %vm1426, %v2467, %v2468
    %v2472 = vpack.c.bf16 %v2469, %v2466
    %2473 = vmatprep.subr.bf16.mxu0 0
    %2474 = vmatpush1.bf16.msra.mxu0 %v1484
    %2475 = vmatprep.subr.bf16.mxu0 0
    %2476 = vmatpush1.bf16.msra.mxu0 %v1485
    %2477 = vmatprep.subr.bf16.mxu0 0
    %2478 = vmatpush1.bf16.msra.mxu0 %v1486
    %2479 = vmatprep.subr.bf16.mxu0 0
    %2480 = vmatpush1.bf16.msra.mxu0 %v1487
    %2481 = vmatprep.subr.bf16.mxu0 0
    %2482 = vmatpush1.bf16.msra.mxu0 %v1488
    %2483 = vmatprep.subr.bf16.mxu0 0
    %2484 = vmatpush1.bf16.msra.mxu0 %v1489
    %2485 = vmatprep.subr.bf16.mxu0 0
    %2486 = vmatpush1.bf16.msra.mxu0 %v1490
    %2487 = vmatprep.subr.bf16.mxu0 0
    %2488 = vmatpush1.bf16.msra.mxu0 %v1491
    %2489 = vmatprep.subr.bf16.mxu0 0
    %2490 = vmatpush1.bf16.msra.mxu0 0
    %2491 = vmatprep.subr.bf16.mxu0 0
    %2492 = vmatpush1.bf16.msra.mxu0 0
    %2493 = vmatprep.subr.bf16.mxu0 0
    %2494 = vmatpush1.bf16.msra.mxu0 0
    %2495 = vmatprep.subr.bf16.mxu0 0
    %2496 = vmatpush1.bf16.msra.mxu0 0
    %2497 = vmatprep.subr.bf16.mxu0 0
    %2498 = vmatpush1.bf16.msra.mxu0 0
    %2499 = vmatprep.subr.bf16.mxu0 0
    %2500 = vmatpush1.bf16.msra.mxu0 0
    %2501 = vmatprep.subr.bf16.mxu0 0
    %2502 = vmatpush1.bf16.msra.mxu0 0
    %2503 = vmatprep.subr.bf16.mxu0 0
    %2504 = vmatpush1.bf16.msra.mxu0 0
    %2505 = vmatprep.mubr.bf16.mxu0 0
    %2506 = vmatmul.mubr.bf16.gmra.mrb[0].mxu0 %v2472
    %v2507 = vpop.f32.mrb[0].mxu0
    %v2508 = vadd.f32 0.0, %v2507
    %v2509 = vpop.f32.mrb[0].mxu0
    %v2510 = vpop.f32.mrb[0].mxu0
    %v2511 = vadd.f32 0.0, %v2510
    %v2512 = vpop.f32.mrb[0].mxu0
    %2513 = vdwg.mxu0
    %2514 = vmatprep.subr.bf16.mxu0 0
    %2515 = vmatpush1.bf16.msra.mxu0 %v1573
    %2516 = vmatprep.subr.bf16.mxu0 0
    %2517 = vmatpush1.bf16.msra.mxu0 %v1574
    %2518 = vmatprep.subr.bf16.mxu0 0
    %2519 = vmatpush1.bf16.msra.mxu0 %v1575
    %2520 = vmatprep.subr.bf16.mxu0 0
    %2521 = vmatpush1.bf16.msra.mxu0 %v1576
    %2522 = vmatprep.subr.bf16.mxu0 0
    %2523 = vmatpush1.bf16.msra.mxu0 %v1577
    %2524 = vmatprep.subr.bf16.mxu0 0
    %2525 = vmatpush1.bf16.msra.mxu0 %v1578
    %2526 = vmatprep.subr.bf16.mxu0 0
    %2527 = vmatpush1.bf16.msra.mxu0 %v1579
    %2528 = vmatprep.subr.bf16.mxu0 0
    %2529 = vmatpush1.bf16.msra.mxu0 %v1580
    %2530 = vmatprep.subr.bf16.mxu0 0
    %2531 = vmatpush1.bf16.msra.mxu0 0
    %2532 = vmatprep.subr.bf16.mxu0 0
    %2533 = vmatpush1.bf16.msra.mxu0 0
    %2534 = vmatprep.subr.bf16.mxu0 0
    %2535 = vmatpush1.bf16.msra.mxu0 0
    %2536 = vmatprep.subr.bf16.mxu0 0
    %2537 = vmatpush1.bf16.msra.mxu0 0
    %2538 = vmatprep.subr.bf16.mxu0 0
    %2539 = vmatpush1.bf16.msra.mxu0 0
    %2540 = vmatprep.subr.bf16.mxu0 0
    %2541 = vmatpush1.bf16.msra.mxu0 0
    %2542 = vmatprep.subr.bf16.mxu0 0
    %2543 = vmatpush1.bf16.msra.mxu0 0
    %2544 = vmatprep.subr.bf16.mxu0 0
    %2545 = vmatpush1.bf16.msra.mxu0 0
    %2546 = vmatprep.mubr.bf16.mxu0 0
    %2547 = vmatmul.mubr.bf16.gmra.mrb[0].mxu0 %v2459
    %v2548 = vpop.f32.mrb[0].mxu0
    %v2549 = vadd.f32 %v2508, %v2548
    %v2550 = vpop.f32.mrb[0].mxu0
    %v2551 = vpop.f32.mrb[0].mxu0
    %v2552 = vadd.f32 %v2511, %v2551
    %v2553 = vpop.f32.mrb[0].mxu0
    %2554 = vdwg.mxu0
    %v2555 = vrot.slane %v2455, 2
    %v2556 = vrot.slane %v2457, 2
    %v2557 = vsel %vm1630, %v2555, %v2556
    %v2558 = vrot.slane %v2456, 2
    %v2559 = vrot.slane %v2458, 2
    %v2560 = vsel %vm1630, %v2558, %v2559
    %v2563 = vpack.c.bf16 %v2560, %v2557
    %2564 = vmatprep.subr.bf16.mxu0 0
    %2565 = vmatpush1.bf16.msra.mxu0 %v1688
    %2566 = vmatprep.subr.bf16.mxu0 0
    %2567 = vmatpush1.bf16.msra.mxu0 %v1689
    %2568 = vmatprep.subr.bf16.mxu0 0
    %2569 = vmatpush1.bf16.msra.mxu0 %v1690
    %2570 = vmatprep.subr.bf16.mxu0 0
    %2571 = vmatpush1.bf16.msra.mxu0 %v1691
    %2572 = vmatprep.subr.bf16.mxu0 0
    %2573 = vmatpush1.bf16.msra.mxu0 %v1692
    %2574 = vmatprep.subr.bf16.mxu0 0
    %2575 = vmatpush1.bf16.msra.mxu0 %v1693
    %2576 = vmatprep.subr.bf16.mxu0 0
    %2577 = vmatpush1.bf16.msra.mxu0 %v1694
    %2578 = vmatprep.subr.bf16.mxu0 0
    %2579 = vmatpush1.bf16.msra.mxu0 %v1695
    %2580 = vmatprep.subr.bf16.mxu0 0
    %2581 = vmatpush1.bf16.msra.mxu0 0
    %2582 = vmatprep.subr.bf16.mxu0 0
    %2583 = vmatpush1.bf16.msra.mxu0 0
    %2584 = vmatprep.subr.bf16.mxu0 0
    %2585 = vmatpush1.bf16.msra.mxu0 0
    %2586 = vmatprep.subr.bf16.mxu0 0
    %2587 = vmatpush1.bf16.msra.mxu0 0
    %2588 = vmatprep.subr.bf16.mxu0 0
    %2589 = vmatpush1.bf16.msra.mxu0 0
    %2590 = vmatprep.subr.bf16.mxu0 0
    %2591 = vmatpush1.bf16.msra.mxu0 0
    %2592 = vmatprep.subr.bf16.mxu0 0
    %2593 = vmatpush1.bf16.msra.mxu0 0
    %2594 = vmatprep.subr.bf16.mxu0 0
    %2595 = vmatpush1.bf16.msra.mxu0 0
    %2596 = vmatprep.mubr.bf16.mxu0 0
    %2597 = vmatmul.mubr.bf16.gmra.mrb[0].mxu0 %v2563
    %v2598 = vpop.f32.mrb[0].mxu0
    %v2599 = vadd.f32 0.0, %v2598
    %v2600 = vpop.f32.mrb[0].mxu0
    %v2601 = vpop.f32.mrb[0].mxu0
    %v2602 = vadd.f32 0.0, %v2601
    %v2603 = vpop.f32.mrb[0].mxu0
    %2604 = vdwg.mxu0
    %v2605 = vadd.f32 %v2549, %v2599
    %v2606 = vadd.f32 %v2552, %v2602
    %v2607 = vadd.f32 %v2605, %v1751
    %v2608 = vadd.f32 %v2606, %v1751
    %v2609 = vmax.f32 %v2607, 0.0
    %v2610 = vmax.f32 %v2608, 0.0
    %v2611 = vadd.f32 %v2609, %v2610
    %v2612 = vrot.slane %v2611, 4
    %v2613 = vadd.f32 %v2611, %v2612
    %v2614 = vrot.slane %v2613, 2
    %v2615 = vadd.f32 %v2613, %v2614
    %v2616 = vrot.slane %v2615, 1
    %v2617 = vadd.f32 %v2615, %v2616
    %v2618 = vmul.f32 %v2609, %v2609
    %v2619 = vmul.f32 %v2610, %v2610
    %v2620 = vadd.f32 %v2618, %v2619
    %v2621 = vrot.slane %v2620, 4
    %v2622 = vadd.f32 %v2620, %v2621
    %v2623 = vrot.slane %v2622, 2
    %v2624 = vadd.f32 %v2622, %v2623
    %v2625 = vrot.slane %v2624, 1
    %v2626 = vadd.f32 %v2624, %v2625
    %v2627 = vsel %vm134, %v2617, %v2626
    %2628 = vmatprep.subr.mxu0 0.0
    %v2629 = vand.u32 %v701, 4294901760
    %2630 = vmatpush1.msra.mxu0 %v2629
    %2631 = vmatprep.subr.mxu0 0.0
    %v2632 = vand.u32 %v702, 4294901760
    %2633 = vmatpush1.msra.mxu0 %v2632
    %2634 = vmatprep.subr.mxu0 0.0
    %v2635 = vand.u32 %v703, 4294901760
    %2636 = vmatpush1.msra.mxu0 %v2635
    %2637 = vmatprep.subr.mxu0 0.0
    %v2638 = vand.u32 %v704, 4294901760
    %2639 = vmatpush1.msra.mxu0 %v2638
    %2640 = vmatprep.subr.mxu0 0.0
    %v2641 = vand.u32 %v705, 4294901760
    %2642 = vmatpush1.msra.mxu0 %v2641
    %2643 = vmatprep.subr.mxu0 0.0
    %v2644 = vand.u32 %v706, 4294901760
    %2645 = vmatpush1.msra.mxu0 %v2644
    %2646 = vmatprep.subr.mxu0 0.0
    %v2647 = vand.u32 %v707, 4294901760
    %2648 = vmatpush1.msra.mxu0 %v2647
    %2649 = vmatprep.subr.mxu0 0.0
    %v2650 = vand.u32 %v708, 4294901760
    %2651 = vmatpush1.msra.mxu0 %v2650
    %2652 = vmatprep.subr.mxu0 0.0
    %v2653 = vand.u32 %v709, 4294901760
    %2654 = vmatpush1.msra.mxu0 %v2653
    %2655 = vmatprep.subr.mxu0 0.0
    %v2656 = vand.u32 %v710, 4294901760
    %2657 = vmatpush1.msra.mxu0 %v2656
    %2658 = vmatprep.subr.mxu0 0.0
    %v2659 = vand.u32 %v711, 4294901760
    %2660 = vmatpush1.msra.mxu0 %v2659
    %2661 = vmatprep.subr.mxu0 0.0
    %v2662 = vand.u32 %v712, 4294901760
    %2663 = vmatpush1.msra.mxu0 %v2662
    %2664 = vmatprep.subr.mxu0 0.0
    %v2665 = vand.u32 %v713, 4294901760
    %2666 = vmatpush1.msra.mxu0 %v2665
    %2667 = vmatprep.subr.mxu0 0.0
    %v2668 = vand.u32 %v714, 4294901760
    %2669 = vmatpush1.msra.mxu0 %v2668
    %2670 = vmatprep.subr.mxu0 0.0
    %v2671 = vand.u32 %v715, 4294901760
    %2672 = vmatpush1.msra.mxu0 %v2671
    %2673 = vmatprep.subr.mxu0 0.0
    %v2674 = vand.u32 %v716, 4294901760
    %2675 = vmatpush1.msra.mxu0 %v2674
    %2676 = vmatprep.subr.mxu0 0.0
    %2677 = vmatpush1.msra.mxu0 0.0
    %2678 = vmatprep.subr.mxu0 0.0
    %2679 = vmatpush1.msra.mxu0 0.0
    %2680 = vmatprep.subr.mxu0 0.0
    %2681 = vmatpush1.msra.mxu0 0.0
    %2682 = vmatprep.subr.mxu0 0.0
    %2683 = vmatpush1.msra.mxu0 0.0
    %2684 = vmatprep.subr.mxu0 0.0
    %2685 = vmatpush1.msra.mxu0 0.0
    %2686 = vmatprep.subr.mxu0 0.0
    %2687 = vmatpush1.msra.mxu0 0.0
    %2688 = vmatprep.subr.mxu0 0.0
    %2689 = vmatpush1.msra.mxu0 0.0
    %2690 = vmatprep.subr.mxu0 0.0
    %2691 = vmatpush1.msra.mxu0 0.0
    %2692 = vmatprep.subr.mxu0 0.0
    %2693 = vmatpush1.msra.mxu0 0.0
    %2694 = vmatprep.subr.mxu0 0.0
    %2695 = vmatpush1.msra.mxu0 0.0
    %2696 = vmatprep.subr.mxu0 0.0
    %2697 = vmatpush1.msra.mxu0 0.0
    %2698 = vmatprep.subr.mxu0 0.0
    %2699 = vmatpush1.msra.mxu0 0.0
    %2700 = vmatprep.subr.mxu0 0.0
    %2701 = vmatpush1.msra.mxu0 0.0
    %2702 = vmatprep.subr.mxu0 0.0
    %2703 = vmatpush1.msra.mxu0 0.0
    %2704 = vmatprep.subr.mxu0 0.0
    %2705 = vmatpush1.msra.mxu0 0.0
    %2706 = vmatprep.subr.mxu0 0.0
    %2707 = vmatpush1.msra.mxu0 0.0
    %2708 = vmatprep.mubr.f32.mxu0 0.0
    %v2709 = vand.u32 %v2627, 4294901760
    %v2710 = vsub.f32 %v2627, %v2709
    %v2711 = vand.u32 %v2710, 4294901760
    %v2712 = vsub.f32 %v2710, %v2711
    %v2713 = vand.u32 %v2712, 4294901760
    %2714 = vmatmul.mubr.f32.gmra.mrb[0].mxu0 %v2713
    %v2715 = vpop.f32.mrb[0].mxu0
    %v2716 = vadd.f32 0.0, %v2715
    %v2717 = vpop.f32.mrb[0].mxu0
    %2718 = vdwg.mxu0
    %2719 = vmatprep.subr.mxu0 0.0
    %v2720 = vand.u32 %v701, 4294901760
    %v2721 = vsub.f32 %v701, %v2720
    %v2722 = vand.u32 %v2721, 4294901760
    %v2723 = vsub.f32 %v2721, %v2722
    %v2724 = vand.u32 %v2723, 4294901760
    %2725 = vmatpush1.msra.mxu0 %v2724
    %2726 = vmatprep.subr.mxu0 0.0
    %v2727 = vand.u32 %v702, 4294901760
    %v2728 = vsub.f32 %v702, %v2727
    %v2729 = vand.u32 %v2728, 4294901760
    %v2730 = vsub.f32 %v2728, %v2729
    %v2731 = vand.u32 %v2730, 4294901760
    %2732 = vmatpush1.msra.mxu0 %v2731
    %2733 = vmatprep.subr.mxu0 0.0
    %v2734 = vand.u32 %v703, 4294901760
    %v2735 = vsub.f32 %v703, %v2734
    %v2736 = vand.u32 %v2735, 4294901760
    %v2737 = vsub.f32 %v2735, %v2736
    %v2738 = vand.u32 %v2737, 4294901760
    %2739 = vmatpush1.msra.mxu0 %v2738
    %2740 = vmatprep.subr.mxu0 0.0
    %v2741 = vand.u32 %v704, 4294901760
    %v2742 = vsub.f32 %v704, %v2741
    %v2743 = vand.u32 %v2742, 4294901760
    %v2744 = vsub.f32 %v2742, %v2743
    %v2745 = vand.u32 %v2744, 4294901760
    %2746 = vmatpush1.msra.mxu0 %v2745
    %2747 = vmatprep.subr.mxu0 0.0
    %v2748 = vand.u32 %v705, 4294901760
    %v2749 = vsub.f32 %v705, %v2748
    %v2750 = vand.u32 %v2749, 4294901760
    %v2751 = vsub.f32 %v2749, %v2750
    %v2752 = vand.u32 %v2751, 4294901760
    %2753 = vmatpush1.msra.mxu0 %v2752
    %2754 = vmatprep.subr.mxu0 0.0
    %v2755 = vand.u32 %v706, 4294901760
    %v2756 = vsub.f32 %v706, %v2755
    %v2757 = vand.u32 %v2756, 4294901760
    %v2758 = vsub.f32 %v2756, %v2757
    %v2759 = vand.u32 %v2758, 4294901760
    %2760 = vmatpush1.msra.mxu0 %v2759
    %2761 = vmatprep.subr.mxu0 0.0
    %v2762 = vand.u32 %v707, 4294901760
    %v2763 = vsub.f32 %v707, %v2762
    %v2764 = vand.u32 %v2763, 4294901760
    %v2765 = vsub.f32 %v2763, %v2764
    %v2766 = vand.u32 %v2765, 4294901760
    %2767 = vmatpush1.msra.mxu0 %v2766
    %2768 = vmatprep.subr.mxu0 0.0
    %v2769 = vand.u32 %v708, 4294901760
    %v2770 = vsub.f32 %v708, %v2769
    %v2771 = vand.u32 %v2770, 4294901760
    %v2772 = vsub.f32 %v2770, %v2771
    %v2773 = vand.u32 %v2772, 4294901760
    %2774 = vmatpush1.msra.mxu0 %v2773
    %2775 = vmatprep.subr.mxu0 0.0
    %v2776 = vand.u32 %v709, 4294901760
    %v2777 = vsub.f32 %v709, %v2776
    %v2778 = vand.u32 %v2777, 4294901760
    %v2779 = vsub.f32 %v2777, %v2778
    %v2780 = vand.u32 %v2779, 4294901760
    %2781 = vmatpush1.msra.mxu0 %v2780
    %2782 = vmatprep.subr.mxu0 0.0
    %v2783 = vand.u32 %v710, 4294901760
    %v2784 = vsub.f32 %v710, %v2783
    %v2785 = vand.u32 %v2784, 4294901760
    %v2786 = vsub.f32 %v2784, %v2785
    %v2787 = vand.u32 %v2786, 4294901760
    %2788 = vmatpush1.msra.mxu0 %v2787
    %2789 = vmatprep.subr.mxu0 0.0
    %v2790 = vand.u32 %v711, 4294901760
    %v2791 = vsub.f32 %v711, %v2790
    %v2792 = vand.u32 %v2791, 4294901760
    %v2793 = vsub.f32 %v2791, %v2792
    %v2794 = vand.u32 %v2793, 4294901760
    %2795 = vmatpush1.msra.mxu0 %v2794
    %2796 = vmatprep.subr.mxu0 0.0
    %v2797 = vand.u32 %v712, 4294901760
    %v2798 = vsub.f32 %v712, %v2797
    %v2799 = vand.u32 %v2798, 4294901760
    %v2800 = vsub.f32 %v2798, %v2799
    %v2801 = vand.u32 %v2800, 4294901760
    %2802 = vmatpush1.msra.mxu0 %v2801
    %2803 = vmatprep.subr.mxu0 0.0
    %v2804 = vand.u32 %v713, 4294901760
    %v2805 = vsub.f32 %v713, %v2804
    %v2806 = vand.u32 %v2805, 4294901760
    %v2807 = vsub.f32 %v2805, %v2806
    %v2808 = vand.u32 %v2807, 4294901760
    %2809 = vmatpush1.msra.mxu0 %v2808
    %2810 = vmatprep.subr.mxu0 0.0
    %v2811 = vand.u32 %v714, 4294901760
    %v2812 = vsub.f32 %v714, %v2811
    %v2813 = vand.u32 %v2812, 4294901760
    %v2814 = vsub.f32 %v2812, %v2813
    %v2815 = vand.u32 %v2814, 4294901760
    %2816 = vmatpush1.msra.mxu0 %v2815
    %2817 = vmatprep.subr.mxu0 0.0
    %v2818 = vand.u32 %v715, 4294901760
    %v2819 = vsub.f32 %v715, %v2818
    %v2820 = vand.u32 %v2819, 4294901760
    %v2821 = vsub.f32 %v2819, %v2820
    %v2822 = vand.u32 %v2821, 4294901760
    %2823 = vmatpush1.msra.mxu0 %v2822
    %2824 = vmatprep.subr.mxu0 0.0
    %v2825 = vand.u32 %v716, 4294901760
    %v2826 = vsub.f32 %v716, %v2825
    %v2827 = vand.u32 %v2826, 4294901760
    %v2828 = vsub.f32 %v2826, %v2827
    %v2829 = vand.u32 %v2828, 4294901760
    %2830 = vmatpush1.msra.mxu0 %v2829
    %2831 = vmatprep.subr.mxu0 0.0
    %2832 = vmatpush1.msra.mxu0 0.0
    %2833 = vmatprep.subr.mxu0 0.0
    %2834 = vmatpush1.msra.mxu0 0.0
    %2835 = vmatprep.subr.mxu0 0.0
    %2836 = vmatpush1.msra.mxu0 0.0
    %2837 = vmatprep.subr.mxu0 0.0
    %2838 = vmatpush1.msra.mxu0 0.0
    %2839 = vmatprep.subr.mxu0 0.0
    %2840 = vmatpush1.msra.mxu0 0.0
    %2841 = vmatprep.subr.mxu0 0.0
    %2842 = vmatpush1.msra.mxu0 0.0
    %2843 = vmatprep.subr.mxu0 0.0
    %2844 = vmatpush1.msra.mxu0 0.0
    %2845 = vmatprep.subr.mxu0 0.0
    %2846 = vmatpush1.msra.mxu0 0.0
    %2847 = vmatprep.subr.mxu0 0.0
    %2848 = vmatpush1.msra.mxu0 0.0
    %2849 = vmatprep.subr.mxu0 0.0
    %2850 = vmatpush1.msra.mxu0 0.0
    %2851 = vmatprep.subr.mxu0 0.0
    %2852 = vmatpush1.msra.mxu0 0.0
    %2853 = vmatprep.subr.mxu0 0.0
    %2854 = vmatpush1.msra.mxu0 0.0
    %2855 = vmatprep.subr.mxu0 0.0
    %2856 = vmatpush1.msra.mxu0 0.0
    %2857 = vmatprep.subr.mxu0 0.0
    %2858 = vmatpush1.msra.mxu0 0.0
    %2859 = vmatprep.subr.mxu0 0.0
    %2860 = vmatpush1.msra.mxu0 0.0
    %2861 = vmatprep.subr.mxu0 0.0
    %2862 = vmatpush1.msra.mxu0 0.0
    %2863 = vmatprep.mubr.f32.mxu0 0.0
    %v2864 = vand.u32 %v2627, 4294901760
    %2865 = vmatmul.mubr.f32.gmra.mrb[0].mxu0 %v2864
    %v2866 = vpop.f32.mrb[0].mxu0
    %v2867 = vadd.f32 %v2716, %v2866
    %v2868 = vpop.f32.mrb[0].mxu0
    %2869 = vdwg.mxu0
    %2870 = vmatprep.subr.mxu0 0.0
    %v2871 = vand.u32 %v701, 4294901760
    %v2872 = vsub.f32 %v701, %v2871
    %2873 = vmatpush1.msra.mxu0 %v2872
    %2874 = vmatprep.subr.mxu0 0.0
    %v2875 = vand.u32 %v702, 4294901760
    %v2876 = vsub.f32 %v702, %v2875
    %2877 = vmatpush1.msra.mxu0 %v2876
    %2878 = vmatprep.subr.mxu0 0.0
    %v2879 = vand.u32 %v703, 4294901760
    %v2880 = vsub.f32 %v703, %v2879
    %2881 = vmatpush1.msra.mxu0 %v2880
    %2882 = vmatprep.subr.mxu0 0.0
    %v2883 = vand.u32 %v704, 4294901760
    %v2884 = vsub.f32 %v704, %v2883
    %2885 = vmatpush1.msra.mxu0 %v2884
    %2886 = vmatprep.subr.mxu0 0.0
    %v2887 = vand.u32 %v705, 4294901760
    %v2888 = vsub.f32 %v705, %v2887
    %2889 = vmatpush1.msra.mxu0 %v2888
    %2890 = vmatprep.subr.mxu0 0.0
    %v2891 = vand.u32 %v706, 4294901760
    %v2892 = vsub.f32 %v706, %v2891
    %2893 = vmatpush1.msra.mxu0 %v2892
    %2894 = vmatprep.subr.mxu0 0.0
    %v2895 = vand.u32 %v707, 4294901760
    %v2896 = vsub.f32 %v707, %v2895
    %2897 = vmatpush1.msra.mxu0 %v2896
    %2898 = vmatprep.subr.mxu0 0.0
    %v2899 = vand.u32 %v708, 4294901760
    %v2900 = vsub.f32 %v708, %v2899
    %2901 = vmatpush1.msra.mxu0 %v2900
    %2902 = vmatprep.subr.mxu0 0.0
    %v2903 = vand.u32 %v709, 4294901760
    %v2904 = vsub.f32 %v709, %v2903
    %2905 = vmatpush1.msra.mxu0 %v2904
    %2906 = vmatprep.subr.mxu0 0.0
    %v2907 = vand.u32 %v710, 4294901760
    %v2908 = vsub.f32 %v710, %v2907
    %2909 = vmatpush1.msra.mxu0 %v2908
    %2910 = vmatprep.subr.mxu0 0.0
    %v2911 = vand.u32 %v711, 4294901760
    %v2912 = vsub.f32 %v711, %v2911
    %2913 = vmatpush1.msra.mxu0 %v2912
    %2914 = vmatprep.subr.mxu0 0.0
    %v2915 = vand.u32 %v712, 4294901760
    %v2916 = vsub.f32 %v712, %v2915
    %2917 = vmatpush1.msra.mxu0 %v2916
    %2918 = vmatprep.subr.mxu0 0.0
    %v2919 = vand.u32 %v713, 4294901760
    %v2920 = vsub.f32 %v713, %v2919
    %2921 = vmatpush1.msra.mxu0 %v2920
    %2922 = vmatprep.subr.mxu0 0.0
    %v2923 = vand.u32 %v714, 4294901760
    %v2924 = vsub.f32 %v714, %v2923
    %2925 = vmatpush1.msra.mxu0 %v2924
    %2926 = vmatprep.subr.mxu0 0.0
    %v2927 = vand.u32 %v715, 4294901760
    %v2928 = vsub.f32 %v715, %v2927
    %2929 = vmatpush1.msra.mxu0 %v2928
    %2930 = vmatprep.subr.mxu0 0.0
    %v2931 = vand.u32 %v716, 4294901760
    %v2932 = vsub.f32 %v716, %v2931
    %2933 = vmatpush1.msra.mxu0 %v2932
    %2934 = vmatprep.subr.mxu0 0.0
    %2935 = vmatpush1.msra.mxu0 0.0
    %2936 = vmatprep.subr.mxu0 0.0
    %2937 = vmatpush1.msra.mxu0 0.0
    %2938 = vmatprep.subr.mxu0 0.0
    %2939 = vmatpush1.msra.mxu0 0.0
    %2940 = vmatprep.subr.mxu0 0.0
    %2941 = vmatpush1.msra.mxu0 0.0
    %2942 = vmatprep.subr.mxu0 0.0
    %2943 = vmatpush1.msra.mxu0 0.0
    %2944 = vmatprep.subr.mxu0 0.0
    %2945 = vmatpush1.msra.mxu0 0.0
    %2946 = vmatprep.subr.mxu0 0.0
    %2947 = vmatpush1.msra.mxu0 0.0
    %2948 = vmatprep.subr.mxu0 0.0
    %2949 = vmatpush1.msra.mxu0 0.0
    %2950 = vmatprep.subr.mxu0 0.0
    %2951 = vmatpush1.msra.mxu0 0.0
    %2952 = vmatprep.subr.mxu0 0.0
    %2953 = vmatpush1.msra.mxu0 0.0
    %2954 = vmatprep.subr.mxu0 0.0
    %2955 = vmatpush1.msra.mxu0 0.0
    %2956 = vmatprep.subr.mxu0 0.0
    %2957 = vmatpush1.msra.mxu0 0.0
    %2958 = vmatprep.subr.mxu0 0.0
    %2959 = vmatpush1.msra.mxu0 0.0
    %2960 = vmatprep.subr.mxu0 0.0
    %2961 = vmatpush1.msra.mxu0 0.0
    %2962 = vmatprep.subr.mxu0 0.0
    %2963 = vmatpush1.msra.mxu0 0.0
    %2964 = vmatprep.subr.mxu0 0.0
    %2965 = vmatpush1.msra.mxu0 0.0
    %2966 = vmatprep.mubr.f32.mxu0 0.0
    %v2967 = vand.u32 %v2627, 4294901760
    %v2968 = vsub.f32 %v2627, %v2967
    %2969 = vmatmul.mubr.f32.gmra.mrb[0].mxu0 %v2968
    %v2970 = vpop.f32.mrb[0].mxu0
    %v2971 = vadd.f32 %v2867, %v2970
    %v2972 = vpop.f32.mrb[0].mxu0
    %2973 = vdwg.mxu0
    %2974 = vmatprep.subr.mxu0 0.0
    %v2975 = vand.u32 %v701, 4294901760
    %2976 = vmatpush1.msra.mxu0 %v2975
    %2977 = vmatprep.subr.mxu0 0.0
    %v2978 = vand.u32 %v702, 4294901760
    %2979 = vmatpush1.msra.mxu0 %v2978
    %2980 = vmatprep.subr.mxu0 0.0
    %v2981 = vand.u32 %v703, 4294901760
    %2982 = vmatpush1.msra.mxu0 %v2981
    %2983 = vmatprep.subr.mxu0 0.0
    %v2984 = vand.u32 %v704, 4294901760
    %2985 = vmatpush1.msra.mxu0 %v2984
    %2986 = vmatprep.subr.mxu0 0.0
    %v2987 = vand.u32 %v705, 4294901760
    %2988 = vmatpush1.msra.mxu0 %v2987
    %2989 = vmatprep.subr.mxu0 0.0
    %v2990 = vand.u32 %v706, 4294901760
    %2991 = vmatpush1.msra.mxu0 %v2990
    %2992 = vmatprep.subr.mxu0 0.0
    %v2993 = vand.u32 %v707, 4294901760
    %2994 = vmatpush1.msra.mxu0 %v2993
    %2995 = vmatprep.subr.mxu0 0.0
    %v2996 = vand.u32 %v708, 4294901760
    %2997 = vmatpush1.msra.mxu0 %v2996
    %2998 = vmatprep.subr.mxu0 0.0
    %v2999 = vand.u32 %v709, 4294901760
    %3000 = vmatpush1.msra.mxu0 %v2999
    %3001 = vmatprep.subr.mxu0 0.0
    %v3002 = vand.u32 %v710, 4294901760
    %3003 = vmatpush1.msra.mxu0 %v3002
    %3004 = vmatprep.subr.mxu0 0.0
    %v3005 = vand.u32 %v711, 4294901760
    %3006 = vmatpush1.msra.mxu0 %v3005
    %3007 = vmatprep.subr.mxu0 0.0
    %v3008 = vand.u32 %v712, 4294901760
    %3009 = vmatpush1.msra.mxu0 %v3008
    %3010 = vmatprep.subr.mxu0 0.0
    %v3011 = vand.u32 %v713, 4294901760
    %3012 = vmatpush1.msra.mxu0 %v3011
    %3013 = vmatprep.subr.mxu0 0.0
    %v3014 = vand.u32 %v714, 4294901760
    %3015 = vmatpush1.msra.mxu0 %v3014
    %3016 = vmatprep.subr.mxu0 0.0
    %v3017 = vand.u32 %v715, 4294901760
    %3018 = vmatpush1.msra.mxu0 %v3017
    %3019 = vmatprep.subr.mxu0 0.0
    %v3020 = vand.u32 %v716, 4294901760
    %3021 = vmatpush1.msra.mxu0 %v3020
    %3022 = vmatprep.subr.mxu0 0.0
    %3023 = vmatpush1.msra.mxu0 0.0
    %3024 = vmatprep.subr.mxu0 0.0
    %3025 = vmatpush1.msra.mxu0 0.0
    %3026 = vmatprep.subr.mxu0 0.0
    %3027 = vmatpush1.msra.mxu0 0.0
    %3028 = vmatprep.subr.mxu0 0.0
    %3029 = vmatpush1.msra.mxu0 0.0
    %3030 = vmatprep.subr.mxu0 0.0
    %3031 = vmatpush1.msra.mxu0 0.0
    %3032 = vmatprep.subr.mxu0 0.0
    %3033 = vmatpush1.msra.mxu0 0.0
    %3034 = vmatprep.subr.mxu0 0.0
    %3035 = vmatpush1.msra.mxu0 0.0
    %3036 = vmatprep.subr.mxu0 0.0
    %3037 = vmatpush1.msra.mxu0 0.0
    %3038 = vmatprep.subr.mxu0 0.0
    %3039 = vmatpush1.msra.mxu0 0.0
    %3040 = vmatprep.subr.mxu0 0.0
    %3041 = vmatpush1.msra.mxu0 0.0
    %3042 = vmatprep.subr.mxu0 0.0
    %3043 = vmatpush1.msra.mxu0 0.0
    %3044 = vmatprep.subr.mxu0 0.0
    %3045 = vmatpush1.msra.mxu0 0.0
    %3046 = vmatprep.subr.mxu0 0.0
    %3047 = vmatpush1.msra.mxu0 0.0
    %3048 = vmatprep.subr.mxu0 0.0
    %3049 = vmatpush1.msra.mxu0 0.0
    %3050 = vmatprep.subr.mxu0 0.0
    %3051 = vmatpush1.msra.mxu0 0.0
    %3052 = vmatprep.subr.mxu0 0.0
    %3053 = vmatpush1.msra.mxu0 0.0
    %3054 = vmatprep.mubr.f32.mxu0 0.0
    %v3055 = vand.u32 %v2627, 4294901760
    %v3056 = vsub.f32 %v2627, %v3055
    %v3057 = vand.u32 %v3056, 4294901760
    %3058 = vmatmul.mubr.f32.gmra.mrb[0].mxu0 %v3057
    %v3059 = vpop.f32.mrb[0].mxu0
    %v3060 = vadd.f32 %v2971, %v3059
    %v3061 = vpop.f32.mrb[0].mxu0
    %3062 = vdwg.mxu0
    %3063 = vmatprep.subr.mxu0 0.0
    %v3064 = vand.u32 %v701, 4294901760
    %v3065 = vsub.f32 %v701, %v3064
    %v3066 = vand.u32 %v3065, 4294901760
    %3067 = vmatpush1.msra.mxu0 %v3066
    %3068 = vmatprep.subr.mxu0 0.0
    %v3069 = vand.u32 %v702, 4294901760
    %v3070 = vsub.f32 %v702, %v3069
    %v3071 = vand.u32 %v3070, 4294901760
    %3072 = vmatpush1.msra.mxu0 %v3071
    %3073 = vmatprep.subr.mxu0 0.0
    %v3074 = vand.u32 %v703, 4294901760
    %v3075 = vsub.f32 %v703, %v3074
    %v3076 = vand.u32 %v3075, 4294901760
    %3077 = vmatpush1.msra.mxu0 %v3076
    %3078 = vmatprep.subr.mxu0 0.0
    %v3079 = vand.u32 %v704, 4294901760
    %v3080 = vsub.f32 %v704, %v3079
    %v3081 = vand.u32 %v3080, 4294901760
    %3082 = vmatpush1.msra.mxu0 %v3081
    %3083 = vmatprep.subr.mxu0 0.0
    %v3084 = vand.u32 %v705, 4294901760
    %v3085 = vsub.f32 %v705, %v3084
    %v3086 = vand.u32 %v3085, 4294901760
    %3087 = vmatpush1.msra.mxu0 %v3086
    %3088 = vmatprep.subr.mxu0 0.0
    %v3089 = vand.u32 %v706, 4294901760
    %v3090 = vsub.f32 %v706, %v3089
    %v3091 = vand.u32 %v3090, 4294901760
    %3092 = vmatpush1.msra.mxu0 %v3091
    %3093 = vmatprep.subr.mxu0 0.0
    %v3094 = vand.u32 %v707, 4294901760
    %v3095 = vsub.f32 %v707, %v3094
    %v3096 = vand.u32 %v3095, 4294901760
    %3097 = vmatpush1.msra.mxu0 %v3096
    %3098 = vmatprep.subr.mxu0 0.0
    %v3099 = vand.u32 %v708, 4294901760
    %v3100 = vsub.f32 %v708, %v3099
    %v3101 = vand.u32 %v3100, 4294901760
    %3102 = vmatpush1.msra.mxu0 %v3101
    %3103 = vmatprep.subr.mxu0 0.0
    %v3104 = vand.u32 %v709, 4294901760
    %v3105 = vsub.f32 %v709, %v3104
    %v3106 = vand.u32 %v3105, 4294901760
    %3107 = vmatpush1.msra.mxu0 %v3106
    %3108 = vmatprep.subr.mxu0 0.0
    %v3109 = vand.u32 %v710, 4294901760
    %v3110 = vsub.f32 %v710, %v3109
    %v3111 = vand.u32 %v3110, 4294901760
    %3112 = vmatpush1.msra.mxu0 %v3111
    %3113 = vmatprep.subr.mxu0 0.0
    %v3114 = vand.u32 %v711, 4294901760
    %v3115 = vsub.f32 %v711, %v3114
    %v3116 = vand.u32 %v3115, 4294901760
    %3117 = vmatpush1.msra.mxu0 %v3116
    %3118 = vmatprep.subr.mxu0 0.0
    %v3119 = vand.u32 %v712, 4294901760
    %v3120 = vsub.f32 %v712, %v3119
    %v3121 = vand.u32 %v3120, 4294901760
    %3122 = vmatpush1.msra.mxu0 %v3121
    %3123 = vmatprep.subr.mxu0 0.0
    %v3124 = vand.u32 %v713, 4294901760
    %v3125 = vsub.f32 %v713, %v3124
    %v3126 = vand.u32 %v3125, 4294901760
    %3127 = vmatpush1.msra.mxu0 %v3126
    %3128 = vmatprep.subr.mxu0 0.0
    %v3129 = vand.u32 %v714, 4294901760
    %v3130 = vsub.f32 %v714, %v3129
    %v3131 = vand.u32 %v3130, 4294901760
    %3132 = vmatpush1.msra.mxu0 %v3131
    %3133 = vmatprep.subr.mxu0 0.0
    %v3134 = vand.u32 %v715, 4294901760
    %v3135 = vsub.f32 %v715, %v3134
    %v3136 = vand.u32 %v3135, 4294901760
    %3137 = vmatpush1.msra.mxu0 %v3136
    %3138 = vmatprep.subr.mxu0 0.0
    %v3139 = vand.u32 %v716, 4294901760
    %v3140 = vsub.f32 %v716, %v3139
    %v3141 = vand.u32 %v3140, 4294901760
    %3142 = vmatpush1.msra.mxu0 %v3141
    %3143 = vmatprep.subr.mxu0 0.0
    %3144 = vmatpush1.msra.mxu0 0.0
    %3145 = vmatprep.subr.mxu0 0.0
    %3146 = vmatpush1.msra.mxu0 0.0
    %3147 = vmatprep.subr.mxu0 0.0
    %3148 = vmatpush1.msra.mxu0 0.0
    %3149 = vmatprep.subr.mxu0 0.0
    %3150 = vmatpush1.msra.mxu0 0.0
    %3151 = vmatprep.subr.mxu0 0.0
    %3152 = vmatpush1.msra.mxu0 0.0
    %3153 = vmatprep.subr.mxu0 0.0
    %3154 = vmatpush1.msra.mxu0 0.0
    %3155 = vmatprep.subr.mxu0 0.0
    %3156 = vmatpush1.msra.mxu0 0.0
    %3157 = vmatprep.subr.mxu0 0.0
    %3158 = vmatpush1.msra.mxu0 0.0
    %3159 = vmatprep.subr.mxu0 0.0
    %3160 = vmatpush1.msra.mxu0 0.0
    %3161 = vmatprep.subr.mxu0 0.0
    %3162 = vmatpush1.msra.mxu0 0.0
    %3163 = vmatprep.subr.mxu0 0.0
    %3164 = vmatpush1.msra.mxu0 0.0
    %3165 = vmatprep.subr.mxu0 0.0
    %3166 = vmatpush1.msra.mxu0 0.0
    %3167 = vmatprep.subr.mxu0 0.0
    %3168 = vmatpush1.msra.mxu0 0.0
    %3169 = vmatprep.subr.mxu0 0.0
    %3170 = vmatpush1.msra.mxu0 0.0
    %3171 = vmatprep.subr.mxu0 0.0
    %3172 = vmatpush1.msra.mxu0 0.0
    %3173 = vmatprep.subr.mxu0 0.0
    %3174 = vmatpush1.msra.mxu0 0.0
    %3175 = vmatprep.mubr.f32.mxu0 0.0
    %v3176 = vand.u32 %v2627, 4294901760
    %3177 = vmatmul.mubr.f32.gmra.mrb[0].mxu0 %v3176
    %v3178 = vpop.f32.mrb[0].mxu0
    %v3179 = vadd.f32 %v3060, %v3178
    %v3180 = vpop.f32.mrb[0].mxu0
    %3181 = vdwg.mxu0
    %3182 = vmatprep.subr.mxu0 0.0
    %v3183 = vand.u32 %v701, 4294901760
    %3184 = vmatpush1.msra.mxu0 %v3183
    %3185 = vmatprep.subr.mxu0 0.0
    %v3186 = vand.u32 %v702, 4294901760
    %3187 = vmatpush1.msra.mxu0 %v3186
    %3188 = vmatprep.subr.mxu0 0.0
    %v3189 = vand.u32 %v703, 4294901760
    %3190 = vmatpush1.msra.mxu0 %v3189
    %3191 = vmatprep.subr.mxu0 0.0
    %v3192 = vand.u32 %v704, 4294901760
    %3193 = vmatpush1.msra.mxu0 %v3192
    %3194 = vmatprep.subr.mxu0 0.0
    %v3195 = vand.u32 %v705, 4294901760
    %3196 = vmatpush1.msra.mxu0 %v3195
    %3197 = vmatprep.subr.mxu0 0.0
    %v3198 = vand.u32 %v706, 4294901760
    %3199 = vmatpush1.msra.mxu0 %v3198
    %3200 = vmatprep.subr.mxu0 0.0
    %v3201 = vand.u32 %v707, 4294901760
    %3202 = vmatpush1.msra.mxu0 %v3201
    %3203 = vmatprep.subr.mxu0 0.0
    %v3204 = vand.u32 %v708, 4294901760
    %3205 = vmatpush1.msra.mxu0 %v3204
    %3206 = vmatprep.subr.mxu0 0.0
    %v3207 = vand.u32 %v709, 4294901760
    %3208 = vmatpush1.msra.mxu0 %v3207
    %3209 = vmatprep.subr.mxu0 0.0
    %v3210 = vand.u32 %v710, 4294901760
    %3211 = vmatpush1.msra.mxu0 %v3210
    %3212 = vmatprep.subr.mxu0 0.0
    %v3213 = vand.u32 %v711, 4294901760
    %3214 = vmatpush1.msra.mxu0 %v3213
    %3215 = vmatprep.subr.mxu0 0.0
    %v3216 = vand.u32 %v712, 4294901760
    %3217 = vmatpush1.msra.mxu0 %v3216
    %3218 = vmatprep.subr.mxu0 0.0
    %v3219 = vand.u32 %v713, 4294901760
    %3220 = vmatpush1.msra.mxu0 %v3219
    %3221 = vmatprep.subr.mxu0 0.0
    %v3222 = vand.u32 %v714, 4294901760
    %3223 = vmatpush1.msra.mxu0 %v3222
    %3224 = vmatprep.subr.mxu0 0.0
    %v3225 = vand.u32 %v715, 4294901760
    %3226 = vmatpush1.msra.mxu0 %v3225
    %3227 = vmatprep.subr.mxu0 0.0
    %v3228 = vand.u32 %v716, 4294901760
    %3229 = vmatpush1.msra.mxu0 %v3228
    %3230 = vmatprep.subr.mxu0 0.0
    %3231 = vmatpush1.msra.mxu0 0.0
    %3232 = vmatprep.subr.mxu0 0.0
    %3233 = vmatpush1.msra.mxu0 0.0
    %3234 = vmatprep.subr.mxu0 0.0
    %3235 = vmatpush1.msra.mxu0 0.0
    %3236 = vmatprep.subr.mxu0 0.0
    %3237 = vmatpush1.msra.mxu0 0.0
    %3238 = vmatprep.subr.mxu0 0.0
    %3239 = vmatpush1.msra.mxu0 0.0
    %3240 = vmatprep.subr.mxu0 0.0
    %3241 = vmatpush1.msra.mxu0 0.0
    %3242 = vmatprep.subr.mxu0 0.0
    %3243 = vmatpush1.msra.mxu0 0.0
    %3244 = vmatprep.subr.mxu0 0.0
    %3245 = vmatpush1.msra.mxu0 0.0
    %3246 = vmatprep.subr.mxu0 0.0
    %3247 = vmatpush1.msra.mxu0 0.0
    %3248 = vmatprep.subr.mxu0 0.0
    %3249 = vmatpush1.msra.mxu0 0.0
    %3250 = vmatprep.subr.mxu0 0.0
    %3251 = vmatpush1.msra.mxu0 0.0
    %3252 = vmatprep.subr.mxu0 0.0
    %3253 = vmatpush1.msra.mxu0 0.0
    %3254 = vmatprep.subr.mxu0 0.0
    %3255 = vmatpush1.msra.mxu0 0.0
    %3256 = vmatprep.subr.mxu0 0.0
    %3257 = vmatpush1.msra.mxu0 0.0
    %3258 = vmatprep.subr.mxu0 0.0
    %3259 = vmatpush1.msra.mxu0 0.0
    %3260 = vmatprep.subr.mxu0 0.0
    %3261 = vmatpush1.msra.mxu0 0.0
    %3262 = vmatprep.mubr.f32.mxu0 0.0
    %v3263 = vand.u32 %v2627, 4294901760
    %3264 = vmatmul.mubr.f32.gmra.mrb[0].mxu0 %v3263
    %v3265 = vpop.f32.mrb[0].mxu0
    %v3266 = vadd.f32 %v3179, %v3265
    %v3267 = vpop.f32.mrb[0].mxu0
    %3268 = vdwg.mxu0
    %v3269 = vmul.f32 %v3266, 0.00390625
    %v3270 = vmul.f32 %v3269, %v3269
    %v3272 = vrot.slane %v3270, 7
    %v3274 = vsub.f32 %v3269, %v3272
    %v3275 = vmax.f32 %v3274, 0.0
    %v3276 = vlaneseq
    %v3277 = vshrl.u32 %v3276, 7
    %v3278 = vsub.s32 0, %v3277
    %v3279 = vrot.slane %v3269, %v3278
    %v3280 = vsub.f32 %v2609, %v3279
    %v3281 = vsub.f32 %v2610, %v3279
    %v3282 = vadd.f32 %v3275, 8.0
    %v3283 = vrsqrt.pop %v3282
    %v3284 = vlaneseq
    %v3285 = vshrl.u32 %v3284, 7
    %v3286 = vsub.s32 1, %v3285
    %v3287 = vrot.slane %v3283, %v3286
    %v3288 = vmul.f32 %v3280, %v3287
    %v3289 = vmul.f32 %v3281, %v3287
    %v3290 = vld [vmem:[%s6 + $0x2] sm:$0x1]
    %v3291 = vlaneseq
    %v3292 = vshrl.u32 %v3291, 7
    %v3293 = vsub.s32 0, %v3292
    %v3294 = vrot.slane %v3290, %v3293
    %v3295 = vmul.f32 %v3288, %v3294
    %v3296 = vmul.f32 %v3289, %v3294
    %v3297 = vld [vmem:[#allocation10 + $0x2] sm:$0x1]
    %v3298 = vlaneseq
    %v3299 = vshrl.u32 %v3298, 7
    %v3300 = vsub.s32 0, %v3299
    %v3301 = vrot.slane %v3297, %v3300
    %v3302 = vadd.f32 %v3295, %v3301
    %v3303 = vadd.f32 %v3296, %v3301
    %v3306 = vrot.slane %v3302, 7
    %v3307 = vrot.slane %v3303, 7
    %v3310 = vsel %vm134, 0.0, %v3306
    %v3311 = vsel %vm134, 0.0, %v3307
    %v3312 = vsel %vm134, %v3306, 0.0
    %v3313 = vsel %vm134, %v3307, 0.0
    %v3314 = vpack.c.bf16 %v3311, %v3310
    %v3319 = vrot.slane %v3310, 1
    %v3320 = vrot.slane %v3312, 1
    %v3321 = vsel %vm1426, %v3319, %v3320
    %v3322 = vrot.slane %v3311, 1
    %v3323 = vrot.slane %v3313, 1
    %v3324 = vsel %vm1426, %v3322, %v3323
    %v3327 = vpack.c.bf16 %v3324, %v3321
    %3328 = vmatprep.subr.bf16.mxu0 0
    %3329 = vmatpush1.bf16.msra.mxu0 %v1484
    %3330 = vmatprep.subr.bf16.mxu0 0
    %3331 = vmatpush1.bf16.msra.mxu0 %v1485
    %3332 = vmatprep.subr.bf16.mxu0 0
    %3333 = vmatpush1.bf16.msra.mxu0 %v1486
    %3334 = vmatprep.subr.bf16.mxu0 0
    %3335 = vmatpush1.bf16.msra.mxu0 %v1487
    %3336 = vmatprep.subr.bf16.mxu0 0
    %3337 = vmatpush1.bf16.msra.mxu0 %v1488
    %3338 = vmatprep.subr.bf16.mxu0 0
    %3339 = vmatpush1.bf16.msra.mxu0 %v1489
    %3340 = vmatprep.subr.bf16.mxu0 0
    %3341 = vmatpush1.bf16.msra.mxu0 %v1490
    %3342 = vmatprep.subr.bf16.mxu0 0
    %3343 = vmatpush1.bf16.msra.mxu0 %v1491
    %3344 = vmatprep.subr.bf16.mxu0 0
    %3345 = vmatpush1.bf16.msra.mxu0 0
    %3346 = vmatprep.subr.bf16.mxu0 0
    %3347 = vmatpush1.bf16.msra.mxu0 0
    %3348 = vmatprep.subr.bf16.mxu0 0
    %3349 = vmatpush1.bf16.msra.mxu0 0
    %3350 = vmatprep.subr.bf16.mxu0 0
    %3351 = vmatpush1.bf16.msra.mxu0 0
    %3352 = vmatprep.subr.bf16.mxu0 0
    %3353 = vmatpush1.bf16.msra.mxu0 0
    %3354 = vmatprep.subr.bf16.mxu0 0
    %3355 = vmatpush1.bf16.msra.mxu0 0
    %3356 = vmatprep.subr.bf16.mxu0 0
    %3357 = vmatpush1.bf16.msra.mxu0 0
    %3358 = vmatprep.subr.bf16.mxu0 0
    %3359 = vmatpush1.bf16.msra.mxu0 0
    %3360 = vmatprep.mubr.bf16.mxu0 0
    %3361 = vmatmul.mubr.bf16.gmra.mrb[0].mxu0 %v3327
    %v3362 = vpop.f32.mrb[0].mxu0
    %v3363 = vadd.f32 0.0, %v3362
    %v3364 = vpop.f32.mrb[0].mxu0
    %v3365 = vpop.f32.mrb[0].mxu0
    %v3366 = vadd.f32 0.0, %v3365
    %v3367 = vpop.f32.mrb[0].mxu0
    %3368 = vdwg.mxu0
    %3369 = vmatprep.subr.bf16.mxu0 0
    %3370 = vmatpush1.bf16.msra.mxu0 %v1573
    %3371 = vmatprep.subr.bf16.mxu0 0
    %3372 = vmatpush1.bf16.msra.mxu0 %v1574
    %3373 = vmatprep.subr.bf16.mxu0 0
    %3374 = vmatpush1.bf16.msra.mxu0 %v1575
    %3375 = vmatprep.subr.bf16.mxu0 0
    %3376 = vmatpush1.bf16.msra.mxu0 %v1576
    %3377 = vmatprep.subr.bf16.mxu0 0
    %3378 = vmatpush1.bf16.msra.mxu0 %v1577
    %3379 = vmatprep.subr.bf16.mxu0 0
    %3380 = vmatpush1.bf16.msra.mxu0 %v1578
    %3381 = vmatprep.subr.bf16.mxu0 0
    %3382 = vmatpush1.bf16.msra.mxu0 %v1579
    %3383 = vmatprep.subr.bf16.mxu0 0
    %3384 = vmatpush1.bf16.msra.mxu0 %v1580
    %3385 = vmatprep.subr.bf16.mxu0 0
    %3386 = vmatpush1.bf16.msra.mxu0 0
    %3387 = vmatprep.subr.bf16.mxu0 0
    %3388 = vmatpush1.bf16.msra.mxu0 0
    %3389 = vmatprep.subr.bf16.mxu0 0
    %3390 = vmatpush1.bf16.msra.mxu0 0
    %3391 = vmatprep.subr.bf16.mxu0 0
    %3392 = vmatpush1.bf16.msra.mxu0 0
    %3393 = vmatprep.subr.bf16.mxu0 0
    %3394 = vmatpush1.bf16.msra.mxu0 0
    %3395 = vmatprep.subr.bf16.mxu0 0
    %3396 = vmatpush1.bf16.msra.mxu0 0
    %3397 = vmatprep.subr.bf16.mxu0 0
    %3398 = vmatpush1.bf16.msra.mxu0 0
    %3399 = vmatprep.subr.bf16.mxu0 0
    %3400 = vmatpush1.bf16.msra.mxu0 0
    %3401 = vmatprep.mubr.bf16.mxu0 0
    %3402 = vmatmul.mubr.bf16.gmra.mrb[0].mxu0 %v3314
    %v3403 = vpop.f32.mrb[0].mxu0
    %v3404 = vadd.f32 %v3363, %v3403
    %v3405 = vpop.f32.mrb[0].mxu0
    %v3406 = vpop.f32.mrb[0].mxu0
    %v3407 = vadd.f32 %v3366, %v3406
    %v3408 = vpop.f32.mrb[0].mxu0
    %3409 = vdwg.mxu0
    %v3410 = vrot.slane %v3310, 2
    %v3411 = vrot.slane %v3312, 2
    %v3412 = vsel %vm1630, %v3410, %v3411
    %v3413 = vrot.slane %v3311, 2
    %v3414 = vrot.slane %v3313, 2
    %v3415 = vsel %vm1630, %v3413, %v3414
    %v3418 = vpack.c.bf16 %v3415, %v3412
    %3419 = vmatprep.subr.bf16.mxu0 0
    %3420 = vmatpush1.bf16.msra.mxu0 %v1688
    %3421 = vmatprep.subr.bf16.mxu0 0
    %3422 = vmatpush1.bf16.msra.mxu0 %v1689
    %3423 = vmatprep.subr.bf16.mxu0 0
    %3424 = vmatpush1.bf16.msra.mxu0 %v1690
    %3425 = vmatprep.subr.bf16.mxu0 0
    %3426 = vmatpush1.bf16.msra.mxu0 %v1691
    %3427 = vmatprep.subr.bf16.mxu0 0
    %3428 = vmatpush1.bf16.msra.mxu0 %v1692
    %3429 = vmatprep.subr.bf16.mxu0 0
    %3430 = vmatpush1.bf16.msra.mxu0 %v1693
    %3431 = vmatprep.subr.bf16.mxu0 0
    %3432 = vmatpush1.bf16.msra.mxu0 %v1694
    %3433 = vmatprep.subr.bf16.mxu0 0
    %3434 = vmatpush1.bf16.msra.mxu0 %v1695
    %3435 = vmatprep.subr.bf16.mxu0 0
    %3436 = vmatpush1.bf16.msra.mxu0 0
    %3437 = vmatprep.subr.bf16.mxu0 0
    %3438 = vmatpush1.bf16.msra.mxu0 0
    %3439 = vmatprep.subr.bf16.mxu0 0
    %3440 = vmatpush1.bf16.msra.mxu0 0
    %3441 = vmatprep.subr.bf16.mxu0 0
    %3442 = vmatpush1.bf16.msra.mxu0 0
    %3443 = vmatprep.subr.bf16.mxu0 0
    %3444 = vmatpush1.bf16.msra.mxu0 0
    %3445 = vmatprep.subr.bf16.mxu0 0
    %3446 = vmatpush1.bf16.msra.mxu0 0
    %3447 = vmatprep.subr.bf16.mxu0 0
    %3448 = vmatpush1.bf16.msra.mxu0 0
    %3449 = vmatprep.subr.bf16.mxu0 0
    %3450 = vmatpush1.bf16.msra.mxu0 0
    %3451 = vmatprep.mubr.bf16.mxu0 0
    %3452 = vmatmul.mubr.bf16.gmra.mrb[0].mxu0 %v3418
    %v3453 = vpop.f32.mrb[0].mxu0
    %v3454 = vadd.f32 0.0, %v3453
    %v3455 = vpop.f32.mrb[0].mxu0
    %v3456 = vpop.f32.mrb[0].mxu0
    %v3457 = vadd.f32 0.0, %v3456
    %v3458 = vpop.f32.mrb[0].mxu0
    %3459 = vdwg.mxu0
    %v3460 = vadd.f32 %v3404, %v3454
    %v3461 = vadd.f32 %v3407, %v3457
    %v3462 = vadd.f32 %v3460, %v1751
    %v3463 = vadd.f32 %v3461, %v1751
    %v3464 = vmax.f32 %v3462, 0.0
    %v3465 = vmax.f32 %v3463, 0.0
    %v3466 = vadd.f32 %v3464, %v3465
    %v3467 = vrot.slane %v3466, 4
    %v3468 = vadd.f32 %v3466, %v3467
    %v3469 = vrot.slane %v3468, 2
    %v3470 = vadd.f32 %v3468, %v3469
    %v3471 = vrot.slane %v3470, 1
    %v3472 = vadd.f32 %v3470, %v3471
    %v3473 = vmul.f32 %v3464, %v3464
    %v3474 = vmul.f32 %v3465, %v3465
    %v3475 = vadd.f32 %v3473, %v3474
    %v3476 = vrot.slane %v3475, 4
    %v3477 = vadd.f32 %v3475, %v3476
    %v3478 = vrot.slane %v3477, 2
    %v3479 = vadd.f32 %v3477, %v3478
    %v3480 = vrot.slane %v3479, 1
    %v3481 = vadd.f32 %v3479, %v3480
    %v3482 = vsel %vm134, %v3472, %v3481
    %3483 = vmatprep.subr.mxu0 0.0
    %v3484 = vand.u32 %v701, 4294901760
    %3485 = vmatpush1.msra.mxu0 %v3484
    %3486 = vmatprep.subr.mxu0 0.0
    %v3487 = vand.u32 %v702, 4294901760
    %3488 = vmatpush1.msra.mxu0 %v3487
    %3489 = vmatprep.subr.mxu0 0.0
    %v3490 = vand.u32 %v703, 4294901760
    %3491 = vmatpush1.msra.mxu0 %v3490
    %3492 = vmatprep.subr.mxu0 0.0
    %v3493 = vand.u32 %v704, 4294901760
    %3494 = vmatpush1.msra.mxu0 %v3493
    %3495 = vmatprep.subr.mxu0 0.0
    %v3496 = vand.u32 %v705, 4294901760
    %3497 = vmatpush1.msra.mxu0 %v3496
    %3498 = vmatprep.subr.mxu0 0.0
    %v3499 = vand.u32 %v706, 4294901760
    %3500 = vmatpush1.msra.mxu0 %v3499
    %3501 = vmatprep.subr.mxu0 0.0
    %v3502 = vand.u32 %v707, 4294901760
    %3503 = vmatpush1.msra.mxu0 %v3502
    %3504 = vmatprep.subr.mxu0 0.0
    %v3505 = vand.u32 %v708, 4294901760
    %3506 = vmatpush1.msra.mxu0 %v3505
    %3507 = vmatprep.subr.mxu0 0.0
    %v3508 = vand.u32 %v709, 4294901760
    %3509 = vmatpush1.msra.mxu0 %v3508
    %3510 = vmatprep.subr.mxu0 0.0
    %v3511 = vand.u32 %v710, 4294901760
    %3512 = vmatpush1.msra.mxu0 %v3511
    %3513 = vmatprep.subr.mxu0 0.0
    %v3514 = vand.u32 %v711, 4294901760
    %3515 = vmatpush1.msra.mxu0 %v3514
    %3516 = vmatprep.subr.mxu0 0.0
    %v3517 = vand.u32 %v712, 4294901760
    %3518 = vmatpush1.msra.mxu0 %v3517
    %3519 = vmatprep.subr.mxu0 0.0
    %v3520 = vand.u32 %v713, 4294901760
    %3521 = vmatpush1.msra.mxu0 %v3520
    %3522 = vmatprep.subr.mxu0 0.0
    %v3523 = vand.u32 %v714, 4294901760
    %3524 = vmatpush1.msra.mxu0 %v3523
    %3525 = vmatprep.subr.mxu0 0.0
    %v3526 = vand.u32 %v715, 4294901760
    %3527 = vmatpush1.msra.mxu0 %v3526
    %3528 = vmatprep.subr.mxu0 0.0
    %v3529 = vand.u32 %v716, 4294901760
    %3530 = vmatpush1.msra.mxu0 %v3529
    %3531 = vmatprep.subr.mxu0 0.0
    %3532 = vmatpush1.msra.mxu0 0.0
    %3533 = vmatprep.subr.mxu0 0.0
    %3534 = vmatpush1.msra.mxu0 0.0
    %3535 = vmatprep.subr.mxu0 0.0
    %3536 = vmatpush1.msra.mxu0 0.0
    %3537 = vmatprep.subr.mxu0 0.0
    %3538 = vmatpush1.msra.mxu0 0.0
    %3539 = vmatprep.subr.mxu0 0.0
    %3540 = vmatpush1.msra.mxu0 0.0
    %3541 = vmatprep.subr.mxu0 0.0
    %3542 = vmatpush1.msra.mxu0 0.0
    %3543 = vmatprep.subr.mxu0 0.0
    %3544 = vmatpush1.msra.mxu0 0.0
    %3545 = vmatprep.subr.mxu0 0.0
    %3546 = vmatpush1.msra.mxu0 0.0
    %3547 = vmatprep.subr.mxu0 0.0
    %3548 = vmatpush1.msra.mxu0 0.0
    %3549 = vmatprep.subr.mxu0 0.0
    %3550 = vmatpush1.msra.mxu0 0.0
    %3551 = vmatprep.subr.mxu0 0.0
    %3552 = vmatpush1.msra.mxu0 0.0
    %3553 = vmatprep.subr.mxu0 0.0
    %3554 = vmatpush1.msra.mxu0 0.0
    %3555 = vmatprep.subr.mxu0 0.0
    %3556 = vmatpush1.msra.mxu0 0.0
    %3557 = vmatprep.subr.mxu0 0.0
    %3558 = vmatpush1.msra.mxu0 0.0
    %3559 = vmatprep.subr.mxu0 0.0
    %3560 = vmatpush1.msra.mxu0 0.0
    %3561 = vmatprep.subr.mxu0 0.0
    %3562 = vmatpush1.msra.mxu0 0.0
    %3563 = vmatprep.mubr.f32.mxu0 0.0
    %v3564 = vand.u32 %v3482, 4294901760
    %v3565 = vsub.f32 %v3482, %v3564
    %v3566 = vand.u32 %v3565, 4294901760
    %v3567 = vsub.f32 %v3565, %v3566
    %v3568 = vand.u32 %v3567, 4294901760
    %3569 = vmatmul.mubr.f32.gmra.mrb[0].mxu0 %v3568
    %v3570 = vpop.f32.mrb[0].mxu0
    %v3571 = vadd.f32 0.0, %v3570
    %v3572 = vpop.f32.mrb[0].mxu0
    %3573 = vdwg.mxu0
    %3574 = vmatprep.subr.mxu0 0.0
    %v3575 = vand.u32 %v701, 4294901760
    %v3576 = vsub.f32 %v701, %v3575
    %v3577 = vand.u32 %v3576, 4294901760
    %v3578 = vsub.f32 %v3576, %v3577
    %v3579 = vand.u32 %v3578, 4294901760
    %3580 = vmatpush1.msra.mxu0 %v3579
    %3581 = vmatprep.subr.mxu0 0.0
    %v3582 = vand.u32 %v702, 4294901760
    %v3583 = vsub.f32 %v702, %v3582
    %v3584 = vand.u32 %v3583, 4294901760
    %v3585 = vsub.f32 %v3583, %v3584
    %v3586 = vand.u32 %v3585, 4294901760
    %3587 = vmatpush1.msra.mxu0 %v3586
    %3588 = vmatprep.subr.mxu0 0.0
    %v3589 = vand.u32 %v703, 4294901760
    %v3590 = vsub.f32 %v703, %v3589
    %v3591 = vand.u32 %v3590, 4294901760
    %v3592 = vsub.f32 %v3590, %v3591
    %v3593 = vand.u32 %v3592, 4294901760
    %3594 = vmatpush1.msra.mxu0 %v3593
    %3595 = vmatprep.subr.mxu0 0.0
    %v3596 = vand.u32 %v704, 4294901760
    %v3597 = vsub.f32 %v704, %v3596
    %v3598 = vand.u32 %v3597, 4294901760
    %v3599 = vsub.f32 %v3597, %v3598
    %v3600 = vand.u32 %v3599, 4294901760
    %3601 = vmatpush1.msra.mxu0 %v3600
    %3602 = vmatprep.subr.mxu0 0.0
    %v3603 = vand.u32 %v705, 4294901760
    %v3604 = vsub.f32 %v705, %v3603
    %v3605 = vand.u32 %v3604, 4294901760
    %v3606 = vsub.f32 %v3604, %v3605
    %v3607 = vand.u32 %v3606, 4294901760
    %3608 = vmatpush1.msra.mxu0 %v3607
    %3609 = vmatprep.subr.mxu0 0.0
    %v3610 = vand.u32 %v706, 4294901760
    %v3611 = vsub.f32 %v706, %v3610
    %v3612 = vand.u32 %v3611, 4294901760
    %v3613 = vsub.f32 %v3611, %v3612
    %v3614 = vand.u32 %v3613, 4294901760
    %3615 = vmatpush1.msra.mxu0 %v3614
    %3616 = vmatprep.subr.mxu0 0.0
    %v3617 = vand.u32 %v707, 4294901760
    %v3618 = vsub.f32 %v707, %v3617
    %v3619 = vand.u32 %v3618, 4294901760
    %v3620 = vsub.f32 %v3618, %v3619
    %v3621 = vand.u32 %v3620, 4294901760
    %3622 = vmatpush1.msra.mxu0 %v3621
    %3623 = vmatprep.subr.mxu0 0.0
    %v3624 = vand.u32 %v708, 4294901760
    %v3625 = vsub.f32 %v708, %v3624
    %v3626 = vand.u32 %v3625, 4294901760
    %v3627 = vsub.f32 %v3625, %v3626
    %v3628 = vand.u32 %v3627, 4294901760
    %3629 = vmatpush1.msra.mxu0 %v3628
    %3630 = vmatprep.subr.mxu0 0.0
    %v3631 = vand.u32 %v709, 4294901760
    %v3632 = vsub.f32 %v709, %v3631
    %v3633 = vand.u32 %v3632, 4294901760
    %v3634 = vsub.f32 %v3632, %v3633
    %v3635 = vand.u32 %v3634, 4294901760
    %3636 = vmatpush1.msra.mxu0 %v3635
    %3637 = vmatprep.subr.mxu0 0.0
    %v3638 = vand.u32 %v710, 4294901760
    %v3639 = vsub.f32 %v710, %v3638
    %v3640 = vand.u32 %v3639, 4294901760
    %v3641 = vsub.f32 %v3639, %v3640
    %v3642 = vand.u32 %v3641, 4294901760
    %3643 = vmatpush1.msra.mxu0 %v3642
    %3644 = vmatprep.subr.mxu0 0.0
    %v3645 = vand.u32 %v711, 4294901760
    %v3646 = vsub.f32 %v711, %v3645
    %v3647 = vand.u32 %v3646, 4294901760
    %v3648 = vsub.f32 %v3646, %v3647
    %v3649 = vand.u32 %v3648, 4294901760
    %3650 = vmatpush1.msra.mxu0 %v3649
    %3651 = vmatprep.subr.mxu0 0.0
    %v3652 = vand.u32 %v712, 4294901760
    %v3653 = vsub.f32 %v712, %v3652
    %v3654 = vand.u32 %v3653, 4294901760
    %v3655 = vsub.f32 %v3653, %v3654
    %v3656 = vand.u32 %v3655, 4294901760
    %3657 = vmatpush1.msra.mxu0 %v3656
    %3658 = vmatprep.subr.mxu0 0.0
    %v3659 = vand.u32 %v713, 4294901760
    %v3660 = vsub.f32 %v713, %v3659
    %v3661 = vand.u32 %v3660, 4294901760
    %v3662 = vsub.f32 %v3660, %v3661
    %v3663 = vand.u32 %v3662, 4294901760
    %3664 = vmatpush1.msra.mxu0 %v3663
    %3665 = vmatprep.subr.mxu0 0.0
    %v3666 = vand.u32 %v714, 4294901760
    %v3667 = vsub.f32 %v714, %v3666
    %v3668 = vand.u32 %v3667, 4294901760
    %v3669 = vsub.f32 %v3667, %v3668
    %v3670 = vand.u32 %v3669, 4294901760
    %3671 = vmatpush1.msra.mxu0 %v3670
    %3672 = vmatprep.subr.mxu0 0.0
    %v3673 = vand.u32 %v715, 4294901760
    %v3674 = vsub.f32 %v715, %v3673
    %v3675 = vand.u32 %v3674, 4294901760
    %v3676 = vsub.f32 %v3674, %v3675
    %v3677 = vand.u32 %v3676, 4294901760
    %3678 = vmatpush1.msra.mxu0 %v3677
    %3679 = vmatprep.subr.mxu0 0.0
    %v3680 = vand.u32 %v716, 4294901760
    %v3681 = vsub.f32 %v716, %v3680
    %v3682 = vand.u32 %v3681, 4294901760
    %v3683 = vsub.f32 %v3681, %v3682
    %v3684 = vand.u32 %v3683, 4294901760
    %3685 = vmatpush1.msra.mxu0 %v3684
    %3686 = vmatprep.subr.mxu0 0.0
    %3687 = vmatpush1.msra.mxu0 0.0
    %3688 = vmatprep.subr.mxu0 0.0
    %3689 = vmatpush1.msra.mxu0 0.0
    %3690 = vmatprep.subr.mxu0 0.0
    %3691 = vmatpush1.msra.mxu0 0.0
    %3692 = vmatprep.subr.mxu0 0.0
    %3693 = vmatpush1.msra.mxu0 0.0
    %3694 = vmatprep.subr.mxu0 0.0
    %3695 = vmatpush1.msra.mxu0 0.0
    %3696 = vmatprep.subr.mxu0 0.0
    %3697 = vmatpush1.msra.mxu0 0.0
    %3698 = vmatprep.subr.mxu0 0.0
    %3699 = vmatpush1.msra.mxu0 0.0
    %3700 = vmatprep.subr.mxu0 0.0
    %3701 = vmatpush1.msra.mxu0 0.0
    %3702 = vmatprep.subr.mxu0 0.0
    %3703 = vmatpush1.msra.mxu0 0.0
    %3704 = vmatprep.subr.mxu0 0.0
    %3705 = vmatpush1.msra.mxu0 0.0
    %3706 = vmatprep.subr.mxu0 0.0
    %3707 = vmatpush1.msra.mxu0 0.0
    %3708 = vmatprep.subr.mxu0 0.0
    %3709 = vmatpush1.msra.mxu0 0.0
    %3710 = vmatprep.subr.mxu0 0.0
    %3711 = vmatpush1.msra.mxu0 0.0
    %3712 = vmatprep.subr.mxu0 0.0
    %3713 = vmatpush1.msra.mxu0 0.0
    %3714 = vmatprep.subr.mxu0 0.0
    %3715 = vmatpush1.msra.mxu0 0.0
    %3716 = vmatprep.subr.mxu0 0.0
    %3717 = vmatpush1.msra.mxu0 0.0
    %3718 = vmatprep.mubr.f32.mxu0 0.0
    %v3719 = vand.u32 %v3482, 4294901760
    %3720 = vmatmul.mubr.f32.gmra.mrb[0].mxu0 %v3719
    %v3721 = vpop.f32.mrb[0].mxu0
    %v3722 = vadd.f32 %v3571, %v3721
    %v3723 = vpop.f32.mrb[0].mxu0
    %3724 = vdwg.mxu0
    %3725 = vmatprep.subr.mxu0 0.0
    %v3726 = vand.u32 %v701, 4294901760
    %v3727 = vsub.f32 %v701, %v3726
    %3728 = vmatpush1.msra.mxu0 %v3727
    %3729 = vmatprep.subr.mxu0 0.0
    %v3730 = vand.u32 %v702, 4294901760
    %v3731 = vsub.f32 %v702, %v3730
    %3732 = vmatpush1.msra.mxu0 %v3731
    %3733 = vmatprep.subr.mxu0 0.0
    %v3734 = vand.u32 %v703, 4294901760
    %v3735 = vsub.f32 %v703, %v3734
    %3736 = vmatpush1.msra.mxu0 %v3735
    %3737 = vmatprep.subr.mxu0 0.0
    %v3738 = vand.u32 %v704, 4294901760
    %v3739 = vsub.f32 %v704, %v3738
    %3740 = vmatpush1.msra.mxu0 %v3739
    %3741 = vmatprep.subr.mxu0 0.0
    %v3742 = vand.u32 %v705, 4294901760
    %v3743 = vsub.f32 %v705, %v3742
    %3744 = vmatpush1.msra.mxu0 %v3743
    %3745 = vmatprep.subr.mxu0 0.0
    %v3746 = vand.u32 %v706, 4294901760
    %v3747 = vsub.f32 %v706, %v3746
    %3748 = vmatpush1.msra.mxu0 %v3747
    %3749 = vmatprep.subr.mxu0 0.0
    %v3750 = vand.u32 %v707, 4294901760
    %v3751 = vsub.f32 %v707, %v3750
    %3752 = vmatpush1.msra.mxu0 %v3751
    %3753 = vmatprep.subr.mxu0 0.0
    %v3754 = vand.u32 %v708, 4294901760
    %v3755 = vsub.f32 %v708, %v3754
    %3756 = vmatpush1.msra.mxu0 %v3755
    %3757 = vmatprep.subr.mxu0 0.0
    %v3758 = vand.u32 %v709, 4294901760
    %v3759 = vsub.f32 %v709, %v3758
    %3760 = vmatpush1.msra.mxu0 %v3759
    %3761 = vmatprep.subr.mxu0 0.0
    %v3762 = vand.u32 %v710, 4294901760
    %v3763 = vsub.f32 %v710, %v3762
    %3764 = vmatpush1.msra.mxu0 %v3763
    %3765 = vmatprep.subr.mxu0 0.0
    %v3766 = vand.u32 %v711, 4294901760
    %v3767 = vsub.f32 %v711, %v3766
    %3768 = vmatpush1.msra.mxu0 %v3767
    %3769 = vmatprep.subr.mxu0 0.0
    %v3770 = vand.u32 %v712, 4294901760
    %v3771 = vsub.f32 %v712, %v3770
    %3772 = vmatpush1.msra.mxu0 %v3771
    %3773 = vmatprep.subr.mxu0 0.0
    %v3774 = vand.u32 %v713, 4294901760
    %v3775 = vsub.f32 %v713, %v3774
    %3776 = vmatpush1.msra.mxu0 %v3775
    %3777 = vmatprep.subr.mxu0 0.0
    %v3778 = vand.u32 %v714, 4294901760
    %v3779 = vsub.f32 %v714, %v3778
    %3780 = vmatpush1.msra.mxu0 %v3779
    %3781 = vmatprep.subr.mxu0 0.0
    %v3782 = vand.u32 %v715, 4294901760
    %v3783 = vsub.f32 %v715, %v3782
    %3784 = vmatpush1.msra.mxu0 %v3783
    %3785 = vmatprep.subr.mxu0 0.0
    %v3786 = vand.u32 %v716, 4294901760
    %v3787 = vsub.f32 %v716, %v3786
    %3788 = vmatpush1.msra.mxu0 %v3787
    %3789 = vmatprep.subr.mxu0 0.0
    %3790 = vmatpush1.msra.mxu0 0.0
    %3791 = vmatprep.subr.mxu0 0.0
    %3792 = vmatpush1.msra.mxu0 0.0
    %3793 = vmatprep.subr.mxu0 0.0
    %3794 = vmatpush1.msra.mxu0 0.0
    %3795 = vmatprep.subr.mxu0 0.0
    %3796 = vmatpush1.msra.mxu0 0.0
    %3797 = vmatprep.subr.mxu0 0.0
    %3798 = vmatpush1.msra.mxu0 0.0
    %3799 = vmatprep.subr.mxu0 0.0
    %3800 = vmatpush1.msra.mxu0 0.0
    %3801 = vmatprep.subr.mxu0 0.0
    %3802 = vmatpush1.msra.mxu0 0.0
    %3803 = vmatprep.subr.mxu0 0.0
    %3804 = vmatpush1.msra.mxu0 0.0
    %3805 = vmatprep.subr.mxu0 0.0
    %3806 = vmatpush1.msra.mxu0 0.0
    %3807 = vmatprep.subr.mxu0 0.0
    %3808 = vmatpush1.msra.mxu0 0.0
    %3809 = vmatprep.subr.mxu0 0.0
    %3810 = vmatpush1.msra.mxu0 0.0
    %3811 = vmatprep.subr.mxu0 0.0
    %3812 = vmatpush1.msra.mxu0 0.0
    %3813 = vmatprep.subr.mxu0 0.0
    %3814 = vmatpush1.msra.mxu0 0.0
    %3815 = vmatprep.subr.mxu0 0.0
    %3816 = vmatpush1.msra.mxu0 0.0
    %3817 = vmatprep.subr.mxu0 0.0
    %3818 = vmatpush1.msra.mxu0 0.0
    %3819 = vmatprep.subr.mxu0 0.0
    %3820 = vmatpush1.msra.mxu0 0.0
    %3821 = vmatprep.mubr.f32.mxu0 0.0
    %v3822 = vand.u32 %v3482, 4294901760
    %v3823 = vsub.f32 %v3482, %v3822
    %3824 = vmatmul.mubr.f32.gmra.mrb[0].mxu0 %v3823
    %v3825 = vpop.f32.mrb[0].mxu0
    %v3826 = vadd.f32 %v3722, %v3825
    %v3827 = vpop.f32.mrb[0].mxu0
    %3828 = vdwg.mxu0
    %3829 = vmatprep.subr.mxu0 0.0
    %v3830 = vand.u32 %v701, 4294901760
    %3831 = vmatpush1.msra.mxu0 %v3830
    %3832 = vmatprep.subr.mxu0 0.0
    %v3833 = vand.u32 %v702, 4294901760
    %3834 = vmatpush1.msra.mxu0 %v3833
    %3835 = vmatprep.subr.mxu0 0.0
    %v3836 = vand.u32 %v703, 4294901760
    %3837 = vmatpush1.msra.mxu0 %v3836
    %3838 = vmatprep.subr.mxu0 0.0
    %v3839 = vand.u32 %v704, 4294901760
    %3840 = vmatpush1.msra.mxu0 %v3839
    %3841 = vmatprep.subr.mxu0 0.0
    %v3842 = vand.u32 %v705, 4294901760
    %3843 = vmatpush1.msra.mxu0 %v3842
    %3844 = vmatprep.subr.mxu0 0.0
    %v3845 = vand.u32 %v706, 4294901760
    %3846 = vmatpush1.msra.mxu0 %v3845
    %3847 = vmatprep.subr.mxu0 0.0
    %v3848 = vand.u32 %v707, 4294901760
    %3849 = vmatpush1.msra.mxu0 %v3848
    %3850 = vmatprep.subr.mxu0 0.0
    %v3851 = vand.u32 %v708, 4294901760
    %3852 = vmatpush1.msra.mxu0 %v3851
    %3853 = vmatprep.subr.mxu0 0.0
    %v3854 = vand.u32 %v709, 4294901760
    %3855 = vmatpush1.msra.mxu0 %v3854
    %3856 = vmatprep.subr.mxu0 0.0
    %v3857 = vand.u32 %v710, 4294901760
    %3858 = vmatpush1.msra.mxu0 %v3857
    %3859 = vmatprep.subr.mxu0 0.0
    %v3860 = vand.u32 %v711, 4294901760
    %3861 = vmatpush1.msra.mxu0 %v3860
    %3862 = vmatprep.subr.mxu0 0.0
    %v3863 = vand.u32 %v712, 4294901760
    %3864 = vmatpush1.msra.mxu0 %v3863
    %3865 = vmatprep.subr.mxu0 0.0
    %v3866 = vand.u32 %v713, 4294901760
    %3867 = vmatpush1.msra.mxu0 %v3866
    %3868 = vmatprep.subr.mxu0 0.0
    %v3869 = vand.u32 %v714, 4294901760
    %3870 = vmatpush1.msra.mxu0 %v3869
    %3871 = vmatprep.subr.mxu0 0.0
    %v3872 = vand.u32 %v715, 4294901760
    %3873 = vmatpush1.msra.mxu0 %v3872
    %3874 = vmatprep.subr.mxu0 0.0
    %v3875 = vand.u32 %v716, 4294901760
    %3876 = vmatpush1.msra.mxu0 %v3875
    %3877 = vmatprep.subr.mxu0 0.0
    %3878 = vmatpush1.msra.mxu0 0.0
    %3879 = vmatprep.subr.mxu0 0.0
    %3880 = vmatpush1.msra.mxu0 0.0
    %3881 = vmatprep.subr.mxu0 0.0
    %3882 = vmatpush1.msra.mxu0 0.0
    %3883 = vmatprep.subr.mxu0 0.0
    %3884 = vmatpush1.msra.mxu0 0.0
    %3885 = vmatprep.subr.mxu0 0.0
    %3886 = vmatpush1.msra.mxu0 0.0
    %3887 = vmatprep.subr.mxu0 0.0
    %3888 = vmatpush1.msra.mxu0 0.0
    %3889 = vmatprep.subr.mxu0 0.0
    %3890 = vmatpush1.msra.mxu0 0.0
    %3891 = vmatprep.subr.mxu0 0.0
    %3892 = vmatpush1.msra.mxu0 0.0
    %3893 = vmatprep.subr.mxu0 0.0
    %3894 = vmatpush1.msra.mxu0 0.0
    %3895 = vmatprep.subr.mxu0 0.0
    %3896 = vmatpush1.msra.mxu0 0.0
    %3897 = vmatprep.subr.mxu0 0.0
    %3898 = vmatpush1.msra.mxu0 0.0
    %3899 = vmatprep.subr.mxu0 0.0
    %3900 = vmatpush1.msra.mxu0 0.0
    %3901 = vmatprep.subr.mxu0 0.0
    %3902 = vmatpush1.msra.mxu0 0.0
    %3903 = vmatprep.subr.mxu0 0.0
    %3904 = vmatpush1.msra.mxu0 0.0
    %3905 = vmatprep.subr.mxu0 0.0
    %3906 = vmatpush1.msra.mxu0 0.0
    %3907 = vmatprep.subr.mxu0 0.0
    %3908 = vmatpush1.msra.mxu0 0.0
    %3909 = vmatprep.mubr.f32.mxu0 0.0
    %v3910 = vand.u32 %v3482, 4294901760
    %v3911 = vsub.f32 %v3482, %v3910
    %v3912 = vand.u32 %v3911, 4294901760
    %3913 = vmatmul.mubr.f32.gmra.mrb[0].mxu0 %v3912
    %v3914 = vpop.f32.mrb[0].mxu0
    %v3915 = vadd.f32 %v3826, %v3914
    %v3916 = vpop.f32.mrb[0].mxu0
    %3917 = vdwg.mxu0
    %3918 = vmatprep.subr.mxu0 0.0
    %v3919 = vand.u32 %v701, 4294901760
    %v3920 = vsub.f32 %v701, %v3919
    %v3921 = vand.u32 %v3920, 4294901760
    %3922 = vmatpush1.msra.mxu0 %v3921
    %3923 = vmatprep.subr.mxu0 0.0
    %v3924 = vand.u32 %v702, 4294901760
    %v3925 = vsub.f32 %v702, %v3924
    %v3926 = vand.u32 %v3925, 4294901760
    %3927 = vmatpush1.msra.mxu0 %v3926
    %3928 = vmatprep.subr.mxu0 0.0
    %v3929 = vand.u32 %v703, 4294901760
    %v3930 = vsub.f32 %v703, %v3929
    %v3931 = vand.u32 %v3930, 4294901760
    %3932 = vmatpush1.msra.mxu0 %v3931
    %3933 = vmatprep.subr.mxu0 0.0
    %v3934 = vand.u32 %v704, 4294901760
    %v3935 = vsub.f32 %v704, %v3934
    %v3936 = vand.u32 %v3935, 4294901760
    %3937 = vmatpush1.msra.mxu0 %v3936
    %3938 = vmatprep.subr.mxu0 0.0
    %v3939 = vand.u32 %v705, 4294901760
    %v3940 = vsub.f32 %v705, %v3939
    %v3941 = vand.u32 %v3940, 4294901760
    %3942 = vmatpush1.msra.mxu0 %v3941
    %3943 = vmatprep.subr.mxu0 0.0
    %v3944 = vand.u32 %v706, 4294901760
    %v3945 = vsub.f32 %v706, %v3944
    %v3946 = vand.u32 %v3945, 4294901760
    %3947 = vmatpush1.msra.mxu0 %v3946
    %3948 = vmatprep.subr.mxu0 0.0
    %v3949 = vand.u32 %v707, 4294901760
    %v3950 = vsub.f32 %v707, %v3949
    %v3951 = vand.u32 %v3950, 4294901760
    %3952 = vmatpush1.msra.mxu0 %v3951
    %3953 = vmatprep.subr.mxu0 0.0
    %v3954 = vand.u32 %v708, 4294901760
    %v3955 = vsub.f32 %v708, %v3954
    %v3956 = vand.u32 %v3955, 4294901760
    %3957 = vmatpush1.msra.mxu0 %v3956
    %3958 = vmatprep.subr.mxu0 0.0
    %v3959 = vand.u32 %v709, 4294901760
    %v3960 = vsub.f32 %v709, %v3959
    %v3961 = vand.u32 %v3960, 4294901760
    %3962 = vmatpush1.msra.mxu0 %v3961
    %3963 = vmatprep.subr.mxu0 0.0
    %v3964 = vand.u32 %v710, 4294901760
    %v3965 = vsub.f32 %v710, %v3964
    %v3966 = vand.u32 %v3965, 4294901760
    %3967 = vmatpush1.msra.mxu0 %v3966
    %3968 = vmatprep.subr.mxu0 0.0
    %v3969 = vand.u32 %v711, 4294901760
    %v3970 = vsub.f32 %v711, %v3969
    %v3971 = vand.u32 %v3970, 4294901760
    %3972 = vmatpush1.msra.mxu0 %v3971
    %3973 = vmatprep.subr.mxu0 0.0
    %v3974 = vand.u32 %v712, 4294901760
    %v3975 = vsub.f32 %v712, %v3974
    %v3976 = vand.u32 %v3975, 4294901760
    %3977 = vmatpush1.msra.mxu0 %v3976
    %3978 = vmatprep.subr.mxu0 0.0
    %v3979 = vand.u32 %v713, 4294901760
    %v3980 = vsub.f32 %v713, %v3979
    %v3981 = vand.u32 %v3980, 4294901760
    %3982 = vmatpush1.msra.mxu0 %v3981
    %3983 = vmatprep.subr.mxu0 0.0
    %v3984 = vand.u32 %v714, 4294901760
    %v3985 = vsub.f32 %v714, %v3984
    %v3986 = vand.u32 %v3985, 4294901760
    %3987 = vmatpush1.msra.mxu0 %v3986
    %3988 = vmatprep.subr.mxu0 0.0
    %v3989 = vand.u32 %v715, 4294901760
    %v3990 = vsub.f32 %v715, %v3989
    %v3991 = vand.u32 %v3990, 4294901760
    %3992 = vmatpush1.msra.mxu0 %v3991
    %3993 = vmatprep.subr.mxu0 0.0
    %v3994 = vand.u32 %v716, 4294901760
    %v3995 = vsub.f32 %v716, %v3994
    %v3996 = vand.u32 %v3995, 4294901760
    %3997 = vmatpush1.msra.mxu0 %v3996
    %3998 = vmatprep.subr.mxu0 0.0
    %3999 = vmatpush1.msra.mxu0 0.0
    %4000 = vmatprep.subr.mxu0 0.0
    %4001 = vmatpush1.msra.mxu0 0.0
    %4002 = vmatprep.subr.mxu0 0.0
    %4003 = vmatpush1.msra.mxu0 0.0
    %4004 = vmatprep.subr.mxu0 0.0
    %4005 = vmatpush1.msra.mxu0 0.0
    %4006 = vmatprep.subr.mxu0 0.0
    %4007 = vmatpush1.msra.mxu0 0.0
    %4008 = vmatprep.subr.mxu0 0.0
    %4009 = vmatpush1.msra.mxu0 0.0
    %4010 = vmatprep.subr.mxu0 0.0
    %4011 = vmatpush1.msra.mxu0 0.0
    %4012 = vmatprep.subr.mxu0 0.0
    %4013 = vmatpush1.msra.mxu0 0.0
    %4014 = vmatprep.subr.mxu0 0.0
    %4015 = vmatpush1.msra.mxu0 0.0
    %4016 = vmatprep.subr.mxu0 0.0
    %4017 = vmatpush1.msra.mxu0 0.0
    %4018 = vmatprep.subr.mxu0 0.0
    %4019 = vmatpush1.msra.mxu0 0.0
    %4020 = vmatprep.subr.mxu0 0.0
    %4021 = vmatpush1.msra.mxu0 0.0
    %4022 = vmatprep.subr.mxu0 0.0
    %4023 = vmatpush1.msra.mxu0 0.0
    %4024 = vmatprep.subr.mxu0 0.0
    %4025 = vmatpush1.msra.mxu0 0.0
    %4026 = vmatprep.subr.mxu0 0.0
    %4027 = vmatpush1.msra.mxu0 0.0
    %4028 = vmatprep.subr.mxu0 0.0
    %4029 = vmatpush1.msra.mxu0 0.0
    %4030 = vmatprep.mubr.f32.mxu0 0.0
    %v4031 = vand.u32 %v3482, 4294901760
    %4032 = vmatmul.mubr.f32.gmra.mrb[0].mxu0 %v4031
    %v4033 = vpop.f32.mrb[0].mxu0
    %v4034 = vadd.f32 %v3915, %v4033
    %v4035 = vpop.f32.mrb[0].mxu0
    %4036 = vdwg.mxu0
    %4037 = vmatprep.subr.mxu0 0.0
    %v4038 = vand.u32 %v701, 4294901760
    %4039 = vmatpush1.msra.mxu0 %v4038
    %4040 = vmatprep.subr.mxu0 0.0
    %v4041 = vand.u32 %v702, 4294901760
    %4042 = vmatpush1.msra.mxu0 %v4041
    %4043 = vmatprep.subr.mxu0 0.0
    %v4044 = vand.u32 %v703, 4294901760
    %4045 = vmatpush1.msra.mxu0 %v4044
    %4046 = vmatprep.subr.mxu0 0.0
    %v4047 = vand.u32 %v704, 4294901760
    %4048 = vmatpush1.msra.mxu0 %v4047
    %4049 = vmatprep.subr.mxu0 0.0
    %v4050 = vand.u32 %v705, 4294901760
    %4051 = vmatpush1.msra.mxu0 %v4050
    %4052 = vmatprep.subr.mxu0 0.0
    %v4053 = vand.u32 %v706, 4294901760
    %4054 = vmatpush1.msra.mxu0 %v4053
    %4055 = vmatprep.subr.mxu0 0.0
    %v4056 = vand.u32 %v707, 4294901760
    %4057 = vmatpush1.msra.mxu0 %v4056
    %4058 = vmatprep.subr.mxu0 0.0
    %v4059 = vand.u32 %v708, 4294901760
    %4060 = vmatpush1.msra.mxu0 %v4059
    %4061 = vmatprep.subr.mxu0 0.0
    %v4062 = vand.u32 %v709, 4294901760
    %4063 = vmatpush1.msra.mxu0 %v4062
    %4064 = vmatprep.subr.mxu0 0.0
    %v4065 = vand.u32 %v710, 4294901760
    %4066 = vmatpush1.msra.mxu0 %v4065
    %4067 = vmatprep.subr.mxu0 0.0
    %v4068 = vand.u32 %v711, 4294901760
    %4069 = vmatpush1.msra.mxu0 %v4068
    %4070 = vmatprep.subr.mxu0 0.0
    %v4071 = vand.u32 %v712, 4294901760
    %4072 = vmatpush1.msra.mxu0 %v4071
    %4073 = vmatprep.subr.mxu0 0.0
    %v4074 = vand.u32 %v713, 4294901760
    %4075 = vmatpush1.msra.mxu0 %v4074
    %4076 = vmatprep.subr.mxu0 0.0
    %v4077 = vand.u32 %v714, 4294901760
    %4078 = vmatpush1.msra.mxu0 %v4077
    %4079 = vmatprep.subr.mxu0 0.0
    %v4080 = vand.u32 %v715, 4294901760
    %4081 = vmatpush1.msra.mxu0 %v4080
    %4082 = vmatprep.subr.mxu0 0.0
    %v4083 = vand.u32 %v716, 4294901760
    %4084 = vmatpush1.msra.mxu0 %v4083
    %4085 = vmatprep.subr.mxu0 0.0
    %4086 = vmatpush1.msra.mxu0 0.0
    %4087 = vmatprep.subr.mxu0 0.0
    %4088 = vmatpush1.msra.mxu0 0.0
    %4089 = vmatprep.subr.mxu0 0.0
    %4090 = vmatpush1.msra.mxu0 0.0
    %4091 = vmatprep.subr.mxu0 0.0
    %4092 = vmatpush1.msra.mxu0 0.0
    %4093 = vmatprep.subr.mxu0 0.0
    %4094 = vmatpush1.msra.mxu0 0.0
    %4095 = vmatprep.subr.mxu0 0.0
    %4096 = vmatpush1.msra.mxu0 0.0
    %4097 = vmatprep.subr.mxu0 0.0
    %4098 = vmatpush1.msra.mxu0 0.0
    %4099 = vmatprep.subr.mxu0 0.0
    %4100 = vmatpush1.msra.mxu0 0.0
    %4101 = vmatprep.subr.mxu0 0.0
    %4102 = vmatpush1.msra.mxu0 0.0
    %4103 = vmatprep.subr.mxu0 0.0
    %4104 = vmatpush1.msra.mxu0 0.0
    %4105 = vmatprep.subr.mxu0 0.0
    %4106 = vmatpush1.msra.mxu0 0.0
    %4107 = vmatprep.subr.mxu0 0.0
    %4108 = vmatpush1.msra.mxu0 0.0
    %4109 = vmatprep.subr.mxu0 0.0
    %4110 = vmatpush1.msra.mxu0 0.0
    %4111 = vmatprep.subr.mxu0 0.0
    %4112 = vmatpush1.msra.mxu0 0.0
    %4113 = vmatprep.subr.mxu0 0.0
    %4114 = vmatpush1.msra.mxu0 0.0
    %4115 = vmatprep.subr.mxu0 0.0
    %4116 = vmatpush1.msra.mxu0 0.0
    %4117 = vmatprep.mubr.f32.mxu0 0.0
    %v4118 = vand.u32 %v3482, 4294901760
    %4119 = vmatmul.mubr.f32.gmra.mrb[0].mxu0 %v4118
    %v4120 = vpop.f32.mrb[0].mxu0
    %v4121 = vadd.f32 %v4034, %v4120
    %v4122 = vpop.f32.mrb[0].mxu0
    %4123 = vdwg.mxu0
    %v4124 = vmul.f32 %v4121, 0.00390625
    %v4125 = vmul.f32 %v4124, %v4124
    %v4127 = vrot.slane %v4125, 7
    %v4129 = vsub.f32 %v4124, %v4127
    %v4130 = vmax.f32 %v4129, 0.0
    %v4131 = vlaneseq
    %v4132 = vshrl.u32 %v4131, 7
    %v4133 = vsub.s32 0, %v4132
    %v4134 = vrot.slane %v4124, %v4133
    %v4135 = vsub.f32 %v3464, %v4134
    %v4136 = vsub.f32 %v3465, %v4134
    %v4137 = vadd.f32 %v4130, 8.0
    %v4138 = vrsqrt.pop %v4137
    %v4139 = vlaneseq
    %v4140 = vshrl.u32 %v4139, 7
    %v4141 = vsub.s32 1, %v4140
    %v4142 = vrot.slane %v4138, %v4141
    %v4143 = vmul.f32 %v4135, %v4142
    %v4144 = vmul.f32 %v4136, %v4142
    %v4145 = vld [vmem:[%s6 + $0x3] sm:$0x1]
    %v4146 = vlaneseq
    %v4147 = vshrl.u32 %v4146, 7
    %v4148 = vsub.s32 0, %v4147
    %v4149 = vrot.slane %v4145, %v4148
    %v4150 = vmul.f32 %v4143, %v4149
    %v4151 = vmul.f32 %v4144, %v4149
    %v4152 = vld [vmem:[#allocation10 + $0x3] sm:$0x1]
    %v4153 = vlaneseq
    %v4154 = vshrl.u32 %v4153, 7
    %v4155 = vsub.s32 0, %v4154
    %v4156 = vrot.slane %v4152, %v4155
    %v4157 = vadd.f32 %v4150, %v4156
    %v4158 = vadd.f32 %v4151, %v4156
    %v4161 = vrot.slane %v4157, 7
    %v4162 = vrot.slane %v4158, 7
    %v4165 = vsel %vm134, 0.0, %v4161
    %v4166 = vsel %vm134, 0.0, %v4162
    %v4167 = vsel %vm134, %v4161, 0.0
    %v4168 = vsel %vm134, %v4162, 0.0
    %v4169 = vpack.c.bf16 %v4166, %v4165
    %v4170 = vld [vmem:[#allocation7] sm:$0xf]
    %v4171 = vld [vmem:[#allocation7 + $0x4] sm:$0xf]
    %v4172 = vld [vmem:[#allocation7 + $0x8] sm:$0xf]
    %v4173 = vld [vmem:[#allocation7 + $0xc] sm:$0xf]
    %v4174 = vld [vmem:[#allocation7 + $0x10] sm:$0xf]
    %v4175 = vld [vmem:[#allocation7 + $0x14] sm:$0xf]
    %v4176 = vld [vmem:[#allocation7 + $0x18] sm:$0xf]
    %v4177 = vld [vmem:[#allocation7 + $0x1c] sm:$0xf]
    %v4178 = vld [vmem:[#allocation7 + $0x20] sm:$0xf]
    %v4179 = vld [vmem:[#allocation7 + $0x24] sm:$0xf]
    %v4180 = vld [vmem:[#allocation7 + $0x28] sm:$0xf]
    %v4181 = vld [vmem:[#allocation7 + $0x2c] sm:$0xf]
    %v4182 = vld [vmem:[#allocation7 + $0x30] sm:$0xf]
    %v4183 = vld [vmem:[#allocation7 + $0x34] sm:$0xf]
    %v4184 = vld [vmem:[#allocation7 + $0x38] sm:$0xf]
    %v4185 = vld [vmem:[#allocation7 + $0x3c] sm:$0xf]
    %v4190 = vrot.slane %v4165, 1
    %v4191 = vrot.slane %v4167, 1
    %v4192 = vsel %vm1426, %v4190, %v4191
    %v4193 = vrot.slane %v4166, 1
    %v4194 = vrot.slane %v4168, 1
    %v4195 = vsel %vm1426, %v4193, %v4194
    %v4198 = vpack.c.bf16 %v4195, %v4192
    %v4199 = vld [vmem:[#allocation7 + $0x40] sm:$0xf]
    %v4200 = vld [vmem:[#allocation7 + $0x44] sm:$0xf]
    %v4201 = vld [vmem:[#allocation7 + $0x48] sm:$0xf]
    %v4202 = vld [vmem:[#allocation7 + $0x4c] sm:$0xf]
    %v4203 = vld [vmem:[#allocation7 + $0x50] sm:$0xf]
    %v4204 = vld [vmem:[#allocation7 + $0x54] sm:$0xf]
    %v4205 = vld [vmem:[#allocation7 + $0x58] sm:$0xf]
    %v4206 = vld [vmem:[#allocation7 + $0x5c] sm:$0xf]
    %v4207 = vld [vmem:[#allocation7 + $0x60] sm:$0xf]
    %v4208 = vld [vmem:[#allocation7 + $0x64] sm:$0xf]
    %v4209 = vld [vmem:[#allocation7 + $0x68] sm:$0xf]
    %v4210 = vld [vmem:[#allocation7 + $0x6c] sm:$0xf]
    %v4211 = vld [vmem:[#allocation7 + $0x70] sm:$0xf]
    %v4212 = vld [vmem:[#allocation7 + $0x74] sm:$0xf]
    %v4213 = vld [vmem:[#allocation7 + $0x78] sm:$0xf]
    %v4214 = vld [vmem:[#allocation7 + $0x7c] sm:$0xf]
    %v4231 = vunpack.c.l.b16 %v4199
    %v4232 = vunpack.c.l.b16 %v4200
    %v4233 = vunpack.c.l.b16 %v4201
    %v4234 = vunpack.c.l.b16 %v4202
    %v4235 = vunpack.c.l.b16 %v4203
    %v4236 = vunpack.c.l.b16 %v4204
    %v4237 = vunpack.c.l.b16 %v4205
    %v4238 = vunpack.c.l.b16 %v4206
    %v4239 = vunpack.c.l.b16 %v4207
    %v4240 = vunpack.c.l.b16 %v4208
    %v4241 = vunpack.c.l.b16 %v4209
    %v4242 = vunpack.c.l.b16 %v4210
    %v4243 = vunpack.c.l.b16 %v4211
    %v4244 = vunpack.c.l.b16 %v4212
    %v4245 = vunpack.c.l.b16 %v4213
    %v4246 = vunpack.c.l.b16 %v4214
    %v4247 = vpack.c.b16 %v4232, %v4231
    %v4248 = vpack.c.b16 %v4234, %v4233
    %v4249 = vpack.c.b16 %v4236, %v4235
    %v4250 = vpack.c.b16 %v4238, %v4237
    %v4251 = vpack.c.b16 %v4240, %v4239
    %v4252 = vpack.c.b16 %v4242, %v4241
    %v4253 = vpack.c.b16 %v4244, %v4243
    %v4254 = vpack.c.b16 %v4246, %v4245
    %4263 = vmatprep.subr.bf16.mxu0 0
    %4264 = vmatpush1.bf16.msra.mxu0 %v4247
    %4265 = vmatprep.subr.bf16.mxu0 0
    %4266 = vmatpush1.bf16.msra.mxu0 %v4248
    %4267 = vmatprep.subr.bf16.mxu0 0
    %4268 = vmatpush1.bf16.msra.mxu0 %v4249
    %4269 = vmatprep.subr.bf16.mxu0 0
    %4270 = vmatpush1.bf16.msra.mxu0 %v4250
    %4271 = vmatprep.subr.bf16.mxu0 0
    %4272 = vmatpush1.bf16.msra.mxu0 %v4251
    %4273 = vmatprep.subr.bf16.mxu0 0
    %4274 = vmatpush1.bf16.msra.mxu0 %v4252
    %4275 = vmatprep.subr.bf16.mxu0 0
    %4276 = vmatpush1.bf16.msra.mxu0 %v4253
    %4277 = vmatprep.subr.bf16.mxu0 0
    %4278 = vmatpush1.bf16.msra.mxu0 %v4254
    %4279 = vmatprep.subr.bf16.mxu0 0
    %4280 = vmatpush1.bf16.msra.mxu0 0
    %4281 = vmatprep.subr.bf16.mxu0 0
    %4282 = vmatpush1.bf16.msra.mxu0 0
    %4283 = vmatprep.subr.bf16.mxu0 0
    %4284 = vmatpush1.bf16.msra.mxu0 0
    %4285 = vmatprep.subr.bf16.mxu0 0
    %4286 = vmatpush1.bf16.msra.mxu0 0
    %4287 = vmatprep.subr.bf16.mxu0 0
    %4288 = vmatpush1.bf16.msra.mxu0 0
    %4289 = vmatprep.subr.bf16.mxu0 0
    %4290 = vmatpush1.bf16.msra.mxu0 0
    %4291 = vmatprep.subr.bf16.mxu0 0
    %4292 = vmatpush1.bf16.msra.mxu0 0
    %4293 = vmatprep.subr.bf16.mxu0 0
    %4294 = vmatpush1.bf16.msra.mxu0 0
    %4295 = vmatprep.mubr.bf16.mxu0 0
    %4296 = vmatmul.mubr.bf16.gmra.mrb[0].mxu0 %v4198
    %v4297 = vpop.f32.mrb[0].mxu0
    %v4298 = vadd.f32 0.0, %v4297
    %v4299 = vpop.f32.mrb[0].mxu0
    %v4300 = vpop.f32.mrb[0].mxu0
    %v4301 = vadd.f32 0.0, %v4300
    %v4302 = vpop.f32.mrb[0].mxu0
    %4303 = vdwg.mxu0
    %v4320 = vunpack.c.l.b16 %v4170
    %v4321 = vunpack.c.l.b16 %v4171
    %v4322 = vunpack.c.l.b16 %v4172
    %v4323 = vunpack.c.l.b16 %v4173
    %v4324 = vunpack.c.l.b16 %v4174
    %v4325 = vunpack.c.l.b16 %v4175
    %v4326 = vunpack.c.l.b16 %v4176
    %v4327 = vunpack.c.l.b16 %v4177
    %v4328 = vunpack.c.l.b16 %v4178
    %v4329 = vunpack.c.l.b16 %v4179
    %v4330 = vunpack.c.l.b16 %v4180
    %v4331 = vunpack.c.l.b16 %v4181
    %v4332 = vunpack.c.l.b16 %v4182
    %v4333 = vunpack.c.l.b16 %v4183
    %v4334 = vunpack.c.l.b16 %v4184
    %v4335 = vunpack.c.l.b16 %v4185
    %v4336 = vpack.c.b16 %v4321, %v4320
    %v4337 = vpack.c.b16 %v4323, %v4322
    %v4338 = vpack.c.b16 %v4325, %v4324
    %v4339 = vpack.c.b16 %v4327, %v4326
    %v4340 = vpack.c.b16 %v4329, %v4328
    %v4341 = vpack.c.b16 %v4331, %v4330
    %v4342 = vpack.c.b16 %v4333, %v4332
    %v4343 = vpack.c.b16 %v4335, %v4334
    %4352 = vmatprep.subr.bf16.mxu0 0
    %4353 = vmatpush1.bf16.msra.mxu0 %v4336
    %4354 = vmatprep.subr.bf16.mxu0 0
    %4355 = vmatpush1.bf16.msra.mxu0 %v4337
    %4356 = vmatprep.subr.bf16.mxu0 0
    %4357 = vmatpush1.bf16.msra.mxu0 %v4338
    %4358 = vmatprep.subr.bf16.mxu0 0
    %4359 = vmatpush1.bf16.msra.mxu0 %v4339
    %4360 = vmatprep.subr.bf16.mxu0 0
    %4361 = vmatpush1.bf16.msra.mxu0 %v4340
    %4362 = vmatprep.subr.bf16.mxu0 0
    %4363 = vmatpush1.bf16.msra.mxu0 %v4341
    %4364 = vmatprep.subr.bf16.mxu0 0
    %4365 = vmatpush1.bf16.msra.mxu0 %v4342
    %4366 = vmatprep.subr.bf16.mxu0 0
    %4367 = vmatpush1.bf16.msra.mxu0 %v4343
    %4368 = vmatprep.subr.bf16.mxu0 0
    %4369 = vmatpush1.bf16.msra.mxu0 0
    %4370 = vmatprep.subr.bf16.mxu0 0
    %4371 = vmatpush1.bf16.msra.mxu0 0
    %4372 = vmatprep.subr.bf16.mxu0 0
    %4373 = vmatpush1.bf16.msra.mxu0 0
    %4374 = vmatprep.subr.bf16.mxu0 0
    %4375 = vmatpush1.bf16.msra.mxu0 0
    %4376 = vmatprep.subr.bf16.mxu0 0
    %4377 = vmatpush1.bf16.msra.mxu0 0
    %4378 = vmatprep.subr.bf16.mxu0 0
    %4379 = vmatpush1.bf16.msra.mxu0 0
    %4380 = vmatprep.subr.bf16.mxu0 0
    %4381 = vmatpush1.bf16.msra.mxu0 0
    %4382 = vmatprep.subr.bf16.mxu0 0
    %4383 = vmatpush1.bf16.msra.mxu0 0
    %4384 = vmatprep.mubr.bf16.mxu0 0
    %4385 = vmatmul.mubr.bf16.gmra.mrb[0].mxu0 %v4169
    %v4386 = vpop.f32.mrb[0].mxu0
    %v4387 = vadd.f32 %v4298, %v4386
    %v4388 = vpop.f32.mrb[0].mxu0
    %v4389 = vpop.f32.mrb[0].mxu0
    %v4390 = vadd.f32 %v4301, %v4389
    %v4391 = vpop.f32.mrb[0].mxu0
    %4392 = vdwg.mxu0
    %v4393 = vrot.slane %v4165, 2
    %v4394 = vrot.slane %v4167, 2
    %v4395 = vsel %vm1630, %v4393, %v4394
    %v4396 = vrot.slane %v4166, 2
    %v4397 = vrot.slane %v4168, 2
    %v4398 = vsel %vm1630, %v4396, %v4397
    %v4401 = vpack.c.bf16 %v4398, %v4395
    %v4402 = vld [vmem:[#allocation7 + $0x80] sm:$0xf]
    %v4403 = vld [vmem:[#allocation7 + $0x84] sm:$0xf]
    %v4404 = vld [vmem:[#allocation7 + $0x88] sm:$0xf]
    %v4405 = vld [vmem:[#allocation7 + $0x8c] sm:$0xf]
    %v4406 = vld [vmem:[#allocation7 + $0x90] sm:$0xf]
    %v4407 = vld [vmem:[#allocation7 + $0x94] sm:$0xf]
    %v4408 = vld [vmem:[#allocation7 + $0x98] sm:$0xf]
    %v4409 = vld [vmem:[#allocation7 + $0x9c] sm:$0xf]
    %v4410 = vld [vmem:[#allocation7 + $0xa0] sm:$0xf]
    %v4411 = vld [vmem:[#allocation7 + $0xa4] sm:$0xf]
    %v4412 = vld [vmem:[#allocation7 + $0xa8] sm:$0xf]
    %v4413 = vld [vmem:[#allocation7 + $0xac] sm:$0xf]
    %v4414 = vld [vmem:[#allocation7 + $0xb0] sm:$0xf]
    %v4415 = vld [vmem:[#allocation7 + $0xb4] sm:$0xf]
    %v4416 = vld [vmem:[#allocation7 + $0xb8] sm:$0xf]
    %v4417 = vld [vmem:[#allocation7 + $0xbc] sm:$0xf]
    %v4434 = vunpack.c.l.b16 %v4402
    %v4435 = vunpack.c.l.b16 %v4403
    %v4436 = vunpack.c.l.b16 %v4404
    %v4437 = vunpack.c.l.b16 %v4405
    %v4438 = vunpack.c.l.b16 %v4406
    %v4439 = vunpack.c.l.b16 %v4407
    %v4440 = vunpack.c.l.b16 %v4408
    %v4441 = vunpack.c.l.b16 %v4409
    %v4442 = vunpack.c.l.b16 %v4410
    %v4443 = vunpack.c.l.b16 %v4411
    %v4444 = vunpack.c.l.b16 %v4412
    %v4445 = vunpack.c.l.b16 %v4413
    %v4446 = vunpack.c.l.b16 %v4414
    %v4447 = vunpack.c.l.b16 %v4415
    %v4448 = vunpack.c.l.b16 %v4416
    %v4449 = vunpack.c.l.b16 %v4417
    %v4450 = vpack.c.b16 %v4435, %v4434
    %v4451 = vpack.c.b16 %v4437, %v4436
    %v4452 = vpack.c.b16 %v4439, %v4438
    %v4453 = vpack.c.b16 %v4441, %v4440
    %v4454 = vpack.c.b16 %v4443, %v4442
    %v4455 = vpack.c.b16 %v4445, %v4444
    %v4456 = vpack.c.b16 %v4447, %v4446
    %v4457 = vpack.c.b16 %v4449, %v4448
    %4466 = vmatprep.subr.bf16.mxu0 0
    %4467 = vmatpush1.bf16.msra.mxu0 %v4450
    %4468 = vmatprep.subr.bf16.mxu0 0
    %4469 = vmatpush1.bf16.msra.mxu0 %v4451
    %4470 = vmatprep.subr.bf16.mxu0 0
    %4471 = vmatpush1.bf16.msra.mxu0 %v4452
    %4472 = vmatprep.subr.bf16.mxu0 0
    %4473 = vmatpush1.bf16.msra.mxu0 %v4453
    %4474 = vmatprep.subr.bf16.mxu0 0
    %4475 = vmatpush1.bf16.msra.mxu0 %v4454
    %4476 = vmatprep.subr.bf16.mxu0 0
    %4477 = vmatpush1.bf16.msra.mxu0 %v4455
    %4478 = vmatprep.subr.bf16.mxu0 0
    %4479 = vmatpush1.bf16.msra.mxu0 %v4456
    %4480 = vmatprep.subr.bf16.mxu0 0
    %4481 = vmatpush1.bf16.msra.mxu0 %v4457
    %4482 = vmatprep.subr.bf16.mxu0 0
    %4483 = vmatpush1.bf16.msra.mxu0 0
    %4484 = vmatprep.subr.bf16.mxu0 0
    %4485 = vmatpush1.bf16.msra.mxu0 0
    %4486 = vmatprep.subr.bf16.mxu0 0
    %4487 = vmatpush1.bf16.msra.mxu0 0
    %4488 = vmatprep.subr.bf16.mxu0 0
    %4489 = vmatpush1.bf16.msra.mxu0 0
    %4490 = vmatprep.subr.bf16.mxu0 0
    %4491 = vmatpush1.bf16.msra.mxu0 0
    %4492 = vmatprep.subr.bf16.mxu0 0
    %4493 = vmatpush1.bf16.msra.mxu0 0
    %4494 = vmatprep.subr.bf16.mxu0 0
    %4495 = vmatpush1.bf16.msra.mxu0 0
    %4496 = vmatprep.subr.bf16.mxu0 0
    %4497 = vmatpush1.bf16.msra.mxu0 0
    %4498 = vmatprep.mubr.bf16.mxu0 0
    %4499 = vmatmul.mubr.bf16.gmra.mrb[0].mxu0 %v4401
    %v4500 = vpop.f32.mrb[0].mxu0
    %v4501 = vadd.f32 0.0, %v4500
    %v4502 = vpop.f32.mrb[0].mxu0
    %v4503 = vpop.f32.mrb[0].mxu0
    %v4504 = vadd.f32 0.0, %v4503
    %v4505 = vpop.f32.mrb[0].mxu0
    %4506 = vdwg.mxu0
    %v4507 = vadd.f32 %v4387, %v4501
    %v4508 = vadd.f32 %v4390, %v4504
    %v4509 = vld [vmem:[%s5 + $0x2] sm:$0x1]
    %v4510 = vlaneseq
    %v4511 = vshrl.u32 %v4510, 7
    %v4512 = vsub.s32 0, %v4511
    %v4513 = vrot.slane %v4509, %v4512
    %v4514 = vadd.f32 %v4507, %v4513
    %v4515 = vadd.f32 %v4508, %v4513
    %v4516 = vmax.f32 %v4514, 0.0
    %v4517 = vmax.f32 %v4515, 0.0
    %v4518 = vadd.f32 %v4516, %v4517
    %v4519 = vrot.slane %v4518, 4
    %v4520 = vadd.f32 %v4518, %v4519
    %v4521 = vrot.slane %v4520, 2
    %v4522 = vadd.f32 %v4520, %v4521
    %v4523 = vrot.slane %v4522, 1
    %v4524 = vadd.f32 %v4522, %v4523
    %v4525 = vmul.f32 %v4516, %v4516
    %v4526 = vmul.f32 %v4517, %v4517
    %v4527 = vadd.f32 %v4525, %v4526
    %v4528 = vrot.slane %v4527, 4
    %v4529 = vadd.f32 %v4527, %v4528
    %v4530 = vrot.slane %v4529, 2
    %v4531 = vadd.f32 %v4529, %v4530
    %v4532 = vrot.slane %v4531, 1
    %v4533 = vadd.f32 %v4531, %v4532
    %v4534 = vsel %vm134, %v4524, %v4533
    %4535 = vmatprep.subr.mxu0 0.0
    %v4536 = vand.u32 %v701, 4294901760
    %4537 = vmatpush1.msra.mxu0 %v4536
    %4538 = vmatprep.subr.mxu0 0.0
    %v4539 = vand.u32 %v702, 4294901760
    %4540 = vmatpush1.msra.mxu0 %v4539
    %4541 = vmatprep.subr.mxu0 0.0
    %v4542 = vand.u32 %v703, 4294901760
    %4543 = vmatpush1.msra.mxu0 %v4542
    %4544 = vmatprep.subr.mxu0 0.0
    %v4545 = vand.u32 %v704, 4294901760
    %4546 = vmatpush1.msra.mxu0 %v4545
    %4547 = vmatprep.subr.mxu0 0.0
    %v4548 = vand.u32 %v705, 4294901760
    %4549 = vmatpush1.msra.mxu0 %v4548
    %4550 = vmatprep.subr.mxu0 0.0
    %v4551 = vand.u32 %v706, 4294901760
    %4552 = vmatpush1.msra.mxu0 %v4551
    %4553 = vmatprep.subr.mxu0 0.0
    %v4554 = vand.u32 %v707, 4294901760
    %4555 = vmatpush1.msra.mxu0 %v4554
    %4556 = vmatprep.subr.mxu0 0.0
    %v4557 = vand.u32 %v708, 4294901760
    %4558 = vmatpush1.msra.mxu0 %v4557
    %4559 = vmatprep.subr.mxu0 0.0
    %v4560 = vand.u32 %v709, 4294901760
    %4561 = vmatpush1.msra.mxu0 %v4560
    %4562 = vmatprep.subr.mxu0 0.0
    %v4563 = vand.u32 %v710, 4294901760
    %4564 = vmatpush1.msra.mxu0 %v4563
    %4565 = vmatprep.subr.mxu0 0.0
    %v4566 = vand.u32 %v711, 4294901760
    %4567 = vmatpush1.msra.mxu0 %v4566
    %4568 = vmatprep.subr.mxu0 0.0
    %v4569 = vand.u32 %v712, 4294901760
    %4570 = vmatpush1.msra.mxu0 %v4569
    %4571 = vmatprep.subr.mxu0 0.0
    %v4572 = vand.u32 %v713, 4294901760
    %4573 = vmatpush1.msra.mxu0 %v4572
    %4574 = vmatprep.subr.mxu0 0.0
    %v4575 = vand.u32 %v714, 4294901760
    %4576 = vmatpush1.msra.mxu0 %v4575
    %4577 = vmatprep.subr.mxu0 0.0
    %v4578 = vand.u32 %v715, 4294901760
    %4579 = vmatpush1.msra.mxu0 %v4578
    %4580 = vmatprep.subr.mxu0 0.0
    %v4581 = vand.u32 %v716, 4294901760
    %4582 = vmatpush1.msra.mxu0 %v4581
    %4583 = vmatprep.subr.mxu0 0.0
    %4584 = vmatpush1.msra.mxu0 0.0
    %4585 = vmatprep.subr.mxu0 0.0
    %4586 = vmatpush1.msra.mxu0 0.0
    %4587 = vmatprep.subr.mxu0 0.0
    %4588 = vmatpush1.msra.mxu0 0.0
    %4589 = vmatprep.subr.mxu0 0.0
    %4590 = vmatpush1.msra.mxu0 0.0
    %4591 = vmatprep.subr.mxu0 0.0
    %4592 = vmatpush1.msra.mxu0 0.0
    %4593 = vmatprep.subr.mxu0 0.0
    %4594 = vmatpush1.msra.mxu0 0.0
    %4595 = vmatprep.subr.mxu0 0.0
    %4596 = vmatpush1.msra.mxu0 0.0
    %4597 = vmatprep.subr.mxu0 0.0
    %4598 = vmatpush1.msra.mxu0 0.0
    %4599 = vmatprep.subr.mxu0 0.0
    %4600 = vmatpush1.msra.mxu0 0.0
    %4601 = vmatprep.subr.mxu0 0.0
    %4602 = vmatpush1.msra.mxu0 0.0
    %4603 = vmatprep.subr.mxu0 0.0
    %4604 = vmatpush1.msra.mxu0 0.0
    %4605 = vmatprep.subr.mxu0 0.0
    %4606 = vmatpush1.msra.mxu0 0.0
    %4607 = vmatprep.subr.mxu0 0.0
    %4608 = vmatpush1.msra.mxu0 0.0
    %4609 = vmatprep.subr.mxu0 0.0
    %4610 = vmatpush1.msra.mxu0 0.0
    %4611 = vmatprep.subr.mxu0 0.0
    %4612 = vmatpush1.msra.mxu0 0.0
    %4613 = vmatprep.subr.mxu0 0.0
    %4614 = vmatpush1.msra.mxu0 0.0
    %4615 = vmatprep.mubr.f32.mxu0 0.0
    %v4616 = vand.u32 %v4534, 4294901760
    %v4617 = vsub.f32 %v4534, %v4616
    %v4618 = vand.u32 %v4617, 4294901760
    %v4619 = vsub.f32 %v4617, %v4618
    %v4620 = vand.u32 %v4619, 4294901760
    %4621 = vmatmul.mubr.f32.gmra.mrb[0].mxu0 %v4620
    %v4622 = vpop.f32.mrb[0].mxu0
    %v4623 = vadd.f32 0.0, %v4622
    %v4624 = vpop.f32.mrb[0].mxu0
    %4625 = vdwg.mxu0
    %4626 = vmatprep.subr.mxu0 0.0
    %v4627 = vand.u32 %v701, 4294901760
    %v4628 = vsub.f32 %v701, %v4627
    %v4629 = vand.u32 %v4628, 4294901760
    %v4630 = vsub.f32 %v4628, %v4629
    %v4631 = vand.u32 %v4630, 4294901760
    %4632 = vmatpush1.msra.mxu0 %v4631
    %4633 = vmatprep.subr.mxu0 0.0
    %v4634 = vand.u32 %v702, 4294901760
    %v4635 = vsub.f32 %v702, %v4634
    %v4636 = vand.u32 %v4635, 4294901760
    %v4637 = vsub.f32 %v4635, %v4636
    %v4638 = vand.u32 %v4637, 4294901760
    %4639 = vmatpush1.msra.mxu0 %v4638
    %4640 = vmatprep.subr.mxu0 0.0
    %v4641 = vand.u32 %v703, 4294901760
    %v4642 = vsub.f32 %v703, %v4641
    %v4643 = vand.u32 %v4642, 4294901760
    %v4644 = vsub.f32 %v4642, %v4643
    %v4645 = vand.u32 %v4644, 4294901760
    %4646 = vmatpush1.msra.mxu0 %v4645
    %4647 = vmatprep.subr.mxu0 0.0
    %v4648 = vand.u32 %v704, 4294901760
    %v4649 = vsub.f32 %v704, %v4648
    %v4650 = vand.u32 %v4649, 4294901760
    %v4651 = vsub.f32 %v4649, %v4650
    %v4652 = vand.u32 %v4651, 4294901760
    %4653 = vmatpush1.msra.mxu0 %v4652
    %4654 = vmatprep.subr.mxu0 0.0
    %v4655 = vand.u32 %v705, 4294901760
    %v4656 = vsub.f32 %v705, %v4655
    %v4657 = vand.u32 %v4656, 4294901760
    %v4658 = vsub.f32 %v4656, %v4657
    %v4659 = vand.u32 %v4658, 4294901760
    %4660 = vmatpush1.msra.mxu0 %v4659
    %4661 = vmatprep.subr.mxu0 0.0
    %v4662 = vand.u32 %v706, 4294901760
    %v4663 = vsub.f32 %v706, %v4662
    %v4664 = vand.u32 %v4663, 4294901760
    %v4665 = vsub.f32 %v4663, %v4664
    %v4666 = vand.u32 %v4665, 4294901760
    %4667 = vmatpush1.msra.mxu0 %v4666
    %4668 = vmatprep.subr.mxu0 0.0
    %v4669 = vand.u32 %v707, 4294901760
    %v4670 = vsub.f32 %v707, %v4669
    %v4671 = vand.u32 %v4670, 4294901760
    %v4672 = vsub.f32 %v4670, %v4671
    %v4673 = vand.u32 %v4672, 4294901760
    %4674 = vmatpush1.msra.mxu0 %v4673
    %4675 = vmatprep.subr.mxu0 0.0
    %v4676 = vand.u32 %v708, 4294901760
    %v4677 = vsub.f32 %v708, %v4676
    %v4678 = vand.u32 %v4677, 4294901760
    %v4679 = vsub.f32 %v4677, %v4678
    %v4680 = vand.u32 %v4679, 4294901760
    %4681 = vmatpush1.msra.mxu0 %v4680
    %4682 = vmatprep.subr.mxu0 0.0
    %v4683 = vand.u32 %v709, 4294901760
    %v4684 = vsub.f32 %v709, %v4683
    %v4685 = vand.u32 %v4684, 4294901760
    %v4686 = vsub.f32 %v4684, %v4685
    %v4687 = vand.u32 %v4686, 4294901760
    %4688 = vmatpush1.msra.mxu0 %v4687
    %4689 = vmatprep.subr.mxu0 0.0
    %v4690 = vand.u32 %v710, 4294901760
    %v4691 = vsub.f32 %v710, %v4690
    %v4692 = vand.u32 %v4691, 4294901760
    %v4693 = vsub.f32 %v4691, %v4692
    %v4694 = vand.u32 %v4693, 4294901760
    %4695 = vmatpush1.msra.mxu0 %v4694
    %4696 = vmatprep.subr.mxu0 0.0
    %v4697 = vand.u32 %v711, 4294901760
    %v4698 = vsub.f32 %v711, %v4697
    %v4699 = vand.u32 %v4698, 4294901760
    %v4700 = vsub.f32 %v4698, %v4699
    %v4701 = vand.u32 %v4700, 4294901760
    %4702 = vmatpush1.msra.mxu0 %v4701
    %4703 = vmatprep.subr.mxu0 0.0
    %v4704 = vand.u32 %v712, 4294901760
    %v4705 = vsub.f32 %v712, %v4704
    %v4706 = vand.u32 %v4705, 4294901760
    %v4707 = vsub.f32 %v4705, %v4706
    %v4708 = vand.u32 %v4707, 4294901760
    %4709 = vmatpush1.msra.mxu0 %v4708
    %4710 = vmatprep.subr.mxu0 0.0
    %v4711 = vand.u32 %v713, 4294901760
    %v4712 = vsub.f32 %v713, %v4711
    %v4713 = vand.u32 %v4712, 4294901760
    %v4714 = vsub.f32 %v4712, %v4713
    %v4715 = vand.u32 %v4714, 4294901760
    %4716 = vmatpush1.msra.mxu0 %v4715
    %4717 = vmatprep.subr.mxu0 0.0
    %v4718 = vand.u32 %v714, 4294901760
    %v4719 = vsub.f32 %v714, %v4718
    %v4720 = vand.u32 %v4719, 4294901760
    %v4721 = vsub.f32 %v4719, %v4720
    %v4722 = vand.u32 %v4721, 4294901760
    %4723 = vmatpush1.msra.mxu0 %v4722
    %4724 = vmatprep.subr.mxu0 0.0
    %v4725 = vand.u32 %v715, 4294901760
    %v4726 = vsub.f32 %v715, %v4725
    %v4727 = vand.u32 %v4726, 4294901760
    %v4728 = vsub.f32 %v4726, %v4727
    %v4729 = vand.u32 %v4728, 4294901760
    %4730 = vmatpush1.msra.mxu0 %v4729
    %4731 = vmatprep.subr.mxu0 0.0
    %v4732 = vand.u32 %v716, 4294901760
    %v4733 = vsub.f32 %v716, %v4732
    %v4734 = vand.u32 %v4733, 4294901760
    %v4735 = vsub.f32 %v4733, %v4734
    %v4736 = vand.u32 %v4735, 4294901760
    %4737 = vmatpush1.msra.mxu0 %v4736
    %4738 = vmatprep.subr.mxu0 0.0
    %4739 = vmatpush1.msra.mxu0 0.0
    %4740 = vmatprep.subr.mxu0 0.0
    %4741 = vmatpush1.msra.mxu0 0.0
    %4742 = vmatprep.subr.mxu0 0.0
    %4743 = vmatpush1.msra.mxu0 0.0
    %4744 = vmatprep.subr.mxu0 0.0
    %4745 = vmatpush1.msra.mxu0 0.0
    %4746 = vmatprep.subr.mxu0 0.0
    %4747 = vmatpush1.msra.mxu0 0.0
    %4748 = vmatprep.subr.mxu0 0.0
    %4749 = vmatpush1.msra.mxu0 0.0
    %4750 = vmatprep.subr.mxu0 0.0
    %4751 = vmatpush1.msra.mxu0 0.0
    %4752 = vmatprep.subr.mxu0 0.0
    %4753 = vmatpush1.msra.mxu0 0.0
    %4754 = vmatprep.subr.mxu0 0.0
    %4755 = vmatpush1.msra.mxu0 0.0
    %4756 = vmatprep.subr.mxu0 0.0
    %4757 = vmatpush1.msra.mxu0 0.0
    %4758 = vmatprep.subr.mxu0 0.0
    %4759 = vmatpush1.msra.mxu0 0.0
    %4760 = vmatprep.subr.mxu0 0.0
    %4761 = vmatpush1.msra.mxu0 0.0
    %4762 = vmatprep.subr.mxu0 0.0
    %4763 = vmatpush1.msra.mxu0 0.0
    %4764 = vmatprep.subr.mxu0 0.0
    %4765 = vmatpush1.msra.mxu0 0.0
    %4766 = vmatprep.subr.mxu0 0.0
    %4767 = vmatpush1.msra.mxu0 0.0
    %4768 = vmatprep.subr.mxu0 0.0
    %4769 = vmatpush1.msra.mxu0 0.0
    %4770 = vmatprep.mubr.f32.mxu0 0.0
    %v4771 = vand.u32 %v4534, 4294901760
    %4772 = vmatmul.mubr.f32.gmra.mrb[0].mxu0 %v4771
    %v4773 = vpop.f32.mrb[0].mxu0
    %v4774 = vadd.f32 %v4623, %v4773
    %v4775 = vpop.f32.mrb[0].mxu0
    %4776 = vdwg.mxu0
    %4777 = vmatprep.subr.mxu0 0.0
    %v4778 = vand.u32 %v701, 4294901760
    %v4779 = vsub.f32 %v701, %v4778
    %4780 = vmatpush1.msra.mxu0 %v4779
    %4781 = vmatprep.subr.mxu0 0.0
    %v4782 = vand.u32 %v702, 4294901760
    %v4783 = vsub.f32 %v702, %v4782
    %4784 = vmatpush1.msra.mxu0 %v4783
    %4785 = vmatprep.subr.mxu0 0.0
    %v4786 = vand.u32 %v703, 4294901760
    %v4787 = vsub.f32 %v703, %v4786
    %4788 = vmatpush1.msra.mxu0 %v4787
    %4789 = vmatprep.subr.mxu0 0.0
    %v4790 = vand.u32 %v704, 4294901760
    %v4791 = vsub.f32 %v704, %v4790
    %4792 = vmatpush1.msra.mxu0 %v4791
    %4793 = vmatprep.subr.mxu0 0.0
    %v4794 = vand.u32 %v705, 4294901760
    %v4795 = vsub.f32 %v705, %v4794
    %4796 = vmatpush1.msra.mxu0 %v4795
    %4797 = vmatprep.subr.mxu0 0.0
    %v4798 = vand.u32 %v706, 4294901760
    %v4799 = vsub.f32 %v706, %v4798
    %4800 = vmatpush1.msra.mxu0 %v4799
    %4801 = vmatprep.subr.mxu0 0.0
    %v4802 = vand.u32 %v707, 4294901760
    %v4803 = vsub.f32 %v707, %v4802
    %4804 = vmatpush1.msra.mxu0 %v4803
    %4805 = vmatprep.subr.mxu0 0.0
    %v4806 = vand.u32 %v708, 4294901760
    %v4807 = vsub.f32 %v708, %v4806
    %4808 = vmatpush1.msra.mxu0 %v4807
    %4809 = vmatprep.subr.mxu0 0.0
    %v4810 = vand.u32 %v709, 4294901760
    %v4811 = vsub.f32 %v709, %v4810
    %4812 = vmatpush1.msra.mxu0 %v4811
    %4813 = vmatprep.subr.mxu0 0.0
    %v4814 = vand.u32 %v710, 4294901760
    %v4815 = vsub.f32 %v710, %v4814
    %4816 = vmatpush1.msra.mxu0 %v4815
    %4817 = vmatprep.subr.mxu0 0.0
    %v4818 = vand.u32 %v711, 4294901760
    %v4819 = vsub.f32 %v711, %v4818
    %4820 = vmatpush1.msra.mxu0 %v4819
    %4821 = vmatprep.subr.mxu0 0.0
    %v4822 = vand.u32 %v712, 4294901760
    %v4823 = vsub.f32 %v712, %v4822
    %4824 = vmatpush1.msra.mxu0 %v4823
    %4825 = vmatprep.subr.mxu0 0.0
    %v4826 = vand.u32 %v713, 4294901760
    %v4827 = vsub.f32 %v713, %v4826
    %4828 = vmatpush1.msra.mxu0 %v4827
    %4829 = vmatprep.subr.mxu0 0.0
    %v4830 = vand.u32 %v714, 4294901760
    %v4831 = vsub.f32 %v714, %v4830
    %4832 = vmatpush1.msra.mxu0 %v4831
    %4833 = vmatprep.subr.mxu0 0.0
    %v4834 = vand.u32 %v715, 4294901760
    %v4835 = vsub.f32 %v715, %v4834
    %4836 = vmatpush1.msra.mxu0 %v4835
    %4837 = vmatprep.subr.mxu0 0.0
    %v4838 = vand.u32 %v716, 4294901760
    %v4839 = vsub.f32 %v716, %v4838
    %4840 = vmatpush1.msra.mxu0 %v4839
    %4841 = vmatprep.subr.mxu0 0.0
    %4842 = vmatpush1.msra.mxu0 0.0
    %4843 = vmatprep.subr.mxu0 0.0
    %4844 = vmatpush1.msra.mxu0 0.0
    %4845 = vmatprep.subr.mxu0 0.0
    %4846 = vmatpush1.msra.mxu0 0.0
    %4847 = vmatprep.subr.mxu0 0.0
    %4848 = vmatpush1.msra.mxu0 0.0
    %4849 = vmatprep.subr.mxu0 0.0
    %4850 = vmatpush1.msra.mxu0 0.0
    %4851 = vmatprep.subr.mxu0 0.0
    %4852 = vmatpush1.msra.mxu0 0.0
    %4853 = vmatprep.subr.mxu0 0.0
    %4854 = vmatpush1.msra.mxu0 0.0
    %4855 = vmatprep.subr.mxu0 0.0
    %4856 = vmatpush1.msra.mxu0 0.0
    %4857 = vmatprep.subr.mxu0 0.0
    %4858 = vmatpush1.msra.mxu0 0.0
    %4859 = vmatprep.subr.mxu0 0.0
    %4860 = vmatpush1.msra.mxu0 0.0
    %4861 = vmatprep.subr.mxu0 0.0
    %4862 = vmatpush1.msra.mxu0 0.0
    %4863 = vmatprep.subr.mxu0 0.0
    %4864 = vmatpush1.msra.mxu0 0.0
    %4865 = vmatprep.subr.mxu0 0.0
    %4866 = vmatpush1.msra.mxu0 0.0
    %4867 = vmatprep.subr.mxu0 0.0
    %4868 = vmatpush1.msra.mxu0 0.0
    %4869 = vmatprep.subr.mxu0 0.0
    %4870 = vmatpush1.msra.mxu0 0.0
    %4871 = vmatprep.subr.mxu0 0.0
    %4872 = vmatpush1.msra.mxu0 0.0
    %4873 = vmatprep.mubr.f32.mxu0 0.0
    %v4874 = vand.u32 %v4534, 4294901760
    %v4875 = vsub.f32 %v4534, %v4874
    %4876 = vmatmul.mubr.f32.gmra.mrb[0].mxu0 %v4875
    %v4877 = vpop.f32.mrb[0].mxu0
    %v4878 = vadd.f32 %v4774, %v4877
    %v4879 = vpop.f32.mrb[0].mxu0
    %4880 = vdwg.mxu0
    %4881 = vmatprep.subr.mxu0 0.0
    %v4882 = vand.u32 %v701, 4294901760
    %4883 = vmatpush1.msra.mxu0 %v4882
    %4884 = vmatprep.subr.mxu0 0.0
    %v4885 = vand.u32 %v702, 4294901760
    %4886 = vmatpush1.msra.mxu0 %v4885
    %4887 = vmatprep.subr.mxu0 0.0
    %v4888 = vand.u32 %v703, 4294901760
    %4889 = vmatpush1.msra.mxu0 %v4888
    %4890 = vmatprep.subr.mxu0 0.0
    %v4891 = vand.u32 %v704, 4294901760
    %4892 = vmatpush1.msra.mxu0 %v4891
    %4893 = vmatprep.subr.mxu0 0.0
    %v4894 = vand.u32 %v705, 4294901760
    %4895 = vmatpush1.msra.mxu0 %v4894
    %4896 = vmatprep.subr.mxu0 0.0
    %v4897 = vand.u32 %v706, 4294901760
    %4898 = vmatpush1.msra.mxu0 %v4897
    %4899 = vmatprep.subr.mxu0 0.0
    %v4900 = vand.u32 %v707, 4294901760
    %4901 = vmatpush1.msra.mxu0 %v4900
    %4902 = vmatprep.subr.mxu0 0.0
    %v4903 = vand.u32 %v708, 4294901760
    %4904 = vmatpush1.msra.mxu0 %v4903
    %4905 = vmatprep.subr.mxu0 0.0
    %v4906 = vand.u32 %v709, 4294901760
    %4907 = vmatpush1.msra.mxu0 %v4906
    %4908 = vmatprep.subr.mxu0 0.0
    %v4909 = vand.u32 %v710, 4294901760
    %4910 = vmatpush1.msra.mxu0 %v4909
    %4911 = vmatprep.subr.mxu0 0.0
    %v4912 = vand.u32 %v711, 4294901760
    %4913 = vmatpush1.msra.mxu0 %v4912
    %4914 = vmatprep.subr.mxu0 0.0
    %v4915 = vand.u32 %v712, 4294901760
    %4916 = vmatpush1.msra.mxu0 %v4915
    %4917 = vmatprep.subr.mxu0 0.0
    %v4918 = vand.u32 %v713, 4294901760
    %4919 = vmatpush1.msra.mxu0 %v4918
    %4920 = vmatprep.subr.mxu0 0.0
    %v4921 = vand.u32 %v714, 4294901760
    %4922 = vmatpush1.msra.mxu0 %v4921
    %4923 = vmatprep.subr.mxu0 0.0
    %v4924 = vand.u32 %v715, 4294901760
    %4925 = vmatpush1.msra.mxu0 %v4924
    %4926 = vmatprep.subr.mxu0 0.0
    %v4927 = vand.u32 %v716, 4294901760
    %4928 = vmatpush1.msra.mxu0 %v4927
    %4929 = vmatprep.subr.mxu0 0.0
    %4930 = vmatpush1.msra.mxu0 0.0
    %4931 = vmatprep.subr.mxu0 0.0
    %4932 = vmatpush1.msra.mxu0 0.0
    %4933 = vmatprep.subr.mxu0 0.0
    %4934 = vmatpush1.msra.mxu0 0.0
    %4935 = vmatprep.subr.mxu0 0.0
    %4936 = vmatpush1.msra.mxu0 0.0
    %4937 = vmatprep.subr.mxu0 0.0
    %4938 = vmatpush1.msra.mxu0 0.0
    %4939 = vmatprep.subr.mxu0 0.0
    %4940 = vmatpush1.msra.mxu0 0.0
    %4941 = vmatprep.subr.mxu0 0.0
    %4942 = vmatpush1.msra.mxu0 0.0
    %4943 = vmatprep.subr.mxu0 0.0
    %4944 = vmatpush1.msra.mxu0 0.0
    %4945 = vmatprep.subr.mxu0 0.0
    %4946 = vmatpush1.msra.mxu0 0.0
    %4947 = vmatprep.subr.mxu0 0.0
    %4948 = vmatpush1.msra.mxu0 0.0
    %4949 = vmatprep.subr.mxu0 0.0
    %4950 = vmatpush1.msra.mxu0 0.0
    %4951 = vmatprep.subr.mxu0 0.0
    %4952 = vmatpush1.msra.mxu0 0.0
    %4953 = vmatprep.subr.mxu0 0.0
    %4954 = vmatpush1.msra.mxu0 0.0
    %4955 = vmatprep.subr.mxu0 0.0
    %4956 = vmatpush1.msra.mxu0 0.0
    %4957 = vmatprep.subr.mxu0 0.0
    %4958 = vmatpush1.msra.mxu0 0.0
    %4959 = vmatprep.subr.mxu0 0.0
    %4960 = vmatpush1.msra.mxu0 0.0
    %4961 = vmatprep.mubr.f32.mxu0 0.0
    %v4962 = vand.u32 %v4534, 4294901760
    %v4963 = vsub.f32 %v4534, %v4962
    %v4964 = vand.u32 %v4963, 4294901760
    %4965 = vmatmul.mubr.f32.gmra.mrb[0].mxu0 %v4964
    %v4966 = vpop.f32.mrb[0].mxu0
    %v4967 = vadd.f32 %v4878, %v4966
    %v4968 = vpop.f32.mrb[0].mxu0
    %4969 = vdwg.mxu0
    %4970 = vmatprep.subr.mxu0 0.0
    %v4971 = vand.u32 %v701, 4294901760
    %v4972 = vsub.f32 %v701, %v4971
    %v4973 = vand.u32 %v4972, 4294901760
    %4974 = vmatpush1.msra.mxu0 %v4973
    %4975 = vmatprep.subr.mxu0 0.0
    %v4976 = vand.u32 %v702, 4294901760
    %v4977 = vsub.f32 %v702, %v4976
    %v4978 = vand.u32 %v4977, 4294901760
    %4979 = vmatpush1.msra.mxu0 %v4978
    %4980 = vmatprep.subr.mxu0 0.0
    %v4981 = vand.u32 %v703, 4294901760
    %v4982 = vsub.f32 %v703, %v4981
    %v4983 = vand.u32 %v4982, 4294901760
    %4984 = vmatpush1.msra.mxu0 %v4983
    %4985 = vmatprep.subr.mxu0 0.0
    %v4986 = vand.u32 %v704, 4294901760
    %v4987 = vsub.f32 %v704, %v4986
    %v4988 = vand.u32 %v4987, 4294901760
    %4989 = vmatpush1.msra.mxu0 %v4988
    %4990 = vmatprep.subr.mxu0 0.0
    %v4991 = vand.u32 %v705, 4294901760
    %v4992 = vsub.f32 %v705, %v4991
    %v4993 = vand.u32 %v4992, 4294901760
    %4994 = vmatpush1.msra.mxu0 %v4993
    %4995 = vmatprep.subr.mxu0 0.0
    %v4996 = vand.u32 %v706, 4294901760
    %v4997 = vsub.f32 %v706, %v4996
    %v4998 = vand.u32 %v4997, 4294901760
    %4999 = vmatpush1.msra.mxu0 %v4998
    %5000 = vmatprep.subr.mxu0 0.0
    %v5001 = vand.u32 %v707, 4294901760
    %v5002 = vsub.f32 %v707, %v5001
    %v5003 = vand.u32 %v5002, 4294901760
    %5004 = vmatpush1.msra.mxu0 %v5003
    %5005 = vmatprep.subr.mxu0 0.0
    %v5006 = vand.u32 %v708, 4294901760
    %v5007 = vsub.f32 %v708, %v5006
    %v5008 = vand.u32 %v5007, 4294901760
    %5009 = vmatpush1.msra.mxu0 %v5008
    %5010 = vmatprep.subr.mxu0 0.0
    %v5011 = vand.u32 %v709, 4294901760
    %v5012 = vsub.f32 %v709, %v5011
    %v5013 = vand.u32 %v5012, 4294901760
    %5014 = vmatpush1.msra.mxu0 %v5013
    %5015 = vmatprep.subr.mxu0 0.0
    %v5016 = vand.u32 %v710, 4294901760
    %v5017 = vsub.f32 %v710, %v5016
    %v5018 = vand.u32 %v5017, 4294901760
    %5019 = vmatpush1.msra.mxu0 %v5018
    %5020 = vmatprep.subr.mxu0 0.0
    %v5021 = vand.u32 %v711, 4294901760
    %v5022 = vsub.f32 %v711, %v5021
    %v5023 = vand.u32 %v5022, 4294901760
    %5024 = vmatpush1.msra.mxu0 %v5023
    %5025 = vmatprep.subr.mxu0 0.0
    %v5026 = vand.u32 %v712, 4294901760
    %v5027 = vsub.f32 %v712, %v5026
    %v5028 = vand.u32 %v5027, 4294901760
    %5029 = vmatpush1.msra.mxu0 %v5028
    %5030 = vmatprep.subr.mxu0 0.0
    %v5031 = vand.u32 %v713, 4294901760
    %v5032 = vsub.f32 %v713, %v5031
    %v5033 = vand.u32 %v5032, 4294901760
    %5034 = vmatpush1.msra.mxu0 %v5033
    %5035 = vmatprep.subr.mxu0 0.0
    %v5036 = vand.u32 %v714, 4294901760
    %v5037 = vsub.f32 %v714, %v5036
    %v5038 = vand.u32 %v5037, 4294901760
    %5039 = vmatpush1.msra.mxu0 %v5038
    %5040 = vmatprep.subr.mxu0 0.0
    %v5041 = vand.u32 %v715, 4294901760
    %v5042 = vsub.f32 %v715, %v5041
    %v5043 = vand.u32 %v5042, 4294901760
    %5044 = vmatpush1.msra.mxu0 %v5043
    %5045 = vmatprep.subr.mxu0 0.0
    %v5046 = vand.u32 %v716, 4294901760
    %v5047 = vsub.f32 %v716, %v5046
    %v5048 = vand.u32 %v5047, 4294901760
    %5049 = vmatpush1.msra.mxu0 %v5048
    %5050 = vmatprep.subr.mxu0 0.0
    %5051 = vmatpush1.msra.mxu0 0.0
    %5052 = vmatprep.subr.mxu0 0.0
    %5053 = vmatpush1.msra.mxu0 0.0
    %5054 = vmatprep.subr.mxu0 0.0
    %5055 = vmatpush1.msra.mxu0 0.0
    %5056 = vmatprep.subr.mxu0 0.0
    %5057 = vmatpush1.msra.mxu0 0.0
    %5058 = vmatprep.subr.mxu0 0.0
    %5059 = vmatpush1.msra.mxu0 0.0
    %5060 = vmatprep.subr.mxu0 0.0
    %5061 = vmatpush1.msra.mxu0 0.0
    %5062 = vmatprep.subr.mxu0 0.0
    %5063 = vmatpush1.msra.mxu0 0.0
    %5064 = vmatprep.subr.mxu0 0.0
    %5065 = vmatpush1.msra.mxu0 0.0
    %5066 = vmatprep.subr.mxu0 0.0
    %5067 = vmatpush1.msra.mxu0 0.0
    %5068 = vmatprep.subr.mxu0 0.0
    %5069 = vmatpush1.msra.mxu0 0.0
    %5070 = vmatprep.subr.mxu0 0.0
    %5071 = vmatpush1.msra.mxu0 0.0
    %5072 = vmatprep.subr.mxu0 0.0
    %5073 = vmatpush1.msra.mxu0 0.0
    %5074 = vmatprep.subr.mxu0 0.0
    %5075 = vmatpush1.msra.mxu0 0.0
    %5076 = vmatprep.subr.mxu0 0.0
    %5077 = vmatpush1.msra.mxu0 0.0
    %5078 = vmatprep.subr.mxu0 0.0
    %5079 = vmatpush1.msra.mxu0 0.0
    %5080 = vmatprep.subr.mxu0 0.0
    %5081 = vmatpush1.msra.mxu0 0.0
    %5082 = vmatprep.mubr.f32.mxu0 0.0
    %v5083 = vand.u32 %v4534, 4294901760
    %5084 = vmatmul.mubr.f32.gmra.mrb[0].mxu0 %v5083
    %v5085 = vpop.f32.mrb[0].mxu0
    %v5086 = vadd.f32 %v4967, %v5085
    %v5087 = vpop.f32.mrb[0].mxu0
    %5088 = vdwg.mxu0
    %5089 = vmatprep.subr.mxu0 0.0
    %v5090 = vand.u32 %v701, 4294901760
    %5091 = vmatpush1.msra.mxu0 %v5090
    %5092 = vmatprep.subr.mxu0 0.0
    %v5093 = vand.u32 %v702, 4294901760
    %5094 = vmatpush1.msra.mxu0 %v5093
    %5095 = vmatprep.subr.mxu0 0.0
    %v5096 = vand.u32 %v703, 4294901760
    %5097 = vmatpush1.msra.mxu0 %v5096
    %5098 = vmatprep.subr.mxu0 0.0
    %v5099 = vand.u32 %v704, 4294901760
    %5100 = vmatpush1.msra.mxu0 %v5099
    %5101 = vmatprep.subr.mxu0 0.0
    %v5102 = vand.u32 %v705, 4294901760
    %5103 = vmatpush1.msra.mxu0 %v5102
    %5104 = vmatprep.subr.mxu0 0.0
    %v5105 = vand.u32 %v706, 4294901760
    %5106 = vmatpush1.msra.mxu0 %v5105
    %5107 = vmatprep.subr.mxu0 0.0
    %v5108 = vand.u32 %v707, 4294901760
    %5109 = vmatpush1.msra.mxu0 %v5108
    %5110 = vmatprep.subr.mxu0 0.0
    %v5111 = vand.u32 %v708, 4294901760
    %5112 = vmatpush1.msra.mxu0 %v5111
    %5113 = vmatprep.subr.mxu0 0.0
    %v5114 = vand.u32 %v709, 4294901760
    %5115 = vmatpush1.msra.mxu0 %v5114
    %5116 = vmatprep.subr.mxu0 0.0
    %v5117 = vand.u32 %v710, 4294901760
    %5118 = vmatpush1.msra.mxu0 %v5117
    %5119 = vmatprep.subr.mxu0 0.0
    %v5120 = vand.u32 %v711, 4294901760
    %5121 = vmatpush1.msra.mxu0 %v5120
    %5122 = vmatprep.subr.mxu0 0.0
    %v5123 = vand.u32 %v712, 4294901760
    %5124 = vmatpush1.msra.mxu0 %v5123
    %5125 = vmatprep.subr.mxu0 0.0
    %v5126 = vand.u32 %v713, 4294901760
    %5127 = vmatpush1.msra.mxu0 %v5126
    %5128 = vmatprep.subr.mxu0 0.0
    %v5129 = vand.u32 %v714, 4294901760
    %5130 = vmatpush1.msra.mxu0 %v5129
    %5131 = vmatprep.subr.mxu0 0.0
    %v5132 = vand.u32 %v715, 4294901760
    %5133 = vmatpush1.msra.mxu0 %v5132
    %5134 = vmatprep.subr.mxu0 0.0
    %v5135 = vand.u32 %v716, 4294901760
    %5136 = vmatpush1.msra.mxu0 %v5135
    %5137 = vmatprep.subr.mxu0 0.0
    %5138 = vmatpush1.msra.mxu0 0.0
    %5139 = vmatprep.subr.mxu0 0.0
    %5140 = vmatpush1.msra.mxu0 0.0
    %5141 = vmatprep.subr.mxu0 0.0
    %5142 = vmatpush1.msra.mxu0 0.0
    %5143 = vmatprep.subr.mxu0 0.0
    %5144 = vmatpush1.msra.mxu0 0.0
    %5145 = vmatprep.subr.mxu0 0.0
    %5146 = vmatpush1.msra.mxu0 0.0
    %5147 = vmatprep.subr.mxu0 0.0
    %5148 = vmatpush1.msra.mxu0 0.0
    %5149 = vmatprep.subr.mxu0 0.0
    %5150 = vmatpush1.msra.mxu0 0.0
    %5151 = vmatprep.subr.mxu0 0.0
    %5152 = vmatpush1.msra.mxu0 0.0
    %5153 = vmatprep.subr.mxu0 0.0
    %5154 = vmatpush1.msra.mxu0 0.0
    %5155 = vmatprep.subr.mxu0 0.0
    %5156 = vmatpush1.msra.mxu0 0.0
    %5157 = vmatprep.subr.mxu0 0.0
    %5158 = vmatpush1.msra.mxu0 0.0
    %5159 = vmatprep.subr.mxu0 0.0
    %5160 = vmatpush1.msra.mxu0 0.0
    %5161 = vmatprep.subr.mxu0 0.0
    %5162 = vmatpush1.msra.mxu0 0.0
    %5163 = vmatprep.subr.mxu0 0.0
    %5164 = vmatpush1.msra.mxu0 0.0
    %5165 = vmatprep.subr.mxu0 0.0
    %5166 = vmatpush1.msra.mxu0 0.0
    %5167 = vmatprep.subr.mxu0 0.0
    %5168 = vmatpush1.msra.mxu0 0.0
    %5169 = vmatprep.mubr.f32.mxu0 0.0
    %v5170 = vand.u32 %v4534, 4294901760
    %5171 = vmatmul.mubr.f32.gmra.mrb[0].mxu0 %v5170
    %v5172 = vpop.f32.mrb[0].mxu0
    %v5173 = vadd.f32 %v5086, %v5172
    %v5174 = vpop.f32.mrb[0].mxu0
    %5175 = vdwg.mxu0
    %v5176 = vmul.f32 %v5173, 0.00390625
    %v5177 = vmul.f32 %v5176, %v5176
    %v5179 = vrot.slane %v5177, 7
    %v5181 = vsub.f32 %v5176, %v5179
    %v5182 = vmax.f32 %v5181, 0.0
    %v5183 = vlaneseq
    %v5184 = vshrl.u32 %v5183, 7
    %v5185 = vsub.s32 0, %v5184
    %v5186 = vrot.slane %v5176, %v5185
    %v5187 = vsub.f32 %v4516, %v5186
    %v5188 = vsub.f32 %v4517, %v5186
    %v5189 = vadd.f32 %v5182, 8.0
    %v5190 = vrsqrt.pop %v5189
    %v5191 = vlaneseq
    %v5192 = vshrl.u32 %v5191, 7
    %v5193 = vsub.s32 1, %v5192
    %v5194 = vrot.slane %v5190, %v5193
    %v5195 = vmul.f32 %v5187, %v5194
    %v5196 = vmul.f32 %v5188, %v5194
    %v5197 = vld [vmem:[%s6 + $0x4] sm:$0x1]
    %v5198 = vlaneseq
    %v5199 = vshrl.u32 %v5198, 7
    %v5200 = vsub.s32 0, %v5199
    %v5201 = vrot.slane %v5197, %v5200
    %v5202 = vmul.f32 %v5195, %v5201
    %v5203 = vmul.f32 %v5196, %v5201
    %v5204 = vld [vmem:[#allocation10 + $0x4] sm:$0x1]
    %v5205 = vlaneseq
    %v5206 = vshrl.u32 %v5205, 7
    %v5207 = vsub.s32 0, %v5206
    %v5208 = vrot.slane %v5204, %v5207
    %v5209 = vadd.f32 %v5202, %v5208
    %v5210 = vadd.f32 %v5203, %v5208
    %v5213 = vrot.slane %v5209, 7
    %v5214 = vrot.slane %v5210, 7
    %v5217 = vsel %vm134, 0.0, %v5213
    %v5218 = vsel %vm134, 0.0, %v5214
    %v5219 = vsel %vm134, %v5213, 0.0
    %v5220 = vsel %vm134, %v5214, 0.0
    %v5221 = vpack.c.bf16 %v5218, %v5217
    %v5226 = vrot.slane %v5217, 1
    %v5227 = vrot.slane %v5219, 1
    %v5228 = vsel %vm1426, %v5226, %v5227
    %v5229 = vrot.slane %v5218, 1
    %v5230 = vrot.slane %v5220, 1
    %v5231 = vsel %vm1426, %v5229, %v5230
    %v5234 = vpack.c.bf16 %v5231, %v5228
    %5235 = vmatprep.subr.bf16.mxu0 0
    %5236 = vmatpush1.bf16.msra.mxu0 %v4247
    %5237 = vmatprep.subr.bf16.mxu0 0
    %5238 = vmatpush1.bf16.msra.mxu0 %v4248
    %5239 = vmatprep.subr.bf16.mxu0 0
    %5240 = vmatpush1.bf16.msra.mxu0 %v4249
    %5241 = vmatprep.subr.bf16.mxu0 0
    %5242 = vmatpush1.bf16.msra.mxu0 %v4250
    %5243 = vmatprep.subr.bf16.mxu0 0
    %5244 = vmatpush1.bf16.msra.mxu0 %v4251
    %5245 = vmatprep.subr.bf16.mxu0 0
    %5246 = vmatpush1.bf16.msra.mxu0 %v4252
    %5247 = vmatprep.subr.bf16.mxu0 0
    %5248 = vmatpush1.bf16.msra.mxu0 %v4253
    %5249 = vmatprep.subr.bf16.mxu0 0
    %5250 = vmatpush1.bf16.msra.mxu0 %v4254
    %5251 = vmatprep.subr.bf16.mxu0 0
    %5252 = vmatpush1.bf16.msra.mxu0 0
    %5253 = vmatprep.subr.bf16.mxu0 0
    %5254 = vmatpush1.bf16.msra.mxu0 0
    %5255 = vmatprep.subr.bf16.mxu0 0
    %5256 = vmatpush1.bf16.msra.mxu0 0
    %5257 = vmatprep.subr.bf16.mxu0 0
    %5258 = vmatpush1.bf16.msra.mxu0 0
    %5259 = vmatprep.subr.bf16.mxu0 0
    %5260 = vmatpush1.bf16.msra.mxu0 0
    %5261 = vmatprep.subr.bf16.mxu0 0
    %5262 = vmatpush1.bf16.msra.mxu0 0
    %5263 = vmatprep.subr.bf16.mxu0 0
    %5264 = vmatpush1.bf16.msra.mxu0 0
    %5265 = vmatprep.subr.bf16.mxu0 0
    %5266 = vmatpush1.bf16.msra.mxu0 0
    %5267 = vmatprep.mubr.bf16.mxu0 0
    %5268 = vmatmul.mubr.bf16.gmra.mrb[0].mxu0 %v5234
    %v5269 = vpop.f32.mrb[0].mxu0
    %v5270 = vadd.f32 0.0, %v5269
    %v5271 = vpop.f32.mrb[0].mxu0
    %v5272 = vpop.f32.mrb[0].mxu0
    %v5273 = vadd.f32 0.0, %v5272
    %v5274 = vpop.f32.mrb[0].mxu0
    %5275 = vdwg.mxu0
    %5276 = vmatprep.subr.bf16.mxu0 0
    %5277 = vmatpush1.bf16.msra.mxu0 %v4336
    %5278 = vmatprep.subr.bf16.mxu0 0
    %5279 = vmatpush1.bf16.msra.mxu0 %v4337
    %5280 = vmatprep.subr.bf16.mxu0 0
    %5281 = vmatpush1.bf16.msra.mxu0 %v4338
    %5282 = vmatprep.subr.bf16.mxu0 0
    %5283 = vmatpush1.bf16.msra.mxu0 %v4339
    %5284 = vmatprep.subr.bf16.mxu0 0
    %5285 = vmatpush1.bf16.msra.mxu0 %v4340
    %5286 = vmatprep.subr.bf16.mxu0 0
    %5287 = vmatpush1.bf16.msra.mxu0 %v4341
    %5288 = vmatprep.subr.bf16.mxu0 0
    %5289 = vmatpush1.bf16.msra.mxu0 %v4342
    %5290 = vmatprep.subr.bf16.mxu0 0
    %5291 = vmatpush1.bf16.msra.mxu0 %v4343
    %5292 = vmatprep.subr.bf16.mxu0 0
    %5293 = vmatpush1.bf16.msra.mxu0 0
    %5294 = vmatprep.subr.bf16.mxu0 0
    %5295 = vmatpush1.bf16.msra.mxu0 0
    %5296 = vmatprep.subr.bf16.mxu0 0
    %5297 = vmatpush1.bf16.msra.mxu0 0
    %5298 = vmatprep.subr.bf16.mxu0 0
    %5299 = vmatpush1.bf16.msra.mxu0 0
    %5300 = vmatprep.subr.bf16.mxu0 0
    %5301 = vmatpush1.bf16.msra.mxu0 0
    %5302 = vmatprep.subr.bf16.mxu0 0
    %5303 = vmatpush1.bf16.msra.mxu0 0
    %5304 = vmatprep.subr.bf16.mxu0 0
    %5305 = vmatpush1.bf16.msra.mxu0 0
    %5306 = vmatprep.subr.bf16.mxu0 0
    %5307 = vmatpush1.bf16.msra.mxu0 0
    %5308 = vmatprep.mubr.bf16.mxu0 0
    %5309 = vmatmul.mubr.bf16.gmra.mrb[0].mxu0 %v5221
    %v5310 = vpop.f32.mrb[0].mxu0
    %v5311 = vadd.f32 %v5270, %v5310
    %v5312 = vpop.f32.mrb[0].mxu0
    %v5313 = vpop.f32.mrb[0].mxu0
    %v5314 = vadd.f32 %v5273, %v5313
    %v5315 = vpop.f32.mrb[0].mxu0
    %5316 = vdwg.mxu0
    %v5317 = vrot.slane %v5217, 2
    %v5318 = vrot.slane %v5219, 2
    %v5319 = vsel %vm1630, %v5317, %v5318
    %v5320 = vrot.slane %v5218, 2
    %v5321 = vrot.slane %v5220, 2
    %v5322 = vsel %vm1630, %v5320, %v5321
    %v5325 = vpack.c.bf16 %v5322, %v5319
    %5326 = vmatprep.subr.bf16.mxu0 0
    %5327 = vmatpush1.bf16.msra.mxu0 %v4450
    %5328 = vmatprep.subr.bf16.mxu0 0
    %5329 = vmatpush1.bf16.msra.mxu0 %v4451
    %5330 = vmatprep.subr.bf16.mxu0 0
    %5331 = vmatpush1.bf16.msra.mxu0 %v4452
    %5332 = vmatprep.subr.bf16.mxu0 0
    %5333 = vmatpush1.bf16.msra.mxu0 %v4453
    %5334 = vmatprep.subr.bf16.mxu0 0
    %5335 = vmatpush1.bf16.msra.mxu0 %v4454
    %5336 = vmatprep.subr.bf16.mxu0 0
    %5337 = vmatpush1.bf16.msra.mxu0 %v4455
    %5338 = vmatprep.subr.bf16.mxu0 0
    %5339 = vmatpush1.bf16.msra.mxu0 %v4456
    %5340 = vmatprep.subr.bf16.mxu0 0
    %5341 = vmatpush1.bf16.msra.mxu0 %v4457
    %5342 = vmatprep.subr.bf16.mxu0 0
    %5343 = vmatpush1.bf16.msra.mxu0 0
    %5344 = vmatprep.subr.bf16.mxu0 0
    %5345 = vmatpush1.bf16.msra.mxu0 0
    %5346 = vmatprep.subr.bf16.mxu0 0
    %5347 = vmatpush1.bf16.msra.mxu0 0
    %5348 = vmatprep.subr.bf16.mxu0 0
    %5349 = vmatpush1.bf16.msra.mxu0 0
    %5350 = vmatprep.subr.bf16.mxu0 0
    %5351 = vmatpush1.bf16.msra.mxu0 0
    %5352 = vmatprep.subr.bf16.mxu0 0
    %5353 = vmatpush1.bf16.msra.mxu0 0
    %5354 = vmatprep.subr.bf16.mxu0 0
    %5355 = vmatpush1.bf16.msra.mxu0 0
    %5356 = vmatprep.subr.bf16.mxu0 0
    %5357 = vmatpush1.bf16.msra.mxu0 0
    %5358 = vmatprep.mubr.bf16.mxu0 0
    %5359 = vmatmul.mubr.bf16.gmra.mrb[0].mxu0 %v5325
    %v5360 = vpop.f32.mrb[0].mxu0
    %v5361 = vadd.f32 0.0, %v5360
    %v5362 = vpop.f32.mrb[0].mxu0
    %v5363 = vpop.f32.mrb[0].mxu0
    %v5364 = vadd.f32 0.0, %v5363
    %v5365 = vpop.f32.mrb[0].mxu0
    %5366 = vdwg.mxu0
    %v5367 = vadd.f32 %v5311, %v5361
    %v5368 = vadd.f32 %v5314, %v5364
    %v5369 = vadd.f32 %v5367, %v4513
    %v5370 = vadd.f32 %v5368, %v4513
    %v5371 = vmax.f32 %v5369, 0.0
    %v5372 = vmax.f32 %v5370, 0.0
    %v5373 = vadd.f32 %v5371, %v5372
    %v5374 = vrot.slane %v5373, 4
    %v5375 = vadd.f32 %v5373, %v5374
    %v5376 = vrot.slane %v5375, 2
    %v5377 = vadd.f32 %v5375, %v5376
    %v5378 = vrot.slane %v5377, 1
    %v5379 = vadd.f32 %v5377, %v5378
    %v5380 = vmul.f32 %v5371, %v5371
    %v5381 = vmul.f32 %v5372, %v5372
    %v5382 = vadd.f32 %v5380, %v5381
    %v5383 = vrot.slane %v5382, 4
    %v5384 = vadd.f32 %v5382, %v5383
    %v5385 = vrot.slane %v5384, 2
    %v5386 = vadd.f32 %v5384, %v5385
    %v5387 = vrot.slane %v5386, 1
    %v5388 = vadd.f32 %v5386, %v5387
    %v5389 = vsel %vm134, %v5379, %v5388
    %5390 = vmatprep.subr.mxu0 0.0
    %v5391 = vand.u32 %v701, 4294901760
    %5392 = vmatpush1.msra.mxu0 %v5391
    %5393 = vmatprep.subr.mxu0 0.0
    %v5394 = vand.u32 %v702, 4294901760
    %5395 = vmatpush1.msra.mxu0 %v5394
    %5396 = vmatprep.subr.mxu0 0.0
    %v5397 = vand.u32 %v703, 4294901760
    %5398 = vmatpush1.msra.mxu0 %v5397
    %5399 = vmatprep.subr.mxu0 0.0
    %v5400 = vand.u32 %v704, 4294901760
    %5401 = vmatpush1.msra.mxu0 %v5400
    %5402 = vmatprep.subr.mxu0 0.0
    %v5403 = vand.u32 %v705, 4294901760
    %5404 = vmatpush1.msra.mxu0 %v5403
    %5405 = vmatprep.subr.mxu0 0.0
    %v5406 = vand.u32 %v706, 4294901760
    %5407 = vmatpush1.msra.mxu0 %v5406
    %5408 = vmatprep.subr.mxu0 0.0
    %v5409 = vand.u32 %v707, 4294901760
    %5410 = vmatpush1.msra.mxu0 %v5409
    %5411 = vmatprep.subr.mxu0 0.0
    %v5412 = vand.u32 %v708, 4294901760
    %5413 = vmatpush1.msra.mxu0 %v5412
    %5414 = vmatprep.subr.mxu0 0.0
    %v5415 = vand.u32 %v709, 4294901760
    %5416 = vmatpush1.msra.mxu0 %v5415
    %5417 = vmatprep.subr.mxu0 0.0
    %v5418 = vand.u32 %v710, 4294901760
    %5419 = vmatpush1.msra.mxu0 %v5418
    %5420 = vmatprep.subr.mxu0 0.0
    %v5421 = vand.u32 %v711, 4294901760
    %5422 = vmatpush1.msra.mxu0 %v5421
    %5423 = vmatprep.subr.mxu0 0.0
    %v5424 = vand.u32 %v712, 4294901760
    %5425 = vmatpush1.msra.mxu0 %v5424
    %5426 = vmatprep.subr.mxu0 0.0
    %v5427 = vand.u32 %v713, 4294901760
    %5428 = vmatpush1.msra.mxu0 %v5427
    %5429 = vmatprep.subr.mxu0 0.0
    %v5430 = vand.u32 %v714, 4294901760
    %5431 = vmatpush1.msra.mxu0 %v5430
    %5432 = vmatprep.subr.mxu0 0.0
    %v5433 = vand.u32 %v715, 4294901760
    %5434 = vmatpush1.msra.mxu0 %v5433
    %5435 = vmatprep.subr.mxu0 0.0
    %v5436 = vand.u32 %v716, 4294901760
    %5437 = vmatpush1.msra.mxu0 %v5436
    %5438 = vmatprep.subr.mxu0 0.0
    %5439 = vmatpush1.msra.mxu0 0.0
    %5440 = vmatprep.subr.mxu0 0.0
    %5441 = vmatpush1.msra.mxu0 0.0
    %5442 = vmatprep.subr.mxu0 0.0
    %5443 = vmatpush1.msra.mxu0 0.0
    %5444 = vmatprep.subr.mxu0 0.0
    %5445 = vmatpush1.msra.mxu0 0.0
    %5446 = vmatprep.subr.mxu0 0.0
    %5447 = vmatpush1.msra.mxu0 0.0
    %5448 = vmatprep.subr.mxu0 0.0
    %5449 = vmatpush1.msra.mxu0 0.0
    %5450 = vmatprep.subr.mxu0 0.0
    %5451 = vmatpush1.msra.mxu0 0.0
    %5452 = vmatprep.subr.mxu0 0.0
    %5453 = vmatpush1.msra.mxu0 0.0
    %5454 = vmatprep.subr.mxu0 0.0
    %5455 = vmatpush1.msra.mxu0 0.0
    %5456 = vmatprep.subr.mxu0 0.0
    %5457 = vmatpush1.msra.mxu0 0.0
    %5458 = vmatprep.subr.mxu0 0.0
    %5459 = vmatpush1.msra.mxu0 0.0
    %5460 = vmatprep.subr.mxu0 0.0
    %5461 = vmatpush1.msra.mxu0 0.0
    %5462 = vmatprep.subr.mxu0 0.0
    %5463 = vmatpush1.msra.mxu0 0.0
    %5464 = vmatprep.subr.mxu0 0.0
    %5465 = vmatpush1.msra.mxu0 0.0
    %5466 = vmatprep.subr.mxu0 0.0
    %5467 = vmatpush1.msra.mxu0 0.0
    %5468 = vmatprep.subr.mxu0 0.0
    %5469 = vmatpush1.msra.mxu0 0.0
    %5470 = vmatprep.mubr.f32.mxu0 0.0
    %v5471 = vand.u32 %v5389, 4294901760
    %v5472 = vsub.f32 %v5389, %v5471
    %v5473 = vand.u32 %v5472, 4294901760
    %v5474 = vsub.f32 %v5472, %v5473
    %v5475 = vand.u32 %v5474, 4294901760
    %5476 = vmatmul.mubr.f32.gmra.mrb[0].mxu0 %v5475
    %v5477 = vpop.f32.mrb[0].mxu0
    %v5478 = vadd.f32 0.0, %v5477
    %v5479 = vpop.f32.mrb[0].mxu0
    %5480 = vdwg.mxu0
    %5481 = vmatprep.subr.mxu0 0.0
    %v5482 = vand.u32 %v701, 4294901760
    %v5483 = vsub.f32 %v701, %v5482
    %v5484 = vand.u32 %v5483, 4294901760
    %v5485 = vsub.f32 %v5483, %v5484
    %v5486 = vand.u32 %v5485, 4294901760
    %5487 = vmatpush1.msra.mxu0 %v5486
    %5488 = vmatprep.subr.mxu0 0.0
    %v5489 = vand.u32 %v702, 4294901760
    %v5490 = vsub.f32 %v702, %v5489
    %v5491 = vand.u32 %v5490, 4294901760
    %v5492 = vsub.f32 %v5490, %v5491
    %v5493 = vand.u32 %v5492, 4294901760
    %5494 = vmatpush1.msra.mxu0 %v5493
    %5495 = vmatprep.subr.mxu0 0.0
    %v5496 = vand.u32 %v703, 4294901760
    %v5497 = vsub.f32 %v703, %v5496
    %v5498 = vand.u32 %v5497, 4294901760
    %v5499 = vsub.f32 %v5497, %v5498
    %v5500 = vand.u32 %v5499, 4294901760
    %5501 = vmatpush1.msra.mxu0 %v5500
    %5502 = vmatprep.subr.mxu0 0.0
    %v5503 = vand.u32 %v704, 4294901760
    %v5504 = vsub.f32 %v704, %v5503
    %v5505 = vand.u32 %v5504, 4294901760
    %v5506 = vsub.f32 %v5504, %v5505
    %v5507 = vand.u32 %v5506, 4294901760
    %5508 = vmatpush1.msra.mxu0 %v5507
    %5509 = vmatprep.subr.mxu0 0.0
    %v5510 = vand.u32 %v705, 4294901760
    %v5511 = vsub.f32 %v705, %v5510
    %v5512 = vand.u32 %v5511, 4294901760
    %v5513 = vsub.f32 %v5511, %v5512
    %v5514 = vand.u32 %v5513, 4294901760
    %5515 = vmatpush1.msra.mxu0 %v5514
    %5516 = vmatprep.subr.mxu0 0.0
    %v5517 = vand.u32 %v706, 4294901760
    %v5518 = vsub.f32 %v706, %v5517
    %v5519 = vand.u32 %v5518, 4294901760
    %v5520 = vsub.f32 %v5518, %v5519
    %v5521 = vand.u32 %v5520, 4294901760
    %5522 = vmatpush1.msra.mxu0 %v5521
    %5523 = vmatprep.subr.mxu0 0.0
    %v5524 = vand.u32 %v707, 4294901760
    %v5525 = vsub.f32 %v707, %v5524
    %v5526 = vand.u32 %v5525, 4294901760
    %v5527 = vsub.f32 %v5525, %v5526
    %v5528 = vand.u32 %v5527, 4294901760
    %5529 = vmatpush1.msra.mxu0 %v5528
    %5530 = vmatprep.subr.mxu0 0.0
    %v5531 = vand.u32 %v708, 4294901760
    %v5532 = vsub.f32 %v708, %v5531
    %v5533 = vand.u32 %v5532, 4294901760
    %v5534 = vsub.f32 %v5532, %v5533
    %v5535 = vand.u32 %v5534, 4294901760
    %5536 = vmatpush1.msra.mxu0 %v5535
    %5537 = vmatprep.subr.mxu0 0.0
    %v5538 = vand.u32 %v709, 4294901760
    %v5539 = vsub.f32 %v709, %v5538
    %v5540 = vand.u32 %v5539, 4294901760
    %v5541 = vsub.f32 %v5539, %v5540
    %v5542 = vand.u32 %v5541, 4294901760
    %5543 = vmatpush1.msra.mxu0 %v5542
    %5544 = vmatprep.subr.mxu0 0.0
    %v5545 = vand.u32 %v710, 4294901760
    %v5546 = vsub.f32 %v710, %v5545
    %v5547 = vand.u32 %v5546, 4294901760
    %v5548 = vsub.f32 %v5546, %v5547
    %v5549 = vand.u32 %v5548, 4294901760
    %5550 = vmatpush1.msra.mxu0 %v5549
    %5551 = vmatprep.subr.mxu0 0.0
    %v5552 = vand.u32 %v711, 4294901760
    %v5553 = vsub.f32 %v711, %v5552
    %v5554 = vand.u32 %v5553, 4294901760
    %v5555 = vsub.f32 %v5553, %v5554
    %v5556 = vand.u32 %v5555, 4294901760
    %5557 = vmatpush1.msra.mxu0 %v5556
    %5558 = vmatprep.subr.mxu0 0.0
    %v5559 = vand.u32 %v712, 4294901760
    %v5560 = vsub.f32 %v712, %v5559
    %v5561 = vand.u32 %v5560, 4294901760
    %v5562 = vsub.f32 %v5560, %v5561
    %v5563 = vand.u32 %v5562, 4294901760
    %5564 = vmatpush1.msra.mxu0 %v5563
    %5565 = vmatprep.subr.mxu0 0.0
    %v5566 = vand.u32 %v713, 4294901760
    %v5567 = vsub.f32 %v713, %v5566
    %v5568 = vand.u32 %v5567, 4294901760
    %v5569 = vsub.f32 %v5567, %v5568
    %v5570 = vand.u32 %v5569, 4294901760
    %5571 = vmatpush1.msra.mxu0 %v5570
    %5572 = vmatprep.subr.mxu0 0.0
    %v5573 = vand.u32 %v714, 4294901760
    %v5574 = vsub.f32 %v714, %v5573
    %v5575 = vand.u32 %v5574, 4294901760
    %v5576 = vsub.f32 %v5574, %v5575
    %v5577 = vand.u32 %v5576, 4294901760
    %5578 = vmatpush1.msra.mxu0 %v5577
    %5579 = vmatprep.subr.mxu0 0.0
    %v5580 = vand.u32 %v715, 4294901760
    %v5581 = vsub.f32 %v715, %v5580
    %v5582 = vand.u32 %v5581, 4294901760
    %v5583 = vsub.f32 %v5581, %v5582
    %v5584 = vand.u32 %v5583, 4294901760
    %5585 = vmatpush1.msra.mxu0 %v5584
    %5586 = vmatprep.subr.mxu0 0.0
    %v5587 = vand.u32 %v716, 4294901760
    %v5588 = vsub.f32 %v716, %v5587
    %v5589 = vand.u32 %v5588, 4294901760
    %v5590 = vsub.f32 %v5588, %v5589
    %v5591 = vand.u32 %v5590, 4294901760
    %5592 = vmatpush1.msra.mxu0 %v5591
    %5593 = vmatprep.subr.mxu0 0.0
    %5594 = vmatpush1.msra.mxu0 0.0
    %5595 = vmatprep.subr.mxu0 0.0
    %5596 = vmatpush1.msra.mxu0 0.0
    %5597 = vmatprep.subr.mxu0 0.0
    %5598 = vmatpush1.msra.mxu0 0.0
    %5599 = vmatprep.subr.mxu0 0.0
    %5600 = vmatpush1.msra.mxu0 0.0
    %5601 = vmatprep.subr.mxu0 0.0
    %5602 = vmatpush1.msra.mxu0 0.0
    %5603 = vmatprep.subr.mxu0 0.0
    %5604 = vmatpush1.msra.mxu0 0.0
    %5605 = vmatprep.subr.mxu0 0.0
    %5606 = vmatpush1.msra.mxu0 0.0
    %5607 = vmatprep.subr.mxu0 0.0
    %5608 = vmatpush1.msra.mxu0 0.0
    %5609 = vmatprep.subr.mxu0 0.0
    %5610 = vmatpush1.msra.mxu0 0.0
    %5611 = vmatprep.subr.mxu0 0.0
    %5612 = vmatpush1.msra.mxu0 0.0
    %5613 = vmatprep.subr.mxu0 0.0
    %5614 = vmatpush1.msra.mxu0 0.0
    %5615 = vmatprep.subr.mxu0 0.0
    %5616 = vmatpush1.msra.mxu0 0.0
    %5617 = vmatprep.subr.mxu0 0.0
    %5618 = vmatpush1.msra.mxu0 0.0
    %5619 = vmatprep.subr.mxu0 0.0
    %5620 = vmatpush1.msra.mxu0 0.0
    %5621 = vmatprep.subr.mxu0 0.0
    %5622 = vmatpush1.msra.mxu0 0.0
    %5623 = vmatprep.subr.mxu0 0.0
    %5624 = vmatpush1.msra.mxu0 0.0
    %5625 = vmatprep.mubr.f32.mxu0 0.0
    %v5626 = vand.u32 %v5389, 4294901760
    %5627 = vmatmul.mubr.f32.gmra.mrb[0].mxu0 %v5626
    %v5628 = vpop.f32.mrb[0].mxu0
    %v5629 = vadd.f32 %v5478, %v5628
    %v5630 = vpop.f32.mrb[0].mxu0
    %5631 = vdwg.mxu0
    %5632 = vmatprep.subr.mxu0 0.0
    %v5633 = vand.u32 %v701, 4294901760
    %v5634 = vsub.f32 %v701, %v5633
    %5635 = vmatpush1.msra.mxu0 %v5634
    %5636 = vmatprep.subr.mxu0 0.0
    %v5637 = vand.u32 %v702, 4294901760
    %v5638 = vsub.f32 %v702, %v5637
    %5639 = vmatpush1.msra.mxu0 %v5638
    %5640 = vmatprep.subr.mxu0 0.0
    %v5641 = vand.u32 %v703, 4294901760
    %v5642 = vsub.f32 %v703, %v5641
    %5643 = vmatpush1.msra.mxu0 %v5642
    %5644 = vmatprep.subr.mxu0 0.0
    %v5645 = vand.u32 %v704, 4294901760
    %v5646 = vsub.f32 %v704, %v5645
    %5647 = vmatpush1.msra.mxu0 %v5646
    %5648 = vmatprep.subr.mxu0 0.0
    %v5649 = vand.u32 %v705, 4294901760
    %v5650 = vsub.f32 %v705, %v5649
    %5651 = vmatpush1.msra.mxu0 %v5650
    %5652 = vmatprep.subr.mxu0 0.0
    %v5653 = vand.u32 %v706, 4294901760
    %v5654 = vsub.f32 %v706, %v5653
    %5655 = vmatpush1.msra.mxu0 %v5654
    %5656 = vmatprep.subr.mxu0 0.0
    %v5657 = vand.u32 %v707, 4294901760
    %v5658 = vsub.f32 %v707, %v5657
    %5659 = vmatpush1.msra.mxu0 %v5658
    %5660 = vmatprep.subr.mxu0 0.0
    %v5661 = vand.u32 %v708, 4294901760
    %v5662 = vsub.f32 %v708, %v5661
    %5663 = vmatpush1.msra.mxu0 %v5662
    %5664 = vmatprep.subr.mxu0 0.0
    %v5665 = vand.u32 %v709, 4294901760
    %v5666 = vsub.f32 %v709, %v5665
    %5667 = vmatpush1.msra.mxu0 %v5666
    %5668 = vmatprep.subr.mxu0 0.0
    %v5669 = vand.u32 %v710, 4294901760
    %v5670 = vsub.f32 %v710, %v5669
    %5671 = vmatpush1.msra.mxu0 %v5670
    %5672 = vmatprep.subr.mxu0 0.0
    %v5673 = vand.u32 %v711, 4294901760
    %v5674 = vsub.f32 %v711, %v5673
    %5675 = vmatpush1.msra.mxu0 %v5674
    %5676 = vmatprep.subr.mxu0 0.0
    %v5677 = vand.u32 %v712, 4294901760
    %v5678 = vsub.f32 %v712, %v5677
    %5679 = vmatpush1.msra.mxu0 %v5678
    %5680 = vmatprep.subr.mxu0 0.0
    %v5681 = vand.u32 %v713, 4294901760
    %v5682 = vsub.f32 %v713, %v5681
    %5683 = vmatpush1.msra.mxu0 %v5682
    %5684 = vmatprep.subr.mxu0 0.0
    %v5685 = vand.u32 %v714, 4294901760
    %v5686 = vsub.f32 %v714, %v5685
    %5687 = vmatpush1.msra.mxu0 %v5686
    %5688 = vmatprep.subr.mxu0 0.0
    %v5689 = vand.u32 %v715, 4294901760
    %v5690 = vsub.f32 %v715, %v5689
    %5691 = vmatpush1.msra.mxu0 %v5690
    %5692 = vmatprep.subr.mxu0 0.0
    %v5693 = vand.u32 %v716, 4294901760
    %v5694 = vsub.f32 %v716, %v5693
    %5695 = vmatpush1.msra.mxu0 %v5694
    %5696 = vmatprep.subr.mxu0 0.0
    %5697 = vmatpush1.msra.mxu0 0.0
    %5698 = vmatprep.subr.mxu0 0.0
    %5699 = vmatpush1.msra.mxu0 0.0
    %5700 = vmatprep.subr.mxu0 0.0
    %5701 = vmatpush1.msra.mxu0 0.0
    %5702 = vmatprep.subr.mxu0 0.0
    %5703 = vmatpush1.msra.mxu0 0.0
    %5704 = vmatprep.subr.mxu0 0.0
    %5705 = vmatpush1.msra.mxu0 0.0
    %5706 = vmatprep.subr.mxu0 0.0
    %5707 = vmatpush1.msra.mxu0 0.0
    %5708 = vmatprep.subr.mxu0 0.0
    %5709 = vmatpush1.msra.mxu0 0.0
    %5710 = vmatprep.subr.mxu0 0.0
    %5711 = vmatpush1.msra.mxu0 0.0
    %5712 = vmatprep.subr.mxu0 0.0
    %5713 = vmatpush1.msra.mxu0 0.0
    %5714 = vmatprep.subr.mxu0 0.0
    %5715 = vmatpush1.msra.mxu0 0.0
    %5716 = vmatprep.subr.mxu0 0.0
    %5717 = vmatpush1.msra.mxu0 0.0
    %5718 = vmatprep.subr.mxu0 0.0
    %5719 = vmatpush1.msra.mxu0 0.0
    %5720 = vmatprep.subr.mxu0 0.0
    %5721 = vmatpush1.msra.mxu0 0.0
    %5722 = vmatprep.subr.mxu0 0.0
    %5723 = vmatpush1.msra.mxu0 0.0
    %5724 = vmatprep.subr.mxu0 0.0
    %5725 = vmatpush1.msra.mxu0 0.0
    %5726 = vmatprep.subr.mxu0 0.0
    %5727 = vmatpush1.msra.mxu0 0.0
    %5728 = vmatprep.mubr.f32.mxu0 0.0
    %v5729 = vand.u32 %v5389, 4294901760
    %v5730 = vsub.f32 %v5389, %v5729
    %5731 = vmatmul.mubr.f32.gmra.mrb[0].mxu0 %v5730
    %v5732 = vpop.f32.mrb[0].mxu0
    %v5733 = vadd.f32 %v5629, %v5732
    %v5734 = vpop.f32.mrb[0].mxu0
    %5735 = vdwg.mxu0
    %5736 = vmatprep.subr.mxu0 0.0
    %v5737 = vand.u32 %v701, 4294901760
    %5738 = vmatpush1.msra.mxu0 %v5737
    %5739 = vmatprep.subr.mxu0 0.0
    %v5740 = vand.u32 %v702, 4294901760
    %5741 = vmatpush1.msra.mxu0 %v5740
    %5742 = vmatprep.subr.mxu0 0.0
    %v5743 = vand.u32 %v703, 4294901760
    %5744 = vmatpush1.msra.mxu0 %v5743
    %5745 = vmatprep.subr.mxu0 0.0
    %v5746 = vand.u32 %v704, 4294901760
    %5747 = vmatpush1.msra.mxu0 %v5746
    %5748 = vmatprep.subr.mxu0 0.0
    %v5749 = vand.u32 %v705, 4294901760
    %5750 = vmatpush1.msra.mxu0 %v5749
    %5751 = vmatprep.subr.mxu0 0.0
    %v5752 = vand.u32 %v706, 4294901760
    %5753 = vmatpush1.msra.mxu0 %v5752
    %5754 = vmatprep.subr.mxu0 0.0
    %v5755 = vand.u32 %v707, 4294901760
    %5756 = vmatpush1.msra.mxu0 %v5755
    %5757 = vmatprep.subr.mxu0 0.0
    %v5758 = vand.u32 %v708, 4294901760
    %5759 = vmatpush1.msra.mxu0 %v5758
    %5760 = vmatprep.subr.mxu0 0.0
    %v5761 = vand.u32 %v709, 4294901760
    %5762 = vmatpush1.msra.mxu0 %v5761
    %5763 = vmatprep.subr.mxu0 0.0
    %v5764 = vand.u32 %v710, 4294901760
    %5765 = vmatpush1.msra.mxu0 %v5764
    %5766 = vmatprep.subr.mxu0 0.0
    %v5767 = vand.u32 %v711, 4294901760
    %5768 = vmatpush1.msra.mxu0 %v5767
    %5769 = vmatprep.subr.mxu0 0.0
    %v5770 = vand.u32 %v712, 4294901760
    %5771 = vmatpush1.msra.mxu0 %v5770
    %5772 = vmatprep.subr.mxu0 0.0
    %v5773 = vand.u32 %v713, 4294901760
    %5774 = vmatpush1.msra.mxu0 %v5773
    %5775 = vmatprep.subr.mxu0 0.0
    %v5776 = vand.u32 %v714, 4294901760
    %5777 = vmatpush1.msra.mxu0 %v5776
    %5778 = vmatprep.subr.mxu0 0.0
    %v5779 = vand.u32 %v715, 4294901760
    %5780 = vmatpush1.msra.mxu0 %v5779
    %5781 = vmatprep.subr.mxu0 0.0
    %v5782 = vand.u32 %v716, 4294901760
    %5783 = vmatpush1.msra.mxu0 %v5782
    %5784 = vmatprep.subr.mxu0 0.0
    %5785 = vmatpush1.msra.mxu0 0.0
    %5786 = vmatprep.subr.mxu0 0.0
    %5787 = vmatpush1.msra.mxu0 0.0
    %5788 = vmatprep.subr.mxu0 0.0
    %5789 = vmatpush1.msra.mxu0 0.0
    %5790 = vmatprep.subr.mxu0 0.0
    %5791 = vmatpush1.msra.mxu0 0.0
    %5792 = vmatprep.subr.mxu0 0.0
    %5793 = vmatpush1.msra.mxu0 0.0
    %5794 = vmatprep.subr.mxu0 0.0
    %5795 = vmatpush1.msra.mxu0 0.0
    %5796 = vmatprep.subr.mxu0 0.0
    %5797 = vmatpush1.msra.mxu0 0.0
    %5798 = vmatprep.subr.mxu0 0.0
    %5799 = vmatpush1.msra.mxu0 0.0
    %5800 = vmatprep.subr.mxu0 0.0
    %5801 = vmatpush1.msra.mxu0 0.0
    %5802 = vmatprep.subr.mxu0 0.0
    %5803 = vmatpush1.msra.mxu0 0.0
    %5804 = vmatprep.subr.mxu0 0.0
    %5805 = vmatpush1.msra.mxu0 0.0
    %5806 = vmatprep.subr.mxu0 0.0
    %5807 = vmatpush1.msra.mxu0 0.0
    %5808 = vmatprep.subr.mxu0 0.0
    %5809 = vmatpush1.msra.mxu0 0.0
    %5810 = vmatprep.subr.mxu0 0.0
    %5811 = vmatpush1.msra.mxu0 0.0
    %5812 = vmatprep.subr.mxu0 0.0
    %5813 = vmatpush1.msra.mxu0 0.0
    %5814 = vmatprep.subr.mxu0 0.0
    %5815 = vmatpush1.msra.mxu0 0.0
    %5816 = vmatprep.mubr.f32.mxu0 0.0
    %v5817 = vand.u32 %v5389, 4294901760
    %v5818 = vsub.f32 %v5389, %v5817
    %v5819 = vand.u32 %v5818, 4294901760
    %5820 = vmatmul.mubr.f32.gmra.mrb[0].mxu0 %v5819
    %v5821 = vpop.f32.mrb[0].mxu0
    %v5822 = vadd.f32 %v5733, %v5821
    %v5823 = vpop.f32.mrb[0].mxu0
    %5824 = vdwg.mxu0
    %5825 = vmatprep.subr.mxu0 0.0
    %v5826 = vand.u32 %v701, 4294901760
    %v5827 = vsub.f32 %v701, %v5826
    %v5828 = vand.u32 %v5827, 4294901760
    %5829 = vmatpush1.msra.mxu0 %v5828
    %5830 = vmatprep.subr.mxu0 0.0
    %v5831 = vand.u32 %v702, 4294901760
    %v5832 = vsub.f32 %v702, %v5831
    %v5833 = vand.u32 %v5832, 4294901760
    %5834 = vmatpush1.msra.mxu0 %v5833
    %5835 = vmatprep.subr.mxu0 0.0
    %v5836 = vand.u32 %v703, 4294901760
    %v5837 = vsub.f32 %v703, %v5836
    %v5838 = vand.u32 %v5837, 4294901760
    %5839 = vmatpush1.msra.mxu0 %v5838
    %5840 = vmatprep.subr.mxu0 0.0
    %v5841 = vand.u32 %v704, 4294901760
    %v5842 = vsub.f32 %v704, %v5841
    %v5843 = vand.u32 %v5842, 4294901760
    %5844 = vmatpush1.msra.mxu0 %v5843
    %5845 = vmatprep.subr.mxu0 0.0
    %v5846 = vand.u32 %v705, 4294901760
    %v5847 = vsub.f32 %v705, %v5846
    %v5848 = vand.u32 %v5847, 4294901760
    %5849 = vmatpush1.msra.mxu0 %v5848
    %5850 = vmatprep.subr.mxu0 0.0
    %v5851 = vand.u32 %v706, 4294901760
    %v5852 = vsub.f32 %v706, %v5851
    %v5853 = vand.u32 %v5852, 4294901760
    %5854 = vmatpush1.msra.mxu0 %v5853
    %5855 = vmatprep.subr.mxu0 0.0
    %v5856 = vand.u32 %v707, 4294901760
    %v5857 = vsub.f32 %v707, %v5856
    %v5858 = vand.u32 %v5857, 4294901760
    %5859 = vmatpush1.msra.mxu0 %v5858
    %5860 = vmatprep.subr.mxu0 0.0
    %v5861 = vand.u32 %v708, 4294901760
    %v5862 = vsub.f32 %v708, %v5861
    %v5863 = vand.u32 %v5862, 4294901760
    %5864 = vmatpush1.msra.mxu0 %v5863
    %5865 = vmatprep.subr.mxu0 0.0
    %v5866 = vand.u32 %v709, 4294901760
    %v5867 = vsub.f32 %v709, %v5866
    %v5868 = vand.u32 %v5867, 4294901760
    %5869 = vmatpush1.msra.mxu0 %v5868
    %5870 = vmatprep.subr.mxu0 0.0
    %v5871 = vand.u32 %v710, 4294901760
    %v5872 = vsub.f32 %v710, %v5871
    %v5873 = vand.u32 %v5872, 4294901760
    %5874 = vmatpush1.msra.mxu0 %v5873
    %5875 = vmatprep.subr.mxu0 0.0
    %v5876 = vand.u32 %v711, 4294901760
    %v5877 = vsub.f32 %v711, %v5876
    %v5878 = vand.u32 %v5877, 4294901760
    %5879 = vmatpush1.msra.mxu0 %v5878
    %5880 = vmatprep.subr.mxu0 0.0
    %v5881 = vand.u32 %v712, 4294901760
    %v5882 = vsub.f32 %v712, %v5881
    %v5883 = vand.u32 %v5882, 4294901760
    %5884 = vmatpush1.msra.mxu0 %v5883
    %5885 = vmatprep.subr.mxu0 0.0
    %v5886 = vand.u32 %v713, 4294901760
    %v5887 = vsub.f32 %v713, %v5886
    %v5888 = vand.u32 %v5887, 4294901760
    %5889 = vmatpush1.msra.mxu0 %v5888
    %5890 = vmatprep.subr.mxu0 0.0
    %v5891 = vand.u32 %v714, 4294901760
    %v5892 = vsub.f32 %v714, %v5891
    %v5893 = vand.u32 %v5892, 4294901760
    %5894 = vmatpush1.msra.mxu0 %v5893
    %5895 = vmatprep.subr.mxu0 0.0
    %v5896 = vand.u32 %v715, 4294901760
    %v5897 = vsub.f32 %v715, %v5896
    %v5898 = vand.u32 %v5897, 4294901760
    %5899 = vmatpush1.msra.mxu0 %v5898
    %5900 = vmatprep.subr.mxu0 0.0
    %v5901 = vand.u32 %v716, 4294901760
    %v5902 = vsub.f32 %v716, %v5901
    %v5903 = vand.u32 %v5902, 4294901760
    %5904 = vmatpush1.msra.mxu0 %v5903
    %5905 = vmatprep.subr.mxu0 0.0
    %5906 = vmatpush1.msra.mxu0 0.0
    %5907 = vmatprep.subr.mxu0 0.0
    %5908 = vmatpush1.msra.mxu0 0.0
    %5909 = vmatprep.subr.mxu0 0.0
    %5910 = vmatpush1.msra.mxu0 0.0
    %5911 = vmatprep.subr.mxu0 0.0
    %5912 = vmatpush1.msra.mxu0 0.0
    %5913 = vmatprep.subr.mxu0 0.0
    %5914 = vmatpush1.msra.mxu0 0.0
    %5915 = vmatprep.subr.mxu0 0.0
    %5916 = vmatpush1.msra.mxu0 0.0
    %5917 = vmatprep.subr.mxu0 0.0
    %5918 = vmatpush1.msra.mxu0 0.0
    %5919 = vmatprep.subr.mxu0 0.0
    %5920 = vmatpush1.msra.mxu0 0.0
    %5921 = vmatprep.subr.mxu0 0.0
    %5922 = vmatpush1.msra.mxu0 0.0
    %5923 = vmatprep.subr.mxu0 0.0
    %5924 = vmatpush1.msra.mxu0 0.0
    %5925 = vmatprep.subr.mxu0 0.0
    %5926 = vmatpush1.msra.mxu0 0.0
    %5927 = vmatprep.subr.mxu0 0.0
    %5928 = vmatpush1.msra.mxu0 0.0
    %5929 = vmatprep.subr.mxu0 0.0
    %5930 = vmatpush1.msra.mxu0 0.0
    %5931 = vmatprep.subr.mxu0 0.0
    %5932 = vmatpush1.msra.mxu0 0.0
    %5933 = vmatprep.subr.mxu0 0.0
    %5934 = vmatpush1.msra.mxu0 0.0
    %5935 = vmatprep.subr.mxu0 0.0
    %5936 = vmatpush1.msra.mxu0 0.0
    %5937 = vmatprep.mubr.f32.mxu0 0.0
    %v5938 = vand.u32 %v5389, 4294901760
    %5939 = vmatmul.mubr.f32.gmra.mrb[0].mxu0 %v5938
    %v5940 = vpop.f32.mrb[0].mxu0
    %v5941 = vadd.f32 %v5822, %v5940
    %v5942 = vpop.f32.mrb[0].mxu0
    %5943 = vdwg.mxu0
    %5944 = vmatprep.subr.mxu0 0.0
    %v5945 = vand.u32 %v701, 4294901760
    %5946 = vmatpush1.msra.mxu0 %v5945
    %5947 = vmatprep.subr.mxu0 0.0
    %v5948 = vand.u32 %v702, 4294901760
    %5949 = vmatpush1.msra.mxu0 %v5948
    %5950 = vmatprep.subr.mxu0 0.0
    %v5951 = vand.u32 %v703, 4294901760
    %5952 = vmatpush1.msra.mxu0 %v5951
    %5953 = vmatprep.subr.mxu0 0.0
    %v5954 = vand.u32 %v704, 4294901760
    %5955 = vmatpush1.msra.mxu0 %v5954
    %5956 = vmatprep.subr.mxu0 0.0
    %v5957 = vand.u32 %v705, 4294901760
    %5958 = vmatpush1.msra.mxu0 %v5957
    %5959 = vmatprep.subr.mxu0 0.0
    %v5960 = vand.u32 %v706, 4294901760
    %5961 = vmatpush1.msra.mxu0 %v5960
    %5962 = vmatprep.subr.mxu0 0.0
    %v5963 = vand.u32 %v707, 4294901760
    %5964 = vmatpush1.msra.mxu0 %v5963
    %5965 = vmatprep.subr.mxu0 0.0
    %v5966 = vand.u32 %v708, 4294901760
    %5967 = vmatpush1.msra.mxu0 %v5966
    %5968 = vmatprep.subr.mxu0 0.0
    %v5969 = vand.u32 %v709, 4294901760
    %5970 = vmatpush1.msra.mxu0 %v5969
    %5971 = vmatprep.subr.mxu0 0.0
    %v5972 = vand.u32 %v710, 4294901760
    %5973 = vmatpush1.msra.mxu0 %v5972
    %5974 = vmatprep.subr.mxu0 0.0
    %v5975 = vand.u32 %v711, 4294901760
    %5976 = vmatpush1.msra.mxu0 %v5975
    %5977 = vmatprep.subr.mxu0 0.0
    %v5978 = vand.u32 %v712, 4294901760
    %5979 = vmatpush1.msra.mxu0 %v5978
    %5980 = vmatprep.subr.mxu0 0.0
    %v5981 = vand.u32 %v713, 4294901760
    %5982 = vmatpush1.msra.mxu0 %v5981
    %5983 = vmatprep.subr.mxu0 0.0
    %v5984 = vand.u32 %v714, 4294901760
    %5985 = vmatpush1.msra.mxu0 %v5984
    %5986 = vmatprep.subr.mxu0 0.0
    %v5987 = vand.u32 %v715, 4294901760
    %5988 = vmatpush1.msra.mxu0 %v5987
    %5989 = vmatprep.subr.mxu0 0.0
    %v5990 = vand.u32 %v716, 4294901760
    %5991 = vmatpush1.msra.mxu0 %v5990
    %5992 = vmatprep.subr.mxu0 0.0
    %5993 = vmatpush1.msra.mxu0 0.0
    %5994 = vmatprep.subr.mxu0 0.0
    %5995 = vmatpush1.msra.mxu0 0.0
    %5996 = vmatprep.subr.mxu0 0.0
    %5997 = vmatpush1.msra.mxu0 0.0
    %5998 = vmatprep.subr.mxu0 0.0
    %5999 = vmatpush1.msra.mxu0 0.0
    %6000 = vmatprep.subr.mxu0 0.0
    %6001 = vmatpush1.msra.mxu0 0.0
    %6002 = vmatprep.subr.mxu0 0.0
    %6003 = vmatpush1.msra.mxu0 0.0
    %6004 = vmatprep.subr.mxu0 0.0
    %6005 = vmatpush1.msra.mxu0 0.0
    %6006 = vmatprep.subr.mxu0 0.0
    %6007 = vmatpush1.msra.mxu0 0.0
    %6008 = vmatprep.subr.mxu0 0.0
    %6009 = vmatpush1.msra.mxu0 0.0
    %6010 = vmatprep.subr.mxu0 0.0
    %6011 = vmatpush1.msra.mxu0 0.0
    %6012 = vmatprep.subr.mxu0 0.0
    %6013 = vmatpush1.msra.mxu0 0.0
    %6014 = vmatprep.subr.mxu0 0.0
    %6015 = vmatpush1.msra.mxu0 0.0
    %6016 = vmatprep.subr.mxu0 0.0
    %6017 = vmatpush1.msra.mxu0 0.0
    %6018 = vmatprep.subr.mxu0 0.0
    %6019 = vmatpush1.msra.mxu0 0.0
    %6020 = vmatprep.subr.mxu0 0.0
    %6021 = vmatpush1.msra.mxu0 0.0
    %6022 = vmatprep.subr.mxu0 0.0
    %6023 = vmatpush1.msra.mxu0 0.0
    %6024 = vmatprep.mubr.f32.mxu0 0.0
    %v6025 = vand.u32 %v5389, 4294901760
    %6026 = vmatmul.mubr.f32.gmra.mrb[0].mxu0 %v6025
    %v6027 = vpop.f32.mrb[0].mxu0
    %v6028 = vadd.f32 %v5941, %v6027
    %v6029 = vpop.f32.mrb[0].mxu0
    %6030 = vdwg.mxu0
    %v6031 = vmul.f32 %v6028, 0.00390625
    %v6032 = vmul.f32 %v6031, %v6031
    %v6034 = vrot.slane %v6032, 7
    %v6036 = vsub.f32 %v6031, %v6034
    %v6037 = vmax.f32 %v6036, 0.0
    %v6038 = vlaneseq
    %v6039 = vshrl.u32 %v6038, 7
    %v6040 = vsub.s32 0, %v6039
    %v6041 = vrot.slane %v6031, %v6040
    %v6042 = vsub.f32 %v5371, %v6041
    %v6043 = vsub.f32 %v5372, %v6041
    %v6044 = vadd.f32 %v6037, 8.0
    %v6045 = vrsqrt.pop %v6044
    %v6046 = vlaneseq
    %v6047 = vshrl.u32 %v6046, 7
    %v6048 = vsub.s32 1, %v6047
    %v6049 = vrot.slane %v6045, %v6048
    %v6050 = vmul.f32 %v6042, %v6049
    %v6051 = vmul.f32 %v6043, %v6049
    %v6052 = vld [vmem:[%s6 + $0x5] sm:$0x1]
    %v6053 = vlaneseq
    %v6054 = vshrl.u32 %v6053, 7
    %v6055 = vsub.s32 0, %v6054
    %v6056 = vrot.slane %v6052, %v6055
    %v6057 = vmul.f32 %v6050, %v6056
    %v6058 = vmul.f32 %v6051, %v6056
    %v6059 = vld [vmem:[#allocation10 + $0x5] sm:$0x1]
    %v6060 = vlaneseq
    %v6061 = vshrl.u32 %v6060, 7
    %v6062 = vsub.s32 0, %v6061
    %v6063 = vrot.slane %v6059, %v6062
    %v6064 = vadd.f32 %v6057, %v6063
    %v6065 = vadd.f32 %v6058, %v6063
    %v6068 = vrot.slane %v6064, 7
    %v6069 = vrot.slane %v6065, 7
    %v6072 = vsel %vm134, 0.0, %v6068
    %v6073 = vsel %vm134, 0.0, %v6069
    %v6074 = vsel %vm134, %v6068, 0.0
    %v6075 = vsel %vm134, %v6069, 0.0
    %v6076 = vpack.c.bf16 %v6073, %v6072
    %v6081 = vrot.slane %v6072, 1
    %v6082 = vrot.slane %v6074, 1
    %v6083 = vsel %vm1426, %v6081, %v6082
    %v6084 = vrot.slane %v6073, 1
    %v6085 = vrot.slane %v6075, 1
    %v6086 = vsel %vm1426, %v6084, %v6085
    %v6089 = vpack.c.bf16 %v6086, %v6083
    %6090 = vmatprep.subr.bf16.mxu0 0
    %6091 = vmatpush1.bf16.msra.mxu0 %v4247
    %6092 = vmatprep.subr.bf16.mxu0 0
    %6093 = vmatpush1.bf16.msra.mxu0 %v4248
    %6094 = vmatprep.subr.bf16.mxu0 0
    %6095 = vmatpush1.bf16.msra.mxu0 %v4249
    %6096 = vmatprep.subr.bf16.mxu0 0
    %6097 = vmatpush1.bf16.msra.mxu0 %v4250
    %6098 = vmatprep.subr.bf16.mxu0 0
    %6099 = vmatpush1.bf16.msra.mxu0 %v4251
    %6100 = vmatprep.subr.bf16.mxu0 0
    %6101 = vmatpush1.bf16.msra.mxu0 %v4252
    %6102 = vmatprep.subr.bf16.mxu0 0
    %6103 = vmatpush1.bf16.msra.mxu0 %v4253
    %6104 = vmatprep.subr.bf16.mxu0 0
    %6105 = vmatpush1.bf16.msra.mxu0 %v4254
    %6106 = vmatprep.subr.bf16.mxu0 0
    %6107 = vmatpush1.bf16.msra.mxu0 0
    %6108 = vmatprep.subr.bf16.mxu0 0
    %6109 = vmatpush1.bf16.msra.mxu0 0
    %6110 = vmatprep.subr.bf16.mxu0 0
    %6111 = vmatpush1.bf16.msra.mxu0 0
    %6112 = vmatprep.subr.bf16.mxu0 0
    %6113 = vmatpush1.bf16.msra.mxu0 0
    %6114 = vmatprep.subr.bf16.mxu0 0
    %6115 = vmatpush1.bf16.msra.mxu0 0
    %6116 = vmatprep.subr.bf16.mxu0 0
    %6117 = vmatpush1.bf16.msra.mxu0 0
    %6118 = vmatprep.subr.bf16.mxu0 0
    %6119 = vmatpush1.bf16.msra.mxu0 0
    %6120 = vmatprep.subr.bf16.mxu0 0
    %6121 = vmatpush1.bf16.msra.mxu0 0
    %6122 = vmatprep.mubr.bf16.mxu0 0
    %6123 = vmatmul.mubr.bf16.gmra.mrb[0].mxu0 %v6089
    %v6124 = vpop.f32.mrb[0].mxu0
    %v6125 = vadd.f32 0.0, %v6124
    %v6126 = vpop.f32.mrb[0].mxu0
    %v6127 = vpop.f32.mrb[0].mxu0
    %v6128 = vadd.f32 0.0, %v6127
    %v6129 = vpop.f32.mrb[0].mxu0
    %6130 = vdwg.mxu0
    %6131 = vmatprep.subr.bf16.mxu0 0
    %6132 = vmatpush1.bf16.msra.mxu0 %v4336
    %6133 = vmatprep.subr.bf16.mxu0 0
    %6134 = vmatpush1.bf16.msra.mxu0 %v4337
    %6135 = vmatprep.subr.bf16.mxu0 0
    %6136 = vmatpush1.bf16.msra.mxu0 %v4338
    %6137 = vmatprep.subr.bf16.mxu0 0
    %6138 = vmatpush1.bf16.msra.mxu0 %v4339
    %6139 = vmatprep.subr.bf16.mxu0 0
    %6140 = vmatpush1.bf16.msra.mxu0 %v4340
    %6141 = vmatprep.subr.bf16.mxu0 0
    %6142 = vmatpush1.bf16.msra.mxu0 %v4341
    %6143 = vmatprep.subr.bf16.mxu0 0
    %6144 = vmatpush1.bf16.msra.mxu0 %v4342
    %6145 = vmatprep.subr.bf16.mxu0 0
    %6146 = vmatpush1.bf16.msra.mxu0 %v4343
    %6147 = vmatprep.subr.bf16.mxu0 0
    %6148 = vmatpush1.bf16.msra.mxu0 0
    %6149 = vmatprep.subr.bf16.mxu0 0
    %6150 = vmatpush1.bf16.msra.mxu0 0
    %6151 = vmatprep.subr.bf16.mxu0 0
    %6152 = vmatpush1.bf16.msra.mxu0 0
    %6153 = vmatprep.subr.bf16.mxu0 0
    %6154 = vmatpush1.bf16.msra.mxu0 0
    %6155 = vmatprep.subr.bf16.mxu0 0
    %6156 = vmatpush1.bf16.msra.mxu0 0
    %6157 = vmatprep.subr.bf16.mxu0 0
    %6158 = vmatpush1.bf16.msra.mxu0 0
    %6159 = vmatprep.subr.bf16.mxu0 0
    %6160 = vmatpush1.bf16.msra.mxu0 0
    %6161 = vmatprep.subr.bf16.mxu0 0
    %6162 = vmatpush1.bf16.msra.mxu0 0
    %6163 = vmatprep.mubr.bf16.mxu0 0
    %6164 = vmatmul.mubr.bf16.gmra.mrb[0].mxu0 %v6076
    %v6165 = vpop.f32.mrb[0].mxu0
    %v6166 = vadd.f32 %v6125, %v6165
    %v6167 = vpop.f32.mrb[0].mxu0
    %v6168 = vpop.f32.mrb[0].mxu0
    %v6169 = vadd.f32 %v6128, %v6168
    %v6170 = vpop.f32.mrb[0].mxu0
    %6171 = vdwg.mxu0
    %v6172 = vrot.slane %v6072, 2
    %v6173 = vrot.slane %v6074, 2
    %v6174 = vsel %vm1630, %v6172, %v6173
    %v6175 = vrot.slane %v6073, 2
    %v6176 = vrot.slane %v6075, 2
    %v6177 = vsel %vm1630, %v6175, %v6176
    %v6180 = vpack.c.bf16 %v6177, %v6174
    %6181 = vmatprep.subr.bf16.mxu0 0
    %6182 = vmatpush1.bf16.msra.mxu0 %v4450
    %6183 = vmatprep.subr.bf16.mxu0 0
    %6184 = vmatpush1.bf16.msra.mxu0 %v4451
    %6185 = vmatprep.subr.bf16.mxu0 0
    %6186 = vmatpush1.bf16.msra.mxu0 %v4452
    %6187 = vmatprep.subr.bf16.mxu0 0
    %6188 = vmatpush1.bf16.msra.mxu0 %v4453
    %6189 = vmatprep.subr.bf16.mxu0 0
    %6190 = vmatpush1.bf16.msra.mxu0 %v4454
    %6191 = vmatprep.subr.bf16.mxu0 0
    %6192 = vmatpush1.bf16.msra.mxu0 %v4455
    %6193 = vmatprep.subr.bf16.mxu0 0
    %6194 = vmatpush1.bf16.msra.mxu0 %v4456
    %6195 = vmatprep.subr.bf16.mxu0 0
    %6196 = vmatpush1.bf16.msra.mxu0 %v4457
    %6197 = vmatprep.subr.bf16.mxu0 0
    %6198 = vmatpush1.bf16.msra.mxu0 0
    %6199 = vmatprep.subr.bf16.mxu0 0
    %6200 = vmatpush1.bf16.msra.mxu0 0
    %6201 = vmatprep.subr.bf16.mxu0 0
    %6202 = vmatpush1.bf16.msra.mxu0 0
    %6203 = vmatprep.subr.bf16.mxu0 0
    %6204 = vmatpush1.bf16.msra.mxu0 0
    %6205 = vmatprep.subr.bf16.mxu0 0
    %6206 = vmatpush1.bf16.msra.mxu0 0
    %6207 = vmatprep.subr.bf16.mxu0 0
    %6208 = vmatpush1.bf16.msra.mxu0 0
    %6209 = vmatprep.subr.bf16.mxu0 0
    %6210 = vmatpush1.bf16.msra.mxu0 0
    %6211 = vmatprep.subr.bf16.mxu0 0
    %6212 = vmatpush1.bf16.msra.mxu0 0
    %6213 = vmatprep.mubr.bf16.mxu0 0
    %6214 = vmatmul.mubr.bf16.gmra.mrb[0].mxu0 %v6180
    %v6215 = vpop.f32.mrb[0].mxu0
    %v6216 = vadd.f32 0.0, %v6215
    %v6217 = vpop.f32.mrb[0].mxu0
    %v6218 = vpop.f32.mrb[0].mxu0
    %v6219 = vadd.f32 0.0, %v6218
    %v6220 = vpop.f32.mrb[0].mxu0
    %6221 = vdwg.mxu0
    %v6222 = vadd.f32 %v6166, %v6216
    %v6223 = vadd.f32 %v6169, %v6219
    %v6224 = vadd.f32 %v6222, %v4513
    %v6225 = vadd.f32 %v6223, %v4513
    %v6226 = vmax.f32 %v6224, 0.0
    %v6227 = vmax.f32 %v6225, 0.0
    %v6228 = vadd.f32 %v6226, %v6227
    %v6229 = vrot.slane %v6228, 4
    %v6230 = vadd.f32 %v6228, %v6229
    %v6231 = vrot.slane %v6230, 2
    %v6232 = vadd.f32 %v6230, %v6231
    %v6233 = vrot.slane %v6232, 1
    %v6234 = vadd.f32 %v6232, %v6233
    %v6235 = vmul.f32 %v6226, %v6226
    %v6236 = vmul.f32 %v6227, %v6227
    %v6237 = vadd.f32 %v6235, %v6236
    %v6238 = vrot.slane %v6237, 4
    %v6239 = vadd.f32 %v6237, %v6238
    %v6240 = vrot.slane %v6239, 2
    %v6241 = vadd.f32 %v6239, %v6240
    %v6242 = vrot.slane %v6241, 1
    %v6243 = vadd.f32 %v6241, %v6242
    %v6244 = vsel %vm134, %v6234, %v6243
    %6245 = vmatprep.subr.mxu0 0.0
    %v6246 = vand.u32 %v701, 4294901760
    %6247 = vmatpush1.msra.mxu0 %v6246
    %6248 = vmatprep.subr.mxu0 0.0
    %v6249 = vand.u32 %v702, 4294901760
    %6250 = vmatpush1.msra.mxu0 %v6249
    %6251 = vmatprep.subr.mxu0 0.0
    %v6252 = vand.u32 %v703, 4294901760
    %6253 = vmatpush1.msra.mxu0 %v6252
    %6254 = vmatprep.subr.mxu0 0.0
    %v6255 = vand.u32 %v704, 4294901760
    %6256 = vmatpush1.msra.mxu0 %v6255
    %6257 = vmatprep.subr.mxu0 0.0
    %v6258 = vand.u32 %v705, 4294901760
    %6259 = vmatpush1.msra.mxu0 %v6258
    %6260 = vmatprep.subr.mxu0 0.0
    %v6261 = vand.u32 %v706, 4294901760
    %6262 = vmatpush1.msra.mxu0 %v6261
    %6263 = vmatprep.subr.mxu0 0.0
    %v6264 = vand.u32 %v707, 4294901760
    %6265 = vmatpush1.msra.mxu0 %v6264
    %6266 = vmatprep.subr.mxu0 0.0
    %v6267 = vand.u32 %v708, 4294901760
    %6268 = vmatpush1.msra.mxu0 %v6267
    %6269 = vmatprep.subr.mxu0 0.0
    %v6270 = vand.u32 %v709, 4294901760
    %6271 = vmatpush1.msra.mxu0 %v6270
    %6272 = vmatprep.subr.mxu0 0.0
    %v6273 = vand.u32 %v710, 4294901760
    %6274 = vmatpush1.msra.mxu0 %v6273
    %6275 = vmatprep.subr.mxu0 0.0
    %v6276 = vand.u32 %v711, 4294901760
    %6277 = vmatpush1.msra.mxu0 %v6276
    %6278 = vmatprep.subr.mxu0 0.0
    %v6279 = vand.u32 %v712, 4294901760
    %6280 = vmatpush1.msra.mxu0 %v6279
    %6281 = vmatprep.subr.mxu0 0.0
    %v6282 = vand.u32 %v713, 4294901760
    %6283 = vmatpush1.msra.mxu0 %v6282
    %6284 = vmatprep.subr.mxu0 0.0
    %v6285 = vand.u32 %v714, 4294901760
    %6286 = vmatpush1.msra.mxu0 %v6285
    %6287 = vmatprep.subr.mxu0 0.0
    %v6288 = vand.u32 %v715, 4294901760
    %6289 = vmatpush1.msra.mxu0 %v6288
    %6290 = vmatprep.subr.mxu0 0.0
    %v6291 = vand.u32 %v716, 4294901760
    %6292 = vmatpush1.msra.mxu0 %v6291
    %6293 = vmatprep.subr.mxu0 0.0
    %6294 = vmatpush1.msra.mxu0 0.0
    %6295 = vmatprep.subr.mxu0 0.0
    %6296 = vmatpush1.msra.mxu0 0.0
    %6297 = vmatprep.subr.mxu0 0.0
    %6298 = vmatpush1.msra.mxu0 0.0
    %6299 = vmatprep.subr.mxu0 0.0
    %6300 = vmatpush1.msra.mxu0 0.0
    %6301 = vmatprep.subr.mxu0 0.0
    %6302 = vmatpush1.msra.mxu0 0.0
    %6303 = vmatprep.subr.mxu0 0.0
    %6304 = vmatpush1.msra.mxu0 0.0
    %6305 = vmatprep.subr.mxu0 0.0
    %6306 = vmatpush1.msra.mxu0 0.0
    %6307 = vmatprep.subr.mxu0 0.0
    %6308 = vmatpush1.msra.mxu0 0.0
    %6309 = vmatprep.subr.mxu0 0.0
    %6310 = vmatpush1.msra.mxu0 0.0
    %6311 = vmatprep.subr.mxu0 0.0
    %6312 = vmatpush1.msra.mxu0 0.0
    %6313 = vmatprep.subr.mxu0 0.0
    %6314 = vmatpush1.msra.mxu0 0.0
    %6315 = vmatprep.subr.mxu0 0.0
    %6316 = vmatpush1.msra.mxu0 0.0
    %6317 = vmatprep.subr.mxu0 0.0
    %6318 = vmatpush1.msra.mxu0 0.0
    %6319 = vmatprep.subr.mxu0 0.0
    %6320 = vmatpush1.msra.mxu0 0.0
    %6321 = vmatprep.subr.mxu0 0.0
    %6322 = vmatpush1.msra.mxu0 0.0
    %6323 = vmatprep.subr.mxu0 0.0
    %6324 = vmatpush1.msra.mxu0 0.0
    %6325 = vmatprep.mubr.f32.mxu0 0.0
    %v6326 = vand.u32 %v6244, 4294901760
    %v6327 = vsub.f32 %v6244, %v6326
    %v6328 = vand.u32 %v6327, 4294901760
    %v6329 = vsub.f32 %v6327, %v6328
    %v6330 = vand.u32 %v6329, 4294901760
    %6331 = vmatmul.mubr.f32.gmra.mrb[0].mxu0 %v6330
    %v6332 = vpop.f32.mrb[0].mxu0
    %v6333 = vadd.f32 0.0, %v6332
    %v6334 = vpop.f32.mrb[0].mxu0
    %6335 = vdwg.mxu0
    %6336 = vmatprep.subr.mxu0 0.0
    %v6337 = vand.u32 %v701, 4294901760
    %v6338 = vsub.f32 %v701, %v6337
    %v6339 = vand.u32 %v6338, 4294901760
    %v6340 = vsub.f32 %v6338, %v6339
    %v6341 = vand.u32 %v6340, 4294901760
    %6342 = vmatpush1.msra.mxu0 %v6341
    %6343 = vmatprep.subr.mxu0 0.0
    %v6344 = vand.u32 %v702, 4294901760
    %v6345 = vsub.f32 %v702, %v6344
    %v6346 = vand.u32 %v6345, 4294901760
    %v6347 = vsub.f32 %v6345, %v6346
    %v6348 = vand.u32 %v6347, 4294901760
    %6349 = vmatpush1.msra.mxu0 %v6348
    %6350 = vmatprep.subr.mxu0 0.0
    %v6351 = vand.u32 %v703, 4294901760
    %v6352 = vsub.f32 %v703, %v6351
    %v6353 = vand.u32 %v6352, 4294901760
    %v6354 = vsub.f32 %v6352, %v6353
    %v6355 = vand.u32 %v6354, 4294901760
    %6356 = vmatpush1.msra.mxu0 %v6355
    %6357 = vmatprep.subr.mxu0 0.0
    %v6358 = vand.u32 %v704, 4294901760
    %v6359 = vsub.f32 %v704, %v6358
    %v6360 = vand.u32 %v6359, 4294901760
    %v6361 = vsub.f32 %v6359, %v6360
    %v6362 = vand.u32 %v6361, 4294901760
    %6363 = vmatpush1.msra.mxu0 %v6362
    %6364 = vmatprep.subr.mxu0 0.0
    %v6365 = vand.u32 %v705, 4294901760
    %v6366 = vsub.f32 %v705, %v6365
    %v6367 = vand.u32 %v6366, 4294901760
    %v6368 = vsub.f32 %v6366, %v6367
    %v6369 = vand.u32 %v6368, 4294901760
    %6370 = vmatpush1.msra.mxu0 %v6369
    %6371 = vmatprep.subr.mxu0 0.0
    %v6372 = vand.u32 %v706, 4294901760
    %v6373 = vsub.f32 %v706, %v6372
    %v6374 = vand.u32 %v6373, 4294901760
    %v6375 = vsub.f32 %v6373, %v6374
    %v6376 = vand.u32 %v6375, 4294901760
    %6377 = vmatpush1.msra.mxu0 %v6376
    %6378 = vmatprep.subr.mxu0 0.0
    %v6379 = vand.u32 %v707, 4294901760
    %v6380 = vsub.f32 %v707, %v6379
    %v6381 = vand.u32 %v6380, 4294901760
    %v6382 = vsub.f32 %v6380, %v6381
    %v6383 = vand.u32 %v6382, 4294901760
    %6384 = vmatpush1.msra.mxu0 %v6383
    %6385 = vmatprep.subr.mxu0 0.0
    %v6386 = vand.u32 %v708, 4294901760
    %v6387 = vsub.f32 %v708, %v6386
    %v6388 = vand.u32 %v6387, 4294901760
    %v6389 = vsub.f32 %v6387, %v6388
    %v6390 = vand.u32 %v6389, 4294901760
    %6391 = vmatpush1.msra.mxu0 %v6390
    %6392 = vmatprep.subr.mxu0 0.0
    %v6393 = vand.u32 %v709, 4294901760
    %v6394 = vsub.f32 %v709, %v6393
    %v6395 = vand.u32 %v6394, 4294901760
    %v6396 = vsub.f32 %v6394, %v6395
    %v6397 = vand.u32 %v6396, 4294901760
    %6398 = vmatpush1.msra.mxu0 %v6397
    %6399 = vmatprep.subr.mxu0 0.0
    %v6400 = vand.u32 %v710, 4294901760
    %v6401 = vsub.f32 %v710, %v6400
    %v6402 = vand.u32 %v6401, 4294901760
    %v6403 = vsub.f32 %v6401, %v6402
    %v6404 = vand.u32 %v6403, 4294901760
    %6405 = vmatpush1.msra.mxu0 %v6404
    %6406 = vmatprep.subr.mxu0 0.0
    %v6407 = vand.u32 %v711, 4294901760
    %v6408 = vsub.f32 %v711, %v6407
    %v6409 = vand.u32 %v6408, 4294901760
    %v6410 = vsub.f32 %v6408, %v6409
    %v6411 = vand.u32 %v6410, 4294901760
    %6412 = vmatpush1.msra.mxu0 %v6411
    %6413 = vmatprep.subr.mxu0 0.0
    %v6414 = vand.u32 %v712, 4294901760
    %v6415 = vsub.f32 %v712, %v6414
    %v6416 = vand.u32 %v6415, 4294901760
    %v6417 = vsub.f32 %v6415, %v6416
    %v6418 = vand.u32 %v6417, 4294901760
    %6419 = vmatpush1.msra.mxu0 %v6418
    %6420 = vmatprep.subr.mxu0 0.0
    %v6421 = vand.u32 %v713, 4294901760
    %v6422 = vsub.f32 %v713, %v6421
    %v6423 = vand.u32 %v6422, 4294901760
    %v6424 = vsub.f32 %v6422, %v6423
    %v6425 = vand.u32 %v6424, 4294901760
    %6426 = vmatpush1.msra.mxu0 %v6425
    %6427 = vmatprep.subr.mxu0 0.0
    %v6428 = vand.u32 %v714, 4294901760
    %v6429 = vsub.f32 %v714, %v6428
    %v6430 = vand.u32 %v6429, 4294901760
    %v6431 = vsub.f32 %v6429, %v6430
    %v6432 = vand.u32 %v6431, 4294901760
    %6433 = vmatpush1.msra.mxu0 %v6432
    %6434 = vmatprep.subr.mxu0 0.0
    %v6435 = vand.u32 %v715, 4294901760
    %v6436 = vsub.f32 %v715, %v6435
    %v6437 = vand.u32 %v6436, 4294901760
    %v6438 = vsub.f32 %v6436, %v6437
    %v6439 = vand.u32 %v6438, 4294901760
    %6440 = vmatpush1.msra.mxu0 %v6439
    %6441 = vmatprep.subr.mxu0 0.0
    %v6442 = vand.u32 %v716, 4294901760
    %v6443 = vsub.f32 %v716, %v6442
    %v6444 = vand.u32 %v6443, 4294901760
    %v6445 = vsub.f32 %v6443, %v6444
    %v6446 = vand.u32 %v6445, 4294901760
    %6447 = vmatpush1.msra.mxu0 %v6446
    %6448 = vmatprep.subr.mxu0 0.0
    %6449 = vmatpush1.msra.mxu0 0.0
    %6450 = vmatprep.subr.mxu0 0.0
    %6451 = vmatpush1.msra.mxu0 0.0
    %6452 = vmatprep.subr.mxu0 0.0
    %6453 = vmatpush1.msra.mxu0 0.0
    %6454 = vmatprep.subr.mxu0 0.0
    %6455 = vmatpush1.msra.mxu0 0.0
    %6456 = vmatprep.subr.mxu0 0.0
    %6457 = vmatpush1.msra.mxu0 0.0
    %6458 = vmatprep.subr.mxu0 0.0
    %6459 = vmatpush1.msra.mxu0 0.0
    %6460 = vmatprep.subr.mxu0 0.0
    %6461 = vmatpush1.msra.mxu0 0.0
    %6462 = vmatprep.subr.mxu0 0.0
    %6463 = vmatpush1.msra.mxu0 0.0
    %6464 = vmatprep.subr.mxu0 0.0
    %6465 = vmatpush1.msra.mxu0 0.0
    %6466 = vmatprep.subr.mxu0 0.0
    %6467 = vmatpush1.msra.mxu0 0.0
    %6468 = vmatprep.subr.mxu0 0.0
    %6469 = vmatpush1.msra.mxu0 0.0
    %6470 = vmatprep.subr.mxu0 0.0
    %6471 = vmatpush1.msra.mxu0 0.0
    %6472 = vmatprep.subr.mxu0 0.0
    %6473 = vmatpush1.msra.mxu0 0.0
    %6474 = vmatprep.subr.mxu0 0.0
    %6475 = vmatpush1.msra.mxu0 0.0
    %6476 = vmatprep.subr.mxu0 0.0
    %6477 = vmatpush1.msra.mxu0 0.0
    %6478 = vmatprep.subr.mxu0 0.0
    %6479 = vmatpush1.msra.mxu0 0.0
    %6480 = vmatprep.mubr.f32.mxu0 0.0
    %v6481 = vand.u32 %v6244, 4294901760
    %6482 = vmatmul.mubr.f32.gmra.mrb[0].mxu0 %v6481
    %v6483 = vpop.f32.mrb[0].mxu0
    %v6484 = vadd.f32 %v6333, %v6483
    %v6485 = vpop.f32.mrb[0].mxu0
    %6486 = vdwg.mxu0
    %6487 = vmatprep.subr.mxu0 0.0
    %v6488 = vand.u32 %v701, 4294901760
    %v6489 = vsub.f32 %v701, %v6488
    %6490 = vmatpush1.msra.mxu0 %v6489
    %6491 = vmatprep.subr.mxu0 0.0
    %v6492 = vand.u32 %v702, 4294901760
    %v6493 = vsub.f32 %v702, %v6492
    %6494 = vmatpush1.msra.mxu0 %v6493
    %6495 = vmatprep.subr.mxu0 0.0
    %v6496 = vand.u32 %v703, 4294901760
    %v6497 = vsub.f32 %v703, %v6496
    %6498 = vmatpush1.msra.mxu0 %v6497
    %6499 = vmatprep.subr.mxu0 0.0
    %v6500 = vand.u32 %v704, 4294901760
    %v6501 = vsub.f32 %v704, %v6500
    %6502 = vmatpush1.msra.mxu0 %v6501
    %6503 = vmatprep.subr.mxu0 0.0
    %v6504 = vand.u32 %v705, 4294901760
    %v6505 = vsub.f32 %v705, %v6504
    %6506 = vmatpush1.msra.mxu0 %v6505
    %6507 = vmatprep.subr.mxu0 0.0
    %v6508 = vand.u32 %v706, 4294901760
    %v6509 = vsub.f32 %v706, %v6508
    %6510 = vmatpush1.msra.mxu0 %v6509
    %6511 = vmatprep.subr.mxu0 0.0
    %v6512 = vand.u32 %v707, 4294901760
    %v6513 = vsub.f32 %v707, %v6512
    %6514 = vmatpush1.msra.mxu0 %v6513
    %6515 = vmatprep.subr.mxu0 0.0
    %v6516 = vand.u32 %v708, 4294901760
    %v6517 = vsub.f32 %v708, %v6516
    %6518 = vmatpush1.msra.mxu0 %v6517
    %6519 = vmatprep.subr.mxu0 0.0
    %v6520 = vand.u32 %v709, 4294901760
    %v6521 = vsub.f32 %v709, %v6520
    %6522 = vmatpush1.msra.mxu0 %v6521
    %6523 = vmatprep.subr.mxu0 0.0
    %v6524 = vand.u32 %v710, 4294901760
    %v6525 = vsub.f32 %v710, %v6524
    %6526 = vmatpush1.msra.mxu0 %v6525
    %6527 = vmatprep.subr.mxu0 0.0
    %v6528 = vand.u32 %v711, 4294901760
    %v6529 = vsub.f32 %v711, %v6528
    %6530 = vmatpush1.msra.mxu0 %v6529
    %6531 = vmatprep.subr.mxu0 0.0
    %v6532 = vand.u32 %v712, 4294901760
    %v6533 = vsub.f32 %v712, %v6532
    %6534 = vmatpush1.msra.mxu0 %v6533
    %6535 = vmatprep.subr.mxu0 0.0
    %v6536 = vand.u32 %v713, 4294901760
    %v6537 = vsub.f32 %v713, %v6536
    %6538 = vmatpush1.msra.mxu0 %v6537
    %6539 = vmatprep.subr.mxu0 0.0
    %v6540 = vand.u32 %v714, 4294901760
    %v6541 = vsub.f32 %v714, %v6540
    %6542 = vmatpush1.msra.mxu0 %v6541
    %6543 = vmatprep.subr.mxu0 0.0
    %v6544 = vand.u32 %v715, 4294901760
    %v6545 = vsub.f32 %v715, %v6544
    %6546 = vmatpush1.msra.mxu0 %v6545
    %6547 = vmatprep.subr.mxu0 0.0
    %v6548 = vand.u32 %v716, 4294901760
    %v6549 = vsub.f32 %v716, %v6548
    %6550 = vmatpush1.msra.mxu0 %v6549
    %6551 = vmatprep.subr.mxu0 0.0
    %6552 = vmatpush1.msra.mxu0 0.0
    %6553 = vmatprep.subr.mxu0 0.0
    %6554 = vmatpush1.msra.mxu0 0.0
    %6555 = vmatprep.subr.mxu0 0.0
    %6556 = vmatpush1.msra.mxu0 0.0
    %6557 = vmatprep.subr.mxu0 0.0
    %6558 = vmatpush1.msra.mxu0 0.0
    %6559 = vmatprep.subr.mxu0 0.0
    %6560 = vmatpush1.msra.mxu0 0.0
    %6561 = vmatprep.subr.mxu0 0.0
    %6562 = vmatpush1.msra.mxu0 0.0
    %6563 = vmatprep.subr.mxu0 0.0
    %6564 = vmatpush1.msra.mxu0 0.0
    %6565 = vmatprep.subr.mxu0 0.0
    %6566 = vmatpush1.msra.mxu0 0.0
    %6567 = vmatprep.subr.mxu0 0.0
    %6568 = vmatpush1.msra.mxu0 0.0
    %6569 = vmatprep.subr.mxu0 0.0
    %6570 = vmatpush1.msra.mxu0 0.0
    %6571 = vmatprep.subr.mxu0 0.0
    %6572 = vmatpush1.msra.mxu0 0.0
    %6573 = vmatprep.subr.mxu0 0.0
    %6574 = vmatpush1.msra.mxu0 0.0
    %6575 = vmatprep.subr.mxu0 0.0
    %6576 = vmatpush1.msra.mxu0 0.0
    %6577 = vmatprep.subr.mxu0 0.0
    %6578 = vmatpush1.msra.mxu0 0.0
    %6579 = vmatprep.subr.mxu0 0.0
    %6580 = vmatpush1.msra.mxu0 0.0
    %6581 = vmatprep.subr.mxu0 0.0
    %6582 = vmatpush1.msra.mxu0 0.0
    %6583 = vmatprep.mubr.f32.mxu0 0.0
    %v6584 = vand.u32 %v6244, 4294901760
    %v6585 = vsub.f32 %v6244, %v6584
    %6586 = vmatmul.mubr.f32.gmra.mrb[0].mxu0 %v6585
    %v6587 = vpop.f32.mrb[0].mxu0
    %v6588 = vadd.f32 %v6484, %v6587
    %v6589 = vpop.f32.mrb[0].mxu0
    %6590 = vdwg.mxu0
    %6591 = vmatprep.subr.mxu0 0.0
    %v6592 = vand.u32 %v701, 4294901760
    %6593 = vmatpush1.msra.mxu0 %v6592
    %6594 = vmatprep.subr.mxu0 0.0
    %v6595 = vand.u32 %v702, 4294901760
    %6596 = vmatpush1.msra.mxu0 %v6595
    %6597 = vmatprep.subr.mxu0 0.0
    %v6598 = vand.u32 %v703, 4294901760
    %6599 = vmatpush1.msra.mxu0 %v6598
    %6600 = vmatprep.subr.mxu0 0.0
    %v6601 = vand.u32 %v704, 4294901760
    %6602 = vmatpush1.msra.mxu0 %v6601
    %6603 = vmatprep.subr.mxu0 0.0
    %v6604 = vand.u32 %v705, 4294901760
    %6605 = vmatpush1.msra.mxu0 %v6604
    %6606 = vmatprep.subr.mxu0 0.0
    %v6607 = vand.u32 %v706, 4294901760
    %6608 = vmatpush1.msra.mxu0 %v6607
    %6609 = vmatprep.subr.mxu0 0.0
    %v6610 = vand.u32 %v707, 4294901760
    %6611 = vmatpush1.msra.mxu0 %v6610
    %6612 = vmatprep.subr.mxu0 0.0
    %v6613 = vand.u32 %v708, 4294901760
    %6614 = vmatpush1.msra.mxu0 %v6613
    %6615 = vmatprep.subr.mxu0 0.0
    %v6616 = vand.u32 %v709, 4294901760
    %6617 = vmatpush1.msra.mxu0 %v6616
    %6618 = vmatprep.subr.mxu0 0.0
    %v6619 = vand.u32 %v710, 4294901760
    %6620 = vmatpush1.msra.mxu0 %v6619
    %6621 = vmatprep.subr.mxu0 0.0
    %v6622 = vand.u32 %v711, 4294901760
    %6623 = vmatpush1.msra.mxu0 %v6622
    %6624 = vmatprep.subr.mxu0 0.0
    %v6625 = vand.u32 %v712, 4294901760
    %6626 = vmatpush1.msra.mxu0 %v6625
    %6627 = vmatprep.subr.mxu0 0.0
    %v6628 = vand.u32 %v713, 4294901760
    %6629 = vmatpush1.msra.mxu0 %v6628
    %6630 = vmatprep.subr.mxu0 0.0
    %v6631 = vand.u32 %v714, 4294901760
    %6632 = vmatpush1.msra.mxu0 %v6631
    %6633 = vmatprep.subr.mxu0 0.0
    %v6634 = vand.u32 %v715, 4294901760
    %6635 = vmatpush1.msra.mxu0 %v6634
    %6636 = vmatprep.subr.mxu0 0.0
    %v6637 = vand.u32 %v716, 4294901760
    %6638 = vmatpush1.msra.mxu0 %v6637
    %6639 = vmatprep.subr.mxu0 0.0
    %6640 = vmatpush1.msra.mxu0 0.0
    %6641 = vmatprep.subr.mxu0 0.0
    %6642 = vmatpush1.msra.mxu0 0.0
    %6643 = vmatprep.subr.mxu0 0.0
    %6644 = vmatpush1.msra.mxu0 0.0
    %6645 = vmatprep.subr.mxu0 0.0
    %6646 = vmatpush1.msra.mxu0 0.0
    %6647 = vmatprep.subr.mxu0 0.0
    %6648 = vmatpush1.msra.mxu0 0.0
    %6649 = vmatprep.subr.mxu0 0.0
    %6650 = vmatpush1.msra.mxu0 0.0
    %6651 = vmatprep.subr.mxu0 0.0
    %6652 = vmatpush1.msra.mxu0 0.0
    %6653 = vmatprep.subr.mxu0 0.0
    %6654 = vmatpush1.msra.mxu0 0.0
    %6655 = vmatprep.subr.mxu0 0.0
    %6656 = vmatpush1.msra.mxu0 0.0
    %6657 = vmatprep.subr.mxu0 0.0
    %6658 = vmatpush1.msra.mxu0 0.0
    %6659 = vmatprep.subr.mxu0 0.0
    %6660 = vmatpush1.msra.mxu0 0.0
    %6661 = vmatprep.subr.mxu0 0.0
    %6662 = vmatpush1.msra.mxu0 0.0
    %6663 = vmatprep.subr.mxu0 0.0
    %6664 = vmatpush1.msra.mxu0 0.0
    %6665 = vmatprep.subr.mxu0 0.0
    %6666 = vmatpush1.msra.mxu0 0.0
    %6667 = vmatprep.subr.mxu0 0.0
    %6668 = vmatpush1.msra.mxu0 0.0
    %6669 = vmatprep.subr.mxu0 0.0
    %6670 = vmatpush1.msra.mxu0 0.0
    %6671 = vmatprep.mubr.f32.mxu0 0.0
    %v6672 = vand.u32 %v6244, 4294901760
    %v6673 = vsub.f32 %v6244, %v6672
    %v6674 = vand.u32 %v6673, 4294901760
    %6675 = vmatmul.mubr.f32.gmra.mrb[0].mxu0 %v6674
    %v6676 = vpop.f32.mrb[0].mxu0
    %v6677 = vadd.f32 %v6588, %v6676
    %v6678 = vpop.f32.mrb[0].mxu0
    %6679 = vdwg.mxu0
    %6680 = vmatprep.subr.mxu0 0.0
    %v6681 = vand.u32 %v701, 4294901760
    %v6682 = vsub.f32 %v701, %v6681
    %v6683 = vand.u32 %v6682, 4294901760
    %6684 = vmatpush1.msra.mxu0 %v6683
    %6685 = vmatprep.subr.mxu0 0.0
    %v6686 = vand.u32 %v702, 4294901760
    %v6687 = vsub.f32 %v702, %v6686
    %v6688 = vand.u32 %v6687, 4294901760
    %6689 = vmatpush1.msra.mxu0 %v6688
    %6690 = vmatprep.subr.mxu0 0.0
    %v6691 = vand.u32 %v703, 4294901760
    %v6692 = vsub.f32 %v703, %v6691
    %v6693 = vand.u32 %v6692, 4294901760
    %6694 = vmatpush1.msra.mxu0 %v6693
    %6695 = vmatprep.subr.mxu0 0.0
    %v6696 = vand.u32 %v704, 4294901760
    %v6697 = vsub.f32 %v704, %v6696
    %v6698 = vand.u32 %v6697, 4294901760
    %6699 = vmatpush1.msra.mxu0 %v6698
    %6700 = vmatprep.subr.mxu0 0.0
    %v6701 = vand.u32 %v705, 4294901760
    %v6702 = vsub.f32 %v705, %v6701
    %v6703 = vand.u32 %v6702, 4294901760
    %6704 = vmatpush1.msra.mxu0 %v6703
    %6705 = vmatprep.subr.mxu0 0.0
    %v6706 = vand.u32 %v706, 4294901760
    %v6707 = vsub.f32 %v706, %v6706
    %v6708 = vand.u32 %v6707, 4294901760
    %6709 = vmatpush1.msra.mxu0 %v6708
    %6710 = vmatprep.subr.mxu0 0.0
    %v6711 = vand.u32 %v707, 4294901760
    %v6712 = vsub.f32 %v707, %v6711
    %v6713 = vand.u32 %v6712, 4294901760
    %6714 = vmatpush1.msra.mxu0 %v6713
    %6715 = vmatprep.subr.mxu0 0.0
    %v6716 = vand.u32 %v708, 4294901760
    %v6717 = vsub.f32 %v708, %v6716
    %v6718 = vand.u32 %v6717, 4294901760
    %6719 = vmatpush1.msra.mxu0 %v6718
    %6720 = vmatprep.subr.mxu0 0.0
    %v6721 = vand.u32 %v709, 4294901760
    %v6722 = vsub.f32 %v709, %v6721
    %v6723 = vand.u32 %v6722, 4294901760
    %6724 = vmatpush1.msra.mxu0 %v6723
    %6725 = vmatprep.subr.mxu0 0.0
    %v6726 = vand.u32 %v710, 4294901760
    %v6727 = vsub.f32 %v710, %v6726
    %v6728 = vand.u32 %v6727, 4294901760
    %6729 = vmatpush1.msra.mxu0 %v6728
    %6730 = vmatprep.subr.mxu0 0.0
    %v6731 = vand.u32 %v711, 4294901760
    %v6732 = vsub.f32 %v711, %v6731
    %v6733 = vand.u32 %v6732, 4294901760
    %6734 = vmatpush1.msra.mxu0 %v6733
    %6735 = vmatprep.subr.mxu0 0.0
    %v6736 = vand.u32 %v712, 4294901760
    %v6737 = vsub.f32 %v712, %v6736
    %v6738 = vand.u32 %v6737, 4294901760
    %6739 = vmatpush1.msra.mxu0 %v6738
    %6740 = vmatprep.subr.mxu0 0.0
    %v6741 = vand.u32 %v713, 4294901760
    %v6742 = vsub.f32 %v713, %v6741
    %v6743 = vand.u32 %v6742, 4294901760
    %6744 = vmatpush1.msra.mxu0 %v6743
    %6745 = vmatprep.subr.mxu0 0.0
    %v6746 = vand.u32 %v714, 4294901760
    %v6747 = vsub.f32 %v714, %v6746
    %v6748 = vand.u32 %v6747, 4294901760
    %6749 = vmatpush1.msra.mxu0 %v6748
    %6750 = vmatprep.subr.mxu0 0.0
    %v6751 = vand.u32 %v715, 4294901760
    %v6752 = vsub.f32 %v715, %v6751
    %v6753 = vand.u32 %v6752, 4294901760
    %6754 = vmatpush1.msra.mxu0 %v6753
    %6755 = vmatprep.subr.mxu0 0.0
    %v6756 = vand.u32 %v716, 4294901760
    %v6757 = vsub.f32 %v716, %v6756
    %v6758 = vand.u32 %v6757, 4294901760
    %6759 = vmatpush1.msra.mxu0 %v6758
    %6760 = vmatprep.subr.mxu0 0.0
    %6761 = vmatpush1.msra.mxu0 0.0
    %6762 = vmatprep.subr.mxu0 0.0
    %6763 = vmatpush1.msra.mxu0 0.0
    %6764 = vmatprep.subr.mxu0 0.0
    %6765 = vmatpush1.msra.mxu0 0.0
    %6766 = vmatprep.subr.mxu0 0.0
    %6767 = vmatpush1.msra.mxu0 0.0
    %6768 = vmatprep.subr.mxu0 0.0
    %6769 = vmatpush1.msra.mxu0 0.0
    %6770 = vmatprep.subr.mxu0 0.0
    %6771 = vmatpush1.msra.mxu0 0.0
    %6772 = vmatprep.subr.mxu0 0.0
    %6773 = vmatpush1.msra.mxu0 0.0
    %6774 = vmatprep.subr.mxu0 0.0
    %6775 = vmatpush1.msra.mxu0 0.0
    %6776 = vmatprep.subr.mxu0 0.0
    %6777 = vmatpush1.msra.mxu0 0.0
    %6778 = vmatprep.subr.mxu0 0.0
    %6779 = vmatpush1.msra.mxu0 0.0
    %6780 = vmatprep.subr.mxu0 0.0
    %6781 = vmatpush1.msra.mxu0 0.0
    %6782 = vmatprep.subr.mxu0 0.0
    %6783 = vmatpush1.msra.mxu0 0.0
    %6784 = vmatprep.subr.mxu0 0.0
    %6785 = vmatpush1.msra.mxu0 0.0
    %6786 = vmatprep.subr.mxu0 0.0
    %6787 = vmatpush1.msra.mxu0 0.0
    %6788 = vmatprep.subr.mxu0 0.0
    %6789 = vmatpush1.msra.mxu0 0.0
    %6790 = vmatprep.subr.mxu0 0.0
    %6791 = vmatpush1.msra.mxu0 0.0
    %6792 = vmatprep.mubr.f32.mxu0 0.0
    %v6793 = vand.u32 %v6244, 4294901760
    %6794 = vmatmul.mubr.f32.gmra.mrb[0].mxu0 %v6793
    %v6795 = vpop.f32.mrb[0].mxu0
    %v6796 = vadd.f32 %v6677, %v6795
    %v6797 = vpop.f32.mrb[0].mxu0
    %6798 = vdwg.mxu0
    %6799 = vmatprep.subr.mxu0 0.0
    %v6800 = vand.u32 %v701, 4294901760
    %6801 = vmatpush1.msra.mxu0 %v6800
    %6802 = vmatprep.subr.mxu0 0.0
    %v6803 = vand.u32 %v702, 4294901760
    %6804 = vmatpush1.msra.mxu0 %v6803
    %6805 = vmatprep.subr.mxu0 0.0
    %v6806 = vand.u32 %v703, 4294901760
    %6807 = vmatpush1.msra.mxu0 %v6806
    %6808 = vmatprep.subr.mxu0 0.0
    %v6809 = vand.u32 %v704, 4294901760
    %6810 = vmatpush1.msra.mxu0 %v6809
    %6811 = vmatprep.subr.mxu0 0.0
    %v6812 = vand.u32 %v705, 4294901760
    %6813 = vmatpush1.msra.mxu0 %v6812
    %6814 = vmatprep.subr.mxu0 0.0
    %v6815 = vand.u32 %v706, 4294901760
    %6816 = vmatpush1.msra.mxu0 %v6815
    %6817 = vmatprep.subr.mxu0 0.0
    %v6818 = vand.u32 %v707, 4294901760
    %6819 = vmatpush1.msra.mxu0 %v6818
    %6820 = vmatprep.subr.mxu0 0.0
    %v6821 = vand.u32 %v708, 4294901760
    %6822 = vmatpush1.msra.mxu0 %v6821
    %6823 = vmatprep.subr.mxu0 0.0
    %v6824 = vand.u32 %v709, 4294901760
    %6825 = vmatpush1.msra.mxu0 %v6824
    %6826 = vmatprep.subr.mxu0 0.0
    %v6827 = vand.u32 %v710, 4294901760
    %6828 = vmatpush1.msra.mxu0 %v6827
    %6829 = vmatprep.subr.mxu0 0.0
    %v6830 = vand.u32 %v711, 4294901760
    %6831 = vmatpush1.msra.mxu0 %v6830
    %6832 = vmatprep.subr.mxu0 0.0
    %v6833 = vand.u32 %v712, 4294901760
    %6834 = vmatpush1.msra.mxu0 %v6833
    %6835 = vmatprep.subr.mxu0 0.0
    %v6836 = vand.u32 %v713, 4294901760
    %6837 = vmatpush1.msra.mxu0 %v6836
    %6838 = vmatprep.subr.mxu0 0.0
    %v6839 = vand.u32 %v714, 4294901760
    %6840 = vmatpush1.msra.mxu0 %v6839
    %6841 = vmatprep.subr.mxu0 0.0
    %v6842 = vand.u32 %v715, 4294901760
    %6843 = vmatpush1.msra.mxu0 %v6842
    %6844 = vmatprep.subr.mxu0 0.0
    %v6845 = vand.u32 %v716, 4294901760
    %6846 = vmatpush1.msra.mxu0 %v6845
    %6847 = vmatprep.subr.mxu0 0.0
    %6848 = vmatpush1.msra.mxu0 0.0
    %6849 = vmatprep.subr.mxu0 0.0
    %6850 = vmatpush1.msra.mxu0 0.0
    %6851 = vmatprep.subr.mxu0 0.0
    %6852 = vmatpush1.msra.mxu0 0.0
    %6853 = vmatprep.subr.mxu0 0.0
    %6854 = vmatpush1.msra.mxu0 0.0
    %6855 = vmatprep.subr.mxu0 0.0
    %6856 = vmatpush1.msra.mxu0 0.0
    %6857 = vmatprep.subr.mxu0 0.0
    %6858 = vmatpush1.msra.mxu0 0.0
    %6859 = vmatprep.subr.mxu0 0.0
    %6860 = vmatpush1.msra.mxu0 0.0
    %6861 = vmatprep.subr.mxu0 0.0
    %6862 = vmatpush1.msra.mxu0 0.0
    %6863 = vmatprep.subr.mxu0 0.0
    %6864 = vmatpush1.msra.mxu0 0.0
    %6865 = vmatprep.subr.mxu0 0.0
    %6866 = vmatpush1.msra.mxu0 0.0
    %6867 = vmatprep.subr.mxu0 0.0
    %6868 = vmatpush1.msra.mxu0 0.0
    %6869 = vmatprep.subr.mxu0 0.0
    %6870 = vmatpush1.msra.mxu0 0.0
    %6871 = vmatprep.subr.mxu0 0.0
    %6872 = vmatpush1.msra.mxu0 0.0
    %6873 = vmatprep.subr.mxu0 0.0
    %6874 = vmatpush1.msra.mxu0 0.0
    %6875 = vmatprep.subr.mxu0 0.0
    %6876 = vmatpush1.msra.mxu0 0.0
    %6877 = vmatprep.subr.mxu0 0.0
    %6878 = vmatpush1.msra.mxu0 0.0
    %6879 = vmatprep.mubr.f32.mxu0 0.0
    %v6880 = vand.u32 %v6244, 4294901760
    %6881 = vmatmul.mubr.f32.gmra.mrb[0].mxu0 %v6880
    %v6882 = vpop.f32.mrb[0].mxu0
    %v6883 = vadd.f32 %v6796, %v6882
    %v6884 = vpop.f32.mrb[0].mxu0
    %6885 = vdwg.mxu0
    %v6886 = vmul.f32 %v6883, 0.00390625
    %v6887 = vmul.f32 %v6886, %v6886
    %v6889 = vrot.slane %v6887, 7
    %v6891 = vsub.f32 %v6886, %v6889
    %v6892 = vmax.f32 %v6891, 0.0
    %v6893 = vlaneseq
    %v6894 = vshrl.u32 %v6893, 7
    %v6895 = vsub.s32 0, %v6894
    %v6896 = vrot.slane %v6886, %v6895
    %v6897 = vsub.f32 %v6226, %v6896
    %v6898 = vsub.f32 %v6227, %v6896
    %v6899 = vadd.f32 %v6892, 8.0
    %v6900 = vrsqrt.pop %v6899
    %v6901 = vlaneseq
    %v6902 = vshrl.u32 %v6901, 7
    %v6903 = vsub.s32 1, %v6902
    %v6904 = vrot.slane %v6900, %v6903
    %v6905 = vmul.f32 %v6897, %v6904
    %v6906 = vmul.f32 %v6898, %v6904
    %v6907 = vld [vmem:[%s6 + $0x6] sm:$0x1]
    %v6908 = vlaneseq
    %v6909 = vshrl.u32 %v6908, 7
    %v6910 = vsub.s32 0, %v6909
    %v6911 = vrot.slane %v6907, %v6910
    %v6912 = vmul.f32 %v6905, %v6911
    %v6913 = vmul.f32 %v6906, %v6911
    %v6914 = vld [vmem:[#allocation10 + $0x6] sm:$0x1]
    %v6915 = vlaneseq
    %v6916 = vshrl.u32 %v6915, 7
    %v6917 = vsub.s32 0, %v6916
    %v6918 = vrot.slane %v6914, %v6917
    %v6919 = vadd.f32 %v6912, %v6918
    %v6920 = vadd.f32 %v6913, %v6918
    %v6923 = vrot.slane %v6919, 7
    %v6924 = vrot.slane %v6920, 7
    %v6927 = vsel %vm134, 0.0, %v6923
    %v6928 = vsel %vm134, 0.0, %v6924
    %v6929 = vsel %vm134, %v6923, 0.0
    %v6930 = vsel %vm134, %v6924, 0.0
    %v6933 = vcombine.high %v6927, %v6927
    %v6935 = vunpack.c.l.s4 1983009808
    %v6936 = vunpack.c.0.s8 %v6935
    %v6937 = vlaneseq
    %v6938 = vshrl.u32 %v6937, 7
    %v6939 = vsub.s32 %v6936, %v6938
    %v6940 = vrot.slane %v6927, %v6939
    %v6942 = vunpack.c.l.s4 1983009808
    %v6943 = vunpack.c.0.s8 %v6942
    %v6944 = vlaneseq
    %v6945 = vshrl.u32 %v6944, 7
    %v6946 = vsub.s32 %v6943, %v6945
    %v6947 = vrot.slane %v6933, %v6946
    %v6948 = vcombine.high %v6940, %v6940
    %v6949 = vcombine.high %v6947, %v6947
    %v6950 = vcombine.high %v6928, %v6928
    %v6952 = vunpack.c.l.s4 1983009808
    %v6953 = vunpack.c.0.s8 %v6952
    %v6954 = vlaneseq
    %v6955 = vshrl.u32 %v6954, 7
    %v6956 = vsub.s32 %v6953, %v6955
    %v6957 = vrot.slane %v6928, %v6956
    %v6959 = vunpack.c.l.s4 1983009808
    %v6960 = vunpack.c.0.s8 %v6959
    %v6961 = vlaneseq
    %v6962 = vshrl.u32 %v6961, 7
    %v6963 = vsub.s32 %v6960, %v6962
    %v6964 = vrot.slane %v6950, %v6963
    %v6965 = vcombine.high %v6957, %v6957
    %v6966 = vcombine.high %v6964, %v6964
    %v6975 = vpack.c.bf16 %v6940, %v6940
    %v6976 = vpack.c.bf16 %v6948, %v6948
    %v6977 = vpack.c.bf16 %v6947, %v6947
    %v6978 = vpack.c.bf16 %v6949, %v6949
    %v6979 = vpack.c.bf16 %v6957, %v6957
    %v6980 = vpack.c.bf16 %v6965, %v6965
    %v6981 = vpack.c.bf16 %v6964, %v6964
    %v6982 = vpack.c.bf16 %v6966, %v6966
    %v6983 = vld [vmem:[#allocation9] sm:$0xf]
    %v6984 = vld [vmem:[#allocation9 + $0x4] sm:$0xf]
    %v6985 = vld [vmem:[#allocation9 + $0x8] sm:$0xf]
    %v6986 = vld [vmem:[#allocation9 + $0xc] sm:$0xf]
    %v6987 = vld [vmem:[#allocation9 + $0x10] sm:$0xf]
    %v6988 = vld [vmem:[#allocation9 + $0x14] sm:$0xf]
    %v6989 = vld [vmem:[#allocation9 + $0x18] sm:$0xf]
    %v6990 = vld [vmem:[#allocation9 + $0x1c] sm:$0xf]
    %v6991 = vld [vmem:[#allocation9 + $0x20] sm:$0xf]
    %v6992 = vld [vmem:[#allocation9 + $0x24] sm:$0xf]
    %v6993 = vld [vmem:[#allocation9 + $0x28] sm:$0xf]
    %v6994 = vld [vmem:[#allocation9 + $0x2c] sm:$0xf]
    %v6995 = vld [vmem:[#allocation9 + $0x30] sm:$0xf]
    %v6996 = vld [vmem:[#allocation9 + $0x34] sm:$0xf]
    %v6997 = vld [vmem:[#allocation9 + $0x38] sm:$0xf]
    %v6998 = vld [vmem:[#allocation9 + $0x3c] sm:$0xf]
    %v7002 = vunpack.c.l.s4 1983009808
    %v7003 = vunpack.c.0.s8 %v7002
    %v7004 = vlaneseq
    %v7005 = vshrl.u32 %v7004, 7
    %v7006 = vsub.s32 %v7003, %v7005
    %v7007 = vrot.slane %v6929, %v7006
    %v7009 = vunpack.c.l.s4 1983009808
    %v7010 = vunpack.c.0.s8 %v7009
    %v7011 = vlaneseq
    %v7012 = vshrl.u32 %v7011, 7
    %v7013 = vsub.s32 %v7010, %v7012
    %v7014 = vrot.slane %v6930, %v7013
    %v7015 = vrot.slane %v6940, 7
    %v7016 = vrot.slane %v7015, 2
    %v7017 = vrot.slane %v6948, 7
    %v7018 = vsel %vm274, %v7016, %v7017
    %v7019 = vrot.slane %v7017, 2
    %v7020 = vrot.slane %v6947, 7
    %v7021 = vsel %vm274, %v7019, %v7020
    %v7022 = vrot.slane %v7020, 2
    %v7023 = vrot.slane %v6949, 7
    %v7024 = vsel %vm274, %v7022, %v7023
    %v7025 = vrot.slane %v7023, 2
    %v7026 = vrot.slane %v7007, 7
    %v7027 = vsel %vm274, %v7025, %v7026
    %v7028 = vrot.slane %v6957, 7
    %v7029 = vrot.slane %v7028, 2
    %v7030 = vrot.slane %v6965, 7
    %v7031 = vsel %vm274, %v7029, %v7030
    %v7032 = vrot.slane %v7030, 2
    %v7033 = vrot.slane %v6964, 7
    %v7034 = vsel %vm274, %v7032, %v7033
    %v7035 = vrot.slane %v7033, 2
    %v7036 = vrot.slane %v6966, 7
    %v7037 = vsel %vm274, %v7035, %v7036
    %v7038 = vrot.slane %v7036, 2
    %v7039 = vrot.slane %v7014, 7
    %v7040 = vsel %vm274, %v7038, %v7039
    %v7049 = vpack.c.bf16 %v7018, %v7018
    %v7050 = vpack.c.bf16 %v7021, %v7021
    %v7051 = vpack.c.bf16 %v7024, %v7024
    %v7052 = vpack.c.bf16 %v7027, %v7027
    %v7053 = vpack.c.bf16 %v7031, %v7031
    %v7054 = vpack.c.bf16 %v7034, %v7034
    %v7055 = vpack.c.bf16 %v7037, %v7037
    %v7056 = vpack.c.bf16 %v7040, %v7040
    %v7057 = vld [vmem:[#allocation9 + $0x40] sm:$0xf]
    %v7058 = vld [vmem:[#allocation9 + $0x44] sm:$0xf]
    %v7059 = vld [vmem:[#allocation9 + $0x48] sm:$0xf]
    %v7060 = vld [vmem:[#allocation9 + $0x4c] sm:$0xf]
    %v7061 = vld [vmem:[#allocation9 + $0x50] sm:$0xf]
    %v7062 = vld [vmem:[#allocation9 + $0x54] sm:$0xf]
    %v7063 = vld [vmem:[#allocation9 + $0x58] sm:$0xf]
    %v7064 = vld [vmem:[#allocation9 + $0x5c] sm:$0xf]
    %v7065 = vld [vmem:[#allocation9 + $0x60] sm:$0xf]
    %v7066 = vld [vmem:[#allocation9 + $0x64] sm:$0xf]
    %v7067 = vld [vmem:[#allocation9 + $0x68] sm:$0xf]
    %v7068 = vld [vmem:[#allocation9 + $0x6c] sm:$0xf]
    %v7069 = vld [vmem:[#allocation9 + $0x70] sm:$0xf]
    %v7070 = vld [vmem:[#allocation9 + $0x74] sm:$0xf]
    %v7071 = vld [vmem:[#allocation9 + $0x78] sm:$0xf]
    %v7072 = vld [vmem:[#allocation9 + $0x7c] sm:$0xf]
    %v7081 = vunpack.c.l.b16 %v7049
    %v7082 = vunpack.c.l.b16 %v7050
    %v7083 = vunpack.c.l.b16 %v7051
    %v7084 = vunpack.c.l.b16 %v7052
    %v7085 = vunpack.c.l.b16 %v7053
    %v7086 = vunpack.c.l.b16 %v7054
    %v7087 = vunpack.c.l.b16 %v7055
    %v7088 = vunpack.c.l.b16 %v7056
    %v7089 = vrot.slane %v7082, 7
    %v7090 = vsel %vm392, %v7089, %v7081
    %v7091 = vrot.slane %v7083, 6
    %v7092 = vsel %vm269, %v7091, %v7090
    %v7093 = vrot.slane %v7084, 5
    %v7094 = vsel %vm397, %v7093, %v7092
    %v7095 = vrot.slane %v7085, 4
    %v7096 = vsel %vm271, %v7095, %v7094
    %v7097 = vrot.slane %v7086, 3
    %v7098 = vsel %vm402, %v7097, %v7096
    %v7099 = vrot.slane %v7087, 2
    %v7100 = vsel %vm273, %v7099, %v7098
    %v7101 = vrot.slane %v7088, 1
    %v7102 = vsel %vm407, %v7101, %v7100
    %v7103 = vpack.c.b16 %v7102, %v7102
    %v7121 = vunpack.c.l.b16 %v7057
    %v7122 = vunpack.c.l.b16 %v7058
    %v7123 = vunpack.c.l.b16 %v7059
    %v7124 = vunpack.c.l.b16 %v7060
    %v7125 = vunpack.c.l.b16 %v7061
    %v7126 = vunpack.c.l.b16 %v7062
    %v7127 = vunpack.c.l.b16 %v7063
    %v7128 = vunpack.c.l.b16 %v7064
    %v7129 = vunpack.c.l.b16 %v7065
    %v7130 = vunpack.c.l.b16 %v7066
    %v7131 = vunpack.c.l.b16 %v7067
    %v7132 = vunpack.c.l.b16 %v7068
    %v7133 = vunpack.c.l.b16 %v7069
    %v7134 = vunpack.c.l.b16 %v7070
    %v7135 = vunpack.c.l.b16 %v7071
    %v7136 = vunpack.c.l.b16 %v7072
    %v7137 = vpack.c.b16 %v7122, %v7121
    %v7138 = vpack.c.b16 %v7124, %v7123
    %v7139 = vpack.c.b16 %v7126, %v7125
    %v7140 = vpack.c.b16 %v7128, %v7127
    %v7141 = vpack.c.b16 %v7130, %v7129
    %v7142 = vpack.c.b16 %v7132, %v7131
    %v7143 = vpack.c.b16 %v7134, %v7133
    %v7144 = vpack.c.b16 %v7136, %v7135
    %7153 = vmatprep.subr.bf16.mxu0 0
    %7154 = vmatpush1.bf16.msra.mxu0 %v7137
    %7155 = vmatprep.subr.bf16.mxu0 0
    %7156 = vmatpush1.bf16.msra.mxu0 %v7138
    %7157 = vmatprep.subr.bf16.mxu0 0
    %7158 = vmatpush1.bf16.msra.mxu0 %v7139
    %7159 = vmatprep.subr.bf16.mxu0 0
    %7160 = vmatpush1.bf16.msra.mxu0 %v7140
    %7161 = vmatprep.subr.bf16.mxu0 0
    %7162 = vmatpush1.bf16.msra.mxu0 %v7141
    %7163 = vmatprep.subr.bf16.mxu0 0
    %7164 = vmatpush1.bf16.msra.mxu0 %v7142
    %7165 = vmatprep.subr.bf16.mxu0 0
    %7166 = vmatpush1.bf16.msra.mxu0 %v7143
    %7167 = vmatprep.subr.bf16.mxu0 0
    %7168 = vmatpush1.bf16.msra.mxu0 %v7144
    %7169 = vmatprep.subr.bf16.mxu0 0
    %7170 = vmatpush1.bf16.msra.mxu0 0
    %7171 = vmatprep.subr.bf16.mxu0 0
    %7172 = vmatpush1.bf16.msra.mxu0 0
    %7173 = vmatprep.subr.bf16.mxu0 0
    %7174 = vmatpush1.bf16.msra.mxu0 0
    %7175 = vmatprep.subr.bf16.mxu0 0
    %7176 = vmatpush1.bf16.msra.mxu0 0
    %7177 = vmatprep.subr.bf16.mxu0 0
    %7178 = vmatpush1.bf16.msra.mxu0 0
    %7179 = vmatprep.subr.bf16.mxu0 0
    %7180 = vmatpush1.bf16.msra.mxu0 0
    %7181 = vmatprep.subr.bf16.mxu0 0
    %7182 = vmatpush1.bf16.msra.mxu0 0
    %7183 = vmatprep.subr.bf16.mxu0 0
    %7184 = vmatpush1.bf16.msra.mxu0 0
    %7185 = vmatprep.mubr.bf16.mxu0 0
    %7186 = vmatmul.mubr.bf16.gmra.mrb[0].mxu0 %v7103
    %v7187 = vpop.f32.mrb[0].mxu0
    %v7188 = vadd.f32 0.0, %v7187
    %v7189 = vpop.f32.mrb[0].mxu0
    %v7190 = vpop.f32.mrb[0].mxu0
    %v7191 = vpop.f32.mrb[0].mxu0
    %7192 = vdwg.mxu0
    %v7201 = vunpack.c.l.b16 %v6975
    %v7202 = vunpack.c.l.b16 %v6976
    %v7203 = vunpack.c.l.b16 %v6977
    %v7204 = vunpack.c.l.b16 %v6978
    %v7205 = vunpack.c.l.b16 %v6979
    %v7206 = vunpack.c.l.b16 %v6980
    %v7207 = vunpack.c.l.b16 %v6981
    %v7208 = vunpack.c.l.b16 %v6982
    %v7209 = vrot.slane %v7202, 7
    %v7210 = vsel %vm392, %v7209, %v7201
    %v7211 = vrot.slane %v7203, 6
    %v7212 = vsel %vm269, %v7211, %v7210
    %v7213 = vrot.slane %v7204, 5
    %v7214 = vsel %vm397, %v7213, %v7212
    %v7215 = vrot.slane %v7205, 4
    %v7216 = vsel %vm271, %v7215, %v7214
    %v7217 = vrot.slane %v7206, 3
    %v7218 = vsel %vm402, %v7217, %v7216
    %v7219 = vrot.slane %v7207, 2
    %v7220 = vsel %vm273, %v7219, %v7218
    %v7221 = vrot.slane %v7208, 1
    %v7222 = vsel %vm407, %v7221, %v7220
    %v7223 = vpack.c.b16 %v7222, %v7222
    %v7241 = vunpack.c.l.b16 %v6983
    %v7242 = vunpack.c.l.b16 %v6984
    %v7243 = vunpack.c.l.b16 %v6985
    %v7244 = vunpack.c.l.b16 %v6986
    %v7245 = vunpack.c.l.b16 %v6987
    %v7246 = vunpack.c.l.b16 %v6988
    %v7247 = vunpack.c.l.b16 %v6989
    %v7248 = vunpack.c.l.b16 %v6990
    %v7249 = vunpack.c.l.b16 %v6991
    %v7250 = vunpack.c.l.b16 %v6992
    %v7251 = vunpack.c.l.b16 %v6993
    %v7252 = vunpack.c.l.b16 %v6994
    %v7253 = vunpack.c.l.b16 %v6995
    %v7254 = vunpack.c.l.b16 %v6996
    %v7255 = vunpack.c.l.b16 %v6997
    %v7256 = vunpack.c.l.b16 %v6998
    %v7257 = vpack.c.b16 %v7242, %v7241
    %v7258 = vpack.c.b16 %v7244, %v7243
    %v7259 = vpack.c.b16 %v7246, %v7245
    %v7260 = vpack.c.b16 %v7248, %v7247
    %v7261 = vpack.c.b16 %v7250, %v7249
    %v7262 = vpack.c.b16 %v7252, %v7251
    %v7263 = vpack.c.b16 %v7254, %v7253
    %v7264 = vpack.c.b16 %v7256, %v7255
    %7273 = vmatprep.subr.bf16.mxu0 0
    %7274 = vmatpush1.bf16.msra.mxu0 %v7257
    %7275 = vmatprep.subr.bf16.mxu0 0
    %7276 = vmatpush1.bf16.msra.mxu0 %v7258
    %7277 = vmatprep.subr.bf16.mxu0 0
    %7278 = vmatpush1.bf16.msra.mxu0 %v7259
    %7279 = vmatprep.subr.bf16.mxu0 0
    %7280 = vmatpush1.bf16.msra.mxu0 %v7260
    %7281 = vmatprep.subr.bf16.mxu0 0
    %7282 = vmatpush1.bf16.msra.mxu0 %v7261
    %7283 = vmatprep.subr.bf16.mxu0 0
    %7284 = vmatpush1.bf16.msra.mxu0 %v7262
    %7285 = vmatprep.subr.bf16.mxu0 0
    %7286 = vmatpush1.bf16.msra.mxu0 %v7263
    %7287 = vmatprep.subr.bf16.mxu0 0
    %7288 = vmatpush1.bf16.msra.mxu0 %v7264
    %7289 = vmatprep.subr.bf16.mxu0 0
    %7290 = vmatpush1.bf16.msra.mxu0 0
    %7291 = vmatprep.subr.bf16.mxu0 0
    %7292 = vmatpush1.bf16.msra.mxu0 0
    %7293 = vmatprep.subr.bf16.mxu0 0
    %7294 = vmatpush1.bf16.msra.mxu0 0
    %7295 = vmatprep.subr.bf16.mxu0 0
    %7296 = vmatpush1.bf16.msra.mxu0 0
    %7297 = vmatprep.subr.bf16.mxu0 0
    %7298 = vmatpush1.bf16.msra.mxu0 0
    %7299 = vmatprep.subr.bf16.mxu0 0
    %7300 = vmatpush1.bf16.msra.mxu0 0
    %7301 = vmatprep.subr.bf16.mxu0 0
    %7302 = vmatpush1.bf16.msra.mxu0 0
    %7303 = vmatprep.subr.bf16.mxu0 0
    %7304 = vmatpush1.bf16.msra.mxu0 0
    %7305 = vmatprep.mubr.bf16.mxu0 0
    %7306 = vmatmul.mubr.bf16.gmra.mrb[0].mxu0 %v7223
    %v7307 = vpop.f32.mrb[0].mxu0
    %v7308 = vadd.f32 %v7188, %v7307
    %v7309 = vpop.f32.mrb[0].mxu0
    %v7310 = vpop.f32.mrb[0].mxu0
    %v7311 = vpop.f32.mrb[0].mxu0
    %7312 = vdwg.mxu0
    %v7315 = vpack.c.bf16 %v7007, %v7007
    %v7316 = vpack.c.bf16 %v7014, %v7014
    %v7317 = vld [vmem:[#allocation9 + $0x80] sm:$0xf]
    %v7318 = vld [vmem:[#allocation9 + $0x84] sm:$0xf]
    %v7319 = vld [vmem:[#allocation9 + $0x88] sm:$0xf]
    %v7320 = vld [vmem:[#allocation9 + $0x8c] sm:$0xf]
    %v7321 = vld [vmem:[#allocation9 + $0x90] sm:$0xf]
    %v7322 = vld [vmem:[#allocation9 + $0x94] sm:$0xf]
    %v7323 = vld [vmem:[#allocation9 + $0x98] sm:$0xf]
    %v7324 = vld [vmem:[#allocation9 + $0x9c] sm:$0xf]
    %v7325 = vld [vmem:[#allocation9 + $0xa0] sm:$0xf]
    %v7326 = vld [vmem:[#allocation9 + $0xa4] sm:$0xf]
    %v7327 = vld [vmem:[#allocation9 + $0xa8] sm:$0xf]
    %v7328 = vld [vmem:[#allocation9 + $0xac] sm:$0xf]
    %v7329 = vld [vmem:[#allocation9 + $0xb0] sm:$0xf]
    %v7330 = vld [vmem:[#allocation9 + $0xb4] sm:$0xf]
    %v7331 = vld [vmem:[#allocation9 + $0xb8] sm:$0xf]
    %v7332 = vld [vmem:[#allocation9 + $0xbc] sm:$0xf]
    %v7335 = vunpack.c.l.b16 %v7315
    %v7336 = vunpack.c.l.b16 %v7316
    %v7337 = vrot.slane %v7203, 7
    %v7338 = vsel %vm392, %v7337, %v7202
    %v7339 = vrot.slane %v7204, 6
    %v7340 = vsel %vm269, %v7339, %v7338
    %v7341 = vrot.slane %v7335, 5
    %v7342 = vsel %vm397, %v7341, %v7340
    %v7343 = vrot.slane %v7206, 4
    %v7344 = vsel %vm271, %v7343, %v7342
    %v7345 = vrot.slane %v7207, 3
    %v7346 = vsel %vm402, %v7345, %v7344
    %v7347 = vrot.slane %v7208, 2
    %v7348 = vsel %vm273, %v7347, %v7346
    %v7349 = vrot.slane %v7336, 1
    %v7350 = vsel %vm407, %v7349, %v7348
    %v7351 = vpack.c.b16 %v7350, %v7350
    %v7369 = vunpack.c.l.b16 %v7317
    %v7370 = vunpack.c.l.b16 %v7318
    %v7371 = vunpack.c.l.b16 %v7319
    %v7372 = vunpack.c.l.b16 %v7320
    %v7373 = vunpack.c.l.b16 %v7321
    %v7374 = vunpack.c.l.b16 %v7322
    %v7375 = vunpack.c.l.b16 %v7323
    %v7376 = vunpack.c.l.b16 %v7324
    %v7377 = vunpack.c.l.b16 %v7325
    %v7378 = vunpack.c.l.b16 %v7326
    %v7379 = vunpack.c.l.b16 %v7327
    %v7380 = vunpack.c.l.b16 %v7328
    %v7381 = vunpack.c.l.b16 %v7329
    %v7382 = vunpack.c.l.b16 %v7330
    %v7383 = vunpack.c.l.b16 %v7331
    %v7384 = vunpack.c.l.b16 %v7332
    %v7385 = vpack.c.b16 %v7370, %v7369
    %v7386 = vpack.c.b16 %v7372, %v7371
    %v7387 = vpack.c.b16 %v7374, %v7373
    %v7388 = vpack.c.b16 %v7376, %v7375
    %v7389 = vpack.c.b16 %v7378, %v7377
    %v7390 = vpack.c.b16 %v7380, %v7379
    %v7391 = vpack.c.b16 %v7382, %v7381
    %v7392 = vpack.c.b16 %v7384, %v7383
    %7401 = vmatprep.subr.bf16.mxu0 0
    %7402 = vmatpush1.bf16.msra.mxu0 %v7385
    %7403 = vmatprep.subr.bf16.mxu0 0
    %7404 = vmatpush1.bf16.msra.mxu0 %v7386
    %7405 = vmatprep.subr.bf16.mxu0 0
    %7406 = vmatpush1.bf16.msra.mxu0 %v7387
    %7407 = vmatprep.subr.bf16.mxu0 0
    %7408 = vmatpush1.bf16.msra.mxu0 %v7388
    %7409 = vmatprep.subr.bf16.mxu0 0
    %7410 = vmatpush1.bf16.msra.mxu0 %v7389
    %7411 = vmatprep.subr.bf16.mxu0 0
    %7412 = vmatpush1.bf16.msra.mxu0 %v7390
    %7413 = vmatprep.subr.bf16.mxu0 0
    %7414 = vmatpush1.bf16.msra.mxu0 %v7391
    %7415 = vmatprep.subr.bf16.mxu0 0
    %7416 = vmatpush1.bf16.msra.mxu0 %v7392
    %7417 = vmatprep.subr.bf16.mxu0 0
    %7418 = vmatpush1.bf16.msra.mxu0 0
    %7419 = vmatprep.subr.bf16.mxu0 0
    %7420 = vmatpush1.bf16.msra.mxu0 0
    %7421 = vmatprep.subr.bf16.mxu0 0
    %7422 = vmatpush1.bf16.msra.mxu0 0
    %7423 = vmatprep.subr.bf16.mxu0 0
    %7424 = vmatpush1.bf16.msra.mxu0 0
    %7425 = vmatprep.subr.bf16.mxu0 0
    %7426 = vmatpush1.bf16.msra.mxu0 0
    %7427 = vmatprep.subr.bf16.mxu0 0
    %7428 = vmatpush1.bf16.msra.mxu0 0
    %7429 = vmatprep.subr.bf16.mxu0 0
    %7430 = vmatpush1.bf16.msra.mxu0 0
    %7431 = vmatprep.subr.bf16.mxu0 0
    %7432 = vmatpush1.bf16.msra.mxu0 0
    %7433 = vmatprep.mubr.bf16.mxu0 0
    %7434 = vmatmul.mubr.bf16.gmra.mrb[0].mxu0 %v7351
    %v7435 = vpop.f32.mrb[0].mxu0
    %v7436 = vadd.f32 0.0, %v7435
    %v7437 = vpop.f32.mrb[0].mxu0
    %v7438 = vpop.f32.mrb[0].mxu0
    %v7439 = vpop.f32.mrb[0].mxu0
    %7440 = vdwg.mxu0
    %v7441 = vadd.f32 %v7308, %v7436
    %v7442 = vld [vmem:[%s5 + $0x3] sm:$0x1]
    %v7443 = vlaneseq
    %v7444 = vshrl.u32 %v7443, 7
    %v7445 = vsub.s32 0, %v7444
    %v7446 = vrot.slane %v7442, %v7445
    %v7447 = vadd.f32 %v7441, %v7446
    %v7448 = vmax.f32 %v7447, 0.0
    %v7449 = vrot.slane %v7448, 4
    %v7450 = vadd.f32 %v7448, %v7449
    %v7451 = vrot.slane %v7450, 2
    %v7452 = vadd.f32 %v7450, %v7451
    %v7453 = vrot.slane %v7452, 1
    %v7454 = vadd.f32 %v7452, %v7453
    %v7455 = vmul.f32 %v7448, %v7448
    %v7456 = vrot.slane %v7455, 4
    %v7457 = vadd.f32 %v7455, %v7456
    %v7458 = vrot.slane %v7457, 2
    %v7459 = vadd.f32 %v7457, %v7458
    %v7460 = vrot.slane %v7459, 1
    %v7461 = vadd.f32 %v7459, %v7460
    %v7462 = vsel %vm134, %v7454, %v7461
    %7463 = vmatprep.subr.mxu0 0.0
    %v7464 = vand.u32 %v701, 4294901760
    %7465 = vmatpush1.msra.mxu0 %v7464
    %7466 = vmatprep.subr.mxu0 0.0
    %v7467 = vand.u32 %v702, 4294901760
    %7468 = vmatpush1.msra.mxu0 %v7467
    %7469 = vmatprep.subr.mxu0 0.0
    %v7470 = vand.u32 %v703, 4294901760
    %7471 = vmatpush1.msra.mxu0 %v7470
    %7472 = vmatprep.subr.mxu0 0.0
    %v7473 = vand.u32 %v704, 4294901760
    %7474 = vmatpush1.msra.mxu0 %v7473
    %7475 = vmatprep.subr.mxu0 0.0
    %v7476 = vand.u32 %v705, 4294901760
    %7477 = vmatpush1.msra.mxu0 %v7476
    %7478 = vmatprep.subr.mxu0 0.0
    %v7479 = vand.u32 %v706, 4294901760
    %7480 = vmatpush1.msra.mxu0 %v7479
    %7481 = vmatprep.subr.mxu0 0.0
    %v7482 = vand.u32 %v707, 4294901760
    %7483 = vmatpush1.msra.mxu0 %v7482
    %7484 = vmatprep.subr.mxu0 0.0
    %v7485 = vand.u32 %v708, 4294901760
    %7486 = vmatpush1.msra.mxu0 %v7485
    %7487 = vmatprep.subr.mxu0 0.0
    %v7488 = vand.u32 %v709, 4294901760
    %7489 = vmatpush1.msra.mxu0 %v7488
    %7490 = vmatprep.subr.mxu0 0.0
    %v7491 = vand.u32 %v710, 4294901760
    %7492 = vmatpush1.msra.mxu0 %v7491
    %7493 = vmatprep.subr.mxu0 0.0
    %v7494 = vand.u32 %v711, 4294901760
    %7495 = vmatpush1.msra.mxu0 %v7494
    %7496 = vmatprep.subr.mxu0 0.0
    %v7497 = vand.u32 %v712, 4294901760
    %7498 = vmatpush1.msra.mxu0 %v7497
    %7499 = vmatprep.subr.mxu0 0.0
    %v7500 = vand.u32 %v713, 4294901760
    %7501 = vmatpush1.msra.mxu0 %v7500
    %7502 = vmatprep.subr.mxu0 0.0
    %v7503 = vand.u32 %v714, 4294901760
    %7504 = vmatpush1.msra.mxu0 %v7503
    %7505 = vmatprep.subr.mxu0 0.0
    %v7506 = vand.u32 %v715, 4294901760
    %7507 = vmatpush1.msra.mxu0 %v7506
    %7508 = vmatprep.subr.mxu0 0.0
    %v7509 = vand.u32 %v716, 4294901760
    %7510 = vmatpush1.msra.mxu0 %v7509
    %7511 = vmatprep.subr.mxu0 0.0
    %7512 = vmatpush1.msra.mxu0 0.0
    %7513 = vmatprep.subr.mxu0 0.0
    %7514 = vmatpush1.msra.mxu0 0.0
    %7515 = vmatprep.subr.mxu0 0.0
    %7516 = vmatpush1.msra.mxu0 0.0
    %7517 = vmatprep.subr.mxu0 0.0
    %7518 = vmatpush1.msra.mxu0 0.0
    %7519 = vmatprep.subr.mxu0 0.0
    %7520 = vmatpush1.msra.mxu0 0.0
    %7521 = vmatprep.subr.mxu0 0.0
    %7522 = vmatpush1.msra.mxu0 0.0
    %7523 = vmatprep.subr.mxu0 0.0
    %7524 = vmatpush1.msra.mxu0 0.0
    %7525 = vmatprep.subr.mxu0 0.0
    %7526 = vmatpush1.msra.mxu0 0.0
    %7527 = vmatprep.subr.mxu0 0.0
    %7528 = vmatpush1.msra.mxu0 0.0
    %7529 = vmatprep.subr.mxu0 0.0
    %7530 = vmatpush1.msra.mxu0 0.0
    %7531 = vmatprep.subr.mxu0 0.0
    %7532 = vmatpush1.msra.mxu0 0.0
    %7533 = vmatprep.subr.mxu0 0.0
    %7534 = vmatpush1.msra.mxu0 0.0
    %7535 = vmatprep.subr.mxu0 0.0
    %7536 = vmatpush1.msra.mxu0 0.0
    %7537 = vmatprep.subr.mxu0 0.0
    %7538 = vmatpush1.msra.mxu0 0.0
    %7539 = vmatprep.subr.mxu0 0.0
    %7540 = vmatpush1.msra.mxu0 0.0
    %7541 = vmatprep.subr.mxu0 0.0
    %7542 = vmatpush1.msra.mxu0 0.0
    %7543 = vmatprep.mubr.f32.mxu0 0.0
    %v7544 = vand.u32 %v7462, 4294901760
    %v7545 = vsub.f32 %v7462, %v7544
    %v7546 = vand.u32 %v7545, 4294901760
    %v7547 = vsub.f32 %v7545, %v7546
    %v7548 = vand.u32 %v7547, 4294901760
    %7549 = vmatmul.mubr.f32.gmra.mrb[0].mxu0 %v7548
    %v7550 = vpop.f32.mrb[0].mxu0
    %v7551 = vadd.f32 0.0, %v7550
    %v7552 = vpop.f32.mrb[0].mxu0
    %7553 = vdwg.mxu0
    %7554 = vmatprep.subr.mxu0 0.0
    %v7555 = vand.u32 %v701, 4294901760
    %v7556 = vsub.f32 %v701, %v7555
    %v7557 = vand.u32 %v7556, 4294901760
    %v7558 = vsub.f32 %v7556, %v7557
    %v7559 = vand.u32 %v7558, 4294901760
    %7560 = vmatpush1.msra.mxu0 %v7559
    %7561 = vmatprep.subr.mxu0 0.0
    %v7562 = vand.u32 %v702, 4294901760
    %v7563 = vsub.f32 %v702, %v7562
    %v7564 = vand.u32 %v7563, 4294901760
    %v7565 = vsub.f32 %v7563, %v7564
    %v7566 = vand.u32 %v7565, 4294901760
    %7567 = vmatpush1.msra.mxu0 %v7566
    %7568 = vmatprep.subr.mxu0 0.0
    %v7569 = vand.u32 %v703, 4294901760
    %v7570 = vsub.f32 %v703, %v7569
    %v7571 = vand.u32 %v7570, 4294901760
    %v7572 = vsub.f32 %v7570, %v7571
    %v7573 = vand.u32 %v7572, 4294901760
    %7574 = vmatpush1.msra.mxu0 %v7573
    %7575 = vmatprep.subr.mxu0 0.0
    %v7576 = vand.u32 %v704, 4294901760
    %v7577 = vsub.f32 %v704, %v7576
    %v7578 = vand.u32 %v7577, 4294901760
    %v7579 = vsub.f32 %v7577, %v7578
    %v7580 = vand.u32 %v7579, 4294901760
    %7581 = vmatpush1.msra.mxu0 %v7580
    %7582 = vmatprep.subr.mxu0 0.0
    %v7583 = vand.u32 %v705, 4294901760
    %v7584 = vsub.f32 %v705, %v7583
    %v7585 = vand.u32 %v7584, 4294901760
    %v7586 = vsub.f32 %v7584, %v7585
    %v7587 = vand.u32 %v7586, 4294901760
    %7588 = vmatpush1.msra.mxu0 %v7587
    %7589 = vmatprep.subr.mxu0 0.0
    %v7590 = vand.u32 %v706, 4294901760
    %v7591 = vsub.f32 %v706, %v7590
    %v7592 = vand.u32 %v7591, 4294901760
    %v7593 = vsub.f32 %v7591, %v7592
    %v7594 = vand.u32 %v7593, 4294901760
    %7595 = vmatpush1.msra.mxu0 %v7594
    %7596 = vmatprep.subr.mxu0 0.0
    %v7597 = vand.u32 %v707, 4294901760
    %v7598 = vsub.f32 %v707, %v7597
    %v7599 = vand.u32 %v7598, 4294901760
    %v7600 = vsub.f32 %v7598, %v7599
    %v7601 = vand.u32 %v7600, 4294901760
    %7602 = vmatpush1.msra.mxu0 %v7601
    %7603 = vmatprep.subr.mxu0 0.0
    %v7604 = vand.u32 %v708, 4294901760
    %v7605 = vsub.f32 %v708, %v7604
    %v7606 = vand.u32 %v7605, 4294901760
    %v7607 = vsub.f32 %v7605, %v7606
    %v7608 = vand.u32 %v7607, 4294901760
    %7609 = vmatpush1.msra.mxu0 %v7608
    %7610 = vmatprep.subr.mxu0 0.0
    %v7611 = vand.u32 %v709, 4294901760
    %v7612 = vsub.f32 %v709, %v7611
    %v7613 = vand.u32 %v7612, 4294901760
    %v7614 = vsub.f32 %v7612, %v7613
    %v7615 = vand.u32 %v7614, 4294901760
    %7616 = vmatpush1.msra.mxu0 %v7615
    %7617 = vmatprep.subr.mxu0 0.0
    %v7618 = vand.u32 %v710, 4294901760
    %v7619 = vsub.f32 %v710, %v7618
    %v7620 = vand.u32 %v7619, 4294901760
    %v7621 = vsub.f32 %v7619, %v7620
    %v7622 = vand.u32 %v7621, 4294901760
    %7623 = vmatpush1.msra.mxu0 %v7622
    %7624 = vmatprep.subr.mxu0 0.0
    %v7625 = vand.u32 %v711, 4294901760
    %v7626 = vsub.f32 %v711, %v7625
    %v7627 = vand.u32 %v7626, 4294901760
    %v7628 = vsub.f32 %v7626, %v7627
    %v7629 = vand.u32 %v7628, 4294901760
    %7630 = vmatpush1.msra.mxu0 %v7629
    %7631 = vmatprep.subr.mxu0 0.0
    %v7632 = vand.u32 %v712, 4294901760
    %v7633 = vsub.f32 %v712, %v7632
    %v7634 = vand.u32 %v7633, 4294901760
    %v7635 = vsub.f32 %v7633, %v7634
    %v7636 = vand.u32 %v7635, 4294901760
    %7637 = vmatpush1.msra.mxu0 %v7636
    %7638 = vmatprep.subr.mxu0 0.0
    %v7639 = vand.u32 %v713, 4294901760
    %v7640 = vsub.f32 %v713, %v7639
    %v7641 = vand.u32 %v7640, 4294901760
    %v7642 = vsub.f32 %v7640, %v7641
    %v7643 = vand.u32 %v7642, 4294901760
    %7644 = vmatpush1.msra.mxu0 %v7643
    %7645 = vmatprep.subr.mxu0 0.0
    %v7646 = vand.u32 %v714, 4294901760
    %v7647 = vsub.f32 %v714, %v7646
    %v7648 = vand.u32 %v7647, 4294901760
    %v7649 = vsub.f32 %v7647, %v7648
    %v7650 = vand.u32 %v7649, 4294901760
    %7651 = vmatpush1.msra.mxu0 %v7650
    %7652 = vmatprep.subr.mxu0 0.0
    %v7653 = vand.u32 %v715, 4294901760
    %v7654 = vsub.f32 %v715, %v7653
    %v7655 = vand.u32 %v7654, 4294901760
    %v7656 = vsub.f32 %v7654, %v7655
    %v7657 = vand.u32 %v7656, 4294901760
    %7658 = vmatpush1.msra.mxu0 %v7657
    %7659 = vmatprep.subr.mxu0 0.0
    %v7660 = vand.u32 %v716, 4294901760
    %v7661 = vsub.f32 %v716, %v7660
    %v7662 = vand.u32 %v7661, 4294901760
    %v7663 = vsub.f32 %v7661, %v7662
    %v7664 = vand.u32 %v7663, 4294901760
    %7665 = vmatpush1.msra.mxu0 %v7664
    %7666 = vmatprep.subr.mxu0 0.0
    %7667 = vmatpush1.msra.mxu0 0.0
    %7668 = vmatprep.subr.mxu0 0.0
    %7669 = vmatpush1.msra.mxu0 0.0
    %7670 = vmatprep.subr.mxu0 0.0
    %7671 = vmatpush1.msra.mxu0 0.0
    %7672 = vmatprep.subr.mxu0 0.0
    %7673 = vmatpush1.msra.mxu0 0.0
    %7674 = vmatprep.subr.mxu0 0.0
    %7675 = vmatpush1.msra.mxu0 0.0
    %7676 = vmatprep.subr.mxu0 0.0
    %7677 = vmatpush1.msra.mxu0 0.0
    %7678 = vmatprep.subr.mxu0 0.0
    %7679 = vmatpush1.msra.mxu0 0.0
    %7680 = vmatprep.subr.mxu0 0.0
    %7681 = vmatpush1.msra.mxu0 0.0
    %7682 = vmatprep.subr.mxu0 0.0
    %7683 = vmatpush1.msra.mxu0 0.0
    %7684 = vmatprep.subr.mxu0 0.0
    %7685 = vmatpush1.msra.mxu0 0.0
    %7686 = vmatprep.subr.mxu0 0.0
    %7687 = vmatpush1.msra.mxu0 0.0
    %7688 = vmatprep.subr.mxu0 0.0
    %7689 = vmatpush1.msra.mxu0 0.0
    %7690 = vmatprep.subr.mxu0 0.0
    %7691 = vmatpush1.msra.mxu0 0.0
    %7692 = vmatprep.subr.mxu0 0.0
    %7693 = vmatpush1.msra.mxu0 0.0
    %7694 = vmatprep.subr.mxu0 0.0
    %7695 = vmatpush1.msra.mxu0 0.0
    %7696 = vmatprep.subr.mxu0 0.0
    %7697 = vmatpush1.msra.mxu0 0.0
    %7698 = vmatprep.mubr.f32.mxu0 0.0
    %v7699 = vand.u32 %v7462, 4294901760
    %7700 = vmatmul.mubr.f32.gmra.mrb[0].mxu0 %v7699
    %v7701 = vpop.f32.mrb[0].mxu0
    %v7702 = vadd.f32 %v7551, %v7701
    %v7703 = vpop.f32.mrb[0].mxu0
    %7704 = vdwg.mxu0
    %7705 = vmatprep.subr.mxu0 0.0
    %v7706 = vand.u32 %v701, 4294901760
    %v7707 = vsub.f32 %v701, %v7706
    %7708 = vmatpush1.msra.mxu0 %v7707
    %7709 = vmatprep.subr.mxu0 0.0
    %v7710 = vand.u32 %v702, 4294901760
    %v7711 = vsub.f32 %v702, %v7710
    %7712 = vmatpush1.msra.mxu0 %v7711
    %7713 = vmatprep.subr.mxu0 0.0
    %v7714 = vand.u32 %v703, 4294901760
    %v7715 = vsub.f32 %v703, %v7714
    %7716 = vmatpush1.msra.mxu0 %v7715
    %7717 = vmatprep.subr.mxu0 0.0
    %v7718 = vand.u32 %v704, 4294901760
    %v7719 = vsub.f32 %v704, %v7718
    %7720 = vmatpush1.msra.mxu0 %v7719
    %7721 = vmatprep.subr.mxu0 0.0
    %v7722 = vand.u32 %v705, 4294901760
    %v7723 = vsub.f32 %v705, %v7722
    %7724 = vmatpush1.msra.mxu0 %v7723
    %7725 = vmatprep.subr.mxu0 0.0
    %v7726 = vand.u32 %v706, 4294901760
    %v7727 = vsub.f32 %v706, %v7726
    %7728 = vmatpush1.msra.mxu0 %v7727
    %7729 = vmatprep.subr.mxu0 0.0
    %v7730 = vand.u32 %v707, 4294901760
    %v7731 = vsub.f32 %v707, %v7730
    %7732 = vmatpush1.msra.mxu0 %v7731
    %7733 = vmatprep.subr.mxu0 0.0
    %v7734 = vand.u32 %v708, 4294901760
    %v7735 = vsub.f32 %v708, %v7734
    %7736 = vmatpush1.msra.mxu0 %v7735
    %7737 = vmatprep.subr.mxu0 0.0
    %v7738 = vand.u32 %v709, 4294901760
    %v7739 = vsub.f32 %v709, %v7738
    %7740 = vmatpush1.msra.mxu0 %v7739
    %7741 = vmatprep.subr.mxu0 0.0
    %v7742 = vand.u32 %v710, 4294901760
    %v7743 = vsub.f32 %v710, %v7742
    %7744 = vmatpush1.msra.mxu0 %v7743
    %7745 = vmatprep.subr.mxu0 0.0
    %v7746 = vand.u32 %v711, 4294901760
    %v7747 = vsub.f32 %v711, %v7746
    %7748 = vmatpush1.msra.mxu0 %v7747
    %7749 = vmatprep.subr.mxu0 0.0
    %v7750 = vand.u32 %v712, 4294901760
    %v7751 = vsub.f32 %v712, %v7750
    %7752 = vmatpush1.msra.mxu0 %v7751
    %7753 = vmatprep.subr.mxu0 0.0
    %v7754 = vand.u32 %v713, 4294901760
    %v7755 = vsub.f32 %v713, %v7754
    %7756 = vmatpush1.msra.mxu0 %v7755
    %7757 = vmatprep.subr.mxu0 0.0
    %v7758 = vand.u32 %v714, 4294901760
    %v7759 = vsub.f32 %v714, %v7758
    %7760 = vmatpush1.msra.mxu0 %v7759
    %7761 = vmatprep.subr.mxu0 0.0
    %v7762 = vand.u32 %v715, 4294901760
    %v7763 = vsub.f32 %v715, %v7762
    %7764 = vmatpush1.msra.mxu0 %v7763
    %7765 = vmatprep.subr.mxu0 0.0
    %v7766 = vand.u32 %v716, 4294901760
    %v7767 = vsub.f32 %v716, %v7766
    %7768 = vmatpush1.msra.mxu0 %v7767
    %7769 = vmatprep.subr.mxu0 0.0
    %7770 = vmatpush1.msra.mxu0 0.0
    %7771 = vmatprep.subr.mxu0 0.0
    %7772 = vmatpush1.msra.mxu0 0.0
    %7773 = vmatprep.subr.mxu0 0.0
    %7774 = vmatpush1.msra.mxu0 0.0
    %7775 = vmatprep.subr.mxu0 0.0
    %7776 = vmatpush1.msra.mxu0 0.0
    %7777 = vmatprep.subr.mxu0 0.0
    %7778 = vmatpush1.msra.mxu0 0.0
    %7779 = vmatprep.subr.mxu0 0.0
    %7780 = vmatpush1.msra.mxu0 0.0
    %7781 = vmatprep.subr.mxu0 0.0
    %7782 = vmatpush1.msra.mxu0 0.0
    %7783 = vmatprep.subr.mxu0 0.0
    %7784 = vmatpush1.msra.mxu0 0.0
    %7785 = vmatprep.subr.mxu0 0.0
    %7786 = vmatpush1.msra.mxu0 0.0
    %7787 = vmatprep.subr.mxu0 0.0
    %7788 = vmatpush1.msra.mxu0 0.0
    %7789 = vmatprep.subr.mxu0 0.0
    %7790 = vmatpush1.msra.mxu0 0.0
    %7791 = vmatprep.subr.mxu0 0.0
    %7792 = vmatpush1.msra.mxu0 0.0
    %7793 = vmatprep.subr.mxu0 0.0
    %7794 = vmatpush1.msra.mxu0 0.0
    %7795 = vmatprep.subr.mxu0 0.0
    %7796 = vmatpush1.msra.mxu0 0.0
    %7797 = vmatprep.subr.mxu0 0.0
    %7798 = vmatpush1.msra.mxu0 0.0
    %7799 = vmatprep.subr.mxu0 0.0
    %7800 = vmatpush1.msra.mxu0 0.0
    %7801 = vmatprep.mubr.f32.mxu0 0.0
    %v7802 = vand.u32 %v7462, 4294901760
    %v7803 = vsub.f32 %v7462, %v7802
    %7804 = vmatmul.mubr.f32.gmra.mrb[0].mxu0 %v7803
    %v7805 = vpop.f32.mrb[0].mxu0
    %v7806 = vadd.f32 %v7702, %v7805
    %v7807 = vpop.f32.mrb[0].mxu0
    %7808 = vdwg.mxu0
    %7809 = vmatprep.subr.mxu0 0.0
    %v7810 = vand.u32 %v701, 4294901760
    %7811 = vmatpush1.msra.mxu0 %v7810
    %7812 = vmatprep.subr.mxu0 0.0
    %v7813 = vand.u32 %v702, 4294901760
    %7814 = vmatpush1.msra.mxu0 %v7813
    %7815 = vmatprep.subr.mxu0 0.0
    %v7816 = vand.u32 %v703, 4294901760
    %7817 = vmatpush1.msra.mxu0 %v7816
    %7818 = vmatprep.subr.mxu0 0.0
    %v7819 = vand.u32 %v704, 4294901760
    %7820 = vmatpush1.msra.mxu0 %v7819
    %7821 = vmatprep.subr.mxu0 0.0
    %v7822 = vand.u32 %v705, 4294901760
    %7823 = vmatpush1.msra.mxu0 %v7822
    %7824 = vmatprep.subr.mxu0 0.0
    %v7825 = vand.u32 %v706, 4294901760
    %7826 = vmatpush1.msra.mxu0 %v7825
    %7827 = vmatprep.subr.mxu0 0.0
    %v7828 = vand.u32 %v707, 4294901760
    %7829 = vmatpush1.msra.mxu0 %v7828
    %7830 = vmatprep.subr.mxu0 0.0
    %v7831 = vand.u32 %v708, 4294901760
    %7832 = vmatpush1.msra.mxu0 %v7831
    %7833 = vmatprep.subr.mxu0 0.0
    %v7834 = vand.u32 %v709, 4294901760
    %7835 = vmatpush1.msra.mxu0 %v7834
    %7836 = vmatprep.subr.mxu0 0.0
    %v7837 = vand.u32 %v710, 4294901760
    %7838 = vmatpush1.msra.mxu0 %v7837
    %7839 = vmatprep.subr.mxu0 0.0
    %v7840 = vand.u32 %v711, 4294901760
    %7841 = vmatpush1.msra.mxu0 %v7840
    %7842 = vmatprep.subr.mxu0 0.0
    %v7843 = vand.u32 %v712, 4294901760
    %7844 = vmatpush1.msra.mxu0 %v7843
    %7845 = vmatprep.subr.mxu0 0.0
    %v7846 = vand.u32 %v713, 4294901760
    %7847 = vmatpush1.msra.mxu0 %v7846
    %7848 = vmatprep.subr.mxu0 0.0
    %v7849 = vand.u32 %v714, 4294901760
    %7850 = vmatpush1.msra.mxu0 %v7849
    %7851 = vmatprep.subr.mxu0 0.0
    %v7852 = vand.u32 %v715, 4294901760
    %7853 = vmatpush1.msra.mxu0 %v7852
    %7854 = vmatprep.subr.mxu0 0.0
    %v7855 = vand.u32 %v716, 4294901760
    %7856 = vmatpush1.msra.mxu0 %v7855
    %7857 = vmatprep.subr.mxu0 0.0
    %7858 = vmatpush1.msra.mxu0 0.0
    %7859 = vmatprep.subr.mxu0 0.0
    %7860 = vmatpush1.msra.mxu0 0.0
    %7861 = vmatprep.subr.mxu0 0.0
    %7862 = vmatpush1.msra.mxu0 0.0
    %7863 = vmatprep.subr.mxu0 0.0
    %7864 = vmatpush1.msra.mxu0 0.0
    %7865 = vmatprep.subr.mxu0 0.0
    %7866 = vmatpush1.msra.mxu0 0.0
    %7867 = vmatprep.subr.mxu0 0.0
    %7868 = vmatpush1.msra.mxu0 0.0
    %7869 = vmatprep.subr.mxu0 0.0
    %7870 = vmatpush1.msra.mxu0 0.0
    %7871 = vmatprep.subr.mxu0 0.0
    %7872 = vmatpush1.msra.mxu0 0.0
    %7873 = vmatprep.subr.mxu0 0.0
    %7874 = vmatpush1.msra.mxu0 0.0
    %7875 = vmatprep.subr.mxu0 0.0
    %7876 = vmatpush1.msra.mxu0 0.0
    %7877 = vmatprep.subr.mxu0 0.0
    %7878 = vmatpush1.msra.mxu0 0.0
    %7879 = vmatprep.subr.mxu0 0.0
    %7880 = vmatpush1.msra.mxu0 0.0
    %7881 = vmatprep.subr.mxu0 0.0
    %7882 = vmatpush1.msra.mxu0 0.0
    %7883 = vmatprep.subr.mxu0 0.0
    %7884 = vmatpush1.msra.mxu0 0.0
    %7885 = vmatprep.subr.mxu0 0.0
    %7886 = vmatpush1.msra.mxu0 0.0
    %7887 = vmatprep.subr.mxu0 0.0
    %7888 = vmatpush1.msra.mxu0 0.0
    %7889 = vmatprep.mubr.f32.mxu0 0.0
    %v7890 = vand.u32 %v7462, 4294901760
    %v7891 = vsub.f32 %v7462, %v7890
    %v7892 = vand.u32 %v7891, 4294901760
    %7893 = vmatmul.mubr.f32.gmra.mrb[0].mxu0 %v7892
    %v7894 = vpop.f32.mrb[0].mxu0
    %v7895 = vadd.f32 %v7806, %v7894
    %v7896 = vpop.f32.mrb[0].mxu0
    %7897 = vdwg.mxu0
    %7898 = vmatprep.subr.mxu0 0.0
    %v7899 = vand.u32 %v701, 4294901760
    %v7900 = vsub.f32 %v701, %v7899
    %v7901 = vand.u32 %v7900, 4294901760
    %7902 = vmatpush1.msra.mxu0 %v7901
    %7903 = vmatprep.subr.mxu0 0.0
    %v7904 = vand.u32 %v702, 4294901760
    %v7905 = vsub.f32 %v702, %v7904
    %v7906 = vand.u32 %v7905, 4294901760
    %7907 = vmatpush1.msra.mxu0 %v7906
    %7908 = vmatprep.subr.mxu0 0.0
    %v7909 = vand.u32 %v703, 4294901760
    %v7910 = vsub.f32 %v703, %v7909
    %v7911 = vand.u32 %v7910, 4294901760
    %7912 = vmatpush1.msra.mxu0 %v7911
    %7913 = vmatprep.subr.mxu0 0.0
    %v7914 = vand.u32 %v704, 4294901760
    %v7915 = vsub.f32 %v704, %v7914
    %v7916 = vand.u32 %v7915, 4294901760
    %7917 = vmatpush1.msra.mxu0 %v7916
    %7918 = vmatprep.subr.mxu0 0.0
    %v7919 = vand.u32 %v705, 4294901760
    %v7920 = vsub.f32 %v705, %v7919
    %v7921 = vand.u32 %v7920, 4294901760
    %7922 = vmatpush1.msra.mxu0 %v7921
    %7923 = vmatprep.subr.mxu0 0.0
    %v7924 = vand.u32 %v706, 4294901760
    %v7925 = vsub.f32 %v706, %v7924
    %v7926 = vand.u32 %v7925, 4294901760
    %7927 = vmatpush1.msra.mxu0 %v7926
    %7928 = vmatprep.subr.mxu0 0.0
    %v7929 = vand.u32 %v707, 4294901760
    %v7930 = vsub.f32 %v707, %v7929
    %v7931 = vand.u32 %v7930, 4294901760
    %7932 = vmatpush1.msra.mxu0 %v7931
    %7933 = vmatprep.subr.mxu0 0.0
    %v7934 = vand.u32 %v708, 4294901760
    %v7935 = vsub.f32 %v708, %v7934
    %v7936 = vand.u32 %v7935, 4294901760
    %7937 = vmatpush1.msra.mxu0 %v7936
    %7938 = vmatprep.subr.mxu0 0.0
    %v7939 = vand.u32 %v709, 4294901760
    %v7940 = vsub.f32 %v709, %v7939
    %v7941 = vand.u32 %v7940, 4294901760
    %7942 = vmatpush1.msra.mxu0 %v7941
    %7943 = vmatprep.subr.mxu0 0.0
    %v7944 = vand.u32 %v710, 4294901760
    %v7945 = vsub.f32 %v710, %v7944
    %v7946 = vand.u32 %v7945, 4294901760
    %7947 = vmatpush1.msra.mxu0 %v7946
    %7948 = vmatprep.subr.mxu0 0.0
    %v7949 = vand.u32 %v711, 4294901760
    %v7950 = vsub.f32 %v711, %v7949
    %v7951 = vand.u32 %v7950, 4294901760
    %7952 = vmatpush1.msra.mxu0 %v7951
    %7953 = vmatprep.subr.mxu0 0.0
    %v7954 = vand.u32 %v712, 4294901760
    %v7955 = vsub.f32 %v712, %v7954
    %v7956 = vand.u32 %v7955, 4294901760
    %7957 = vmatpush1.msra.mxu0 %v7956
    %7958 = vmatprep.subr.mxu0 0.0
    %v7959 = vand.u32 %v713, 4294901760
    %v7960 = vsub.f32 %v713, %v7959
    %v7961 = vand.u32 %v7960, 4294901760
    %7962 = vmatpush1.msra.mxu0 %v7961
    %7963 = vmatprep.subr.mxu0 0.0
    %v7964 = vand.u32 %v714, 4294901760
    %v7965 = vsub.f32 %v714, %v7964
    %v7966 = vand.u32 %v7965, 4294901760
    %7967 = vmatpush1.msra.mxu0 %v7966
    %7968 = vmatprep.subr.mxu0 0.0
    %v7969 = vand.u32 %v715, 4294901760
    %v7970 = vsub.f32 %v715, %v7969
    %v7971 = vand.u32 %v7970, 4294901760
    %7972 = vmatpush1.msra.mxu0 %v7971
    %7973 = vmatprep.subr.mxu0 0.0
    %v7974 = vand.u32 %v716, 4294901760
    %v7975 = vsub.f32 %v716, %v7974
    %v7976 = vand.u32 %v7975, 4294901760
    %7977 = vmatpush1.msra.mxu0 %v7976
    %7978 = vmatprep.subr.mxu0 0.0
    %7979 = vmatpush1.msra.mxu0 0.0
    %7980 = vmatprep.subr.mxu0 0.0
    %7981 = vmatpush1.msra.mxu0 0.0
    %7982 = vmatprep.subr.mxu0 0.0
    %7983 = vmatpush1.msra.mxu0 0.0
    %7984 = vmatprep.subr.mxu0 0.0
    %7985 = vmatpush1.msra.mxu0 0.0
    %7986 = vmatprep.subr.mxu0 0.0
    %7987 = vmatpush1.msra.mxu0 0.0
    %7988 = vmatprep.subr.mxu0 0.0
    %7989 = vmatpush1.msra.mxu0 0.0
    %7990 = vmatprep.subr.mxu0 0.0
    %7991 = vmatpush1.msra.mxu0 0.0
    %7992 = vmatprep.subr.mxu0 0.0
    %7993 = vmatpush1.msra.mxu0 0.0
    %7994 = vmatprep.subr.mxu0 0.0
    %7995 = vmatpush1.msra.mxu0 0.0
    %7996 = vmatprep.subr.mxu0 0.0
    %7997 = vmatpush1.msra.mxu0 0.0
    %7998 = vmatprep.subr.mxu0 0.0
    %7999 = vmatpush1.msra.mxu0 0.0
    %8000 = vmatprep.subr.mxu0 0.0
    %8001 = vmatpush1.msra.mxu0 0.0
    %8002 = vmatprep.subr.mxu0 0.0
    %8003 = vmatpush1.msra.mxu0 0.0
    %8004 = vmatprep.subr.mxu0 0.0
    %8005 = vmatpush1.msra.mxu0 0.0
    %8006 = vmatprep.subr.mxu0 0.0
    %8007 = vmatpush1.msra.mxu0 0.0
    %8008 = vmatprep.subr.mxu0 0.0
    %8009 = vmatpush1.msra.mxu0 0.0
    %8010 = vmatprep.mubr.f32.mxu0 0.0
    %v8011 = vand.u32 %v7462, 4294901760
    %8012 = vmatmul.mubr.f32.gmra.mrb[0].mxu0 %v8011
    %v8013 = vpop.f32.mrb[0].mxu0
    %v8014 = vadd.f32 %v7895, %v8013
    %v8015 = vpop.f32.mrb[0].mxu0
    %8016 = vdwg.mxu0
    %8017 = vmatprep.subr.mxu0 0.0
    %v8018 = vand.u32 %v701, 4294901760
    %8019 = vmatpush1.msra.mxu0 %v8018
    %8020 = vmatprep.subr.mxu0 0.0
    %v8021 = vand.u32 %v702, 4294901760
    %8022 = vmatpush1.msra.mxu0 %v8021
    %8023 = vmatprep.subr.mxu0 0.0
    %v8024 = vand.u32 %v703, 4294901760
    %8025 = vmatpush1.msra.mxu0 %v8024
    %8026 = vmatprep.subr.mxu0 0.0
    %v8027 = vand.u32 %v704, 4294901760
    %8028 = vmatpush1.msra.mxu0 %v8027
    %8029 = vmatprep.subr.mxu0 0.0
    %v8030 = vand.u32 %v705, 4294901760
    %8031 = vmatpush1.msra.mxu0 %v8030
    %8032 = vmatprep.subr.mxu0 0.0
    %v8033 = vand.u32 %v706, 4294901760
    %8034 = vmatpush1.msra.mxu0 %v8033
    %8035 = vmatprep.subr.mxu0 0.0
    %v8036 = vand.u32 %v707, 4294901760
    %8037 = vmatpush1.msra.mxu0 %v8036
    %8038 = vmatprep.subr.mxu0 0.0
    %v8039 = vand.u32 %v708, 4294901760
    %8040 = vmatpush1.msra.mxu0 %v8039
    %8041 = vmatprep.subr.mxu0 0.0
    %v8042 = vand.u32 %v709, 4294901760
    %8043 = vmatpush1.msra.mxu0 %v8042
    %8044 = vmatprep.subr.mxu0 0.0
    %v8045 = vand.u32 %v710, 4294901760
    %8046 = vmatpush1.msra.mxu0 %v8045
    %8047 = vmatprep.subr.mxu0 0.0
    %v8048 = vand.u32 %v711, 4294901760
    %8049 = vmatpush1.msra.mxu0 %v8048
    %8050 = vmatprep.subr.mxu0 0.0
    %v8051 = vand.u32 %v712, 4294901760
    %8052 = vmatpush1.msra.mxu0 %v8051
    %8053 = vmatprep.subr.mxu0 0.0
    %v8054 = vand.u32 %v713, 4294901760
    %8055 = vmatpush1.msra.mxu0 %v8054
    %8056 = vmatprep.subr.mxu0 0.0
    %v8057 = vand.u32 %v714, 4294901760
    %8058 = vmatpush1.msra.mxu0 %v8057
    %8059 = vmatprep.subr.mxu0 0.0
    %v8060 = vand.u32 %v715, 4294901760
    %8061 = vmatpush1.msra.mxu0 %v8060
    %8062 = vmatprep.subr.mxu0 0.0
    %v8063 = vand.u32 %v716, 4294901760
    %8064 = vmatpush1.msra.mxu0 %v8063
    %8065 = vmatprep.subr.mxu0 0.0
    %8066 = vmatpush1.msra.mxu0 0.0
    %8067 = vmatprep.subr.mxu0 0.0
    %8068 = vmatpush1.msra.mxu0 0.0
    %8069 = vmatprep.subr.mxu0 0.0
    %8070 = vmatpush1.msra.mxu0 0.0
    %8071 = vmatprep.subr.mxu0 0.0
    %8072 = vmatpush1.msra.mxu0 0.0
    %8073 = vmatprep.subr.mxu0 0.0
    %8074 = vmatpush1.msra.mxu0 0.0
    %8075 = vmatprep.subr.mxu0 0.0
    %8076 = vmatpush1.msra.mxu0 0.0
    %8077 = vmatprep.subr.mxu0 0.0
    %8078 = vmatpush1.msra.mxu0 0.0
    %8079 = vmatprep.subr.mxu0 0.0
    %8080 = vmatpush1.msra.mxu0 0.0
    %8081 = vmatprep.subr.mxu0 0.0
    %8082 = vmatpush1.msra.mxu0 0.0
    %8083 = vmatprep.subr.mxu0 0.0
    %8084 = vmatpush1.msra.mxu0 0.0
    %8085 = vmatprep.subr.mxu0 0.0
    %8086 = vmatpush1.msra.mxu0 0.0
    %8087 = vmatprep.subr.mxu0 0.0
    %8088 = vmatpush1.msra.mxu0 0.0
    %8089 = vmatprep.subr.mxu0 0.0
    %8090 = vmatpush1.msra.mxu0 0.0
    %8091 = vmatprep.subr.mxu0 0.0
    %8092 = vmatpush1.msra.mxu0 0.0
    %8093 = vmatprep.subr.mxu0 0.0
    %8094 = vmatpush1.msra.mxu0 0.0
    %8095 = vmatprep.subr.mxu0 0.0
    %8096 = vmatpush1.msra.mxu0 0.0
    %8097 = vmatprep.mubr.f32.mxu0 0.0
    %v8098 = vand.u32 %v7462, 4294901760
    %8099 = vmatmul.mubr.f32.gmra.mrb[0].mxu0 %v8098
    %v8100 = vpop.f32.mrb[0].mxu0
    %v8101 = vadd.f32 %v8014, %v8100
    %v8102 = vpop.f32.mrb[0].mxu0
    %8103 = vdwg.mxu0
    %v8104 = vmul.f32 %v8101, 0.0078125
    %v8105 = vmul.f32 %v8104, %v8104
    %v8107 = vrot.slane %v8105, 7
    %v8109 = vsub.f32 %v8104, %v8107
    %v8110 = vmax.f32 %v8109, 0.0
    %v8111 = vlaneseq
    %v8112 = vshrl.u32 %v8111, 7
    %v8113 = vsub.s32 0, %v8112
    %v8114 = vrot.slane %v8104, %v8113
    %v8115 = vsub.f32 %v7448, %v8114
    %v8116 = vadd.f32 %v8110, 1e-05
    %v8117 = vrsqrt.pop %v8116
    %v8118 = vlaneseq
    %v8119 = vshrl.u32 %v8118, 7
    %v8120 = vsub.s32 1, %v8119
    %v8121 = vrot.slane %v8117, %v8120
    %v8122 = vmul.f32 %v8115, %v8121
    %v8123 = vld [vmem:[%s6 + $0x7] sm:$0x1]
    %v8124 = vlaneseq
    %v8125 = vshrl.u32 %v8124, 7
    %v8126 = vsub.s32 0, %v8125
    %v8127 = vrot.slane %v8123, %v8126
    %v8128 = vmul.f32 %v8122, %v8127
    %v8129 = vld [vmem:[#allocation10 + $0x7] sm:$0x1]
    %v8130 = vlaneseq
    %v8131 = vshrl.u32 %v8130, 7
    %v8132 = vsub.s32 0, %v8131
    %v8133 = vrot.slane %v8129, %v8132
    %v8134 = vadd.f32 %v8128, %v8133
    %8135 = vst [vmem:[%s9] sm:$0xff] %v8134
    // Predicated region
    $region66: #{cnn_forward.1} parent=1 // pred_check
      _
    $region67: #{cnn_forward.1} parent=1 // pred_check_branch
      %8137 = sbr.rel (0) target = $region69
    $region68: #{cnn_forward.1} parent=1 // pred_region
      _
    $region69: #{cnn_forward.1} parent=1 // pred_fallthru
      _
    // Predicated region
    $region70: #{cnn_forward.1} parent=1 // pred_check
      _
    $region71: #{cnn_forward.1} parent=1 // pred_check_branch
      %8139 = sbr.rel (0) target = $region73
    $region72: #{cnn_forward.1} parent=1 // pred_region
      _
    $region73: #{cnn_forward.1} parent=1 // pred_fallthru
      _
    %8140 = vsyncpa [#allocation3], 1
    %8141 = vsyncpa [#allocation5], 1
    %8142 = vsyncpa [#allocation8], 1
    %8143 = vsyncpa [#allocation11], 1

</llo_original>
